<compile_context>
chip_gen: v7x
topology: tpu7x:2x2x1
jax: 0.10.0
libtpu: 0.0.40
codegen_flags: <defaults>
</compile_context>

<pallas_src>
import jax
import jax.numpy as jnp
from jax import lax
from jax.experimental import pallas as pl
from jax.experimental.pallas import tpu as pltpu

NUM_NODE_FEAT = 11
NUM_EDGE_FEAT = 4
HID1 = 32   # conv1 out channels
HID2 = 16   # conv2 out channels
FC_HID = 32


# ---------------------------------------------------------------------------
# Fused Pallas kernel
#   grid = (2, n_edge_tiles): axis 0 = layer (0: conv1, 1: conv2+head),
#                             axis 1 = edge tile (reduction, iterated last).
# ---------------------------------------------------------------------------
def _fused_mpnn_kernel(src_ref, dst_ref, batch_ref, x_ref, ea_ref,
                       c1w1_ref, c1b1_ref, c1w2_ref, c1b2_ref, c1wr_ref, c1br_ref,
                       c2w1_ref, c2b1_ref, c2w2_ref, c2b2_ref, c2wr_ref, c2br_ref,
                       fc1w_ref, fc1b_ref, outw_ref, outb_ref,
                       o_ref,
                       h1_acc, h2_acc):
    layer = pl.program_id(0)
    et = pl.program_id(1)
    n_et = pl.num_programs(1)

    te = ea_ref.shape[0]        # edge tile size
    n_pad = x_ref.shape[0]      # padded node count

    # ---- accumulator init (start of each layer's edge reduction) -----------
    @pl.when(jnp.logical_and(layer == 0, et == 0))
    def _init1():
        h1_acc[...] = jnp.zeros_like(h1_acc)

    @pl.when(jnp.logical_and(layer == 1, et == 0))
    def _init2():
        h2_acc[...] = jnp.zeros_like(h2_acc)

    # ---- per-tile gather / scatter operators built in VMEM from indices ----
    src_ids = src_ref[...]                                    # [te, 1] int32
    dst_ids = dst_ref[...]                                    # [1, te] int32
    src_oh = (lax.broadcasted_iota(jnp.int32, (te, n_pad), 1) == src_ids
              ).astype(jnp.float32)                           # [te, n_pad] gather
    dst_oh_t = (lax.broadcasted_iota(jnp.int32, (n_pad, te), 0) == dst_ids
                ).astype(jnp.float32)                         # [n_pad, te] scatter

    def nnconv_edge_tile(feat_ref, w1_ref, b1_ref, w2_ref, b2_ref, acc_ref):
        """Accumulate this edge tile's messages of one NNConv layer."""
        cin = w2_ref.shape[0]
        cout = acc_ref.shape[1]
        # edge NN hidden: [te, 32]
        h = jnp.maximum(
            jnp.dot(ea_ref[...], w1_ref[...], preferred_element_type=jnp.float32)
            + b1_ref[...], 0.0)
        # gather source-node features via one-hot matmul (MXU): [te, cin]
        x_src = jnp.dot(src_oh, feat_ref[...], preferred_element_type=jnp.float32)
        # per-edge bmm without materializing the [te, cin*cout] wedge:
        #   msg += x_src[:, c] * (h @ W2[c] + b2[c])   for each c  (MXU matmuls)
        msg = jnp.zeros((te, cout), jnp.float32)
        for c in range(cin):                                  # small static loop
            wedge_c = (jnp.dot(h, w2_ref[c], preferred_element_type=jnp.float32)
                       + b2_ref[c])                           # [te, cout]
            msg = msg + x_src[:, c:c + 1] * wedge_c
        # scatter-add to destination nodes via one-hot^T matmul (MXU)
        acc_ref[...] += jnp.dot(dst_oh_t, msg, preferred_element_type=jnp.float32)

    # ---- layer 0: conv1 message accumulation --------------------------------
    @pl.when(layer == 0)
    def _conv1_step():
        nnconv_edge_tile(x_ref, c1w1_ref, c1b1_ref, c1w2_ref, c1b2_ref, h1_acc)

    # ---- layer 0 finalize: h1 = relu(aggr + x @ Wroot1 + b1)  (kept in VMEM)
    @pl.when(jnp.logical_and(layer == 0, et == n_et - 1))
    def _conv1_done():
        root = (jnp.dot(x_ref[...], c1wr_ref[...],
                        preferred_element_type=jnp.float32) + c1br_ref[...])
        h1_acc[...] = jnp.maximum(h1_acc[...] + root, 0.0)

    # ---- layer 1: conv2 message accumulation (reads h1 from scratch) --------
    @pl.when(layer == 1)
    def _conv2_step():
        nnconv_edge_tile(h1_acc, c2w1_ref, c2b1_ref, c2w2_ref, c2b2_ref, h2_acc)

    # ---- layer 1 finalize + global_add_pool + relu(fc_1) + out ---------------
    @pl.when(jnp.logical_and(layer == 1, et == n_et - 1))
    def _conv2_done_and_head():
        root = (jnp.dot(h1_acc[...], c2wr_ref[...],
                        preferred_element_type=jnp.float32) + c2br_ref[...])
        h2 = jnp.maximum(h2_acc[...] + root, 0.0)             # [n_pad, 16]
        nb = o_ref.shape[0]
        pool_oh = (lax.broadcasted_iota(jnp.int32, (nb, n_pad), 0)
                   == batch_ref[...]).astype(jnp.float32)     # [B, n_pad]
        pooled = jnp.dot(pool_oh, h2, preferred_element_type=jnp.float32)
        hid = jnp.maximum(
            jnp.dot(pooled, fc1w_ref[...], preferred_element_type=jnp.float32)
            + fc1b_ref[...], 0.0)
        o_ref[...] = (jnp.dot(hid, outw_ref[...],
                              preferred_element_type=jnp.float32) + outb_ref[...])


# ---------------------------------------------------------------------------
# Host wrapper: padding, weight re-layout, BlockSpecs, single pallas_call.
# ---------------------------------------------------------------------------
def _round_up(v, m):
    return (v + m - 1) // m * m


def mpnn_forward(x, edge_attr, src, dst, batch, num_graphs, params):
    N, cin0 = x.shape
    E = edge_attr.shape[0]
    B = int(num_graphs)
    f32 = jnp.float32

    n_pad = _round_up(N, 8)
    if E <= 512:
        te = _round_up(E, 8)
        n_tiles = 1
    else:
        te = 512                                # multiple of 128: clean blocks
        n_tiles = pl.cdiv(E, te)
    e_pad = te * n_tiles

    # Padded inputs. Padded edges: src=0 (harmless gather), dst=-1 (no scatter).
    # Padded nodes: batch=-1 (excluded from pooling).
    x_p = jnp.zeros((n_pad, cin0), f32).at[:N].set(x)
    ea_p = jnp.zeros((e_pad, edge_attr.shape[1]), f32).at[:E].set(edge_attr)
    src_col = jnp.zeros((e_pad, 1), jnp.int32).at[:E, 0].set(src.astype(jnp.int32))
    dst_row = jnp.full((1, e_pad), -1, jnp.int32).at[0, :E].set(dst.astype(jnp.int32))
    batch_row = jnp.full((1, n_pad), -1, jnp.int32).at[0, :N].set(batch.astype(jnp.int32))

    p = params
    # Pre-split edge-NN output weights: [32, cin*cout] -> [cin, 32, cout]
    c1_w2s = p["c1_w2"].reshape(32, NUM_NODE_FEAT, HID1).transpose(1, 0, 2)
    c1_b2s = p["c1_b2"].reshape(NUM_NODE_FEAT, HID1)[:, None, :]
    c2_w2s = p["c2_w2"].reshape(32, HID1, HID2).transpose(1, 0, 2)
    c2_b2s = p["c2_b2"].reshape(HID1, HID2)[:, None, :]

    in_arrays = [
        src_col, dst_row, batch_row, x_p, ea_p,
        p["c1_w1"], p["c1_b1"], c1_w2s, c1_b2s, p["c1_wroot"], p["c1_broot"],
        p["c2_w1"], p["c2_b1"], c2_w2s, c2_b2s, p["c2_wroot"], p["c2_broot"],
        p["fc1_w"], p["fc1_b"], p["out_w"], p["out_b"],
    ]

    def _const_spec(a):
        nd = a.ndim
        return pl.BlockSpec(a.shape, lambda l, e, _nd=nd: (0,) * _nd)

    in_specs = [
        pl.BlockSpec((te, 1), lambda l, e: (e, 0)),               # src_col
        pl.BlockSpec((1, te), lambda l, e: (0, e)),               # dst_row
        _const_spec(batch_row),                                   # batch
        _const_spec(x_p),                                         # x (resident)
        pl.BlockSpec((te, ea_p.shape[1]), lambda l, e: (e, 0)),   # edge_attr tile
    ] + [_const_spec(a) for a in in_arrays[5:]]                   # weights

    grid_spec = pltpu.PrefetchScalarGridSpec(
        num_scalar_prefetch=0,
        grid=(2, n_tiles),                       # (layer, edge-tile); reduction last
        in_specs=in_specs,
        out_specs=pl.BlockSpec((B, 1), lambda l, e: (0, 0)),
        scratch_shapes=[
            pltpu.VMEM((n_pad, HID1), jnp.float32),   # conv1 accumulator -> h1
            pltpu.VMEM((n_pad, HID2), jnp.float32),   # conv2 accumulator
        ],
    )

    return pl.pallas_call(
        _fused_mpnn_kernel,
        grid_spec=grid_spec,
        out_shape=jax.ShapeDtypeStruct((B, 1), jnp.float32),
        compiler_params=pltpu.CompilerParams(
            dimension_semantics=("arbitrary", "arbitrary"),
            vmem_limit_bytes=32 * 1024 * 1024),
    )(*in_arrays)


# ---------------------------------------------------------------------------
# Pure-JAX reference (for correctness check)
# ---------------------------------------------------------------------------
def _nnconv_ref(x, ea, src, dst, w1, b1, w2, b2, wroot, broot, cin, cout, N):
    h = jax.nn.relu(ea @ w1 + b1)
    wedge = (h @ w2 + b2).reshape(-1, cin, cout)
    msg = jnp.einsum("ec,eco->eo", x[src], wedge)
    aggr = jnp.zeros((N, cout), jnp.float32).at[dst].add(msg)
    return jax.nn.relu(aggr + x @ wroot + broot)


def mpnn_ref(x, ea, src, dst, batch, B, p):
    N = x.shape[0]
    h1 = _nnconv_ref(x, ea, src, dst, p["c1_w1"], p["c1_b1"][0], p["c1_w2"],
                     p["c1_b2"][0], p["c1_wroot"], p["c1_broot"][0],
                     NUM_NODE_FEAT, HID1, N)
    h2 = _nnconv_ref(h1, ea, src, dst, p["c2_w1"], p["c2_b1"][0], p["c2_w2"],
                     p["c2_b2"][0], p["c2_wroot"], p["c2_broot"][0],
                     HID1, HID2, N)
    pooled = jnp.zeros((B, HID2), jnp.float32).at[batch].add(h2)
    h = jax.nn.relu(pooled @ p["fc1_w"] + p["fc1_b"][0])
    return h @ p["out_w"] + p["out_b"][0]


# ---------------------------------------------------------------------------
# Deterministic parameter / input construction
# ---------------------------------------------------------------------------
def init_params(key):
    ks = jax.random.split(key, 16)
    f32 = jnp.float32

    def w(k, shape, fan_in):
        return jax.random.normal(k, shape, f32) / jnp.sqrt(f32(fan_in))

    return {
        # conv1 edge NN: 4 -> 32 -> 11*32 ; root: 11 -> 32
        "c1_w1": w(ks[0], (NUM_EDGE_FEAT, 32), NUM_EDGE_FEAT),
        "c1_b1": w(ks[1], (1, 32), 32),
        "c1_w2": w(ks[2], (32, NUM_NODE_FEAT * HID1), 32),
        "c1_b2": w(ks[3], (1, NUM_NODE_FEAT * HID1), 32),
        "c1_wroot": w(ks[4], (NUM_NODE_FEAT, HID1), NUM_NODE_FEAT),
        "c1_broot": w(ks[5], (1, HID1), HID1),
        # conv2 edge NN: 4 -> 32 -> 32*16 ; root: 32 -> 16
        "c2_w1": w(ks[6], (NUM_EDGE_FEAT, 32), NUM_EDGE_FEAT),
        "c2_b1": w(ks[7], (1, 32), 32),
        "c2_w2": w(ks[8], (32, HID1 * HID2), 32),
        "c2_b2": w(ks[9], (1, HID1 * HID2), 32),
        "c2_wroot": w(ks[10], (HID1, HID2), HID1),
        "c2_broot": w(ks[11], (1, HID2), HID2),
        # head
        "fc1_w": w(ks[12], (HID2, FC_HID), HID2),
        "fc1_b": w(ks[13], (1, FC_HID), FC_HID),
        "out_w": w(ks[14], (FC_HID, 1), FC_HID),
        "out_b": w(ks[15], (1, 1), 1),
    }


if __name__ == "__main__":
    key = jax.random.PRNGKey(0)
    k_x, k_e, k_p = jax.random.split(key, 3)

    # Small synthetic graph batch: B=2 graphs, 8 nodes each (N=16), E=32 edges.
    B, nodes_per_graph = 2, 8
    N = B * nodes_per_graph
    E = 32

    x = jax.random.normal(k_x, (N, NUM_NODE_FEAT), jnp.float32)
    edge_attr = jax.random.normal(k_e, (E, NUM_EDGE_FEAT), jnp.float32)

    src_list, dst_list = [], []
    for g in range(B):
        base = g * nodes_per_graph
        for i in range(E // B):
            src_list.append(base + (i % nodes_per_graph))
            dst_list.append(base + ((3 * i + 1) % nodes_per_graph))
    src = jnp.asarray(src_list, jnp.int32)
    dst = jnp.asarray(dst_list, jnp.int32)
    batch = jnp.asarray(sum(([g] * nodes_per_graph for g in range(B)), []),
                        jnp.int32)

    params = init_params(k_p)

    out = mpnn_forward(x, edge_attr, src, dst, batch, B, params)
    out = jax.block_until_ready(out)
    assert out.shape == (B, 1), out.shape

    ref = mpnn_ref(x, edge_attr, src, dst, batch, B, params)
    assert jnp.allclose(out, ref, atol=1e-4, rtol=1e-4), (out, ref)

    print("KERNEL_OK")
</pallas_src>

<mosaic_0001>
module attributes {stable_mosaic.version = 11 : i64} {
  func.func @_fused_mpnn_kernel(%arg0: i32, %arg1: i32, %arg2: memref<32x1xi32, #tpu.memory_space<vmem>>, %arg3: memref<1x32xi32, #tpu.memory_space<vmem>>, %arg4: memref<1x16xi32, #tpu.memory_space<vmem>>, %arg5: memref<16x11xf32, #tpu.memory_space<vmem>>, %arg6: memref<32x4xf32, #tpu.memory_space<vmem>>, %arg7: memref<4x32xf32, #tpu.memory_space<vmem>>, %arg8: memref<1x32xf32, #tpu.memory_space<vmem>>, %arg9: memref<11x32x32xf32, #tpu.memory_space<vmem>>, %arg10: memref<11x1x32xf32, #tpu.memory_space<vmem>>, %arg11: memref<11x32xf32, #tpu.memory_space<vmem>>, %arg12: memref<1x32xf32, #tpu.memory_space<vmem>>, %arg13: memref<4x32xf32, #tpu.memory_space<vmem>>, %arg14: memref<1x32xf32, #tpu.memory_space<vmem>>, %arg15: memref<32x32x16xf32, #tpu.memory_space<vmem>>, %arg16: memref<32x1x16xf32, #tpu.memory_space<vmem>>, %arg17: memref<32x16xf32, #tpu.memory_space<vmem>>, %arg18: memref<1x16xf32, #tpu.memory_space<vmem>>, %arg19: memref<16x32xf32, #tpu.memory_space<vmem>>, %arg20: memref<1x32xf32, #tpu.memory_space<vmem>>, %arg21: memref<32x1xf32, #tpu.memory_space<vmem>>, %arg22: memref<1x1xf32, #tpu.memory_space<vmem>>, %arg23: memref<2x1xf32, #tpu.memory_space<vmem>>, %arg24: memref<16x32xf32, #tpu.memory_space<vmem>>, %arg25: memref<16x16xf32, #tpu.memory_space<vmem>>) attributes {dimension_semantics = [#tpu.dimension_semantics<arbitrary>, #tpu.dimension_semantics<arbitrary>], iteration_bounds = array<i64: 2, 1>, scalar_prefetch = 0 : i64, scratch_operands = 2 : i64, tpu.core_type = #tpu.core_type<tc>, window_params = [{transform_indices = @transform_0, window_bounds = array<i64: 32, 1>}, {transform_indices = @transform_1, window_bounds = array<i64: 1, 32>}, {pipeline_mode = #tpu.pipeline_mode<synchronous>, transform_indices = @transform_2, window_bounds = array<i64: 1, 16>}, {pipeline_mode = #tpu.pipeline_mode<synchronous>, transform_indices = @transform_3, window_bounds = array<i64: 16, 11>}, {transform_indices = @transform_4, window_bounds = array<i64: 32, 4>}, {pipeline_mode = #tpu.pipeline_mode<synchronous>, transform_indices = @transform_5, window_bounds = array<i64: 4, 32>}, {pipeline_mode = #tpu.pipeline_mode<synchronous>, transform_indices = @transform_6, window_bounds = array<i64: 1, 32>}, {pipeline_mode = #tpu.pipeline_mode<synchronous>, transform_indices = @transform_7, window_bounds = array<i64: 11, 32, 32>}, {pipeline_mode = #tpu.pipeline_mode<synchronous>, transform_indices = @transform_8, window_bounds = array<i64: 11, 1, 32>}, {pipeline_mode = #tpu.pipeline_mode<synchronous>, transform_indices = @transform_9, window_bounds = array<i64: 11, 32>}, {pipeline_mode = #tpu.pipeline_mode<synchronous>, transform_indices = @transform_10, window_bounds = array<i64: 1, 32>}, {pipeline_mode = #tpu.pipeline_mode<synchronous>, transform_indices = @transform_11, window_bounds = array<i64: 4, 32>}, {pipeline_mode = #tpu.pipeline_mode<synchronous>, transform_indices = @transform_12, window_bounds = array<i64: 1, 32>}, {pipeline_mode = #tpu.pipeline_mode<synchronous>, transform_indices = @transform_13, window_bounds = array<i64: 32, 32, 16>}, {pipeline_mode = #tpu.pipeline_mode<synchronous>, transform_indices = @transform_14, window_bounds = array<i64: 32, 1, 16>}, {pipeline_mode = #tpu.pipeline_mode<synchronous>, transform_indices = @transform_15, window_bounds = array<i64: 32, 16>}, {pipeline_mode = #tpu.pipeline_mode<synchronous>, transform_indices = @transform_16, window_bounds = array<i64: 1, 16>}, {pipeline_mode = #tpu.pipeline_mode<synchronous>, transform_indices = @transform_17, window_bounds = array<i64: 16, 32>}, {pipeline_mode = #tpu.pipeline_mode<synchronous>, transform_indices = @transform_18, window_bounds = array<i64: 1, 32>}, {pipeline_mode = #tpu.pipeline_mode<synchronous>, transform_indices = @transform_19, window_bounds = array<i64: 32, 1>}, {pipeline_mode = #tpu.pipeline_mode<synchronous>, transform_indices = @transform_20, window_bounds = array<i64: 1, 1>}, {pipeline_mode = #tpu.pipeline_mode<synchronous>, transform_indices = @transform_21, window_bounds = array<i64: 2, 1>}]} {
    %c0_i32 = arith.constant 0 : i32
    %0 = arith.cmpi eq, %arg0, %c0_i32 : i32
    %c0_i32_0 = arith.constant 0 : i32
    %1 = arith.cmpi eq, %arg1, %c0_i32_0 : i32
    %2 = arith.andi %0, %1 : i1
    %3 = arith.extui %2 : i1 to i32
    %c0_i32_1 = arith.constant 0 : i32
    %4 = arith.cmpi ne, %3, %c0_i32_1 : i32
    scf.if %4 {
      %cst = arith.constant 0.000000e+00 : f32
      %38 = vector.broadcast %cst : f32 to vector<16x32xf32>
      %c0_17 = arith.constant 0 : index
      %c0_18 = arith.constant 0 : index
      %39 = vector.load %arg24[%c0_17, %c0_18] : memref<16x32xf32, #tpu.memory_space<vmem>>, vector<16x32xf32>
      tpu.vector_store %arg24[%c0_17, %c0_18], %38 {strides = array<i32>} : memref<16x32xf32, #tpu.memory_space<vmem>>, vector<16x32xf32>,
    } else {
    }
    %c1_i32 = arith.constant 1 : i32
    %5 = arith.cmpi eq, %arg0, %c1_i32 : i32
    %c0_i32_2 = arith.constant 0 : i32
    %6 = arith.cmpi eq, %arg1, %c0_i32_2 : i32
    %7 = arith.andi %5, %6 : i1
    %8 = arith.extui %7 : i1 to i32
    %c0_i32_3 = arith.constant 0 : i32
    %9 = arith.cmpi ne, %8, %c0_i32_3 : i32
    scf.if %9 {
      %cst = arith.constant 0.000000e+00 : f32
      %38 = vector.broadcast %cst : f32 to vector<16x16xf32>
      %c0_17 = arith.constant 0 : index
      %c0_18 = arith.constant 0 : index
      %39 = vector.load %arg25[%c0_17, %c0_18] : memref<16x16xf32, #tpu.memory_space<vmem>>, vector<16x16xf32>
      tpu.vector_store %arg25[%c0_17, %c0_18], %38 {strides = array<i32>} : memref<16x16xf32, #tpu.memory_space<vmem>>, vector<16x16xf32>,
    } else {
    }
    %c0 = arith.constant 0 : index
    %c0_4 = arith.constant 0 : index
    %10 = vector.load %arg2[%c0, %c0_4] : memref<32x1xi32, #tpu.memory_space<vmem>>, vector<32x1xi32>
    %c0_5 = arith.constant 0 : index
    %c0_6 = arith.constant 0 : index
    %11 = vector.load %arg3[%c0_5, %c0_6] : memref<1x32xi32, #tpu.memory_space<vmem>>, vector<1x32xi32>
    %12 = tpu.iota {dimensions = array<i32: 1>} : vector<32x16xi32>
    %13 = vector.broadcast %10 : vector<32x1xi32> to vector<32x16xi32>
    %14 = arith.cmpi eq, %12, %13 : vector<32x16xi32>
    %15 = arith.extui %14 : vector<32x16xi1> to vector<32x16xi32>
    %16 = arith.sitofp %15 : vector<32x16xi32> to vector<32x16xf32>
    %17 = tpu.iota {dimensions = array<i32: 0>} : vector<16x32xi32>
    %18 = vector.broadcast %11 : vector<1x32xi32> to vector<16x32xi32>
    %19 = arith.cmpi eq, %17, %18 : vector<16x32xi32>
    %20 = arith.extui %19 : vector<16x32xi1> to vector<16x32xi32>
    %21 = arith.sitofp %20 : vector<16x32xi32> to vector<16x32xf32>
    %c0_i32_7 = arith.constant 0 : i32
    %22 = arith.cmpi eq, %arg0, %c0_i32_7 : i32
    %23 = arith.extui %22 : i1 to i32
    %c0_i32_8 = arith.constant 0 : i32
    %24 = arith.cmpi ne, %23, %c0_i32_8 : i32
    scf.if %24 {
      %c0_17 = arith.constant 0 : index
      %c0_18 = arith.constant 0 : index
      %38 = vector.load %arg6[%c0_17, %c0_18] : memref<32x4xf32, #tpu.memory_space<vmem>>, vector<32x4xf32>
      %c0_19 = arith.constant 0 : index
      %c0_20 = arith.constant 0 : index
      %39 = vector.load %arg7[%c0_19, %c0_20] : memref<4x32xf32, #tpu.memory_space<vmem>>, vector<4x32xf32>
      %cst = arith.constant dense<0.000000e+00> : vector<32x32xf32>
      %40 = tpu.matmul %38, %39, %cst {dimension_numbers = #tpu.dot_dimension_numbers<[1], [0], [0], [1], [0, 0, 1, 1], [], []>} : vector<32x4xf32>, vector<4x32xf32>, vector<32x32xf32> -> vector<32x32xf32>
      %c0_21 = arith.constant 0 : index
      %c0_22 = arith.constant 0 : index
      %41 = vector.load %arg8[%c0_21, %c0_22] : memref<1x32xf32, #tpu.memory_space<vmem>>, vector<1x32xf32>
      %42 = vector.broadcast %41 : vector<1x32xf32> to vector<32x32xf32>
      %43 = arith.addf %40, %42 : vector<32x32xf32>
      %cst_23 = arith.constant 0.000000e+00 : f32
      %44 = vector.broadcast %cst_23 : f32 to vector<32x32xf32>
      %45 = arith.maximumf %43, %44 : vector<32x32xf32>
      %c0_24 = arith.constant 0 : index
      %c0_25 = arith.constant 0 : index
      %46 = vector.load %arg5[%c0_24, %c0_25] : memref<16x11xf32, #tpu.memory_space<vmem>>, vector<16x11xf32>
      %cst_26 = arith.constant dense<0.000000e+00> : vector<32x11xf32>
      %47 = tpu.matmul %16, %46, %cst_26 {dimension_numbers = #tpu.dot_dimension_numbers<[1], [0], [0], [1], [0, 0, 1, 1], [], []>} : vector<32x16xf32>, vector<16x11xf32>, vector<32x11xf32> -> vector<32x11xf32>
      %cst_27 = arith.constant 0.000000e+00 : f32
      %48 = vector.broadcast %cst_27 : f32 to vector<32x32xf32>
      %c0_28 = arith.constant 0 : index
      %c0_29 = arith.constant 0 : index
      %c0_30 = arith.constant 0 : index
      %49 = vector.load %arg9[%c0_28, %c0_29, %c0_30] : memref<11x32x32xf32, #tpu.memory_space<vmem>>, vector<1x32x32xf32>
      %50 = vector.shape_cast %49 : vector<1x32x32xf32> to vector<32x32xf32>
      %cst_31 = arith.constant dense<0.000000e+00> : vector<32x32xf32>
      %51 = tpu.matmul %45, %50, %cst_31 {dimension_numbers = #tpu.dot_dimension_numbers<[1], [0], [0], [1], [0, 0, 1, 1], [], []>} : vector<32x32xf32>, vector<32x32xf32>, vector<32x32xf32> -> vector<32x32xf32>
      %c0_32 = arith.constant 0 : index
      %c0_33 = arith.constant 0 : index
      %c0_34 = arith.constant 0 : index
      %52 = vector.load %arg10[%c0_32, %c0_33, %c0_34] : memref<11x1x32xf32, #tpu.memory_space<vmem>>, vector<1x1x32xf32>
      %53 = vector.shape_cast %52 : vector<1x1x32xf32> to vector<1x32xf32>
      %54 = vector.broadcast %53 : vector<1x32xf32> to vector<32x32xf32>
      %55 = arith.addf %51, %54 : vector<32x32xf32>
      %56 = vector.extract_strided_slice %47 {offsets = [0, 0], sizes = [32, 1], strides = [1, 1]} : vector<32x11xf32> to vector<32x1xf32>
      %57 = vector.broadcast %56 : vector<32x1xf32> to vector<32x32xf32>
      %58 = arith.mulf %57, %55 : vector<32x32xf32>
      %59 = arith.addf %48, %58 : vector<32x32xf32>
      %c1 = arith.constant 1 : index
      %c0_35 = arith.constant 0 : index
      %c0_36 = arith.constant 0 : index
      %60 = vector.load %arg9[%c1, %c0_35, %c0_36] : memref<11x32x32xf32, #tpu.memory_space<vmem>>, vector<1x32x32xf32>
      %61 = vector.shape_cast %60 : vector<1x32x32xf32> to vector<32x32xf32>
      %cst_37 = arith.constant dense<0.000000e+00> : vector<32x32xf32>
      %62 = tpu.matmul %45, %61, %cst_37 {dimension_numbers = #tpu.dot_dimension_numbers<[1], [0], [0], [1], [0, 0, 1, 1], [], []>} : vector<32x32xf32>, vector<32x32xf32>, vector<32x32xf32> -> vector<32x32xf32>
      %c1_38 = arith.constant 1 : index
      %c0_39 = arith.constant 0 : index
      %c0_40 = arith.constant 0 : index
      %63 = vector.load %arg10[%c1_38, %c0_39, %c0_40] : memref<11x1x32xf32, #tpu.memory_space<vmem>>, vector<1x1x32xf32>
      %64 = vector.shape_cast %63 : vector<1x1x32xf32> to vector<1x32xf32>
      %65 = vector.broadcast %64 : vector<1x32xf32> to vector<32x32xf32>
      %66 = arith.addf %62, %65 : vector<32x32xf32>
      %67 = vector.extract_strided_slice %47 {offsets = [0, 1], sizes = [32, 1], strides = [1, 1]} : vector<32x11xf32> to vector<32x1xf32>
      %68 = vector.broadcast %67 : vector<32x1xf32> to vector<32x32xf32>
      %69 = arith.mulf %68, %66 : vector<32x32xf32>
      %70 = arith.addf %59, %69 : vector<32x32xf32>
      %c2 = arith.constant 2 : index
      %c0_41 = arith.constant 0 : index
      %c0_42 = arith.constant 0 : index
      %71 = vector.load %arg9[%c2, %c0_41, %c0_42] : memref<11x32x32xf32, #tpu.memory_space<vmem>>, vector<1x32x32xf32>
      %72 = vector.shape_cast %71 : vector<1x32x32xf32> to vector<32x32xf32>
      %cst_43 = arith.constant dense<0.000000e+00> : vector<32x32xf32>
      %73 = tpu.matmul %45, %72, %cst_43 {dimension_numbers = #tpu.dot_dimension_numbers<[1], [0], [0], [1], [0, 0, 1, 1], [], []>} : vector<32x32xf32>, vector<32x32xf32>, vector<32x32xf32> -> vector<32x32xf32>
      %c2_44 = arith.constant 2 : index
      %c0_45 = arith.constant 0 : index
      %c0_46 = arith.constant 0 : index
      %74 = vector.load %arg10[%c2_44, %c0_45, %c0_46] : memref<11x1x32xf32, #tpu.memory_space<vmem>>, vector<1x1x32xf32>
      %75 = vector.shape_cast %74 : vector<1x1x32xf32> to vector<1x32xf32>
      %76 = vector.broadcast %75 : vector<1x32xf32> to vector<32x32xf32>
      %77 = arith.addf %73, %76 : vector<32x32xf32>
      %78 = vector.extract_strided_slice %47 {offsets = [0, 2], sizes = [32, 1], strides = [1, 1]} : vector<32x11xf32> to vector<32x1xf32>
      %79 = vector.broadcast %78 : vector<32x1xf32> to vector<32x32xf32>
      %80 = arith.mulf %79, %77 : vector<32x32xf32>
      %81 = arith.addf %70, %80 : vector<32x32xf32>
      %c3 = arith.constant 3 : index
      %c0_47 = arith.constant 0 : index
      %c0_48 = arith.constant 0 : index
      %82 = vector.load %arg9[%c3, %c0_47, %c0_48] : memref<11x32x32xf32, #tpu.memory_space<vmem>>, vector<1x32x32xf32>
      %83 = vector.shape_cast %82 : vector<1x32x32xf32> to vector<32x32xf32>
      %cst_49 = arith.constant dense<0.000000e+00> : vector<32x32xf32>
      %84 = tpu.matmul %45, %83, %cst_49 {dimension_numbers = #tpu.dot_dimension_numbers<[1], [0], [0], [1], [0, 0, 1, 1], [], []>} : vector<32x32xf32>, vector<32x32xf32>, vector<32x32xf32> -> vector<32x32xf32>
      %c3_50 = arith.constant 3 : index
      %c0_51 = arith.constant 0 : index
      %c0_52 = arith.constant 0 : index
      %85 = vector.load %arg10[%c3_50, %c0_51, %c0_52] : memref<11x1x32xf32, #tpu.memory_space<vmem>>, vector<1x1x32xf32>
      %86 = vector.shape_cast %85 : vector<1x1x32xf32> to vector<1x32xf32>
      %87 = vector.broadcast %86 : vector<1x32xf32> to vector<32x32xf32>
      %88 = arith.addf %84, %87 : vector<32x32xf32>
      %89 = vector.extract_strided_slice %47 {offsets = [0, 3], sizes = [32, 1], strides = [1, 1]} : vector<32x11xf32> to vector<32x1xf32>
      %90 = vector.broadcast %89 : vector<32x1xf32> to vector<32x32xf32>
      %91 = arith.mulf %90, %88 : vector<32x32xf32>
      %92 = arith.addf %81, %91 : vector<32x32xf32>
      %c4 = arith.constant 4 : index
      %c0_53 = arith.constant 0 : index
      %c0_54 = arith.constant 0 : index
      %93 = vector.load %arg9[%c4, %c0_53, %c0_54] : memref<11x32x32xf32, #tpu.memory_space<vmem>>, vector<1x32x32xf32>
      %94 = vector.shape_cast %93 : vector<1x32x32xf32> to vector<32x32xf32>
      %cst_55 = arith.constant dense<0.000000e+00> : vector<32x32xf32>
      %95 = tpu.matmul %45, %94, %cst_55 {dimension_numbers = #tpu.dot_dimension_numbers<[1], [0], [0], [1], [0, 0, 1, 1], [], []>} : vector<32x32xf32>, vector<32x32xf32>, vector<32x32xf32> -> vector<32x32xf32>
      %c4_56 = arith.constant 4 : index
      %c0_57 = arith.constant 0 : index
      %c0_58 = arith.constant 0 : index
      %96 = vector.load %arg10[%c4_56, %c0_57, %c0_58] : memref<11x1x32xf32, #tpu.memory_space<vmem>>, vector<1x1x32xf32>
      %97 = vector.shape_cast %96 : vector<1x1x32xf32> to vector<1x32xf32>
      %98 = vector.broadcast %97 : vector<1x32xf32> to vector<32x32xf32>
      %99 = arith.addf %95, %98 : vector<32x32xf32>
      %100 = vector.extract_strided_slice %47 {offsets = [0, 4], sizes = [32, 1], strides = [1, 1]} : vector<32x11xf32> to vector<32x1xf32>
      %101 = vector.broadcast %100 : vector<32x1xf32> to vector<32x32xf32>
      %102 = arith.mulf %101, %99 : vector<32x32xf32>
      %103 = arith.addf %92, %102 : vector<32x32xf32>
      %c5 = arith.constant 5 : index
      %c0_59 = arith.constant 0 : index
      %c0_60 = arith.constant 0 : index
      %104 = vector.load %arg9[%c5, %c0_59, %c0_60] : memref<11x32x32xf32, #tpu.memory_space<vmem>>, vector<1x32x32xf32>
      %105 = vector.shape_cast %104 : vector<1x32x32xf32> to vector<32x32xf32>
      %cst_61 = arith.constant dense<0.000000e+00> : vector<32x32xf32>
      %106 = tpu.matmul %45, %105, %cst_61 {dimension_numbers = #tpu.dot_dimension_numbers<[1], [0], [0], [1], [0, 0, 1, 1], [], []>} : vector<32x32xf32>, vector<32x32xf32>, vector<32x32xf32> -> vector<32x32xf32>
      %c5_62 = arith.constant 5 : index
      %c0_63 = arith.constant 0 : index
      %c0_64 = arith.constant 0 : index
      %107 = vector.load %arg10[%c5_62, %c0_63, %c0_64] : memref<11x1x32xf32, #tpu.memory_space<vmem>>, vector<1x1x32xf32>
      %108 = vector.shape_cast %107 : vector<1x1x32xf32> to vector<1x32xf32>
      %109 = vector.broadcast %108 : vector<1x32xf32> to vector<32x32xf32>
      %110 = arith.addf %106, %109 : vector<32x32xf32>
      %111 = vector.extract_strided_slice %47 {offsets = [0, 5], sizes = [32, 1], strides = [1, 1]} : vector<32x11xf32> to vector<32x1xf32>
      %112 = vector.broadcast %111 : vector<32x1xf32> to vector<32x32xf32>
      %113 = arith.mulf %112, %110 : vector<32x32xf32>
      %114 = arith.addf %103, %113 : vector<32x32xf32>
      %c6 = arith.constant 6 : index
      %c0_65 = arith.constant 0 : index
      %c0_66 = arith.constant 0 : index
      %115 = vector.load %arg9[%c6, %c0_65, %c0_66] : memref<11x32x32xf32, #tpu.memory_space<vmem>>, vector<1x32x32xf32>
      %116 = vector.shape_cast %115 : vector<1x32x32xf32> to vector<32x32xf32>
      %cst_67 = arith.constant dense<0.000000e+00> : vector<32x32xf32>
      %117 = tpu.matmul %45, %116, %cst_67 {dimension_numbers = #tpu.dot_dimension_numbers<[1], [0], [0], [1], [0, 0, 1, 1], [], []>} : vector<32x32xf32>, vector<32x32xf32>, vector<32x32xf32> -> vector<32x32xf32>
      %c6_68 = arith.constant 6 : index
      %c0_69 = arith.constant 0 : index
      %c0_70 = arith.constant 0 : index
      %118 = vector.load %arg10[%c6_68, %c0_69, %c0_70] : memref<11x1x32xf32, #tpu.memory_space<vmem>>, vector<1x1x32xf32>
      %119 = vector.shape_cast %118 : vector<1x1x32xf32> to vector<1x32xf32>
      %120 = vector.broadcast %119 : vector<1x32xf32> to vector<32x32xf32>
      %121 = arith.addf %117, %120 : vector<32x32xf32>
      %122 = vector.extract_strided_slice %47 {offsets = [0, 6], sizes = [32, 1], strides = [1, 1]} : vector<32x11xf32> to vector<32x1xf32>
      %123 = vector.broadcast %122 : vector<32x1xf32> to vector<32x32xf32>
      %124 = arith.mulf %123, %121 : vector<32x32xf32>
      %125 = arith.addf %114, %124 : vector<32x32xf32>
      %c7 = arith.constant 7 : index
      %c0_71 = arith.constant 0 : index
      %c0_72 = arith.constant 0 : index
      %126 = vector.load %arg9[%c7, %c0_71, %c0_72] : memref<11x32x32xf32, #tpu.memory_space<vmem>>, vector<1x32x32xf32>
      %127 = vector.shape_cast %126 : vector<1x32x32xf32> to vector<32x32xf32>
      %cst_73 = arith.constant dense<0.000000e+00> : vector<32x32xf32>
      %128 = tpu.matmul %45, %127, %cst_73 {dimension_numbers = #tpu.dot_dimension_numbers<[1], [0], [0], [1], [0, 0, 1, 1], [], []>} : vector<32x32xf32>, vector<32x32xf32>, vector<32x32xf32> -> vector<32x32xf32>
      %c7_74 = arith.constant 7 : index
      %c0_75 = arith.constant 0 : index
      %c0_76 = arith.constant 0 : index
      %129 = vector.load %arg10[%c7_74, %c0_75, %c0_76] : memref<11x1x32xf32, #tpu.memory_space<vmem>>, vector<1x1x32xf32>
      %130 = vector.shape_cast %129 : vector<1x1x32xf32> to vector<1x32xf32>
      %131 = vector.broadcast %130 : vector<1x32xf32> to vector<32x32xf32>
      %132 = arith.addf %128, %131 : vector<32x32xf32>
      %133 = vector.extract_strided_slice %47 {offsets = [0, 7], sizes = [32, 1], strides = [1, 1]} : vector<32x11xf32> to vector<32x1xf32>
      %134 = vector.broadcast %133 : vector<32x1xf32> to vector<32x32xf32>
      %135 = arith.mulf %134, %132 : vector<32x32xf32>
      %136 = arith.addf %125, %135 : vector<32x32xf32>
      %c8 = arith.constant 8 : index
      %c0_77 = arith.constant 0 : index
      %c0_78 = arith.constant 0 : index
      %137 = vector.load %arg9[%c8, %c0_77, %c0_78] : memref<11x32x32xf32, #tpu.memory_space<vmem>>, vector<1x32x32xf32>
      %138 = vector.shape_cast %137 : vector<1x32x32xf32> to vector<32x32xf32>
      %cst_79 = arith.constant dense<0.000000e+00> : vector<32x32xf32>
      %139 = tpu.matmul %45, %138, %cst_79 {dimension_numbers = #tpu.dot_dimension_numbers<[1], [0], [0], [1], [0, 0, 1, 1], [], []>} : vector<32x32xf32>, vector<32x32xf32>, vector<32x32xf32> -> vector<32x32xf32>
      %c8_80 = arith.constant 8 : index
      %c0_81 = arith.constant 0 : index
      %c0_82 = arith.constant 0 : index
      %140 = vector.load %arg10[%c8_80, %c0_81, %c0_82] : memref<11x1x32xf32, #tpu.memory_space<vmem>>, vector<1x1x32xf32>
      %141 = vector.shape_cast %140 : vector<1x1x32xf32> to vector<1x32xf32>
      %142 = vector.broadcast %141 : vector<1x32xf32> to vector<32x32xf32>
      %143 = arith.addf %139, %142 : vector<32x32xf32>
      %144 = vector.extract_strided_slice %47 {offsets = [0, 8], sizes = [32, 1], strides = [1, 1]} : vector<32x11xf32> to vector<32x1xf32>
      %145 = vector.broadcast %144 : vector<32x1xf32> to vector<32x32xf32>
      %146 = arith.mulf %145, %143 : vector<32x32xf32>
      %147 = arith.addf %136, %146 : vector<32x32xf32>
      %c9 = arith.constant 9 : index
      %c0_83 = arith.constant 0 : index
      %c0_84 = arith.constant 0 : index
      %148 = vector.load %arg9[%c9, %c0_83, %c0_84] : memref<11x32x32xf32, #tpu.memory_space<vmem>>, vector<1x32x32xf32>
      %149 = vector.shape_cast %148 : vector<1x32x32xf32> to vector<32x32xf32>
      %cst_85 = arith.constant dense<0.000000e+00> : vector<32x32xf32>
      %150 = tpu.matmul %45, %149, %cst_85 {dimension_numbers = #tpu.dot_dimension_numbers<[1], [0], [0], [1], [0, 0, 1, 1], [], []>} : vector<32x32xf32>, vector<32x32xf32>, vector<32x32xf32> -> vector<32x32xf32>
      %c9_86 = arith.constant 9 : index
      %c0_87 = arith.constant 0 : index
      %c0_88 = arith.constant 0 : index
      %151 = vector.load %arg10[%c9_86, %c0_87, %c0_88] : memref<11x1x32xf32, #tpu.memory_space<vmem>>, vector<1x1x32xf32>
      %152 = vector.shape_cast %151 : vector<1x1x32xf32> to vector<1x32xf32>
      %153 = vector.broadcast %152 : vector<1x32xf32> to vector<32x32xf32>
      %154 = arith.addf %150, %153 : vector<32x32xf32>
      %155 = vector.extract_strided_slice %47 {offsets = [0, 9], sizes = [32, 1], strides = [1, 1]} : vector<32x11xf32> to vector<32x1xf32>
      %156 = vector.broadcast %155 : vector<32x1xf32> to vector<32x32xf32>
      %157 = arith.mulf %156, %154 : vector<32x32xf32>
      %158 = arith.addf %147, %157 : vector<32x32xf32>
      %c10 = arith.constant 10 : index
      %c0_89 = arith.constant 0 : index
      %c0_90 = arith.constant 0 : index
      %159 = vector.load %arg9[%c10, %c0_89, %c0_90] : memref<11x32x32xf32, #tpu.memory_space<vmem>>, vector<1x32x32xf32>
      %160 = vector.shape_cast %159 : vector<1x32x32xf32> to vector<32x32xf32>
      %cst_91 = arith.constant dense<0.000000e+00> : vector<32x32xf32>
      %161 = tpu.matmul %45, %160, %cst_91 {dimension_numbers = #tpu.dot_dimension_numbers<[1], [0], [0], [1], [0, 0, 1, 1], [], []>} : vector<32x32xf32>, vector<32x32xf32>, vector<32x32xf32> -> vector<32x32xf32>
      %c10_92 = arith.constant 10 : index
      %c0_93 = arith.constant 0 : index
      %c0_94 = arith.constant 0 : index
      %162 = vector.load %arg10[%c10_92, %c0_93, %c0_94] : memref<11x1x32xf32, #tpu.memory_space<vmem>>, vector<1x1x32xf32>
      %163 = vector.shape_cast %162 : vector<1x1x32xf32> to vector<1x32xf32>
      %164 = vector.broadcast %163 : vector<1x32xf32> to vector<32x32xf32>
      %165 = arith.addf %161, %164 : vector<32x32xf32>
      %166 = vector.extract_strided_slice %47 {offsets = [0, 10], sizes = [32, 1], strides = [1, 1]} : vector<32x11xf32> to vector<32x1xf32>
      %167 = vector.broadcast %166 : vector<32x1xf32> to vector<32x32xf32>
      %168 = arith.mulf %167, %165 : vector<32x32xf32>
      %169 = arith.addf %158, %168 : vector<32x32xf32>
      %c0_95 = arith.constant 0 : index
      %c0_96 = arith.constant 0 : index
      %170 = vector.load %arg24[%c0_95, %c0_96] : memref<16x32xf32, #tpu.memory_space<vmem>>, vector<16x32xf32>
      %cst_97 = arith.constant dense<0.000000e+00> : vector<16x32xf32>
      %171 = tpu.matmul %21, %169, %cst_97 {dimension_numbers = #tpu.dot_dimension_numbers<[1], [0], [0], [1], [0, 0, 1, 1], [], []>} : vector<16x32xf32>, vector<32x32xf32>, vector<16x32xf32> -> vector<16x32xf32>
      %172 = arith.addf %170, %171 : vector<16x32xf32>
      %c0_98 = arith.constant 0 : index
      %c0_99 = arith.constant 0 : index
      %173 = vector.load %arg24[%c0_98, %c0_99] : memref<16x32xf32, #tpu.memory_space<vmem>>, vector<16x32xf32>
      tpu.vector_store %arg24[%c0_98, %c0_99], %172 {strides = array<i32>} : memref<16x32xf32, #tpu.memory_space<vmem>>, vector<16x32xf32>,
    } else {
    }
    %c0_i32_9 = arith.constant 0 : i32
    %25 = arith.cmpi eq, %arg0, %c0_i32_9 : i32
    %c0_i32_10 = arith.constant 0 : i32
    %26 = arith.cmpi eq, %arg1, %c0_i32_10 : i32
    %27 = arith.andi %25, %26 : i1
    %28 = arith.extui %27 : i1 to i32
    %c0_i32_11 = arith.constant 0 : i32
    %29 = arith.cmpi ne, %28, %c0_i32_11 : i32
    scf.if %29 {
      %c0_17 = arith.constant 0 : index
      %c0_18 = arith.constant 0 : index
      %38 = vector.load %arg5[%c0_17, %c0_18] : memref<16x11xf32, #tpu.memory_space<vmem>>, vector<16x11xf32>
      %c0_19 = arith.constant 0 : index
      %c0_20 = arith.constant 0 : index
      %39 = vector.load %arg11[%c0_19, %c0_20] : memref<11x32xf32, #tpu.memory_space<vmem>>, vector<11x32xf32>
      %cst = arith.constant dense<0.000000e+00> : vector<16x32xf32>
      %40 = tpu.matmul %38, %39, %cst {dimension_numbers = #tpu.dot_dimension_numbers<[1], [0], [0], [1], [0, 0, 1, 1], [], []>} : vector<16x11xf32>, vector<11x32xf32>, vector<16x32xf32> -> vector<16x32xf32>
      %c0_21 = arith.constant 0 : index
      %c0_22 = arith.constant 0 : index
      %41 = vector.load %arg12[%c0_21, %c0_22] : memref<1x32xf32, #tpu.memory_space<vmem>>, vector<1x32xf32>
      %42 = vector.broadcast %41 : vector<1x32xf32> to vector<16x32xf32>
      %43 = arith.addf %40, %42 : vector<16x32xf32>
      %c0_23 = arith.constant 0 : index
      %c0_24 = arith.constant 0 : index
      %44 = vector.load %arg24[%c0_23, %c0_24] : memref<16x32xf32, #tpu.memory_space<vmem>>, vector<16x32xf32>
      %45 = arith.addf %44, %43 : vector<16x32xf32>
      %cst_25 = arith.constant 0.000000e+00 : f32
      %46 = vector.broadcast %cst_25 : f32 to vector<16x32xf32>
      %47 = arith.maximumf %45, %46 : vector<16x32xf32>
      %c0_26 = arith.constant 0 : index
      %c0_27 = arith.constant 0 : index
      %48 = vector.load %arg24[%c0_26, %c0_27] : memref<16x32xf32, #tpu.memory_space<vmem>>, vector<16x32xf32>
      tpu.vector_store %arg24[%c0_26, %c0_27], %47 {strides = array<i32>} : memref<16x32xf32, #tpu.memory_space<vmem>>, vector<16x32xf32>,
    } else {
    }
    %c1_i32_12 = arith.constant 1 : i32
    %30 = arith.cmpi eq, %arg0, %c1_i32_12 : i32
    %31 = arith.extui %30 : i1 to i32
    %c0_i32_13 = arith.constant 0 : i32
    %32 = arith.cmpi ne, %31, %c0_i32_13 : i32
    scf.if %32 {
      %c0_17 = arith.constant 0 : index
      %c0_18 = arith.constant 0 : index
      %38 = vector.load %arg6[%c0_17, %c0_18] : memref<32x4xf32, #tpu.memory_space<vmem>>, vector<32x4xf32>
      %c0_19 = arith.constant 0 : index
      %c0_20 = arith.constant 0 : index
      %39 = vector.load %arg13[%c0_19, %c0_20] : memref<4x32xf32, #tpu.memory_space<vmem>>, vector<4x32xf32>
      %cst = arith.constant dense<0.000000e+00> : vector<32x32xf32>
      %40 = tpu.matmul %38, %39, %cst {dimension_numbers = #tpu.dot_dimension_numbers<[1], [0], [0], [1], [0, 0, 1, 1], [], []>} : vector<32x4xf32>, vector<4x32xf32>, vector<32x32xf32> -> vector<32x32xf32>
      %c0_21 = arith.constant 0 : index
      %c0_22 = arith.constant 0 : index
      %41 = vector.load %arg14[%c0_21, %c0_22] : memref<1x32xf32, #tpu.memory_space<vmem>>, vector<1x32xf32>
      %42 = vector.broadcast %41 : vector<1x32xf32> to vector<32x32xf32>
      %43 = arith.addf %40, %42 : vector<32x32xf32>
      %cst_23 = arith.constant 0.000000e+00 : f32
      %44 = vector.broadcast %cst_23 : f32 to vector<32x32xf32>
      %45 = arith.maximumf %43, %44 : vector<32x32xf32>
      %c0_24 = arith.constant 0 : index
      %c0_25 = arith.constant 0 : index
      %46 = vector.load %arg24[%c0_24, %c0_25] : memref<16x32xf32, #tpu.memory_space<vmem>>, vector<16x32xf32>
      %cst_26 = arith.constant dense<0.000000e+00> : vector<32x32xf32>
      %47 = tpu.matmul %16, %46, %cst_26 {dimension_numbers = #tpu.dot_dimension_numbers<[1], [0], [0], [1], [0, 0, 1, 1], [], []>} : vector<32x16xf32>, vector<16x32xf32>, vector<32x32xf32> -> vector<32x32xf32>
      %cst_27 = arith.constant 0.000000e+00 : f32
      %48 = vector.broadcast %cst_27 : f32 to vector<32x16xf32>
      %c0_28 = arith.constant 0 : index
      %c0_29 = arith.constant 0 : index
      %c0_30 = arith.constant 0 : index
      %49 = vector.load %arg15[%c0_28, %c0_29, %c0_30] : memref<32x32x16xf32, #tpu.memory_space<vmem>>, vector<1x32x16xf32>
      %50 = vector.shape_cast %49 : vector<1x32x16xf32> to vector<32x16xf32>
      %cst_31 = arith.constant dense<0.000000e+00> : vector<32x16xf32>
      %51 = tpu.matmul %45, %50, %cst_31 {dimension_numbers = #tpu.dot_dimension_numbers<[1], [0], [0], [1], [0, 0, 1, 1], [], []>} : vector<32x32xf32>, vector<32x16xf32>, vector<32x16xf32> -> vector<32x16xf32>
      %c0_32 = arith.constant 0 : index
      %c0_33 = arith.constant 0 : index
      %c0_34 = arith.constant 0 : index
      %52 = vector.load %arg16[%c0_32, %c0_33, %c0_34] : memref<32x1x16xf32, #tpu.memory_space<vmem>>, vector<1x1x16xf32>
      %53 = vector.shape_cast %52 : vector<1x1x16xf32> to vector<1x16xf32>
      %54 = vector.broadcast %53 : vector<1x16xf32> to vector<32x16xf32>
      %55 = arith.addf %51, %54 : vector<32x16xf32>
      %56 = vector.extract_strided_slice %47 {offsets = [0, 0], sizes = [32, 1], strides = [1, 1]} : vector<32x32xf32> to vector<32x1xf32>
      %57 = vector.broadcast %56 : vector<32x1xf32> to vector<32x16xf32>
      %58 = arith.mulf %57, %55 : vector<32x16xf32>
      %59 = arith.addf %48, %58 : vector<32x16xf32>
      %c1 = arith.constant 1 : index
      %c0_35 = arith.constant 0 : index
      %c0_36 = arith.constant 0 : index
      %60 = vector.load %arg15[%c1, %c0_35, %c0_36] : memref<32x32x16xf32, #tpu.memory_space<vmem>>, vector<1x32x16xf32>
      %61 = vector.shape_cast %60 : vector<1x32x16xf32> to vector<32x16xf32>
      %cst_37 = arith.constant dense<0.000000e+00> : vector<32x16xf32>
      %62 = tpu.matmul %45, %61, %cst_37 {dimension_numbers = #tpu.dot_dimension_numbers<[1], [0], [0], [1], [0, 0, 1, 1], [], []>} : vector<32x32xf32>, vector<32x16xf32>, vector<32x16xf32> -> vector<32x16xf32>
      %c1_38 = arith.constant 1 : index
      %c0_39 = arith.constant 0 : index
      %c0_40 = arith.constant 0 : index
      %63 = vector.load %arg16[%c1_38, %c0_39, %c0_40] : memref<32x1x16xf32, #tpu.memory_space<vmem>>, vector<1x1x16xf32>
      %64 = vector.shape_cast %63 : vector<1x1x16xf32> to vector<1x16xf32>
      %65 = vector.broadcast %64 : vector<1x16xf32> to vector<32x16xf32>
      %66 = arith.addf %62, %65 : vector<32x16xf32>
      %67 = vector.extract_strided_slice %47 {offsets = [0, 1], sizes = [32, 1], strides = [1, 1]} : vector<32x32xf32> to vector<32x1xf32>
      %68 = vector.broadcast %67 : vector<32x1xf32> to vector<32x16xf32>
      %69 = arith.mulf %68, %66 : vector<32x16xf32>
      %70 = arith.addf %59, %69 : vector<32x16xf32>
      %c2 = arith.constant 2 : index
      %c0_41 = arith.constant 0 : index
      %c0_42 = arith.constant 0 : index
      %71 = vector.load %arg15[%c2, %c0_41, %c0_42] : memref<32x32x16xf32, #tpu.memory_space<vmem>>, vector<1x32x16xf32>
      %72 = vector.shape_cast %71 : vector<1x32x16xf32> to vector<32x16xf32>
      %cst_43 = arith.constant dense<0.000000e+00> : vector<32x16xf32>
      %73 = tpu.matmul %45, %72, %cst_43 {dimension_numbers = #tpu.dot_dimension_numbers<[1], [0], [0], [1], [0, 0, 1, 1], [], []>} : vector<32x32xf32>, vector<32x16xf32>, vector<32x16xf32> -> vector<32x16xf32>
      %c2_44 = arith.constant 2 : index
      %c0_45 = arith.constant 0 : index
      %c0_46 = arith.constant 0 : index
      %74 = vector.load %arg16[%c2_44, %c0_45, %c0_46] : memref<32x1x16xf32, #tpu.memory_space<vmem>>, vector<1x1x16xf32>
      %75 = vector.shape_cast %74 : vector<1x1x16xf32> to vector<1x16xf32>
      %76 = vector.broadcast %75 : vector<1x16xf32> to vector<32x16xf32>
      %77 = arith.addf %73, %76 : vector<32x16xf32>
      %78 = vector.extract_strided_slice %47 {offsets = [0, 2], sizes = [32, 1], strides = [1, 1]} : vector<32x32xf32> to vector<32x1xf32>
      %79 = vector.broadcast %78 : vector<32x1xf32> to vector<32x16xf32>
      %80 = arith.mulf %79, %77 : vector<32x16xf32>
      %81 = arith.addf %70, %80 : vector<32x16xf32>
      %c3 = arith.constant 3 : index
      %c0_47 = arith.constant 0 : index
      %c0_48 = arith.constant 0 : index
      %82 = vector.load %arg15[%c3, %c0_47, %c0_48] : memref<32x32x16xf32, #tpu.memory_space<vmem>>, vector<1x32x16xf32>
      %83 = vector.shape_cast %82 : vector<1x32x16xf32> to vector<32x16xf32>
      %cst_49 = arith.constant dense<0.000000e+00> : vector<32x16xf32>
      %84 = tpu.matmul %45, %83, %cst_49 {dimension_numbers = #tpu.dot_dimension_numbers<[1], [0], [0], [1], [0, 0, 1, 1], [], []>} : vector<32x32xf32>, vector<32x16xf32>, vector<32x16xf32> -> vector<32x16xf32>
      %c3_50 = arith.constant 3 : index
      %c0_51 = arith.constant 0 : index
      %c0_52 = arith.constant 0 : index
      %85 = vector.load %arg16[%c3_50, %c0_51, %c0_52] : memref<32x1x16xf32, #tpu.memory_space<vmem>>, vector<1x1x16xf32>
      %86 = vector.shape_cast %85 : vector<1x1x16xf32> to vector<1x16xf32>
      %87 = vector.broadcast %86 : vector<1x16xf32> to vector<32x16xf32>
      %88 = arith.addf %84, %87 : vector<32x16xf32>
      %89 = vector.extract_strided_slice %47 {offsets = [0, 3], sizes = [32, 1], strides = [1, 1]} : vector<32x32xf32> to vector<32x1xf32>
      %90 = vector.broadcast %89 : vector<32x1xf32> to vector<32x16xf32>
      %91 = arith.mulf %90, %88 : vector<32x16xf32>
      %92 = arith.addf %81, %91 : vector<32x16xf32>
      %c4 = arith.constant 4 : index
      %c0_53 = arith.constant 0 : index
      %c0_54 = arith.constant 0 : index
      %93 = vector.load %arg15[%c4, %c0_53, %c0_54] : memref<32x32x16xf32, #tpu.memory_space<vmem>>, vector<1x32x16xf32>
      %94 = vector.shape_cast %93 : vector<1x32x16xf32> to vector<32x16xf32>
      %cst_55 = arith.constant dense<0.000000e+00> : vector<32x16xf32>
      %95 = tpu.matmul %45, %94, %cst_55 {dimension_numbers = #tpu.dot_dimension_numbers<[1], [0], [0], [1], [0, 0, 1, 1], [], []>} : vector<32x32xf32>, vector<32x16xf32>, vector<32x16xf32> -> vector<32x16xf32>
      %c4_56 = arith.constant 4 : index
      %c0_57 = arith.constant 0 : index
      %c0_58 = arith.constant 0 : index
      %96 = vector.load %arg16[%c4_56, %c0_57, %c0_58] : memref<32x1x16xf32, #tpu.memory_space<vmem>>, vector<1x1x16xf32>
      %97 = vector.shape_cast %96 : vector<1x1x16xf32> to vector<1x16xf32>
      %98 = vector.broadcast %97 : vector<1x16xf32> to vector<32x16xf32>
      %99 = arith.addf %95, %98 : vector<32x16xf32>
      %100 = vector.extract_strided_slice %47 {offsets = [0, 4], sizes = [32, 1], strides = [1, 1]} : vector<32x32xf32> to vector<32x1xf32>
      %101 = vector.broadcast %100 : vector<32x1xf32> to vector<32x16xf32>
      %102 = arith.mulf %101, %99 : vector<32x16xf32>
      %103 = arith.addf %92, %102 : vector<32x16xf32>
      %c5 = arith.constant 5 : index
      %c0_59 = arith.constant 0 : index
      %c0_60 = arith.constant 0 : index
      %104 = vector.load %arg15[%c5, %c0_59, %c0_60] : memref<32x32x16xf32, #tpu.memory_space<vmem>>, vector<1x32x16xf32>
      %105 = vector.shape_cast %104 : vector<1x32x16xf32> to vector<32x16xf32>
      %cst_61 = arith.constant dense<0.000000e+00> : vector<32x16xf32>
      %106 = tpu.matmul %45, %105, %cst_61 {dimension_numbers = #tpu.dot_dimension_numbers<[1], [0], [0], [1], [0, 0, 1, 1], [], []>} : vector<32x32xf32>, vector<32x16xf32>, vector<32x16xf32> -> vector<32x16xf32>
      %c5_62 = arith.constant 5 : index
      %c0_63 = arith.constant 0 : index
      %c0_64 = arith.constant 0 : index
      %107 = vector.load %arg16[%c5_62, %c0_63, %c0_64] : memref<32x1x16xf32, #tpu.memory_space<vmem>>, vector<1x1x16xf32>
      %108 = vector.shape_cast %107 : vector<1x1x16xf32> to vector<1x16xf32>
      %109 = vector.broadcast %108 : vector<1x16xf32> to vector<32x16xf32>
      %110 = arith.addf %106, %109 : vector<32x16xf32>
      %111 = vector.extract_strided_slice %47 {offsets = [0, 5], sizes = [32, 1], strides = [1, 1]} : vector<32x32xf32> to vector<32x1xf32>
      %112 = vector.broadcast %111 : vector<32x1xf32> to vector<32x16xf32>
      %113 = arith.mulf %112, %110 : vector<32x16xf32>
      %114 = arith.addf %103, %113 : vector<32x16xf32>
      %c6 = arith.constant 6 : index
      %c0_65 = arith.constant 0 : index
      %c0_66 = arith.constant 0 : index
      %115 = vector.load %arg15[%c6, %c0_65, %c0_66] : memref<32x32x16xf32, #tpu.memory_space<vmem>>, vector<1x32x16xf32>
      %116 = vector.shape_cast %115 : vector<1x32x16xf32> to vector<32x16xf32>
      %cst_67 = arith.constant dense<0.000000e+00> : vector<32x16xf32>
      %117 = tpu.matmul %45, %116, %cst_67 {dimension_numbers = #tpu.dot_dimension_numbers<[1], [0], [0], [1], [0, 0, 1, 1], [], []>} : vector<32x32xf32>, vector<32x16xf32>, vector<32x16xf32> -> vector<32x16xf32>
      %c6_68 = arith.constant 6 : index
      %c0_69 = arith.constant 0 : index
      %c0_70 = arith.constant 0 : index
      %118 = vector.load %arg16[%c6_68, %c0_69, %c0_70] : memref<32x1x16xf32, #tpu.memory_space<vmem>>, vector<1x1x16xf32>
      %119 = vector.shape_cast %118 : vector<1x1x16xf32> to vector<1x16xf32>
      %120 = vector.broadcast %119 : vector<1x16xf32> to vector<32x16xf32>
      %121 = arith.addf %117, %120 : vector<32x16xf32>
      %122 = vector.extract_strided_slice %47 {offsets = [0, 6], sizes = [32, 1], strides = [1, 1]} : vector<32x32xf32> to vector<32x1xf32>
      %123 = vector.broadcast %122 : vector<32x1xf32> to vector<32x16xf32>
      %124 = arith.mulf %123, %121 : vector<32x16xf32>
      %125 = arith.addf %114, %124 : vector<32x16xf32>
      %c7 = arith.constant 7 : index
      %c0_71 = arith.constant 0 : index
      %c0_72 = arith.constant 0 : index
      %126 = vector.load %arg15[%c7, %c0_71, %c0_72] : memref<32x32x16xf32, #tpu.memory_space<vmem>>, vector<1x32x16xf32>
      %127 = vector.shape_cast %126 : vector<1x32x16xf32> to vector<32x16xf32>
      %cst_73 = arith.constant dense<0.000000e+00> : vector<32x16xf32>
      %128 = tpu.matmul %45, %127, %cst_73 {dimension_numbers = #tpu.dot_dimension_numbers<[1], [0], [0], [1], [0, 0, 1, 1], [], []>} : vector<32x32xf32>, vector<32x16xf32>, vector<32x16xf32> -> vector<32x16xf32>
      %c7_74 = arith.constant 7 : index
      %c0_75 = arith.constant 0 : index
      %c0_76 = arith.constant 0 : index
      %129 = vector.load %arg16[%c7_74, %c0_75, %c0_76] : memref<32x1x16xf32, #tpu.memory_space<vmem>>, vector<1x1x16xf32>
      %130 = vector.shape_cast %129 : vector<1x1x16xf32> to vector<1x16xf32>
      %131 = vector.broadcast %130 : vector<1x16xf32> to vector<32x16xf32>
      %132 = arith.addf %128, %131 : vector<32x16xf32>
      %133 = vector.extract_strided_slice %47 {offsets = [0, 7], sizes = [32, 1], strides = [1, 1]} : vector<32x32xf32> to vector<32x1xf32>
      %134 = vector.broadcast %133 : vector<32x1xf32> to vector<32x16xf32>
      %135 = arith.mulf %134, %132 : vector<32x16xf32>
      %136 = arith.addf %125, %135 : vector<32x16xf32>
      %c8 = arith.constant 8 : index
      %c0_77 = arith.constant 0 : index
      %c0_78 = arith.constant 0 : index
      %137 = vector.load %arg15[%c8, %c0_77, %c0_78] : memref<32x32x16xf32, #tpu.memory_space<vmem>>, vector<1x32x16xf32>
      %138 = vector.shape_cast %137 : vector<1x32x16xf32> to vector<32x16xf32>
      %cst_79 = arith.constant dense<0.000000e+00> : vector<32x16xf32>
      %139 = tpu.matmul %45, %138, %cst_79 {dimension_numbers = #tpu.dot_dimension_numbers<[1], [0], [0], [1], [0, 0, 1, 1], [], []>} : vector<32x32xf32>, vector<32x16xf32>, vector<32x16xf32> -> vector<32x16xf32>
      %c8_80 = arith.constant 8 : index
      %c0_81 = arith.constant 0 : index
      %c0_82 = arith.constant 0 : index
      %140 = vector.load %arg16[%c8_80, %c0_81, %c0_82] : memref<32x1x16xf32, #tpu.memory_space<vmem>>, vector<1x1x16xf32>
      %141 = vector.shape_cast %140 : vector<1x1x16xf32> to vector<1x16xf32>
      %142 = vector.broadcast %141 : vector<1x16xf32> to vector<32x16xf32>
      %143 = arith.addf %139, %142 : vector<32x16xf32>
      %144 = vector.extract_strided_slice %47 {offsets = [0, 8], sizes = [32, 1], strides = [1, 1]} : vector<32x32xf32> to vector<32x1xf32>
      %145 = vector.broadcast %144 : vector<32x1xf32> to vector<32x16xf32>
      %146 = arith.mulf %145, %143 : vector<32x16xf32>
      %147 = arith.addf %136, %146 : vector<32x16xf32>
      %c9 = arith.constant 9 : index
      %c0_83 = arith.constant 0 : index
      %c0_84 = arith.constant 0 : index
      %148 = vector.load %arg15[%c9, %c0_83, %c0_84] : memref<32x32x16xf32, #tpu.memory_space<vmem>>, vector<1x32x16xf32>
      %149 = vector.shape_cast %148 : vector<1x32x16xf32> to vector<32x16xf32>
      %cst_85 = arith.constant dense<0.000000e+00> : vector<32x16xf32>
      %150 = tpu.matmul %45, %149, %cst_85 {dimension_numbers = #tpu.dot_dimension_numbers<[1], [0], [0], [1], [0, 0, 1, 1], [], []>} : vector<32x32xf32>, vector<32x16xf32>, vector<32x16xf32> -> vector<32x16xf32>
      %c9_86 = arith.constant 9 : index
      %c0_87 = arith.constant 0 : index
      %c0_88 = arith.constant 0 : index
      %151 = vector.load %arg16[%c9_86, %c0_87, %c0_88] : memref<32x1x16xf32, #tpu.memory_space<vmem>>, vector<1x1x16xf32>
      %152 = vector.shape_cast %151 : vector<1x1x16xf32> to vector<1x16xf32>
      %153 = vector.broadcast %152 : vector<1x16xf32> to vector<32x16xf32>
      %154 = arith.addf %150, %153 : vector<32x16xf32>
      %155 = vector.extract_strided_slice %47 {offsets = [0, 9], sizes = [32, 1], strides = [1, 1]} : vector<32x32xf32> to vector<32x1xf32>
      %156 = vector.broadcast %155 : vector<32x1xf32> to vector<32x16xf32>
      %157 = arith.mulf %156, %154 : vector<32x16xf32>
      %158 = arith.addf %147, %157 : vector<32x16xf32>
      %c10 = arith.constant 10 : index
      %c0_89 = arith.constant 0 : index
      %c0_90 = arith.constant 0 : index
      %159 = vector.load %arg15[%c10, %c0_89, %c0_90] : memref<32x32x16xf32, #tpu.memory_space<vmem>>, vector<1x32x16xf32>
      %160 = vector.shape_cast %159 : vector<1x32x16xf32> to vector<32x16xf32>
      %cst_91 = arith.constant dense<0.000000e+00> : vector<32x16xf32>
      %161 = tpu.matmul %45, %160, %cst_91 {dimension_numbers = #tpu.dot_dimension_numbers<[1], [0], [0], [1], [0, 0, 1, 1], [], []>} : vector<32x32xf32>, vector<32x16xf32>, vector<32x16xf32> -> vector<32x16xf32>
      %c10_92 = arith.constant 10 : index
      %c0_93 = arith.constant 0 : index
      %c0_94 = arith.constant 0 : index
      %162 = vector.load %arg16[%c10_92, %c0_93, %c0_94] : memref<32x1x16xf32, #tpu.memory_space<vmem>>, vector<1x1x16xf32>
      %163 = vector.shape_cast %162 : vector<1x1x16xf32> to vector<1x16xf32>
      %164 = vector.broadcast %163 : vector<1x16xf32> to vector<32x16xf32>
      %165 = arith.addf %161, %164 : vector<32x16xf32>
      %166 = vector.extract_strided_slice %47 {offsets = [0, 10], sizes = [32, 1], strides = [1, 1]} : vector<32x32xf32> to vector<32x1xf32>
      %167 = vector.broadcast %166 : vector<32x1xf32> to vector<32x16xf32>
      %168 = arith.mulf %167, %165 : vector<32x16xf32>
      %169 = arith.addf %158, %168 : vector<32x16xf32>
      %c11 = arith.constant 11 : index
      %c0_95 = arith.constant 0 : index
      %c0_96 = arith.constant 0 : index
      %170 = vector.load %arg15[%c11, %c0_95, %c0_96] : memref<32x32x16xf32, #tpu.memory_space<vmem>>, vector<1x32x16xf32>
      %171 = vector.shape_cast %170 : vector<1x32x16xf32> to vector<32x16xf32>
      %cst_97 = arith.constant dense<0.000000e+00> : vector<32x16xf32>
      %172 = tpu.matmul %45, %171, %cst_97 {dimension_numbers = #tpu.dot_dimension_numbers<[1], [0], [0], [1], [0, 0, 1, 1], [], []>} : vector<32x32xf32>, vector<32x16xf32>, vector<32x16xf32> -> vector<32x16xf32>
      %c11_98 = arith.constant 11 : index
      %c0_99 = arith.constant 0 : index
      %c0_100 = arith.constant 0 : index
      %173 = vector.load %arg16[%c11_98, %c0_99, %c0_100] : memref<32x1x16xf32, #tpu.memory_space<vmem>>, vector<1x1x16xf32>
      %174 = vector.shape_cast %173 : vector<1x1x16xf32> to vector<1x16xf32>
      %175 = vector.broadcast %174 : vector<1x16xf32> to vector<32x16xf32>
      %176 = arith.addf %172, %175 : vector<32x16xf32>
      %177 = vector.extract_strided_slice %47 {offsets = [0, 11], sizes = [32, 1], strides = [1, 1]} : vector<32x32xf32> to vector<32x1xf32>
      %178 = vector.broadcast %177 : vector<32x1xf32> to vector<32x16xf32>
      %179 = arith.mulf %178, %176 : vector<32x16xf32>
      %180 = arith.addf %169, %179 : vector<32x16xf32>
      %c12 = arith.constant 12 : index
      %c0_101 = arith.constant 0 : index
      %c0_102 = arith.constant 0 : index
      %181 = vector.load %arg15[%c12, %c0_101, %c0_102] : memref<32x32x16xf32, #tpu.memory_space<vmem>>, vector<1x32x16xf32>
      %182 = vector.shape_cast %181 : vector<1x32x16xf32> to vector<32x16xf32>
      %cst_103 = arith.constant dense<0.000000e+00> : vector<32x16xf32>
      %183 = tpu.matmul %45, %182, %cst_103 {dimension_numbers = #tpu.dot_dimension_numbers<[1], [0], [0], [1], [0, 0, 1, 1], [], []>} : vector<32x32xf32>, vector<32x16xf32>, vector<32x16xf32> -> vector<32x16xf32>
      %c12_104 = arith.constant 12 : index
      %c0_105 = arith.constant 0 : index
      %c0_106 = arith.constant 0 : index
      %184 = vector.load %arg16[%c12_104, %c0_105, %c0_106] : memref<32x1x16xf32, #tpu.memory_space<vmem>>, vector<1x1x16xf32>
      %185 = vector.shape_cast %184 : vector<1x1x16xf32> to vector<1x16xf32>
      %186 = vector.broadcast %185 : vector<1x16xf32> to vector<32x16xf32>
      %187 = arith.addf %183, %186 : vector<32x16xf32>
      %188 = vector.extract_strided_slice %47 {offsets = [0, 12], sizes = [32, 1], strides = [1, 1]} : vector<32x32xf32> to vector<32x1xf32>
      %189 = vector.broadcast %188 : vector<32x1xf32> to vector<32x16xf32>
      %190 = arith.mulf %189, %187 : vector<32x16xf32>
      %191 = arith.addf %180, %190 : vector<32x16xf32>
      %c13 = arith.constant 13 : index
      %c0_107 = arith.constant 0 : index
      %c0_108 = arith.constant 0 : index
      %192 = vector.load %arg15[%c13, %c0_107, %c0_108] : memref<32x32x16xf32, #tpu.memory_space<vmem>>, vector<1x32x16xf32>
      %193 = vector.shape_cast %192 : vector<1x32x16xf32> to vector<32x16xf32>
      %cst_109 = arith.constant dense<0.000000e+00> : vector<32x16xf32>
      %194 = tpu.matmul %45, %193, %cst_109 {dimension_numbers = #tpu.dot_dimension_numbers<[1], [0], [0], [1], [0, 0, 1, 1], [], []>} : vector<32x32xf32>, vector<32x16xf32>, vector<32x16xf32> -> vector<32x16xf32>
      %c13_110 = arith.constant 13 : index
      %c0_111 = arith.constant 0 : index
      %c0_112 = arith.constant 0 : index
      %195 = vector.load %arg16[%c13_110, %c0_111, %c0_112] : memref<32x1x16xf32, #tpu.memory_space<vmem>>, vector<1x1x16xf32>
      %196 = vector.shape_cast %195 : vector<1x1x16xf32> to vector<1x16xf32>
      %197 = vector.broadcast %196 : vector<1x16xf32> to vector<32x16xf32>
      %198 = arith.addf %194, %197 : vector<32x16xf32>
      %199 = vector.extract_strided_slice %47 {offsets = [0, 13], sizes = [32, 1], strides = [1, 1]} : vector<32x32xf32> to vector<32x1xf32>
      %200 = vector.broadcast %199 : vector<32x1xf32> to vector<32x16xf32>
      %201 = arith.mulf %200, %198 : vector<32x16xf32>
      %202 = arith.addf %191, %201 : vector<32x16xf32>
      %c14 = arith.constant 14 : index
      %c0_113 = arith.constant 0 : index
      %c0_114 = arith.constant 0 : index
      %203 = vector.load %arg15[%c14, %c0_113, %c0_114] : memref<32x32x16xf32, #tpu.memory_space<vmem>>, vector<1x32x16xf32>
      %204 = vector.shape_cast %203 : vector<1x32x16xf32> to vector<32x16xf32>
      %cst_115 = arith.constant dense<0.000000e+00> : vector<32x16xf32>
      %205 = tpu.matmul %45, %204, %cst_115 {dimension_numbers = #tpu.dot_dimension_numbers<[1], [0], [0], [1], [0, 0, 1, 1], [], []>} : vector<32x32xf32>, vector<32x16xf32>, vector<32x16xf32> -> vector<32x16xf32>
      %c14_116 = arith.constant 14 : index
      %c0_117 = arith.constant 0 : index
      %c0_118 = arith.constant 0 : index
      %206 = vector.load %arg16[%c14_116, %c0_117, %c0_118] : memref<32x1x16xf32, #tpu.memory_space<vmem>>, vector<1x1x16xf32>
      %207 = vector.shape_cast %206 : vector<1x1x16xf32> to vector<1x16xf32>
      %208 = vector.broadcast %207 : vector<1x16xf32> to vector<32x16xf32>
      %209 = arith.addf %205, %208 : vector<32x16xf32>
      %210 = vector.extract_strided_slice %47 {offsets = [0, 14], sizes = [32, 1], strides = [1, 1]} : vector<32x32xf32> to vector<32x1xf32>
      %211 = vector.broadcast %210 : vector<32x1xf32> to vector<32x16xf32>
      %212 = arith.mulf %211, %209 : vector<32x16xf32>
      %213 = arith.addf %202, %212 : vector<32x16xf32>
      %c15 = arith.constant 15 : index
      %c0_119 = arith.constant 0 : index
      %c0_120 = arith.constant 0 : index
      %214 = vector.load %arg15[%c15, %c0_119, %c0_120] : memref<32x32x16xf32, #tpu.memory_space<vmem>>, vector<1x32x16xf32>
      %215 = vector.shape_cast %214 : vector<1x32x16xf32> to vector<32x16xf32>
      %cst_121 = arith.constant dense<0.000000e+00> : vector<32x16xf32>
      %216 = tpu.matmul %45, %215, %cst_121 {dimension_numbers = #tpu.dot_dimension_numbers<[1], [0], [0], [1], [0, 0, 1, 1], [], []>} : vector<32x32xf32>, vector<32x16xf32>, vector<32x16xf32> -> vector<32x16xf32>
      %c15_122 = arith.constant 15 : index
      %c0_123 = arith.constant 0 : index
      %c0_124 = arith.constant 0 : index
      %217 = vector.load %arg16[%c15_122, %c0_123, %c0_124] : memref<32x1x16xf32, #tpu.memory_space<vmem>>, vector<1x1x16xf32>
      %218 = vector.shape_cast %217 : vector<1x1x16xf32> to vector<1x16xf32>
      %219 = vector.broadcast %218 : vector<1x16xf32> to vector<32x16xf32>
      %220 = arith.addf %216, %219 : vector<32x16xf32>
      %221 = vector.extract_strided_slice %47 {offsets = [0, 15], sizes = [32, 1], strides = [1, 1]} : vector<32x32xf32> to vector<32x1xf32>
      %222 = vector.broadcast %221 : vector<32x1xf32> to vector<32x16xf32>
      %223 = arith.mulf %222, %220 : vector<32x16xf32>
      %224 = arith.addf %213, %223 : vector<32x16xf32>
      %c16 = arith.constant 16 : index
      %c0_125 = arith.constant 0 : index
      %c0_126 = arith.constant 0 : index
      %225 = vector.load %arg15[%c16, %c0_125, %c0_126] : memref<32x32x16xf32, #tpu.memory_space<vmem>>, vector<1x32x16xf32>
      %226 = vector.shape_cast %225 : vector<1x32x16xf32> to vector<32x16xf32>
      %cst_127 = arith.constant dense<0.000000e+00> : vector<32x16xf32>
      %227 = tpu.matmul %45, %226, %cst_127 {dimension_numbers = #tpu.dot_dimension_numbers<[1], [0], [0], [1], [0, 0, 1, 1], [], []>} : vector<32x32xf32>, vector<32x16xf32>, vector<32x16xf32> -> vector<32x16xf32>
      %c16_128 = arith.constant 16 : index
      %c0_129 = arith.constant 0 : index
      %c0_130 = arith.constant 0 : index
      %228 = vector.load %arg16[%c16_128, %c0_129, %c0_130] : memref<32x1x16xf32, #tpu.memory_space<vmem>>, vector<1x1x16xf32>
      %229 = vector.shape_cast %228 : vector<1x1x16xf32> to vector<1x16xf32>
      %230 = vector.broadcast %229 : vector<1x16xf32> to vector<32x16xf32>
      %231 = arith.addf %227, %230 : vector<32x16xf32>
      %232 = vector.extract_strided_slice %47 {offsets = [0, 16], sizes = [32, 1], strides = [1, 1]} : vector<32x32xf32> to vector<32x1xf32>
      %233 = vector.broadcast %232 : vector<32x1xf32> to vector<32x16xf32>
      %234 = arith.mulf %233, %231 : vector<32x16xf32>
      %235 = arith.addf %224, %234 : vector<32x16xf32>
      %c17 = arith.constant 17 : index
      %c0_131 = arith.constant 0 : index
      %c0_132 = arith.constant 0 : index
      %236 = vector.load %arg15[%c17, %c0_131, %c0_132] : memref<32x32x16xf32, #tpu.memory_space<vmem>>, vector<1x32x16xf32>
      %237 = vector.shape_cast %236 : vector<1x32x16xf32> to vector<32x16xf32>
      %cst_133 = arith.constant dense<0.000000e+00> : vector<32x16xf32>
      %238 = tpu.matmul %45, %237, %cst_133 {dimension_numbers = #tpu.dot_dimension_numbers<[1], [0], [0], [1], [0, 0, 1, 1], [], []>} : vector<32x32xf32>, vector<32x16xf32>, vector<32x16xf32> -> vector<32x16xf32>
      %c17_134 = arith.constant 17 : index
      %c0_135 = arith.constant 0 : index
      %c0_136 = arith.constant 0 : index
      %239 = vector.load %arg16[%c17_134, %c0_135, %c0_136] : memref<32x1x16xf32, #tpu.memory_space<vmem>>, vector<1x1x16xf32>
      %240 = vector.shape_cast %239 : vector<1x1x16xf32> to vector<1x16xf32>
      %241 = vector.broadcast %240 : vector<1x16xf32> to vector<32x16xf32>
      %242 = arith.addf %238, %241 : vector<32x16xf32>
      %243 = vector.extract_strided_slice %47 {offsets = [0, 17], sizes = [32, 1], strides = [1, 1]} : vector<32x32xf32> to vector<32x1xf32>
      %244 = vector.broadcast %243 : vector<32x1xf32> to vector<32x16xf32>
      %245 = arith.mulf %244, %242 : vector<32x16xf32>
      %246 = arith.addf %235, %245 : vector<32x16xf32>
      %c18 = arith.constant 18 : index
      %c0_137 = arith.constant 0 : index
      %c0_138 = arith.constant 0 : index
      %247 = vector.load %arg15[%c18, %c0_137, %c0_138] : memref<32x32x16xf32, #tpu.memory_space<vmem>>, vector<1x32x16xf32>
      %248 = vector.shape_cast %247 : vector<1x32x16xf32> to vector<32x16xf32>
      %cst_139 = arith.constant dense<0.000000e+00> : vector<32x16xf32>
      %249 = tpu.matmul %45, %248, %cst_139 {dimension_numbers = #tpu.dot_dimension_numbers<[1], [0], [0], [1], [0, 0, 1, 1], [], []>} : vector<32x32xf32>, vector<32x16xf32>, vector<32x16xf32> -> vector<32x16xf32>
      %c18_140 = arith.constant 18 : index
      %c0_141 = arith.constant 0 : index
      %c0_142 = arith.constant 0 : index
      %250 = vector.load %arg16[%c18_140, %c0_141, %c0_142] : memref<32x1x16xf32, #tpu.memory_space<vmem>>, vector<1x1x16xf32>
      %251 = vector.shape_cast %250 : vector<1x1x16xf32> to vector<1x16xf32>
      %252 = vector.broadcast %251 : vector<1x16xf32> to vector<32x16xf32>
      %253 = arith.addf %249, %252 : vector<32x16xf32>
      %254 = vector.extract_strided_slice %47 {offsets = [0, 18], sizes = [32, 1], strides = [1, 1]} : vector<32x32xf32> to vector<32x1xf32>
      %255 = vector.broadcast %254 : vector<32x1xf32> to vector<32x16xf32>
      %256 = arith.mulf %255, %253 : vector<32x16xf32>
      %257 = arith.addf %246, %256 : vector<32x16xf32>
      %c19 = arith.constant 19 : index
      %c0_143 = arith.constant 0 : index
      %c0_144 = arith.constant 0 : index
      %258 = vector.load %arg15[%c19, %c0_143, %c0_144] : memref<32x32x16xf32, #tpu.memory_space<vmem>>, vector<1x32x16xf32>
      %259 = vector.shape_cast %258 : vector<1x32x16xf32> to vector<32x16xf32>
      %cst_145 = arith.constant dense<0.000000e+00> : vector<32x16xf32>
      %260 = tpu.matmul %45, %259, %cst_145 {dimension_numbers = #tpu.dot_dimension_numbers<[1], [0], [0], [1], [0, 0, 1, 1], [], []>} : vector<32x32xf32>, vector<32x16xf32>, vector<32x16xf32> -> vector<32x16xf32>
      %c19_146 = arith.constant 19 : index
      %c0_147 = arith.constant 0 : index
      %c0_148 = arith.constant 0 : index
      %261 = vector.load %arg16[%c19_146, %c0_147, %c0_148] : memref<32x1x16xf32, #tpu.memory_space<vmem>>, vector<1x1x16xf32>
      %262 = vector.shape_cast %261 : vector<1x1x16xf32> to vector<1x16xf32>
      %263 = vector.broadcast %262 : vector<1x16xf32> to vector<32x16xf32>
      %264 = arith.addf %260, %263 : vector<32x16xf32>
      %265 = vector.extract_strided_slice %47 {offsets = [0, 19], sizes = [32, 1], strides = [1, 1]} : vector<32x32xf32> to vector<32x1xf32>
      %266 = vector.broadcast %265 : vector<32x1xf32> to vector<32x16xf32>
      %267 = arith.mulf %266, %264 : vector<32x16xf32>
      %268 = arith.addf %257, %267 : vector<32x16xf32>
      %c20 = arith.constant 20 : index
      %c0_149 = arith.constant 0 : index
      %c0_150 = arith.constant 0 : index
      %269 = vector.load %arg15[%c20, %c0_149, %c0_150] : memref<32x32x16xf32, #tpu.memory_space<vmem>>, vector<1x32x16xf32>
      %270 = vector.shape_cast %269 : vector<1x32x16xf32> to vector<32x16xf32>
      %cst_151 = arith.constant dense<0.000000e+00> : vector<32x16xf32>
      %271 = tpu.matmul %45, %270, %cst_151 {dimension_numbers = #tpu.dot_dimension_numbers<[1], [0], [0], [1], [0, 0, 1, 1], [], []>} : vector<32x32xf32>, vector<32x16xf32>, vector<32x16xf32> -> vector<32x16xf32>
      %c20_152 = arith.constant 20 : index
      %c0_153 = arith.constant 0 : index
      %c0_154 = arith.constant 0 : index
      %272 = vector.load %arg16[%c20_152, %c0_153, %c0_154] : memref<32x1x16xf32, #tpu.memory_space<vmem>>, vector<1x1x16xf32>
      %273 = vector.shape_cast %272 : vector<1x1x16xf32> to vector<1x16xf32>
      %274 = vector.broadcast %273 : vector<1x16xf32> to vector<32x16xf32>
      %275 = arith.addf %271, %274 : vector<32x16xf32>
      %276 = vector.extract_strided_slice %47 {offsets = [0, 20], sizes = [32, 1], strides = [1, 1]} : vector<32x32xf32> to vector<32x1xf32>
      %277 = vector.broadcast %276 : vector<32x1xf32> to vector<32x16xf32>
      %278 = arith.mulf %277, %275 : vector<32x16xf32>
      %279 = arith.addf %268, %278 : vector<32x16xf32>
      %c21 = arith.constant 21 : index
      %c0_155 = arith.constant 0 : index
      %c0_156 = arith.constant 0 : index
      %280 = vector.load %arg15[%c21, %c0_155, %c0_156] : memref<32x32x16xf32, #tpu.memory_space<vmem>>, vector<1x32x16xf32>
      %281 = vector.shape_cast %280 : vector<1x32x16xf32> to vector<32x16xf32>
      %cst_157 = arith.constant dense<0.000000e+00> : vector<32x16xf32>
      %282 = tpu.matmul %45, %281, %cst_157 {dimension_numbers = #tpu.dot_dimension_numbers<[1], [0], [0], [1], [0, 0, 1, 1], [], []>} : vector<32x32xf32>, vector<32x16xf32>, vector<32x16xf32> -> vector<32x16xf32>
      %c21_158 = arith.constant 21 : index
      %c0_159 = arith.constant 0 : index
      %c0_160 = arith.constant 0 : index
      %283 = vector.load %arg16[%c21_158, %c0_159, %c0_160] : memref<32x1x16xf32, #tpu.memory_space<vmem>>, vector<1x1x16xf32>
      %284 = vector.shape_cast %283 : vector<1x1x16xf32> to vector<1x16xf32>
      %285 = vector.broadcast %284 : vector<1x16xf32> to vector<32x16xf32>
      %286 = arith.addf %282, %285 : vector<32x16xf32>
      %287 = vector.extract_strided_slice %47 {offsets = [0, 21], sizes = [32, 1], strides = [1, 1]} : vector<32x32xf32> to vector<32x1xf32>
      %288 = vector.broadcast %287 : vector<32x1xf32> to vector<32x16xf32>
      %289 = arith.mulf %288, %286 : vector<32x16xf32>
      %290 = arith.addf %279, %289 : vector<32x16xf32>
      %c22 = arith.constant 22 : index
      %c0_161 = arith.constant 0 : index
      %c0_162 = arith.constant 0 : index
      %291 = vector.load %arg15[%c22, %c0_161, %c0_162] : memref<32x32x16xf32, #tpu.memory_space<vmem>>, vector<1x32x16xf32>
      %292 = vector.shape_cast %291 : vector<1x32x16xf32> to vector<32x16xf32>
      %cst_163 = arith.constant dense<0.000000e+00> : vector<32x16xf32>
      %293 = tpu.matmul %45, %292, %cst_163 {dimension_numbers = #tpu.dot_dimension_numbers<[1], [0], [0], [1], [0, 0, 1, 1], [], []>} : vector<32x32xf32>, vector<32x16xf32>, vector<32x16xf32> -> vector<32x16xf32>
      %c22_164 = arith.constant 22 : index
      %c0_165 = arith.constant 0 : index
      %c0_166 = arith.constant 0 : index
      %294 = vector.load %arg16[%c22_164, %c0_165, %c0_166] : memref<32x1x16xf32, #tpu.memory_space<vmem>>, vector<1x1x16xf32>
      %295 = vector.shape_cast %294 : vector<1x1x16xf32> to vector<1x16xf32>
      %296 = vector.broadcast %295 : vector<1x16xf32> to vector<32x16xf32>
      %297 = arith.addf %293, %296 : vector<32x16xf32>
      %298 = vector.extract_strided_slice %47 {offsets = [0, 22], sizes = [32, 1], strides = [1, 1]} : vector<32x32xf32> to vector<32x1xf32>
      %299 = vector.broadcast %298 : vector<32x1xf32> to vector<32x16xf32>
      %300 = arith.mulf %299, %297 : vector<32x16xf32>
      %301 = arith.addf %290, %300 : vector<32x16xf32>
      %c23 = arith.constant 23 : index
      %c0_167 = arith.constant 0 : index
      %c0_168 = arith.constant 0 : index
      %302 = vector.load %arg15[%c23, %c0_167, %c0_168] : memref<32x32x16xf32, #tpu.memory_space<vmem>>, vector<1x32x16xf32>
      %303 = vector.shape_cast %302 : vector<1x32x16xf32> to vector<32x16xf32>
      %cst_169 = arith.constant dense<0.000000e+00> : vector<32x16xf32>
      %304 = tpu.matmul %45, %303, %cst_169 {dimension_numbers = #tpu.dot_dimension_numbers<[1], [0], [0], [1], [0, 0, 1, 1], [], []>} : vector<32x32xf32>, vector<32x16xf32>, vector<32x16xf32> -> vector<32x16xf32>
      %c23_170 = arith.constant 23 : index
      %c0_171 = arith.constant 0 : index
      %c0_172 = arith.constant 0 : index
      %305 = vector.load %arg16[%c23_170, %c0_171, %c0_172] : memref<32x1x16xf32, #tpu.memory_space<vmem>>, vector<1x1x16xf32>
      %306 = vector.shape_cast %305 : vector<1x1x16xf32> to vector<1x16xf32>
      %307 = vector.broadcast %306 : vector<1x16xf32> to vector<32x16xf32>
      %308 = arith.addf %304, %307 : vector<32x16xf32>
      %309 = vector.extract_strided_slice %47 {offsets = [0, 23], sizes = [32, 1], strides = [1, 1]} : vector<32x32xf32> to vector<32x1xf32>
      %310 = vector.broadcast %309 : vector<32x1xf32> to vector<32x16xf32>
      %311 = arith.mulf %310, %308 : vector<32x16xf32>
      %312 = arith.addf %301, %311 : vector<32x16xf32>
      %c24 = arith.constant 24 : index
      %c0_173 = arith.constant 0 : index
      %c0_174 = arith.constant 0 : index
      %313 = vector.load %arg15[%c24, %c0_173, %c0_174] : memref<32x32x16xf32, #tpu.memory_space<vmem>>, vector<1x32x16xf32>
      %314 = vector.shape_cast %313 : vector<1x32x16xf32> to vector<32x16xf32>
      %cst_175 = arith.constant dense<0.000000e+00> : vector<32x16xf32>
      %315 = tpu.matmul %45, %314, %cst_175 {dimension_numbers = #tpu.dot_dimension_numbers<[1], [0], [0], [1], [0, 0, 1, 1], [], []>} : vector<32x32xf32>, vector<32x16xf32>, vector<32x16xf32> -> vector<32x16xf32>
      %c24_176 = arith.constant 24 : index
      %c0_177 = arith.constant 0 : index
      %c0_178 = arith.constant 0 : index
      %316 = vector.load %arg16[%c24_176, %c0_177, %c0_178] : memref<32x1x16xf32, #tpu.memory_space<vmem>>, vector<1x1x16xf32>
      %317 = vector.shape_cast %316 : vector<1x1x16xf32> to vector<1x16xf32>
      %318 = vector.broadcast %317 : vector<1x16xf32> to vector<32x16xf32>
      %319 = arith.addf %315, %318 : vector<32x16xf32>
      %320 = vector.extract_strided_slice %47 {offsets = [0, 24], sizes = [32, 1], strides = [1, 1]} : vector<32x32xf32> to vector<32x1xf32>
      %321 = vector.broadcast %320 : vector<32x1xf32> to vector<32x16xf32>
      %322 = arith.mulf %321, %319 : vector<32x16xf32>
      %323 = arith.addf %312, %322 : vector<32x16xf32>
      %c25 = arith.constant 25 : index
      %c0_179 = arith.constant 0 : index
      %c0_180 = arith.constant 0 : index
      %324 = vector.load %arg15[%c25, %c0_179, %c0_180] : memref<32x32x16xf32, #tpu.memory_space<vmem>>, vector<1x32x16xf32>
      %325 = vector.shape_cast %324 : vector<1x32x16xf32> to vector<32x16xf32>
      %cst_181 = arith.constant dense<0.000000e+00> : vector<32x16xf32>
      %326 = tpu.matmul %45, %325, %cst_181 {dimension_numbers = #tpu.dot_dimension_numbers<[1], [0], [0], [1], [0, 0, 1, 1], [], []>} : vector<32x32xf32>, vector<32x16xf32>, vector<32x16xf32> -> vector<32x16xf32>
      %c25_182 = arith.constant 25 : index
      %c0_183 = arith.constant 0 : index
      %c0_184 = arith.constant 0 : index
      %327 = vector.load %arg16[%c25_182, %c0_183, %c0_184] : memref<32x1x16xf32, #tpu.memory_space<vmem>>, vector<1x1x16xf32>
      %328 = vector.shape_cast %327 : vector<1x1x16xf32> to vector<1x16xf32>
      %329 = vector.broadcast %328 : vector<1x16xf32> to vector<32x16xf32>
      %330 = arith.addf %326, %329 : vector<32x16xf32>
      %331 = vector.extract_strided_slice %47 {offsets = [0, 25], sizes = [32, 1], strides = [1, 1]} : vector<32x32xf32> to vector<32x1xf32>
      %332 = vector.broadcast %331 : vector<32x1xf32> to vector<32x16xf32>
      %333 = arith.mulf %332, %330 : vector<32x16xf32>
      %334 = arith.addf %323, %333 : vector<32x16xf32>
      %c26 = arith.constant 26 : index
      %c0_185 = arith.constant 0 : index
      %c0_186 = arith.constant 0 : index
      %335 = vector.load %arg15[%c26, %c0_185, %c0_186] : memref<32x32x16xf32, #tpu.memory_space<vmem>>, vector<1x32x16xf32>
      %336 = vector.shape_cast %335 : vector<1x32x16xf32> to vector<32x16xf32>
      %cst_187 = arith.constant dense<0.000000e+00> : vector<32x16xf32>
      %337 = tpu.matmul %45, %336, %cst_187 {dimension_numbers = #tpu.dot_dimension_numbers<[1], [0], [0], [1], [0, 0, 1, 1], [], []>} : vector<32x32xf32>, vector<32x16xf32>, vector<32x16xf32> -> vector<32x16xf32>
      %c26_188 = arith.constant 26 : index
      %c0_189 = arith.constant 0 : index
      %c0_190 = arith.constant 0 : index
      %338 = vector.load %arg16[%c26_188, %c0_189, %c0_190] : memref<32x1x16xf32, #tpu.memory_space<vmem>>, vector<1x1x16xf32>
      %339 = vector.shape_cast %338 : vector<1x1x16xf32> to vector<1x16xf32>
      %340 = vector.broadcast %339 : vector<1x16xf32> to vector<32x16xf32>
      %341 = arith.addf %337, %340 : vector<32x16xf32>
      %342 = vector.extract_strided_slice %47 {offsets = [0, 26], sizes = [32, 1], strides = [1, 1]} : vector<32x32xf32> to vector<32x1xf32>
      %343 = vector.broadcast %342 : vector<32x1xf32> to vector<32x16xf32>
      %344 = arith.mulf %343, %341 : vector<32x16xf32>
      %345 = arith.addf %334, %344 : vector<32x16xf32>
      %c27 = arith.constant 27 : index
      %c0_191 = arith.constant 0 : index
      %c0_192 = arith.constant 0 : index
      %346 = vector.load %arg15[%c27, %c0_191, %c0_192] : memref<32x32x16xf32, #tpu.memory_space<vmem>>, vector<1x32x16xf32>
      %347 = vector.shape_cast %346 : vector<1x32x16xf32> to vector<32x16xf32>
      %cst_193 = arith.constant dense<0.000000e+00> : vector<32x16xf32>
      %348 = tpu.matmul %45, %347, %cst_193 {dimension_numbers = #tpu.dot_dimension_numbers<[1], [0], [0], [1], [0, 0, 1, 1], [], []>} : vector<32x32xf32>, vector<32x16xf32>, vector<32x16xf32> -> vector<32x16xf32>
      %c27_194 = arith.constant 27 : index
      %c0_195 = arith.constant 0 : index
      %c0_196 = arith.constant 0 : index
      %349 = vector.load %arg16[%c27_194, %c0_195, %c0_196] : memref<32x1x16xf32, #tpu.memory_space<vmem>>, vector<1x1x16xf32>
      %350 = vector.shape_cast %349 : vector<1x1x16xf32> to vector<1x16xf32>
      %351 = vector.broadcast %350 : vector<1x16xf32> to vector<32x16xf32>
      %352 = arith.addf %348, %351 : vector<32x16xf32>
      %353 = vector.extract_strided_slice %47 {offsets = [0, 27], sizes = [32, 1], strides = [1, 1]} : vector<32x32xf32> to vector<32x1xf32>
      %354 = vector.broadcast %353 : vector<32x1xf32> to vector<32x16xf32>
      %355 = arith.mulf %354, %352 : vector<32x16xf32>
      %356 = arith.addf %345, %355 : vector<32x16xf32>
      %c28 = arith.constant 28 : index
      %c0_197 = arith.constant 0 : index
      %c0_198 = arith.constant 0 : index
      %357 = vector.load %arg15[%c28, %c0_197, %c0_198] : memref<32x32x16xf32, #tpu.memory_space<vmem>>, vector<1x32x16xf32>
      %358 = vector.shape_cast %357 : vector<1x32x16xf32> to vector<32x16xf32>
      %cst_199 = arith.constant dense<0.000000e+00> : vector<32x16xf32>
      %359 = tpu.matmul %45, %358, %cst_199 {dimension_numbers = #tpu.dot_dimension_numbers<[1], [0], [0], [1], [0, 0, 1, 1], [], []>} : vector<32x32xf32>, vector<32x16xf32>, vector<32x16xf32> -> vector<32x16xf32>
      %c28_200 = arith.constant 28 : index
      %c0_201 = arith.constant 0 : index
      %c0_202 = arith.constant 0 : index
      %360 = vector.load %arg16[%c28_200, %c0_201, %c0_202] : memref<32x1x16xf32, #tpu.memory_space<vmem>>, vector<1x1x16xf32>
      %361 = vector.shape_cast %360 : vector<1x1x16xf32> to vector<1x16xf32>
      %362 = vector.broadcast %361 : vector<1x16xf32> to vector<32x16xf32>
      %363 = arith.addf %359, %362 : vector<32x16xf32>
      %364 = vector.extract_strided_slice %47 {offsets = [0, 28], sizes = [32, 1], strides = [1, 1]} : vector<32x32xf32> to vector<32x1xf32>
      %365 = vector.broadcast %364 : vector<32x1xf32> to vector<32x16xf32>
      %366 = arith.mulf %365, %363 : vector<32x16xf32>
      %367 = arith.addf %356, %366 : vector<32x16xf32>
      %c29 = arith.constant 29 : index
      %c0_203 = arith.constant 0 : index
      %c0_204 = arith.constant 0 : index
      %368 = vector.load %arg15[%c29, %c0_203, %c0_204] : memref<32x32x16xf32, #tpu.memory_space<vmem>>, vector<1x32x16xf32>
      %369 = vector.shape_cast %368 : vector<1x32x16xf32> to vector<32x16xf32>
      %cst_205 = arith.constant dense<0.000000e+00> : vector<32x16xf32>
      %370 = tpu.matmul %45, %369, %cst_205 {dimension_numbers = #tpu.dot_dimension_numbers<[1], [0], [0], [1], [0, 0, 1, 1], [], []>} : vector<32x32xf32>, vector<32x16xf32>, vector<32x16xf32> -> vector<32x16xf32>
      %c29_206 = arith.constant 29 : index
      %c0_207 = arith.constant 0 : index
      %c0_208 = arith.constant 0 : index
      %371 = vector.load %arg16[%c29_206, %c0_207, %c0_208] : memref<32x1x16xf32, #tpu.memory_space<vmem>>, vector<1x1x16xf32>
      %372 = vector.shape_cast %371 : vector<1x1x16xf32> to vector<1x16xf32>
      %373 = vector.broadcast %372 : vector<1x16xf32> to vector<32x16xf32>
      %374 = arith.addf %370, %373 : vector<32x16xf32>
      %375 = vector.extract_strided_slice %47 {offsets = [0, 29], sizes = [32, 1], strides = [1, 1]} : vector<32x32xf32> to vector<32x1xf32>
      %376 = vector.broadcast %375 : vector<32x1xf32> to vector<32x16xf32>
      %377 = arith.mulf %376, %374 : vector<32x16xf32>
      %378 = arith.addf %367, %377 : vector<32x16xf32>
      %c30 = arith.constant 30 : index
      %c0_209 = arith.constant 0 : index
      %c0_210 = arith.constant 0 : index
      %379 = vector.load %arg15[%c30, %c0_209, %c0_210] : memref<32x32x16xf32, #tpu.memory_space<vmem>>, vector<1x32x16xf32>
      %380 = vector.shape_cast %379 : vector<1x32x16xf32> to vector<32x16xf32>
      %cst_211 = arith.constant dense<0.000000e+00> : vector<32x16xf32>
      %381 = tpu.matmul %45, %380, %cst_211 {dimension_numbers = #tpu.dot_dimension_numbers<[1], [0], [0], [1], [0, 0, 1, 1], [], []>} : vector<32x32xf32>, vector<32x16xf32>, vector<32x16xf32> -> vector<32x16xf32>
      %c30_212 = arith.constant 30 : index
      %c0_213 = arith.constant 0 : index
      %c0_214 = arith.constant 0 : index
      %382 = vector.load %arg16[%c30_212, %c0_213, %c0_214] : memref<32x1x16xf32, #tpu.memory_space<vmem>>, vector<1x1x16xf32>
      %383 = vector.shape_cast %382 : vector<1x1x16xf32> to vector<1x16xf32>
      %384 = vector.broadcast %383 : vector<1x16xf32> to vector<32x16xf32>
      %385 = arith.addf %381, %384 : vector<32x16xf32>
      %386 = vector.extract_strided_slice %47 {offsets = [0, 30], sizes = [32, 1], strides = [1, 1]} : vector<32x32xf32> to vector<32x1xf32>
      %387 = vector.broadcast %386 : vector<32x1xf32> to vector<32x16xf32>
      %388 = arith.mulf %387, %385 : vector<32x16xf32>
      %389 = arith.addf %378, %388 : vector<32x16xf32>
      %c31 = arith.constant 31 : index
      %c0_215 = arith.constant 0 : index
      %c0_216 = arith.constant 0 : index
      %390 = vector.load %arg15[%c31, %c0_215, %c0_216] : memref<32x32x16xf32, #tpu.memory_space<vmem>>, vector<1x32x16xf32>
      %391 = vector.shape_cast %390 : vector<1x32x16xf32> to vector<32x16xf32>
      %cst_217 = arith.constant dense<0.000000e+00> : vector<32x16xf32>
      %392 = tpu.matmul %45, %391, %cst_217 {dimension_numbers = #tpu.dot_dimension_numbers<[1], [0], [0], [1], [0, 0, 1, 1], [], []>} : vector<32x32xf32>, vector<32x16xf32>, vector<32x16xf32> -> vector<32x16xf32>
      %c31_218 = arith.constant 31 : index
      %c0_219 = arith.constant 0 : index
      %c0_220 = arith.constant 0 : index
      %393 = vector.load %arg16[%c31_218, %c0_219, %c0_220] : memref<32x1x16xf32, #tpu.memory_space<vmem>>, vector<1x1x16xf32>
      %394 = vector.shape_cast %393 : vector<1x1x16xf32> to vector<1x16xf32>
      %395 = vector.broadcast %394 : vector<1x16xf32> to vector<32x16xf32>
      %396 = arith.addf %392, %395 : vector<32x16xf32>
      %397 = vector.extract_strided_slice %47 {offsets = [0, 31], sizes = [32, 1], strides = [1, 1]} : vector<32x32xf32> to vector<32x1xf32>
      %398 = vector.broadcast %397 : vector<32x1xf32> to vector<32x16xf32>
      %399 = arith.mulf %398, %396 : vector<32x16xf32>
      %400 = arith.addf %389, %399 : vector<32x16xf32>
      %c0_221 = arith.constant 0 : index
      %c0_222 = arith.constant 0 : index
      %401 = vector.load %arg25[%c0_221, %c0_222] : memref<16x16xf32, #tpu.memory_space<vmem>>, vector<16x16xf32>
      %cst_223 = arith.constant dense<0.000000e+00> : vector<16x16xf32>
      %402 = tpu.matmul %21, %400, %cst_223 {dimension_numbers = #tpu.dot_dimension_numbers<[1], [0], [0], [1], [0, 0, 1, 1], [], []>} : vector<16x32xf32>, vector<32x16xf32>, vector<16x16xf32> -> vector<16x16xf32>
      %403 = arith.addf %401, %402 : vector<16x16xf32>
      %c0_224 = arith.constant 0 : index
      %c0_225 = arith.constant 0 : index
      %404 = vector.load %arg25[%c0_224, %c0_225] : memref<16x16xf32, #tpu.memory_space<vmem>>, vector<16x16xf32>
      tpu.vector_store %arg25[%c0_224, %c0_225], %403 {strides = array<i32>} : memref<16x16xf32, #tpu.memory_space<vmem>>, vector<16x16xf32>,
    } else {
    }
    %c1_i32_14 = arith.constant 1 : i32
    %33 = arith.cmpi eq, %arg0, %c1_i32_14 : i32
    %c0_i32_15 = arith.constant 0 : i32
    %34 = arith.cmpi eq, %arg1, %c0_i32_15 : i32
    %35 = arith.andi %33, %34 : i1
    %36 = arith.extui %35 : i1 to i32
    %c0_i32_16 = arith.constant 0 : i32
    %37 = arith.cmpi ne, %36, %c0_i32_16 : i32
    scf.if %37 {
      %c0_17 = arith.constant 0 : index
      %c0_18 = arith.constant 0 : index
      %38 = vector.load %arg24[%c0_17, %c0_18] : memref<16x32xf32, #tpu.memory_space<vmem>>, vector<16x32xf32>
      %c0_19 = arith.constant 0 : index
      %c0_20 = arith.constant 0 : index
      %39 = vector.load %arg17[%c0_19, %c0_20] : memref<32x16xf32, #tpu.memory_space<vmem>>, vector<32x16xf32>
      %cst = arith.constant dense<0.000000e+00> : vector<16x16xf32>
      %40 = tpu.matmul %38, %39, %cst {dimension_numbers = #tpu.dot_dimension_numbers<[1], [0], [0], [1], [0, 0, 1, 1], [], []>} : vector<16x32xf32>, vector<32x16xf32>, vector<16x16xf32> -> vector<16x16xf32>
      %c0_21 = arith.constant 0 : index
      %c0_22 = arith.constant 0 : index
      %41 = vector.load %arg18[%c0_21, %c0_22] : memref<1x16xf32, #tpu.memory_space<vmem>>, vector<1x16xf32>
      %42 = vector.broadcast %41 : vector<1x16xf32> to vector<16x16xf32>
      %43 = arith.addf %40, %42 : vector<16x16xf32>
      %c0_23 = arith.constant 0 : index
      %c0_24 = arith.constant 0 : index
      %44 = vector.load %arg25[%c0_23, %c0_24] : memref<16x16xf32, #tpu.memory_space<vmem>>, vector<16x16xf32>
      %45 = arith.addf %44, %43 : vector<16x16xf32>
      %cst_25 = arith.constant 0.000000e+00 : f32
      %46 = vector.broadcast %cst_25 : f32 to vector<16x16xf32>
      %47 = arith.maximumf %45, %46 : vector<16x16xf32>
      %48 = tpu.iota {dimensions = array<i32: 0>} : vector<2x16xi32>
      %c0_26 = arith.constant 0 : index
      %c0_27 = arith.constant 0 : index
      %49 = vector.load %arg4[%c0_26, %c0_27] : memref<1x16xi32, #tpu.memory_space<vmem>>, vector<1x16xi32>
      %50 = vector.broadcast %49 : vector<1x16xi32> to vector<2x16xi32>
      %51 = arith.cmpi eq, %48, %50 : vector<2x16xi32>
      %52 = arith.extui %51 : vector<2x16xi1> to vector<2x16xi32>
      %53 = arith.sitofp %52 : vector<2x16xi32> to vector<2x16xf32>
      %cst_28 = arith.constant dense<0.000000e+00> : vector<2x16xf32>
      %54 = tpu.matmul %53, %47, %cst_28 {dimension_numbers = #tpu.dot_dimension_numbers<[1], [0], [0], [1], [0, 0, 1, 1], [], []>} : vector<2x16xf32>, vector<16x16xf32>, vector<2x16xf32> -> vector<2x16xf32>
      %c0_29 = arith.constant 0 : index
      %c0_30 = arith.constant 0 : index
      %55 = vector.load %arg19[%c0_29, %c0_30] : memref<16x32xf32, #tpu.memory_space<vmem>>, vector<16x32xf32>
      %cst_31 = arith.constant dense<0.000000e+00> : vector<2x32xf32>
      %56 = tpu.matmul %54, %55, %cst_31 {dimension_numbers = #tpu.dot_dimension_numbers<[1], [0], [0], [1], [0, 0, 1, 1], [], []>} : vector<2x16xf32>, vector<16x32xf32>, vector<2x32xf32> -> vector<2x32xf32>
      %c0_32 = arith.constant 0 : index
      %c0_33 = arith.constant 0 : index
      %57 = vector.load %arg20[%c0_32, %c0_33] : memref<1x32xf32, #tpu.memory_space<vmem>>, vector<1x32xf32>
      %58 = vector.broadcast %57 : vector<1x32xf32> to vector<2x32xf32>
      %59 = arith.addf %56, %58 : vector<2x32xf32>
      %cst_34 = arith.constant 0.000000e+00 : f32
      %60 = vector.broadcast %cst_34 : f32 to vector<2x32xf32>
      %61 = arith.maximumf %59, %60 : vector<2x32xf32>
      %c0_35 = arith.constant 0 : index
      %c0_36 = arith.constant 0 : index
      %62 = vector.load %arg21[%c0_35, %c0_36] : memref<32x1xf32, #tpu.memory_space<vmem>>, vector<32x1xf32>
      %cst_37 = arith.constant dense<0.000000e+00> : vector<2x1xf32>
      %63 = tpu.matmul %61, %62, %cst_37 {dimension_numbers = #tpu.dot_dimension_numbers<[1], [0], [0], [1], [0, 0, 1, 1], [], []>} : vector<2x32xf32>, vector<32x1xf32>, vector<2x1xf32> -> vector<2x1xf32>
      %c0_38 = arith.constant 0 : index
      %c0_39 = arith.constant 0 : index
      %64 = vector.load %arg22[%c0_38, %c0_39] : memref<1x1xf32, #tpu.memory_space<vmem>>, vector<1x1xf32>
      %65 = vector.broadcast %64 : vector<1x1xf32> to vector<2x1xf32>
      %66 = arith.addf %63, %65 : vector<2x1xf32>
      %c0_40 = arith.constant 0 : index
      %c0_41 = arith.constant 0 : index
      %67 = vector.load %arg23[%c0_40, %c0_41] : memref<2x1xf32, #tpu.memory_space<vmem>>, vector<2x1xf32>
      tpu.vector_store %arg23[%c0_40, %c0_41], %66 {strides = array<i32>} : memref<2x1xf32, #tpu.memory_space<vmem>>, vector<2x1xf32>,
    } else {
    }
    return
  }
  func.func @transform_0(%arg0: i32, %arg1: i32) -> (i32, i32) {
    %c0_i32 = arith.constant 0 : i32
    %c0_i32_0 = arith.constant 0 : i32
    return %arg1, %c0_i32 : i32, i32
  }
  func.func @transform_1(%arg0: i32, %arg1: i32) -> (i32, i32) {
    %c0_i32 = arith.constant 0 : i32
    %c0_i32_0 = arith.constant 0 : i32
    return %c0_i32, %arg1 : i32, i32
  }
  func.func @transform_2(%arg0: i32, %arg1: i32) -> (i32, i32) {
    %c0_i32 = arith.constant 0 : i32
    %c0_i32_0 = arith.constant 0 : i32
    %c0_i32_1 = arith.constant 0 : i32
    return %c0_i32, %c0_i32_0 : i32, i32
  }
  func.func @transform_3(%arg0: i32, %arg1: i32) -> (i32, i32) {
    %c0_i32 = arith.constant 0 : i32
    %c0_i32_0 = arith.constant 0 : i32
    %c0_i32_1 = arith.constant 0 : i32
    return %c0_i32, %c0_i32_0 : i32, i32
  }
  func.func @transform_4(%arg0: i32, %arg1: i32) -> (i32, i32) {
    %c0_i32 = arith.constant 0 : i32
    %c0_i32_0 = arith.constant 0 : i32
    return %arg1, %c0_i32 : i32, i32
  }
  func.func @transform_5(%arg0: i32, %arg1: i32) -> (i32, i32) {
    %c0_i32 = arith.constant 0 : i32
    %c0_i32_0 = arith.constant 0 : i32
    %c0_i32_1 = arith.constant 0 : i32
    return %c0_i32, %c0_i32_0 : i32, i32
  }
  func.func @transform_6(%arg0: i32, %arg1: i32) -> (i32, i32) {
    %c0_i32 = arith.constant 0 : i32
    %c0_i32_0 = arith.constant 0 : i32
    %c0_i32_1 = arith.constant 0 : i32
    return %c0_i32, %c0_i32_0 : i32, i32
  }
  func.func @transform_7(%arg0: i32, %arg1: i32) -> (i32, i32, i32) {
    %c0_i32 = arith.constant 0 : i32
    %c0_i32_0 = arith.constant 0 : i32
    %c0_i32_1 = arith.constant 0 : i32
    %c0_i32_2 = arith.constant 0 : i32
    return %c0_i32, %c0_i32_0, %c0_i32_1 : i32, i32, i32
  }
  func.func @transform_8(%arg0: i32, %arg1: i32) -> (i32, i32, i32) {
    %c0_i32 = arith.constant 0 : i32
    %c0_i32_0 = arith.constant 0 : i32
    %c0_i32_1 = arith.constant 0 : i32
    %c0_i32_2 = arith.constant 0 : i32
    return %c0_i32, %c0_i32_0, %c0_i32_1 : i32, i32, i32
  }
  func.func @transform_9(%arg0: i32, %arg1: i32) -> (i32, i32) {
    %c0_i32 = arith.constant 0 : i32
    %c0_i32_0 = arith.constant 0 : i32
    %c0_i32_1 = arith.constant 0 : i32
    return %c0_i32, %c0_i32_0 : i32, i32
  }
  func.func @transform_10(%arg0: i32, %arg1: i32) -> (i32, i32) {
    %c0_i32 = arith.constant 0 : i32
    %c0_i32_0 = arith.constant 0 : i32
    %c0_i32_1 = arith.constant 0 : i32
    return %c0_i32, %c0_i32_0 : i32, i32
  }
  func.func @transform_11(%arg0: i32, %arg1: i32) -> (i32, i32) {
    %c0_i32 = arith.constant 0 : i32
    %c0_i32_0 = arith.constant 0 : i32
    %c0_i32_1 = arith.constant 0 : i32
    return %c0_i32, %c0_i32_0 : i32, i32
  }
  func.func @transform_12(%arg0: i32, %arg1: i32) -> (i32, i32) {
    %c0_i32 = arith.constant 0 : i32
    %c0_i32_0 = arith.constant 0 : i32
    %c0_i32_1 = arith.constant 0 : i32
    return %c0_i32, %c0_i32_0 : i32, i32
  }
  func.func @transform_13(%arg0: i32, %arg1: i32) -> (i32, i32, i32) {
    %c0_i32 = arith.constant 0 : i32
    %c0_i32_0 = arith.constant 0 : i32
    %c0_i32_1 = arith.constant 0 : i32
    %c0_i32_2 = arith.constant 0 : i32
    return %c0_i32, %c0_i32_0, %c0_i32_1 : i32, i32, i32
  }
  func.func @transform_14(%arg0: i32, %arg1: i32) -> (i32, i32, i32) {
    %c0_i32 = arith.constant 0 : i32
    %c0_i32_0 = arith.constant 0 : i32
    %c0_i32_1 = arith.constant 0 : i32
    %c0_i32_2 = arith.constant 0 : i32
    return %c0_i32, %c0_i32_0, %c0_i32_1 : i32, i32, i32
  }
  func.func @transform_15(%arg0: i32, %arg1: i32) -> (i32, i32) {
    %c0_i32 = arith.constant 0 : i32
    %c0_i32_0 = arith.constant 0 : i32
    %c0_i32_1 = arith.constant 0 : i32
    return %c0_i32, %c0_i32_0 : i32, i32
  }
  func.func @transform_16(%arg0: i32, %arg1: i32) -> (i32, i32) {
    %c0_i32 = arith.constant 0 : i32
    %c0_i32_0 = arith.constant 0 : i32
    %c0_i32_1 = arith.constant 0 : i32
    return %c0_i32, %c0_i32_0 : i32, i32
  }
  func.func @transform_17(%arg0: i32, %arg1: i32) -> (i32, i32) {
    %c0_i32 = arith.constant 0 : i32
    %c0_i32_0 = arith.constant 0 : i32
    %c0_i32_1 = arith.constant 0 : i32
    return %c0_i32, %c0_i32_0 : i32, i32
  }
  func.func @transform_18(%arg0: i32, %arg1: i32) -> (i32, i32) {
    %c0_i32 = arith.constant 0 : i32
    %c0_i32_0 = arith.constant 0 : i32
    %c0_i32_1 = arith.constant 0 : i32
    return %c0_i32, %c0_i32_0 : i32, i32
  }
  func.func @transform_19(%arg0: i32, %arg1: i32) -> (i32, i32) {
    %c0_i32 = arith.constant 0 : i32
    %c0_i32_0 = arith.constant 0 : i32
    %c0_i32_1 = arith.constant 0 : i32
    return %c0_i32, %c0_i32_0 : i32, i32
  }
  func.func @transform_20(%arg0: i32, %arg1: i32) -> (i32, i32) {
    %c0_i32 = arith.constant 0 : i32
    %c0_i32_0 = arith.constant 0 : i32
    %c0_i32_1 = arith.constant 0 : i32
    return %c0_i32, %c0_i32_0 : i32, i32
  }
  func.func @transform_21(%arg0: i32, %arg1: i32) -> (i32, i32) {
    %c0_i32 = arith.constant 0 : i32
    %c0_i32_0 = arith.constant 0 : i32
    %c0_i32_1 = arith.constant 0 : i32
    return %c0_i32, %c0_i32_0 : i32, i32
  }
}

</mosaic_0001>

<llo_original>
// kernel: tpu_custom_call.1
$region0: #{tpu_custom_call.1}
  #allocation0 [shape = 'u32[]', space=smem, size = 0x4, offset = 0x4, fixed_abs, tag = 'smem constant byte address 0x4 - core index']
  #allocation1 [shape = 'u32[144,128]{1,0:T(1,128)}', space=vmem, size = 0x12000, scoped, tag = 'internal scratch']
  #allocation2 [shape = 'f32[16,32]{1,0:T(8,128)}', space=vmem, size = 0x2000, scoped, tag = 'scratch operand']
  #allocation3 [shape = 'f32[16,16]{1,0:T(8,128)}', space=vmem, size = 0x2000, scoped, tag = 'scratch operand']
  #allocation4 [shape = 'f32[1,1]{1,0:T(1,128)S(1)}', space=vmem, size = 0x200, scoped, tag = 'scoped memory for tpu_custom_call.1']
  %s0 = inlined_call_operand.vmem [shape: s32[32,1], index: 0, kind: input, shape index: {}]
  %s1 = inlined_call_operand.vmem [shape: s32[1,32], index: 1, kind: input, shape index: {}]
  %s2 = inlined_call_operand.vmem [shape: s32[1,16], index: 2, kind: input, shape index: {}]
  %s3 = inlined_call_operand.vmem [shape: f32[16,11], index: 3, kind: input, shape index: {}]
  %s4 = inlined_call_operand.vmem [shape: f32[32,4], index: 4, kind: input, shape index: {}]
  %s5 = inlined_call_operand.vmem [shape: f32[4,32], index: 5, kind: input, shape index: {}]
  %s6 = inlined_call_operand.vmem [shape: f32[1,32], index: 6, kind: input, shape index: {}]
  %s7 = inlined_call_operand.vmem [shape: f32[11,32,32], index: 7, kind: input, shape index: {}]
  %s8 = inlined_call_operand.vmem [shape: f32[11,1,32], index: 8, kind: input, shape index: {}]
  %s9 = inlined_call_operand.vmem [shape: f32[11,32], index: 9, kind: input, shape index: {}]
  %s10 = inlined_call_operand.vmem [shape: f32[1,32], index: 10, kind: input, shape index: {}]
  %s11 = inlined_call_operand.vmem [shape: f32[4,32], index: 11, kind: input, shape index: {}]
  %s12 = inlined_call_operand.vmem [shape: f32[1,32], index: 12, kind: input, shape index: {}]
  %s13 = inlined_call_operand.vmem [shape: f32[32,32,16], index: 13, kind: input, shape index: {}]
  %s14 = inlined_call_operand.vmem [shape: f32[32,1,16], index: 14, kind: input, shape index: {}]
  %s15 = inlined_call_operand.vmem [shape: f32[32,16], index: 15, kind: input, shape index: {}]
  %s16 = inlined_call_operand.vmem [shape: f32[1,16], index: 16, kind: input, shape index: {}]
  %s17 = inlined_call_operand.vmem [shape: f32[16,32], index: 17, kind: input, shape index: {}]
  %s18 = inlined_call_operand.vmem [shape: f32[1,32], index: 18, kind: input, shape index: {}]
  %s19 = inlined_call_operand.vmem [shape: f32[32,1], index: 19, kind: input, shape index: {}]
  %s20 = inlined_call_operand.<no memory space> [shape: f32[1,1], index: 20, kind: input, shape index: {}]
  %s21 = inlined_call_operand.vmem [shape: f32[2,1], index: 21, kind: output, shape index: {}]
  %s22 = sld [smem:[#allocation0]]
  $region141: #{tpu_custom_call.1} parent=0
    _
  %s24 = ssub.s32 1, %s22
  %s25 = scalar_select 0, %s24, %s22
  %v26 = vstv %s20
  %27 = vst [vmem:[#allocation4] sm:$0x1] %v26
  loop: start=0, step=1, limit=4
  $region2: #{tpu_custom_call.1} parent=0 // loop_pre_header
    _
  $region3: #{tpu_custom_call.1} parent=0 // loop_header
    %s29 = sphi 0, %s33
    %p30 = scmp.ge.s32.totalorder %s29, 4
    %s36 = sphi 0, %s48
    %s37 = sphi 0, %s44
    %s38 = sphi 0, %s36
    %s39 = sphi 0, %s37
    %s40 = sphi 0, %s38
    %s41 = sphi 0, %s39
    %s51 = sphi 0, %s53
    %s54 = sphi 0, %s51
    %s55 = sphi 0, %s54
    %s71 = sphi 0, %s55
    %s77 = sphi 0, %s79
    %s80 = sphi 0, %s77
    %s81 = sphi 0, %s80
    %s97 = sphi 0, %s81
    %s101 = sphi 0, %s101
    %s103 = sphi 0, %s101
    %s104 = sphi 0, %s103
    %s118 = sphi 0, %s104
    %s122 = sphi 0, %s122
    %s124 = sphi 0, %s122
    %s125 = sphi 0, %s124
    %s139 = sphi 0, %s125
    %s145 = sphi 0, %s147
    %s148 = sphi 0, %s145
    %s149 = sphi 0, %s148
    %s165 = sphi 0, %s149
    %s169 = sphi 0, %s169
    %s171 = sphi 0, %s169
    %s172 = sphi 0, %s171
    %s186 = sphi 0, %s172
    %s190 = sphi 0, %s190
    %s192 = sphi 0, %s190
    %s193 = sphi 0, %s192
    %s207 = sphi 0, %s193
    %s211 = sphi 0, %s211
    %s213 = sphi 0, %s211
    %s214 = sphi 0, %s213
    %s228 = sphi 0, %s214
    %s232 = sphi 0, %s232
    %s234 = sphi 0, %s232
    %s235 = sphi 0, %s234
    %s249 = sphi 0, %s235
    %s253 = sphi 0, %s253
    %s255 = sphi 0, %s253
    %s256 = sphi 0, %s255
    %s270 = sphi 0, %s256
    %s274 = sphi 0, %s274
    %s276 = sphi 0, %s274
    %s277 = sphi 0, %s276
    %s291 = sphi 0, %s277
    %s295 = sphi 0, %s295
    %s297 = sphi 0, %s295
    %s298 = sphi 0, %s297
    %s312 = sphi 0, %s298
    %s316 = sphi 0, %s316
    %s318 = sphi 0, %s316
    %s319 = sphi 0, %s318
    %s333 = sphi 0, %s319
    %s337 = sphi 0, %s337
    %s339 = sphi 0, %s337
    %s340 = sphi 0, %s339
    %s354 = sphi 0, %s340
    %s358 = sphi 0, %s358
    %s360 = sphi 0, %s358
    %s361 = sphi 0, %s360
    %s375 = sphi 0, %s361
    %s379 = sphi 0, %s379
    %s381 = sphi 0, %s379
    %s382 = sphi 0, %s381
    %s396 = sphi 0, %s382
    %s400 = sphi 0, %s400
    %s402 = sphi 0, %s400
    %s403 = sphi 0, %s402
    %s417 = sphi 0, %s403
    %s421 = sphi 0, %s421
    %s423 = sphi 0, %s421
    %s424 = sphi 0, %s423
    %s438 = sphi 0, %s424
    %s442 = sphi 0, %s442
    %s444 = sphi 0, %s442
    %s445 = sphi 0, %s444
    %s459 = sphi 0, %s445
    %s463 = sphi 0, %s463
    %s465 = sphi 0, %s463
    %s466 = sphi 0, %s465
    %s480 = sphi 0, %s466
    %s484 = sphi 0, %s484
    %s486 = sphi 0, %s484
    %s487 = sphi 0, %s486
    %s501 = sphi 0, %s487
    %s505 = sphi 0, %s505
    %s507 = sphi 0, %s505
    %s508 = sphi 0, %s507
    %s522 = sphi 0, %s508
  $region4: #{tpu_custom_call.1} parent=0 // loop_header_branch
    %32 = sbr.rel (%p30) target = $region8
  $region5: #{tpu_custom_call.1} parent=0 // loop_body
    %s34 = ssub.s32 %s29, 1
    %s35 = ssub.s32 %s29, 2
    %s42 = sadd.s32 1, %s37
    %p43 = scmp.ge.s32.totalorder %s42, 1
    %s44 = scalar_select %p43, 0, %s42
    %s45 = sadd.s32 1, %s36
    %s46 = scalar_select %p43, %s45, %s36
    %p47 = scmp.ge.s32.totalorder %s46, 2
    %s48 = scalar_select %p47, 0, %s46
    %s49 = ssub.s32 %s37, %s44
    %p50 = scmp.eq.s32.totalorder %s49, 0
    %s52 = sadd.s32 %s51, 1
    %s53 = scalar_select %p50, %s51, %s52
    %p56 = pneg %p50
    %p57 = scmp.eq.s32.totalorder %s29, 1
    %p58 = por %p56, %p57
    %p59 = scmp.ne.s32.totalorder %s51, %s54
    %p60 = scmp.eq.s32.totalorder %s29, 0
    %p61 = por %p59, %p60
    %p62 = scmp.ne.s32.totalorder %s51, %s54
    %p63 = scmp.eq.s32.totalorder %s34, 1
    %p64 = por %p62, %p63
    %p65 = scmp.ne.s32.totalorder %s54, %s55
    %p66 = scmp.eq.s32.totalorder %s34, 0
    %p67 = por %p65, %p66
    %p68 = scmp.ne.s32.totalorder %s54, %s55
    %p69 = scmp.eq.s32.totalorder %s35, 1
    %p70 = por %p68, %p69
    %p72 = scmp.ne.s32.totalorder %s55, %s71
    %p73 = scmp.eq.s32.totalorder %s35, 0
    %p74 = por %p72, %p73
    %s75 = ssub.s32 %s37, %s44
    %p76 = scmp.eq.s32.totalorder %s75, 0
    %s78 = sadd.s32 %s77, 1
    %s79 = scalar_select %p76, %s77, %s78
    %p82 = pneg %p76
    %p83 = scmp.eq.s32.totalorder %s29, 1
    %p84 = por %p82, %p83
    %p85 = scmp.ne.s32.totalorder %s77, %s80
    %p86 = scmp.eq.s32.totalorder %s29, 0
    %p87 = por %p85, %p86
    %p88 = scmp.ne.s32.totalorder %s77, %s80
    %p89 = scmp.eq.s32.totalorder %s34, 1
    %p90 = por %p88, %p89
    %p91 = scmp.ne.s32.totalorder %s80, %s81
    %p92 = scmp.eq.s32.totalorder %s34, 0
    %p93 = por %p91, %p92
    %p94 = scmp.ne.s32.totalorder %s80, %s81
    %p95 = scmp.eq.s32.totalorder %s35, 1
    %p96 = por %p94, %p95
    %p98 = scmp.ne.s32.totalorder %s81, %s97
    %p99 = scmp.eq.s32.totalorder %s35, 0
    %p100 = por %p98, %p99
    %s102 = sadd.s32 %s101, 1
    %p105 = scmp.eq.s32.totalorder %s29, 1
    %p106 = scmp.ne.s32.totalorder %s101, %s103
    %p107 = scmp.eq.s32.totalorder %s29, 0
    %p108 = por %p106, %p107
    %p109 = scmp.ne.s32.totalorder %s101, %s103
    %p110 = scmp.eq.s32.totalorder %s34, 1
    %p111 = por %p109, %p110
    %p112 = scmp.ne.s32.totalorder %s103, %s104
    %p113 = scmp.eq.s32.totalorder %s34, 0
    %p114 = por %p112, %p113
    %p115 = scmp.ne.s32.totalorder %s103, %s104
    %p116 = scmp.eq.s32.totalorder %s35, 1
    %p117 = por %p115, %p116
    %p119 = scmp.ne.s32.totalorder %s104, %s118
    %p120 = scmp.eq.s32.totalorder %s35, 0
    %p121 = por %p119, %p120
    %s123 = sadd.s32 %s122, 1
    %p126 = scmp.eq.s32.totalorder %s29, 1
    %p127 = scmp.ne.s32.totalorder %s122, %s124
    %p128 = scmp.eq.s32.totalorder %s29, 0
    %p129 = por %p127, %p128
    %p130 = scmp.ne.s32.totalorder %s122, %s124
    %p131 = scmp.eq.s32.totalorder %s34, 1
    %p132 = por %p130, %p131
    %p133 = scmp.ne.s32.totalorder %s124, %s125
    %p134 = scmp.eq.s32.totalorder %s34, 0
    %p135 = por %p133, %p134
    %p136 = scmp.ne.s32.totalorder %s124, %s125
    %p137 = scmp.eq.s32.totalorder %s35, 1
    %p138 = por %p136, %p137
    %p140 = scmp.ne.s32.totalorder %s125, %s139
    %p141 = scmp.eq.s32.totalorder %s35, 0
    %p142 = por %p140, %p141
    %s143 = ssub.s32 %s37, %s44
    %p144 = scmp.eq.s32.totalorder %s143, 0
    %s146 = sadd.s32 %s145, 1
    %s147 = scalar_select %p144, %s145, %s146
    %p150 = pneg %p144
    %p151 = scmp.eq.s32.totalorder %s29, 1
    %p152 = por %p150, %p151
    %p153 = scmp.ne.s32.totalorder %s145, %s148
    %p154 = scmp.eq.s32.totalorder %s29, 0
    %p155 = por %p153, %p154
    %p156 = scmp.ne.s32.totalorder %s145, %s148
    %p157 = scmp.eq.s32.totalorder %s34, 1
    %p158 = por %p156, %p157
    %p159 = scmp.ne.s32.totalorder %s148, %s149
    %p160 = scmp.eq.s32.totalorder %s34, 0
    %p161 = por %p159, %p160
    %p162 = scmp.ne.s32.totalorder %s148, %s149
    %p163 = scmp.eq.s32.totalorder %s35, 1
    %p164 = por %p162, %p163
    %p166 = scmp.ne.s32.totalorder %s149, %s165
    %p167 = scmp.eq.s32.totalorder %s35, 0
    %p168 = por %p166, %p167
    %s170 = sadd.s32 %s169, 1
    %p173 = scmp.eq.s32.totalorder %s29, 1
    %p174 = scmp.ne.s32.totalorder %s169, %s171
    %p175 = scmp.eq.s32.totalorder %s29, 0
    %p176 = por %p174, %p175
    %p177 = scmp.ne.s32.totalorder %s169, %s171
    %p178 = scmp.eq.s32.totalorder %s34, 1
    %p179 = por %p177, %p178
    %p180 = scmp.ne.s32.totalorder %s171, %s172
    %p181 = scmp.eq.s32.totalorder %s34, 0
    %p182 = por %p180, %p181
    %p183 = scmp.ne.s32.totalorder %s171, %s172
    %p184 = scmp.eq.s32.totalorder %s35, 1
    %p185 = por %p183, %p184
    %p187 = scmp.ne.s32.totalorder %s172, %s186
    %p188 = scmp.eq.s32.totalorder %s35, 0
    %p189 = por %p187, %p188
    %s191 = sadd.s32 %s190, 1
    %p194 = scmp.eq.s32.totalorder %s29, 1
    %p195 = scmp.ne.s32.totalorder %s190, %s192
    %p196 = scmp.eq.s32.totalorder %s29, 0
    %p197 = por %p195, %p196
    %p198 = scmp.ne.s32.totalorder %s190, %s192
    %p199 = scmp.eq.s32.totalorder %s34, 1
    %p200 = por %p198, %p199
    %p201 = scmp.ne.s32.totalorder %s192, %s193
    %p202 = scmp.eq.s32.totalorder %s34, 0
    %p203 = por %p201, %p202
    %p204 = scmp.ne.s32.totalorder %s192, %s193
    %p205 = scmp.eq.s32.totalorder %s35, 1
    %p206 = por %p204, %p205
    %p208 = scmp.ne.s32.totalorder %s193, %s207
    %p209 = scmp.eq.s32.totalorder %s35, 0
    %p210 = por %p208, %p209
    %s212 = sadd.s32 %s211, 1
    %p215 = scmp.eq.s32.totalorder %s29, 1
    %p216 = scmp.ne.s32.totalorder %s211, %s213
    %p217 = scmp.eq.s32.totalorder %s29, 0
    %p218 = por %p216, %p217
    %p219 = scmp.ne.s32.totalorder %s211, %s213
    %p220 = scmp.eq.s32.totalorder %s34, 1
    %p221 = por %p219, %p220
    %p222 = scmp.ne.s32.totalorder %s213, %s214
    %p223 = scmp.eq.s32.totalorder %s34, 0
    %p224 = por %p222, %p223
    %p225 = scmp.ne.s32.totalorder %s213, %s214
    %p226 = scmp.eq.s32.totalorder %s35, 1
    %p227 = por %p225, %p226
    %p229 = scmp.ne.s32.totalorder %s214, %s228
    %p230 = scmp.eq.s32.totalorder %s35, 0
    %p231 = por %p229, %p230
    %s233 = sadd.s32 %s232, 1
    %p236 = scmp.eq.s32.totalorder %s29, 1
    %p237 = scmp.ne.s32.totalorder %s232, %s234
    %p238 = scmp.eq.s32.totalorder %s29, 0
    %p239 = por %p237, %p238
    %p240 = scmp.ne.s32.totalorder %s232, %s234
    %p241 = scmp.eq.s32.totalorder %s34, 1
    %p242 = por %p240, %p241
    %p243 = scmp.ne.s32.totalorder %s234, %s235
    %p244 = scmp.eq.s32.totalorder %s34, 0
    %p245 = por %p243, %p244
    %p246 = scmp.ne.s32.totalorder %s234, %s235
    %p247 = scmp.eq.s32.totalorder %s35, 1
    %p248 = por %p246, %p247
    %p250 = scmp.ne.s32.totalorder %s235, %s249
    %p251 = scmp.eq.s32.totalorder %s35, 0
    %p252 = por %p250, %p251
    %s254 = sadd.s32 %s253, 1
    %p257 = scmp.eq.s32.totalorder %s29, 1
    %p258 = scmp.ne.s32.totalorder %s253, %s255
    %p259 = scmp.eq.s32.totalorder %s29, 0
    %p260 = por %p258, %p259
    %p261 = scmp.ne.s32.totalorder %s253, %s255
    %p262 = scmp.eq.s32.totalorder %s34, 1
    %p263 = por %p261, %p262
    %p264 = scmp.ne.s32.totalorder %s255, %s256
    %p265 = scmp.eq.s32.totalorder %s34, 0
    %p266 = por %p264, %p265
    %p267 = scmp.ne.s32.totalorder %s255, %s256
    %p268 = scmp.eq.s32.totalorder %s35, 1
    %p269 = por %p267, %p268
    %p271 = scmp.ne.s32.totalorder %s256, %s270
    %p272 = scmp.eq.s32.totalorder %s35, 0
    %p273 = por %p271, %p272
    %s275 = sadd.s32 %s274, 1
    %p278 = scmp.eq.s32.totalorder %s29, 1
    %p279 = scmp.ne.s32.totalorder %s274, %s276
    %p280 = scmp.eq.s32.totalorder %s29, 0
    %p281 = por %p279, %p280
    %p282 = scmp.ne.s32.totalorder %s274, %s276
    %p283 = scmp.eq.s32.totalorder %s34, 1
    %p284 = por %p282, %p283
    %p285 = scmp.ne.s32.totalorder %s276, %s277
    %p286 = scmp.eq.s32.totalorder %s34, 0
    %p287 = por %p285, %p286
    %p288 = scmp.ne.s32.totalorder %s276, %s277
    %p289 = scmp.eq.s32.totalorder %s35, 1
    %p290 = por %p288, %p289
    %p292 = scmp.ne.s32.totalorder %s277, %s291
    %p293 = scmp.eq.s32.totalorder %s35, 0
    %p294 = por %p292, %p293
    %s296 = sadd.s32 %s295, 1
    %p299 = scmp.eq.s32.totalorder %s29, 1
    %p300 = scmp.ne.s32.totalorder %s295, %s297
    %p301 = scmp.eq.s32.totalorder %s29, 0
    %p302 = por %p300, %p301
    %p303 = scmp.ne.s32.totalorder %s295, %s297
    %p304 = scmp.eq.s32.totalorder %s34, 1
    %p305 = por %p303, %p304
    %p306 = scmp.ne.s32.totalorder %s297, %s298
    %p307 = scmp.eq.s32.totalorder %s34, 0
    %p308 = por %p306, %p307
    %p309 = scmp.ne.s32.totalorder %s297, %s298
    %p310 = scmp.eq.s32.totalorder %s35, 1
    %p311 = por %p309, %p310
    %p313 = scmp.ne.s32.totalorder %s298, %s312
    %p314 = scmp.eq.s32.totalorder %s35, 0
    %p315 = por %p313, %p314
    %s317 = sadd.s32 %s316, 1
    %p320 = scmp.eq.s32.totalorder %s29, 1
    %p321 = scmp.ne.s32.totalorder %s316, %s318
    %p322 = scmp.eq.s32.totalorder %s29, 0
    %p323 = por %p321, %p322
    %p324 = scmp.ne.s32.totalorder %s316, %s318
    %p325 = scmp.eq.s32.totalorder %s34, 1
    %p326 = por %p324, %p325
    %p327 = scmp.ne.s32.totalorder %s318, %s319
    %p328 = scmp.eq.s32.totalorder %s34, 0
    %p329 = por %p327, %p328
    %p330 = scmp.ne.s32.totalorder %s318, %s319
    %p331 = scmp.eq.s32.totalorder %s35, 1
    %p332 = por %p330, %p331
    %p334 = scmp.ne.s32.totalorder %s319, %s333
    %p335 = scmp.eq.s32.totalorder %s35, 0
    %p336 = por %p334, %p335
    %s338 = sadd.s32 %s337, 1
    %p341 = scmp.eq.s32.totalorder %s29, 1
    %p342 = scmp.ne.s32.totalorder %s337, %s339
    %p343 = scmp.eq.s32.totalorder %s29, 0
    %p344 = por %p342, %p343
    %p345 = scmp.ne.s32.totalorder %s337, %s339
    %p346 = scmp.eq.s32.totalorder %s34, 1
    %p347 = por %p345, %p346
    %p348 = scmp.ne.s32.totalorder %s339, %s340
    %p349 = scmp.eq.s32.totalorder %s34, 0
    %p350 = por %p348, %p349
    %p351 = scmp.ne.s32.totalorder %s339, %s340
    %p352 = scmp.eq.s32.totalorder %s35, 1
    %p353 = por %p351, %p352
    %p355 = scmp.ne.s32.totalorder %s340, %s354
    %p356 = scmp.eq.s32.totalorder %s35, 0
    %p357 = por %p355, %p356
    %s359 = sadd.s32 %s358, 1
    %p362 = scmp.eq.s32.totalorder %s29, 1
    %p363 = scmp.ne.s32.totalorder %s358, %s360
    %p364 = scmp.eq.s32.totalorder %s29, 0
    %p365 = por %p363, %p364
    %p366 = scmp.ne.s32.totalorder %s358, %s360
    %p367 = scmp.eq.s32.totalorder %s34, 1
    %p368 = por %p366, %p367
    %p369 = scmp.ne.s32.totalorder %s360, %s361
    %p370 = scmp.eq.s32.totalorder %s34, 0
    %p371 = por %p369, %p370
    %p372 = scmp.ne.s32.totalorder %s360, %s361
    %p373 = scmp.eq.s32.totalorder %s35, 1
    %p374 = por %p372, %p373
    %p376 = scmp.ne.s32.totalorder %s361, %s375
    %p377 = scmp.eq.s32.totalorder %s35, 0
    %p378 = por %p376, %p377
    %s380 = sadd.s32 %s379, 1
    %p383 = scmp.eq.s32.totalorder %s29, 1
    %p384 = scmp.ne.s32.totalorder %s379, %s381
    %p385 = scmp.eq.s32.totalorder %s29, 0
    %p386 = por %p384, %p385
    %p387 = scmp.ne.s32.totalorder %s379, %s381
    %p388 = scmp.eq.s32.totalorder %s34, 1
    %p389 = por %p387, %p388
    %p390 = scmp.ne.s32.totalorder %s381, %s382
    %p391 = scmp.eq.s32.totalorder %s34, 0
    %p392 = por %p390, %p391
    %p393 = scmp.ne.s32.totalorder %s381, %s382
    %p394 = scmp.eq.s32.totalorder %s35, 1
    %p395 = por %p393, %p394
    %p397 = scmp.ne.s32.totalorder %s382, %s396
    %p398 = scmp.eq.s32.totalorder %s35, 0
    %p399 = por %p397, %p398
    %s401 = sadd.s32 %s400, 1
    %p404 = scmp.eq.s32.totalorder %s29, 1
    %p405 = scmp.ne.s32.totalorder %s400, %s402
    %p406 = scmp.eq.s32.totalorder %s29, 0
    %p407 = por %p405, %p406
    %p408 = scmp.ne.s32.totalorder %s400, %s402
    %p409 = scmp.eq.s32.totalorder %s34, 1
    %p410 = por %p408, %p409
    %p411 = scmp.ne.s32.totalorder %s402, %s403
    %p412 = scmp.eq.s32.totalorder %s34, 0
    %p413 = por %p411, %p412
    %p414 = scmp.ne.s32.totalorder %s402, %s403
    %p415 = scmp.eq.s32.totalorder %s35, 1
    %p416 = por %p414, %p415
    %p418 = scmp.ne.s32.totalorder %s403, %s417
    %p419 = scmp.eq.s32.totalorder %s35, 0
    %p420 = por %p418, %p419
    %s422 = sadd.s32 %s421, 1
    %p425 = scmp.eq.s32.totalorder %s29, 1
    %p426 = scmp.ne.s32.totalorder %s421, %s423
    %p427 = scmp.eq.s32.totalorder %s29, 0
    %p428 = por %p426, %p427
    %p429 = scmp.ne.s32.totalorder %s421, %s423
    %p430 = scmp.eq.s32.totalorder %s34, 1
    %p431 = por %p429, %p430
    %p432 = scmp.ne.s32.totalorder %s423, %s424
    %p433 = scmp.eq.s32.totalorder %s34, 0
    %p434 = por %p432, %p433
    %p435 = scmp.ne.s32.totalorder %s423, %s424
    %p436 = scmp.eq.s32.totalorder %s35, 1
    %p437 = por %p435, %p436
    %p439 = scmp.ne.s32.totalorder %s424, %s438
    %p440 = scmp.eq.s32.totalorder %s35, 0
    %p441 = por %p439, %p440
    %s443 = sadd.s32 %s442, 1
    %p446 = scmp.eq.s32.totalorder %s29, 1
    %p447 = scmp.ne.s32.totalorder %s442, %s444
    %p448 = scmp.eq.s32.totalorder %s29, 0
    %p449 = por %p447, %p448
    %p450 = scmp.ne.s32.totalorder %s442, %s444
    %p451 = scmp.eq.s32.totalorder %s34, 1
    %p452 = por %p450, %p451
    %p453 = scmp.ne.s32.totalorder %s444, %s445
    %p454 = scmp.eq.s32.totalorder %s34, 0
    %p455 = por %p453, %p454
    %p456 = scmp.ne.s32.totalorder %s444, %s445
    %p457 = scmp.eq.s32.totalorder %s35, 1
    %p458 = por %p456, %p457
    %p460 = scmp.ne.s32.totalorder %s445, %s459
    %p461 = scmp.eq.s32.totalorder %s35, 0
    %p462 = por %p460, %p461
    %s464 = sadd.s32 %s463, 1
    %p467 = scmp.eq.s32.totalorder %s29, 1
    %p468 = scmp.ne.s32.totalorder %s463, %s465
    %p469 = scmp.eq.s32.totalorder %s29, 0
    %p470 = por %p468, %p469
    %p471 = scmp.ne.s32.totalorder %s463, %s465
    %p472 = scmp.eq.s32.totalorder %s34, 1
    %p473 = por %p471, %p472
    %p474 = scmp.ne.s32.totalorder %s465, %s466
    %p475 = scmp.eq.s32.totalorder %s34, 0
    %p476 = por %p474, %p475
    %p477 = scmp.ne.s32.totalorder %s465, %s466
    %p478 = scmp.eq.s32.totalorder %s35, 1
    %p479 = por %p477, %p478
    %p481 = scmp.ne.s32.totalorder %s466, %s480
    %p482 = scmp.eq.s32.totalorder %s35, 0
    %p483 = por %p481, %p482
    %s485 = sadd.s32 %s484, 1
    %p488 = scmp.eq.s32.totalorder %s29, 1
    %p489 = scmp.ne.s32.totalorder %s484, %s486
    %p490 = scmp.eq.s32.totalorder %s29, 0
    %p491 = por %p489, %p490
    %p492 = scmp.ne.s32.totalorder %s484, %s486
    %p493 = scmp.eq.s32.totalorder %s34, 1
    %p494 = por %p492, %p493
    %p495 = scmp.ne.s32.totalorder %s486, %s487
    %p496 = scmp.eq.s32.totalorder %s34, 0
    %p497 = por %p495, %p496
    %p498 = scmp.ne.s32.totalorder %s486, %s487
    %p499 = scmp.eq.s32.totalorder %s35, 1
    %p500 = por %p498, %p499
    %p502 = scmp.ne.s32.totalorder %s487, %s501
    %p503 = scmp.eq.s32.totalorder %s35, 0
    %p504 = por %p502, %p503
    %s506 = sadd.s32 %s505, 1
    %p509 = scmp.eq.s32.totalorder %s29, 1
    %p510 = scmp.ne.s32.totalorder %s505, %s507
    %p511 = scmp.eq.s32.totalorder %s29, 0
    %p512 = por %p510, %p511
    %p513 = scmp.ne.s32.totalorder %s505, %s507
    %p514 = scmp.eq.s32.totalorder %s34, 1
    %p515 = por %p513, %p514
    %p516 = scmp.ne.s32.totalorder %s507, %s508
    %p517 = scmp.eq.s32.totalorder %s34, 0
    %p518 = por %p516, %p517
    %p519 = scmp.ne.s32.totalorder %s507, %s508
    %p520 = scmp.eq.s32.totalorder %s35, 1
    %p521 = por %p519, %p520
    %p523 = scmp.ne.s32.totalorder %s508, %s522
    %p524 = scmp.eq.s32.totalorder %s35, 0
    %p525 = por %p523, %p524
    %p526 = scmp.le.s32.totalorder 1, %s29
    %p527 = scmp.lt.s32.totalorder %s29, 3
    %p528 = pnand %p526, %p527
    %p529 = pneg %p528
    // Predicated region
    $region9: #{tpu_custom_call.1} parent=5 // pred_check
      _
    $region10: #{tpu_custom_call.1} parent=5 // pred_check_branch
      %531 = sbr.rel (%p528) target = $region12
    $region11: #{tpu_custom_call.1} parent=5 // pred_region
      %s532 = ssub.s32 %s29, 1
      // Predicated region
      $region13: #{tpu_custom_call.1} parent=11 // pred_check
        %p533 = pneg %p67
      $region14: #{tpu_custom_call.1} parent=11 // pred_check_branch
        %535 = sbr.rel (%p533) target = $region16
      $region15: #{tpu_custom_call.1} parent=11 // pred_region
        %s536 = smul.u32 4, %s39
        %p537 = scmp.lt.s32.totalorder %s536, 3
        %s538 = scalar_select %p537, %s536, 3
        %s539 = smul.addr %s538, 8
        %s540 = scalar_lea.vmem %s0, %s539
        %s541 = smul.u32 4, %s39
      $region16: #{tpu_custom_call.1} parent=11 // pred_fallthru
        _
      // Predicated region
      $region17: #{tpu_custom_call.1} parent=11 // pred_check
        %p542 = pneg %p93
      $region18: #{tpu_custom_call.1} parent=11 // pred_check_branch
        %544 = sbr.rel (%p542) target = $region20
      $region19: #{tpu_custom_call.1} parent=11 // pred_region
        %p545 = scmp.lt.s32.totalorder %s39, 0
        %s546 = scalar_select %p545, %s39, 0
        %s547 = scalar_lea.vmem %s1, %s546
      $region20: #{tpu_custom_call.1} parent=11 // pred_fallthru
        _
      // Predicated region
      $region21: #{tpu_custom_call.1} parent=11 // pred_check
        %p548 = pneg %p114
      $region22: #{tpu_custom_call.1} parent=11 // pred_check_branch
        %550 = sbr.rel (%p548) target = $region24
      $region23: #{tpu_custom_call.1} parent=11 // pred_region
        _
      $region24: #{tpu_custom_call.1} parent=11 // pred_fallthru
        _
      // Predicated region
      $region25: #{tpu_custom_call.1} parent=11 // pred_check
        %p551 = pneg %p135
      $region26: #{tpu_custom_call.1} parent=11 // pred_check_branch
        %553 = sbr.rel (%p551) target = $region28
      $region27: #{tpu_custom_call.1} parent=11 // pred_region
        _
      $region28: #{tpu_custom_call.1} parent=11 // pred_fallthru
        _
      // Predicated region
      $region29: #{tpu_custom_call.1} parent=11 // pred_check
        %p554 = pneg %p161
      $region30: #{tpu_custom_call.1} parent=11 // pred_check_branch
        %556 = sbr.rel (%p554) target = $region32
      $region31: #{tpu_custom_call.1} parent=11 // pred_region
        %s557 = smul.u32 4, %s39
        %p558 = scmp.lt.s32.totalorder %s557, 3
        %s559 = scalar_select %p558, %s557, 3
        %s560 = smul.addr %s559, 8
        %s561 = scalar_lea.vmem %s4, %s560
        %s562 = smul.u32 4, %s39
      $region32: #{tpu_custom_call.1} parent=11 // pred_fallthru
        _
      // Predicated region
      $region33: #{tpu_custom_call.1} parent=11 // pred_check
        %p563 = pneg %p182
      $region34: #{tpu_custom_call.1} parent=11 // pred_check_branch
        %565 = sbr.rel (%p563) target = $region36
      $region35: #{tpu_custom_call.1} parent=11 // pred_region
        _
      $region36: #{tpu_custom_call.1} parent=11 // pred_fallthru
        _
      // Predicated region
      $region37: #{tpu_custom_call.1} parent=11 // pred_check
        %p566 = pneg %p203
      $region38: #{tpu_custom_call.1} parent=11 // pred_check_branch
        %568 = sbr.rel (%p566) target = $region40
      $region39: #{tpu_custom_call.1} parent=11 // pred_region
        _
      $region40: #{tpu_custom_call.1} parent=11 // pred_fallthru
        _
      // Predicated region
      $region41: #{tpu_custom_call.1} parent=11 // pred_check
        %p569 = pneg %p224
      $region42: #{tpu_custom_call.1} parent=11 // pred_check_branch
        %571 = sbr.rel (%p569) target = $region44
      $region43: #{tpu_custom_call.1} parent=11 // pred_region
        _
      $region44: #{tpu_custom_call.1} parent=11 // pred_fallthru
        _
      // Predicated region
      $region45: #{tpu_custom_call.1} parent=11 // pred_check
        %p572 = pneg %p245
      $region46: #{tpu_custom_call.1} parent=11 // pred_check_branch
        %574 = sbr.rel (%p572) target = $region48
      $region47: #{tpu_custom_call.1} parent=11 // pred_region
        _
      $region48: #{tpu_custom_call.1} parent=11 // pred_fallthru
        _
      // Predicated region
      $region49: #{tpu_custom_call.1} parent=11 // pred_check
        %p575 = pneg %p266
      $region50: #{tpu_custom_call.1} parent=11 // pred_check_branch
        %577 = sbr.rel (%p575) target = $region52
      $region51: #{tpu_custom_call.1} parent=11 // pred_region
        _
      $region52: #{tpu_custom_call.1} parent=11 // pred_fallthru
        _
      // Predicated region
      $region53: #{tpu_custom_call.1} parent=11 // pred_check
        %p578 = pneg %p287
      $region54: #{tpu_custom_call.1} parent=11 // pred_check_branch
        %580 = sbr.rel (%p578) target = $region56
      $region55: #{tpu_custom_call.1} parent=11 // pred_region
        _
      $region56: #{tpu_custom_call.1} parent=11 // pred_fallthru
        _
      // Predicated region
      $region57: #{tpu_custom_call.1} parent=11 // pred_check
        %p581 = pneg %p308
      $region58: #{tpu_custom_call.1} parent=11 // pred_check_branch
        %583 = sbr.rel (%p581) target = $region60
      $region59: #{tpu_custom_call.1} parent=11 // pred_region
        _
      $region60: #{tpu_custom_call.1} parent=11 // pred_fallthru
        _
      // Predicated region
      $region61: #{tpu_custom_call.1} parent=11 // pred_check
        %p584 = pneg %p329
      $region62: #{tpu_custom_call.1} parent=11 // pred_check_branch
        %586 = sbr.rel (%p584) target = $region64
      $region63: #{tpu_custom_call.1} parent=11 // pred_region
        _
      $region64: #{tpu_custom_call.1} parent=11 // pred_fallthru
        _
      // Predicated region
      $region65: #{tpu_custom_call.1} parent=11 // pred_check
        %p587 = pneg %p350
      $region66: #{tpu_custom_call.1} parent=11 // pred_check_branch
        %589 = sbr.rel (%p587) target = $region68
      $region67: #{tpu_custom_call.1} parent=11 // pred_region
        _
      $region68: #{tpu_custom_call.1} parent=11 // pred_fallthru
        _
      // Predicated region
      $region69: #{tpu_custom_call.1} parent=11 // pred_check
        %p590 = pneg %p371
      $region70: #{tpu_custom_call.1} parent=11 // pred_check_branch
        %592 = sbr.rel (%p590) target = $region72
      $region71: #{tpu_custom_call.1} parent=11 // pred_region
        _
      $region72: #{tpu_custom_call.1} parent=11 // pred_fallthru
        _
      // Predicated region
      $region73: #{tpu_custom_call.1} parent=11 // pred_check
        %p593 = pneg %p392
      $region74: #{tpu_custom_call.1} parent=11 // pred_check_branch
        %595 = sbr.rel (%p593) target = $region76
      $region75: #{tpu_custom_call.1} parent=11 // pred_region
        _
      $region76: #{tpu_custom_call.1} parent=11 // pred_fallthru
        _
      // Predicated region
      $region77: #{tpu_custom_call.1} parent=11 // pred_check
        %p596 = pneg %p413
      $region78: #{tpu_custom_call.1} parent=11 // pred_check_branch
        %598 = sbr.rel (%p596) target = $region80
      $region79: #{tpu_custom_call.1} parent=11 // pred_region
        _
      $region80: #{tpu_custom_call.1} parent=11 // pred_fallthru
        _
      // Predicated region
      $region81: #{tpu_custom_call.1} parent=11 // pred_check
        %p599 = pneg %p434
      $region82: #{tpu_custom_call.1} parent=11 // pred_check_branch
        %601 = sbr.rel (%p599) target = $region84
      $region83: #{tpu_custom_call.1} parent=11 // pred_region
        _
      $region84: #{tpu_custom_call.1} parent=11 // pred_fallthru
        _
      // Predicated region
      $region85: #{tpu_custom_call.1} parent=11 // pred_check
        %p602 = pneg %p455
      $region86: #{tpu_custom_call.1} parent=11 // pred_check_branch
        %604 = sbr.rel (%p602) target = $region88
      $region87: #{tpu_custom_call.1} parent=11 // pred_region
        _
      $region88: #{tpu_custom_call.1} parent=11 // pred_fallthru
        _
      // Predicated region
      $region89: #{tpu_custom_call.1} parent=11 // pred_check
        %p605 = pneg %p476
      $region90: #{tpu_custom_call.1} parent=11 // pred_check_branch
        %607 = sbr.rel (%p605) target = $region92
      $region91: #{tpu_custom_call.1} parent=11 // pred_region
        _
      $region92: #{tpu_custom_call.1} parent=11 // pred_fallthru
        _
      // Predicated region
      $region93: #{tpu_custom_call.1} parent=11 // pred_check
        %p608 = pneg %p497
      $region94: #{tpu_custom_call.1} parent=11 // pred_check_branch
        %610 = sbr.rel (%p608) target = $region96
      $region95: #{tpu_custom_call.1} parent=11 // pred_region
        _
      $region96: #{tpu_custom_call.1} parent=11 // pred_fallthru
        _
    $region12: #{tpu_custom_call.1} parent=5 // pred_fallthru
      _
    %p611 = scmp.lt.s32.totalorder %s29, 2
    // Predicated region
    $region97: #{tpu_custom_call.1} parent=5 // pred_check
      %p612 = pneg %p611
    $region98: #{tpu_custom_call.1} parent=5 // pred_check_branch
      %614 = sbr.rel (%p612) target = $region100
    $region99: #{tpu_custom_call.1} parent=5 // pred_region
      _
    $region100: #{tpu_custom_call.1} parent=5 // pred_fallthru
      _
    %p615 = scmp.le.s32.totalorder 1, %s29
    %p616 = scmp.lt.s32.totalorder %s29, 3
    %p617 = pnand %p615, %p616
    %p618 = pneg %p617
    // Predicated region
    $region101: #{tpu_custom_call.1} parent=5 // pred_check
      _
    $region102: #{tpu_custom_call.1} parent=5 // pred_check_branch
      %620 = sbr.rel (%p617) target = $region104
    $region103: #{tpu_custom_call.1} parent=5 // pred_region
      %s621 = ssub.s32 %s29, 1
      %s622 = smul.u32 4, %s39
      %p623 = scmp.lt.s32.totalorder %s622, 3
      %s624 = scalar_select %p623, %s622, 3
      %s625 = smul.addr %s624, 8
      %s626 = scalar_lea.vmem %s0, %s625
      %p627 = pneg %p67
      %p628 = pneg %p64
      %p629 = scmp.lt.s32.totalorder %s39, 0
      %s630 = scalar_select %p629, %s39, 0
      %s631 = scalar_lea.vmem %s1, %s630
      %p632 = pneg %p93
      %p633 = pneg %p90
      %p634 = pneg %p114
      %p635 = pneg %p111
      %p636 = pneg %p135
      %p637 = pneg %p132
      %s638 = smul.u32 4, %s39
      %p639 = scmp.lt.s32.totalorder %s638, 3
      %s640 = scalar_select %p639, %s638, 3
      %s641 = smul.addr %s640, 8
      %s642 = scalar_lea.vmem %s4, %s641
      %p643 = pneg %p161
      %p644 = pneg %p158
      %p645 = pneg %p182
      %p646 = pneg %p179
      %p647 = pneg %p203
      %p648 = pneg %p200
      %p649 = pneg %p224
      %p650 = pneg %p221
      %p651 = pneg %p245
      %p652 = pneg %p242
      %p653 = pneg %p266
      %p654 = pneg %p263
      %p655 = pneg %p287
      %p656 = pneg %p284
      %p657 = pneg %p308
      %p658 = pneg %p305
      %p659 = pneg %p329
      %p660 = pneg %p326
      %p661 = pneg %p350
      %p662 = pneg %p347
      %p663 = pneg %p371
      %p664 = pneg %p368
      %p665 = pneg %p392
      %p666 = pneg %p389
      %p667 = pneg %p413
      %p668 = pneg %p410
      %p669 = pneg %p434
      %p670 = pneg %p431
      %p671 = pneg %p455
      %p672 = pneg %p452
      %p673 = pneg %p476
      %p674 = pneg %p473
      %p675 = pneg %p497
      %p676 = pneg %p494
      %p677 = pneg %p518
      %p678 = pneg %p515
      %s679 = smul.u32 4, %s39
      %p680 = scmp.lt.s32.totalorder %s679, 3
      %s681 = scalar_select %p680, %s679, 3
      %s682 = smul.addr %s681, 8
      %s683 = scalar_lea.vmem %s0, %s682
      %s684 = smul.u32 4, %s39
      %p685 = scmp.lt.s32.totalorder %s39, 0
      %s686 = scalar_select %p685, %s39, 0
      %s687 = scalar_lea.vmem %s1, %s686
      %s688 = smul.u32 4, %s39
      %p689 = scmp.lt.s32.totalorder %s688, 3
      %s690 = scalar_select %p689, %s688, 3
      %s691 = smul.addr %s690, 8
      %s692 = scalar_lea.vmem %s4, %s691
      %s693 = smul.u32 4, %s39
      %p694 = scmp.eq.s32.totalorder %s38, 0
      %p695 = scmp.eq.s32.totalorder %s39, 0
      %p696 = pnand %p694, %p695
      %p697 = pneg %p696
      // Predicated region
      $region105: #{tpu_custom_call.1} parent=103 // pred_check
        _
      $region106: #{tpu_custom_call.1} parent=103 // pred_check_branch
        %699 = sbr.rel (%p696) target = $region108
      $region107: #{tpu_custom_call.1} parent=103 // pred_region
        %vm700 = vcmask 261120
        %701 = vst.msk [vmem:[#allocation2] sm:$0xff] %vm700, 0.0
        %702 = vst.msk [vmem:[#allocation2 + $0x8] sm:$0xff] %vm700, 0.0
      $region108: #{tpu_custom_call.1} parent=103 // pred_fallthru
        _
      %p703 = scmp.eq.s32.totalorder %s38, 1
      %p704 = pnand %p703, %p695
      %p705 = pneg %p704
      // Predicated region
      $region109: #{tpu_custom_call.1} parent=103 // pred_check
        _
      $region110: #{tpu_custom_call.1} parent=103 // pred_check_branch
        %707 = sbr.rel (%p704) target = $region112
      $region111: #{tpu_custom_call.1} parent=103 // pred_region
        %vm708 = vcmask 130048
        %709 = vst.msk [vmem:[#allocation3] sm:$0xff] %vm708, 0.0
        %710 = vst.msk [vmem:[#allocation3 + $0x8] sm:$0xff] %vm708, 0.0
      $region112: #{tpu_custom_call.1} parent=103 // pred_fallthru
        _
      %v711 = vld [vmem:[%s683] sm:$0xff]
      %v712 = vld [vmem:[%s683 + $0x8] sm:$0xff]
      %v713 = vld [vmem:[%s683 + $0x10] sm:$0xff]
      %v714 = vld [vmem:[%s683 + $0x18] sm:$0xff]
      %v715 = vld [vmem:[%s687] sm:$0x1]
      %v716 = vlaneseq
      %v717 = vand.u32 %v716, 127
      %718 = vset.pattern.permute.xlu0 0
      %719 = vperm.xlu0 %718, %v711
      %v720 = vpop.permute.xlu0 %719
      %721 = vset.pattern.permute.xlu0 0
      %722 = vperm.xlu0 %721, %v712
      %v723 = vpop.permute.xlu0 %722
      %724 = vset.pattern.permute.xlu0 0
      %725 = vperm.xlu0 %724, %v713
      %v726 = vpop.permute.xlu0 %725
      %727 = vset.pattern.permute.xlu0 0
      %728 = vperm.xlu0 %727, %v714
      %v729 = vpop.permute.xlu0 %728
      %vm730 = vcmp.eq.s32.totalorder %v717, %v720
      %vm731 = vcmp.eq.s32.totalorder %v717, %v723
      %vm732 = vcmp.eq.s32.totalorder %v717, %v726
      %vm733 = vcmp.eq.s32.totalorder %v717, %v729
      %v734 = vsel %vm730, 1, 0
      %v735 = vsel %vm731, 1, 0
      %v736 = vsel %vm732, 1, 0
      %v737 = vsel %vm733, 1, 0
      %v738 = vcvt.s32.f32 %v734
      %v739 = vcvt.s32.f32 %v735
      %v740 = vcvt.s32.f32 %v736
      %v741 = vcvt.s32.f32 %v737
      %v742 = vlaneseq
      %v743 = vshrl.u32 %v742, 7
      %v744 = vadd.s32 %v743, 8
      %v745 = vlaneseq
      %v746 = vshrl.u32 %v745, 7
      %v747 = vsub.s32 0, %v746
      %v748 = vrot.slane %v715, %v747
      %vm749 = vcmp.eq.s32.totalorder %v743, %v748
      %vm750 = vcmp.eq.s32.totalorder %v744, %v748
      %v751 = vsel %vm749, 1, 0
      %v752 = vsel %vm750, 1, 0
      %v753 = vcvt.s32.f32 %v751
      %v754 = vcvt.s32.f32 %v752
      // Predicated region
      $region113: #{tpu_custom_call.1} parent=103 // pred_check
        %p755 = pneg %p694
      $region114: #{tpu_custom_call.1} parent=103 // pred_check_branch
        %757 = sbr.rel (%p755) target = $region116
      $region115: #{tpu_custom_call.1} parent=103 // pred_region
        %v758 = vld [vmem:[%s692] sm:$0xff]
        %v759 = vld [vmem:[%s692 + $0x8] sm:$0xff]
        %v760 = vld [vmem:[%s692 + $0x10] sm:$0xff]
        %v761 = vld [vmem:[%s692 + $0x18] sm:$0xff]
        %v762 = vld [vmem:[%s5] sm:$0xf]
        %v763 = vld [vmem:[%s6] sm:$0x1]
        %v765 = vlaneseq
        %v766 = vshrl.u32 %v765, 7
        %v767 = vsub.s32 0, %v766
        %v768 = vrot.slane %v763, %v767
        %vm770 = vcmask 31744
        %v772 = vsel %vm770, %v758, 0
        %v775 = vsel %vm770, %v759, 0
        %v778 = vsel %vm770, %v760, 0
        %v781 = vsel %vm770, %v761, 0
        %vm783 = vcmask 1043456
        %v785 = vsel %vm783, %v762, 0
        %787 = vmatprep.subr.mxu0 0.0
        %788 = vmatpush1.msra.mxu0 %v785
        %789 = vmatprep.subr.mxu0 0.0
        %790 = vmatpush1.msra.mxu0 0.0
        %791 = vmatprep.subr.mxu0 0.0
        %792 = vmatpush1.msra.mxu0 0.0
        %793 = vmatprep.subr.mxu0 0.0
        %794 = vmatpush1.msra.mxu0 0.0
        %795 = vmatprep.subr.mxu0 0.0
        %796 = vmatpush1.msra.mxu0 0.0
        %797 = vmatprep.subr.mxu0 0.0
        %798 = vmatpush1.msra.mxu0 0.0
        %799 = vmatprep.subr.mxu0 0.0
        %800 = vmatpush1.msra.mxu0 0.0
        %801 = vmatprep.subr.mxu0 0.0
        %802 = vmatpush1.msra.mxu0 0.0
        %803 = vmatprep.subr.mxu0 0.0
        %804 = vmatpush1.msra.mxu0 0.0
        %805 = vmatprep.subr.mxu0 0.0
        %806 = vmatpush1.msra.mxu0 0.0
        %807 = vmatprep.subr.mxu0 0.0
        %808 = vmatpush1.msra.mxu0 0.0
        %809 = vmatprep.subr.mxu0 0.0
        %810 = vmatpush1.msra.mxu0 0.0
        %811 = vmatprep.subr.mxu0 0.0
        %812 = vmatpush1.msra.mxu0 0.0
        %813 = vmatprep.subr.mxu0 0.0
        %814 = vmatpush1.msra.mxu0 0.0
        %815 = vmatprep.subr.mxu0 0.0
        %816 = vmatpush1.msra.mxu0 0.0
        %817 = vmatprep.subr.mxu0 0.0
        %818 = vmatpush1.msra.mxu0 0.0
        %819 = vmatprep.subr.mxu0 0.0
        %820 = vmatpush1.msra.mxu0 0.0
        %821 = vmatprep.subr.mxu0 0.0
        %822 = vmatpush1.msra.mxu0 0.0
        %823 = vmatprep.subr.mxu0 0.0
        %824 = vmatpush1.msra.mxu0 0.0
        %825 = vmatprep.subr.mxu0 0.0
        %826 = vmatpush1.msra.mxu0 0.0
        %827 = vmatprep.subr.mxu0 0.0
        %828 = vmatpush1.msra.mxu0 0.0
        %829 = vmatprep.subr.mxu0 0.0
        %830 = vmatpush1.msra.mxu0 0.0
        %831 = vmatprep.subr.mxu0 0.0
        %832 = vmatpush1.msra.mxu0 0.0
        %833 = vmatprep.subr.mxu0 0.0
        %834 = vmatpush1.msra.mxu0 0.0
        %835 = vmatprep.subr.mxu0 0.0
        %836 = vmatpush1.msra.mxu0 0.0
        %837 = vmatprep.subr.mxu0 0.0
        %838 = vmatpush1.msra.mxu0 0.0
        %839 = vmatprep.subr.mxu0 0.0
        %840 = vmatpush1.msra.mxu0 0.0
        %841 = vmatprep.subr.mxu0 0.0
        %842 = vmatpush1.msra.mxu0 0.0
        %843 = vmatprep.subr.mxu0 0.0
        %844 = vmatpush1.msra.mxu0 0.0
        %845 = vmatprep.subr.mxu0 0.0
        %846 = vmatpush1.msra.mxu0 0.0
        %847 = vmatprep.subr.mxu0 0.0
        %848 = vmatpush1.msra.mxu0 0.0
        %849 = vmatprep.subr.mxu0 0.0
        %850 = vmatpush1.msra.mxu0 0.0
        %851 = vmatprep.mubr.f32.mxu0 0.0
        %852 = vmatmul.mubr.f32.gmra.mrb[0].mxu0 %v772
        %v853 = vpop.f32.mrb[0].mxu0
        %v854 = vadd.f32 %v768, %v853
        %v855 = vpop.f32.mrb[0].mxu0
        %856 = vmatprep.mubr.f32.mxu0 0.0
        %857 = vmatmul.mubr.f32.gmra.mrb[0].mxu0 %v775
        %v858 = vpop.f32.mrb[0].mxu0
        %v859 = vadd.f32 %v768, %v858
        %v860 = vpop.f32.mrb[0].mxu0
        %861 = vmatprep.mubr.f32.mxu0 0.0
        %862 = vmatmul.mubr.f32.gmra.mrb[0].mxu0 %v778
        %v863 = vpop.f32.mrb[0].mxu0
        %v864 = vadd.f32 %v768, %v863
        %v865 = vpop.f32.mrb[0].mxu0
        %866 = vmatprep.mubr.f32.mxu0 0.0
        %867 = vmatmul.mubr.f32.gmra.mrb[0].mxu0 %v781
        %v868 = vpop.f32.mrb[0].mxu0
        %v869 = vadd.f32 %v768, %v868
        %v870 = vpop.f32.mrb[0].mxu0
        %871 = vdwg.mxu0
        %v872 = vmax.f32 %v854, 0.0
        %v873 = vmax.f32 %v859, 0.0
        %v874 = vmax.f32 %v864, 0.0
        %v875 = vmax.f32 %v869, 0.0
        %v876 = vld [vmem:[%s3] sm:$0xff]
        %v877 = vld [vmem:[%s3 + $0x8] sm:$0xff]
        %vm878 = vcmask 130048
        %v880 = vsel %vm878, %v738, 0
        %v883 = vsel %vm878, %v739, 0
        %v886 = vsel %vm878, %v740, 0
        %v889 = vsel %vm878, %v741, 0
        %891 = vmatprep.subr.mxu0 0.0
        %892 = vmatpush1.msra.mxu0 %v876
        %893 = vmatprep.subr.mxu0 0.0
        %894 = vmatpush1.msra.mxu0 %v877
        %895 = vmatprep.subr.mxu0 0.0
        %896 = vmatpush1.msra.mxu0 0.0
        %897 = vmatprep.subr.mxu0 0.0
        %898 = vmatpush1.msra.mxu0 0.0
        %899 = vmatprep.subr.mxu0 0.0
        %900 = vmatpush1.msra.mxu0 0.0
        %901 = vmatprep.subr.mxu0 0.0
        %902 = vmatpush1.msra.mxu0 0.0
        %903 = vmatprep.subr.mxu0 0.0
        %904 = vmatpush1.msra.mxu0 0.0
        %905 = vmatprep.subr.mxu0 0.0
        %906 = vmatpush1.msra.mxu0 0.0
        %907 = vmatprep.subr.mxu0 0.0
        %908 = vmatpush1.msra.mxu0 0.0
        %909 = vmatprep.subr.mxu0 0.0
        %910 = vmatpush1.msra.mxu0 0.0
        %911 = vmatprep.subr.mxu0 0.0
        %912 = vmatpush1.msra.mxu0 0.0
        %913 = vmatprep.subr.mxu0 0.0
        %914 = vmatpush1.msra.mxu0 0.0
        %915 = vmatprep.subr.mxu0 0.0
        %916 = vmatpush1.msra.mxu0 0.0
        %917 = vmatprep.subr.mxu0 0.0
        %918 = vmatpush1.msra.mxu0 0.0
        %919 = vmatprep.subr.mxu0 0.0
        %920 = vmatpush1.msra.mxu0 0.0
        %921 = vmatprep.subr.mxu0 0.0
        %922 = vmatpush1.msra.mxu0 0.0
        %923 = vmatprep.subr.mxu0 0.0
        %924 = vmatpush1.msra.mxu0 0.0
        %925 = vmatprep.subr.mxu0 0.0
        %926 = vmatpush1.msra.mxu0 0.0
        %927 = vmatprep.subr.mxu0 0.0
        %928 = vmatpush1.msra.mxu0 0.0
        %929 = vmatprep.subr.mxu0 0.0
        %930 = vmatpush1.msra.mxu0 0.0
        %931 = vmatprep.subr.mxu0 0.0
        %932 = vmatpush1.msra.mxu0 0.0
        %933 = vmatprep.subr.mxu0 0.0
        %934 = vmatpush1.msra.mxu0 0.0
        %935 = vmatprep.subr.mxu0 0.0
        %936 = vmatpush1.msra.mxu0 0.0
        %937 = vmatprep.subr.mxu0 0.0
        %938 = vmatpush1.msra.mxu0 0.0
        %939 = vmatprep.subr.mxu0 0.0
        %940 = vmatpush1.msra.mxu0 0.0
        %941 = vmatprep.subr.mxu0 0.0
        %942 = vmatpush1.msra.mxu0 0.0
        %943 = vmatprep.subr.mxu0 0.0
        %944 = vmatpush1.msra.mxu0 0.0
        %945 = vmatprep.subr.mxu0 0.0
        %946 = vmatpush1.msra.mxu0 0.0
        %947 = vmatprep.subr.mxu0 0.0
        %948 = vmatpush1.msra.mxu0 0.0
        %949 = vmatprep.subr.mxu0 0.0
        %950 = vmatpush1.msra.mxu0 0.0
        %951 = vmatprep.subr.mxu0 0.0
        %952 = vmatpush1.msra.mxu0 0.0
        %953 = vmatprep.subr.mxu0 0.0
        %954 = vmatpush1.msra.mxu0 0.0
        %955 = vmatprep.mubr.f32.mxu0 0.0
        %956 = vmatmul.mubr.f32.gmra.mrb[0].mxu0 %v880
        %v957 = vpop.f32.mrb[0].mxu0
        %v958 = vadd.f32 0.0, %v957
        %v959 = vpop.f32.mrb[0].mxu0
        %960 = vmatprep.mubr.f32.mxu0 0.0
        %961 = vmatmul.mubr.f32.gmra.mrb[0].mxu0 %v883
        %v962 = vpop.f32.mrb[0].mxu0
        %v963 = vadd.f32 0.0, %v962
        %v964 = vpop.f32.mrb[0].mxu0
        %965 = vmatprep.mubr.f32.mxu0 0.0
        %966 = vmatmul.mubr.f32.gmra.mrb[0].mxu0 %v886
        %v967 = vpop.f32.mrb[0].mxu0
        %v968 = vadd.f32 0.0, %v967
        %v969 = vpop.f32.mrb[0].mxu0
        %970 = vmatprep.mubr.f32.mxu0 0.0
        %971 = vmatmul.mubr.f32.gmra.mrb[0].mxu0 %v889
        %v972 = vpop.f32.mrb[0].mxu0
        %v973 = vadd.f32 0.0, %v972
        %v974 = vpop.f32.mrb[0].mxu0
        %975 = vdwg.mxu0
        %v976 = vld [vmem:[%s7] sm:$0xff]
        %v977 = vld [vmem:[%s7 + $0x8] sm:$0xff]
        %v978 = vld [vmem:[%s7 + $0x10] sm:$0xff]
        %v979 = vld [vmem:[%s7 + $0x18] sm:$0xff]
        %v980 = vld [vmem:[%s8] sm:$0x1]
        %v982 = vlaneseq
        %v983 = vshrl.u32 %v982, 7
        %v984 = vsub.s32 0, %v983
        %v985 = vrot.slane %v980, %v984
        %vm987 = vcmask 261120
        %v989 = vsel %vm987, %v872, 0
        %v992 = vsel %vm987, %v873, 0
        %v995 = vsel %vm987, %v874, 0
        %v998 = vsel %vm987, %v875, 0
        %1000 = vmatprep.subr.mxu0 0.0
        %1001 = vmatpush1.msra.mxu0 %v976
        %1002 = vmatprep.subr.mxu0 0.0
        %1003 = vmatpush1.msra.mxu0 %v977
        %1004 = vmatprep.subr.mxu0 0.0
        %1005 = vmatpush1.msra.mxu0 %v978
        %1006 = vmatprep.subr.mxu0 0.0
        %1007 = vmatpush1.msra.mxu0 %v979
        %1008 = vmatprep.subr.mxu0 0.0
        %1009 = vmatpush1.msra.mxu0 0.0
        %1010 = vmatprep.subr.mxu0 0.0
        %1011 = vmatpush1.msra.mxu0 0.0
        %1012 = vmatprep.subr.mxu0 0.0
        %1013 = vmatpush1.msra.mxu0 0.0
        %1014 = vmatprep.subr.mxu0 0.0
        %1015 = vmatpush1.msra.mxu0 0.0
        %1016 = vmatprep.subr.mxu0 0.0
        %1017 = vmatpush1.msra.mxu0 0.0
        %1018 = vmatprep.subr.mxu0 0.0
        %1019 = vmatpush1.msra.mxu0 0.0
        %1020 = vmatprep.subr.mxu0 0.0
        %1021 = vmatpush1.msra.mxu0 0.0
        %1022 = vmatprep.subr.mxu0 0.0
        %1023 = vmatpush1.msra.mxu0 0.0
        %1024 = vmatprep.subr.mxu0 0.0
        %1025 = vmatpush1.msra.mxu0 0.0
        %1026 = vmatprep.subr.mxu0 0.0
        %1027 = vmatpush1.msra.mxu0 0.0
        %1028 = vmatprep.subr.mxu0 0.0
        %1029 = vmatpush1.msra.mxu0 0.0
        %1030 = vmatprep.subr.mxu0 0.0
        %1031 = vmatpush1.msra.mxu0 0.0
        %1032 = vmatprep.subr.mxu0 0.0
        %1033 = vmatpush1.msra.mxu0 0.0
        %1034 = vmatprep.subr.mxu0 0.0
        %1035 = vmatpush1.msra.mxu0 0.0
        %1036 = vmatprep.subr.mxu0 0.0
        %1037 = vmatpush1.msra.mxu0 0.0
        %1038 = vmatprep.subr.mxu0 0.0
        %1039 = vmatpush1.msra.mxu0 0.0
        %1040 = vmatprep.subr.mxu0 0.0
        %1041 = vmatpush1.msra.mxu0 0.0
        %1042 = vmatprep.subr.mxu0 0.0
        %1043 = vmatpush1.msra.mxu0 0.0
        %1044 = vmatprep.subr.mxu0 0.0
        %1045 = vmatpush1.msra.mxu0 0.0
        %1046 = vmatprep.subr.mxu0 0.0
        %1047 = vmatpush1.msra.mxu0 0.0
        %1048 = vmatprep.subr.mxu0 0.0
        %1049 = vmatpush1.msra.mxu0 0.0
        %1050 = vmatprep.subr.mxu0 0.0
        %1051 = vmatpush1.msra.mxu0 0.0
        %1052 = vmatprep.subr.mxu0 0.0
        %1053 = vmatpush1.msra.mxu0 0.0
        %1054 = vmatprep.subr.mxu0 0.0
        %1055 = vmatpush1.msra.mxu0 0.0
        %1056 = vmatprep.subr.mxu0 0.0
        %1057 = vmatpush1.msra.mxu0 0.0
        %1058 = vmatprep.subr.mxu0 0.0
        %1059 = vmatpush1.msra.mxu0 0.0
        %1060 = vmatprep.subr.mxu0 0.0
        %1061 = vmatpush1.msra.mxu0 0.0
        %1062 = vmatprep.subr.mxu0 0.0
        %1063 = vmatpush1.msra.mxu0 0.0
        %1064 = vmatprep.mubr.f32.mxu0 0.0
        %1065 = vmatmul.mubr.f32.gmra.mrb[0].mxu0 %v989
        %v1066 = vpop.f32.mrb[0].mxu0
        %v1067 = vadd.f32 %v985, %v1066
        %v1068 = vpop.f32.mrb[0].mxu0
        %1069 = vmatprep.mubr.f32.mxu0 0.0
        %1070 = vmatmul.mubr.f32.gmra.mrb[0].mxu0 %v992
        %v1071 = vpop.f32.mrb[0].mxu0
        %v1072 = vadd.f32 %v985, %v1071
        %v1073 = vpop.f32.mrb[0].mxu0
        %1074 = vmatprep.mubr.f32.mxu0 0.0
        %1075 = vmatmul.mubr.f32.gmra.mrb[0].mxu0 %v995
        %v1076 = vpop.f32.mrb[0].mxu0
        %v1077 = vadd.f32 %v985, %v1076
        %v1078 = vpop.f32.mrb[0].mxu0
        %1079 = vmatprep.mubr.f32.mxu0 0.0
        %1080 = vmatmul.mubr.f32.gmra.mrb[0].mxu0 %v998
        %v1081 = vpop.f32.mrb[0].mxu0
        %v1082 = vadd.f32 %v985, %v1081
        %v1083 = vpop.f32.mrb[0].mxu0
        %1084 = vdwg.mxu0
        %1086 = vset.pattern.permute.xlu0 0
        %1087 = vperm.xlu0 %1086, %v958
        %v1088 = vpop.permute.xlu0 %1087
        %1091 = vset.pattern.permute.xlu0 0
        %1092 = vperm.xlu0 %1091, %v963
        %v1093 = vpop.permute.xlu0 %1092
        %1096 = vset.pattern.permute.xlu0 0
        %1097 = vperm.xlu0 %1096, %v968
        %v1098 = vpop.permute.xlu0 %1097
        %1101 = vset.pattern.permute.xlu0 0
        %1102 = vperm.xlu0 %1101, %v973
        %v1103 = vpop.permute.xlu0 %1102
        %v1105 = vmul.f32 %v1088, %v1067
        %v1106 = vmul.f32 %v1093, %v1072
        %v1107 = vmul.f32 %v1098, %v1077
        %v1108 = vmul.f32 %v1103, %v1082
        %v1109 = vadd.f32 %v1105, 0.0
        %v1110 = vadd.f32 %v1106, 0.0
        %v1111 = vadd.f32 %v1107, 0.0
        %v1112 = vadd.f32 %v1108, 0.0
        %s1113 = scalar_lea.vmem %s7, 32
        %v1114 = vld [vmem:[%s1113] sm:$0xff]
        %v1115 = vld [vmem:[%s1113 + $0x8] sm:$0xff]
        %v1116 = vld [vmem:[%s1113 + $0x10] sm:$0xff]
        %v1117 = vld [vmem:[%s1113 + $0x18] sm:$0xff]
        %s1118 = scalar_lea.vmem %s8, 1
        %v1119 = vld [vmem:[%s1118] sm:$0x1]
        %v1121 = vlaneseq
        %v1122 = vshrl.u32 %v1121, 7
        %v1123 = vsub.s32 0, %v1122
        %v1124 = vrot.slane %v1119, %v1123
        %1126 = vmatprep.subr.mxu0 0.0
        %1127 = vmatpush1.msra.mxu0 %v1114
        %1128 = vmatprep.subr.mxu0 0.0
        %1129 = vmatpush1.msra.mxu0 %v1115
        %1130 = vmatprep.subr.mxu0 0.0
        %1131 = vmatpush1.msra.mxu0 %v1116
        %1132 = vmatprep.subr.mxu0 0.0
        %1133 = vmatpush1.msra.mxu0 %v1117
        %1134 = vmatprep.subr.mxu0 0.0
        %1135 = vmatpush1.msra.mxu0 0.0
        %1136 = vmatprep.subr.mxu0 0.0
        %1137 = vmatpush1.msra.mxu0 0.0
        %1138 = vmatprep.subr.mxu0 0.0
        %1139 = vmatpush1.msra.mxu0 0.0
        %1140 = vmatprep.subr.mxu0 0.0
        %1141 = vmatpush1.msra.mxu0 0.0
        %1142 = vmatprep.subr.mxu0 0.0
        %1143 = vmatpush1.msra.mxu0 0.0
        %1144 = vmatprep.subr.mxu0 0.0
        %1145 = vmatpush1.msra.mxu0 0.0
        %1146 = vmatprep.subr.mxu0 0.0
        %1147 = vmatpush1.msra.mxu0 0.0
        %1148 = vmatprep.subr.mxu0 0.0
        %1149 = vmatpush1.msra.mxu0 0.0
        %1150 = vmatprep.subr.mxu0 0.0
        %1151 = vmatpush1.msra.mxu0 0.0
        %1152 = vmatprep.subr.mxu0 0.0
        %1153 = vmatpush1.msra.mxu0 0.0
        %1154 = vmatprep.subr.mxu0 0.0
        %1155 = vmatpush1.msra.mxu0 0.0
        %1156 = vmatprep.subr.mxu0 0.0
        %1157 = vmatpush1.msra.mxu0 0.0
        %1158 = vmatprep.subr.mxu0 0.0
        %1159 = vmatpush1.msra.mxu0 0.0
        %1160 = vmatprep.subr.mxu0 0.0
        %1161 = vmatpush1.msra.mxu0 0.0
        %1162 = vmatprep.subr.mxu0 0.0
        %1163 = vmatpush1.msra.mxu0 0.0
        %1164 = vmatprep.subr.mxu0 0.0
        %1165 = vmatpush1.msra.mxu0 0.0
        %1166 = vmatprep.subr.mxu0 0.0
        %1167 = vmatpush1.msra.mxu0 0.0
        %1168 = vmatprep.subr.mxu0 0.0
        %1169 = vmatpush1.msra.mxu0 0.0
        %1170 = vmatprep.subr.mxu0 0.0
        %1171 = vmatpush1.msra.mxu0 0.0
        %1172 = vmatprep.subr.mxu0 0.0
        %1173 = vmatpush1.msra.mxu0 0.0
        %1174 = vmatprep.subr.mxu0 0.0
        %1175 = vmatpush1.msra.mxu0 0.0
        %1176 = vmatprep.subr.mxu0 0.0
        %1177 = vmatpush1.msra.mxu0 0.0
        %1178 = vmatprep.subr.mxu0 0.0
        %1179 = vmatpush1.msra.mxu0 0.0
        %1180 = vmatprep.subr.mxu0 0.0
        %1181 = vmatpush1.msra.mxu0 0.0
        %1182 = vmatprep.subr.mxu0 0.0
        %1183 = vmatpush1.msra.mxu0 0.0
        %1184 = vmatprep.subr.mxu0 0.0
        %1185 = vmatpush1.msra.mxu0 0.0
        %1186 = vmatprep.subr.mxu0 0.0
        %1187 = vmatpush1.msra.mxu0 0.0
        %1188 = vmatprep.subr.mxu0 0.0
        %1189 = vmatpush1.msra.mxu0 0.0
        %1190 = vmatprep.mubr.f32.mxu0 0.0
        %1191 = vmatmul.mubr.f32.gmra.mrb[0].mxu0 %v989
        %v1192 = vpop.f32.mrb[0].mxu0
        %v1193 = vadd.f32 %v1124, %v1192
        %v1194 = vpop.f32.mrb[0].mxu0
        %1195 = vmatprep.mubr.f32.mxu0 0.0
        %1196 = vmatmul.mubr.f32.gmra.mrb[0].mxu0 %v992
        %v1197 = vpop.f32.mrb[0].mxu0
        %v1198 = vadd.f32 %v1124, %v1197
        %v1199 = vpop.f32.mrb[0].mxu0
        %1200 = vmatprep.mubr.f32.mxu0 0.0
        %1201 = vmatmul.mubr.f32.gmra.mrb[0].mxu0 %v995
        %v1202 = vpop.f32.mrb[0].mxu0
        %v1203 = vadd.f32 %v1124, %v1202
        %v1204 = vpop.f32.mrb[0].mxu0
        %1205 = vmatprep.mubr.f32.mxu0 0.0
        %1206 = vmatmul.mubr.f32.gmra.mrb[0].mxu0 %v998
        %v1207 = vpop.f32.mrb[0].mxu0
        %v1208 = vadd.f32 %v1124, %v1207
        %v1209 = vpop.f32.mrb[0].mxu0
        %1210 = vdwg.mxu0
        %1211 = vset.pattern.permute.xlu0 1
        %1212 = vperm.xlu0 %1211, %v958
        %v1213 = vpop.permute.xlu0 %1212
        %1215 = vset.pattern.permute.xlu0 1
        %1216 = vperm.xlu0 %1215, %v963
        %v1217 = vpop.permute.xlu0 %1216
        %1219 = vset.pattern.permute.xlu0 1
        %1220 = vperm.xlu0 %1219, %v968
        %v1221 = vpop.permute.xlu0 %1220
        %1223 = vset.pattern.permute.xlu0 1
        %1224 = vperm.xlu0 %1223, %v973
        %v1225 = vpop.permute.xlu0 %1224
        %v1227 = vmul.f32 %v1213, %v1193
        %v1228 = vmul.f32 %v1217, %v1198
        %v1229 = vmul.f32 %v1221, %v1203
        %v1230 = vmul.f32 %v1225, %v1208
        %v1231 = vadd.f32 %v1109, %v1227
        %v1232 = vadd.f32 %v1110, %v1228
        %v1233 = vadd.f32 %v1111, %v1229
        %v1234 = vadd.f32 %v1112, %v1230
        %s1235 = scalar_lea.vmem %s7, 64
        %v1236 = vld [vmem:[%s1235] sm:$0xff]
        %v1237 = vld [vmem:[%s1235 + $0x8] sm:$0xff]
        %v1238 = vld [vmem:[%s1235 + $0x10] sm:$0xff]
        %v1239 = vld [vmem:[%s1235 + $0x18] sm:$0xff]
        %s1240 = scalar_lea.vmem %s8, 2
        %v1241 = vld [vmem:[%s1240] sm:$0x1]
        %v1243 = vlaneseq
        %v1244 = vshrl.u32 %v1243, 7
        %v1245 = vsub.s32 0, %v1244
        %v1246 = vrot.slane %v1241, %v1245
        %1248 = vmatprep.subr.mxu0 0.0
        %1249 = vmatpush1.msra.mxu0 %v1236
        %1250 = vmatprep.subr.mxu0 0.0
        %1251 = vmatpush1.msra.mxu0 %v1237
        %1252 = vmatprep.subr.mxu0 0.0
        %1253 = vmatpush1.msra.mxu0 %v1238
        %1254 = vmatprep.subr.mxu0 0.0
        %1255 = vmatpush1.msra.mxu0 %v1239
        %1256 = vmatprep.subr.mxu0 0.0
        %1257 = vmatpush1.msra.mxu0 0.0
        %1258 = vmatprep.subr.mxu0 0.0
        %1259 = vmatpush1.msra.mxu0 0.0
        %1260 = vmatprep.subr.mxu0 0.0
        %1261 = vmatpush1.msra.mxu0 0.0
        %1262 = vmatprep.subr.mxu0 0.0
        %1263 = vmatpush1.msra.mxu0 0.0
        %1264 = vmatprep.subr.mxu0 0.0
        %1265 = vmatpush1.msra.mxu0 0.0
        %1266 = vmatprep.subr.mxu0 0.0
        %1267 = vmatpush1.msra.mxu0 0.0
        %1268 = vmatprep.subr.mxu0 0.0
        %1269 = vmatpush1.msra.mxu0 0.0
        %1270 = vmatprep.subr.mxu0 0.0
        %1271 = vmatpush1.msra.mxu0 0.0
        %1272 = vmatprep.subr.mxu0 0.0
        %1273 = vmatpush1.msra.mxu0 0.0
        %1274 = vmatprep.subr.mxu0 0.0
        %1275 = vmatpush1.msra.mxu0 0.0
        %1276 = vmatprep.subr.mxu0 0.0
        %1277 = vmatpush1.msra.mxu0 0.0
        %1278 = vmatprep.subr.mxu0 0.0
        %1279 = vmatpush1.msra.mxu0 0.0
        %1280 = vmatprep.subr.mxu0 0.0
        %1281 = vmatpush1.msra.mxu0 0.0
        %1282 = vmatprep.subr.mxu0 0.0
        %1283 = vmatpush1.msra.mxu0 0.0
        %1284 = vmatprep.subr.mxu0 0.0
        %1285 = vmatpush1.msra.mxu0 0.0
        %1286 = vmatprep.subr.mxu0 0.0
        %1287 = vmatpush1.msra.mxu0 0.0
        %1288 = vmatprep.subr.mxu0 0.0
        %1289 = vmatpush1.msra.mxu0 0.0
        %1290 = vmatprep.subr.mxu0 0.0
        %1291 = vmatpush1.msra.mxu0 0.0
        %1292 = vmatprep.subr.mxu0 0.0
        %1293 = vmatpush1.msra.mxu0 0.0
        %1294 = vmatprep.subr.mxu0 0.0
        %1295 = vmatpush1.msra.mxu0 0.0
        %1296 = vmatprep.subr.mxu0 0.0
        %1297 = vmatpush1.msra.mxu0 0.0
        %1298 = vmatprep.subr.mxu0 0.0
        %1299 = vmatpush1.msra.mxu0 0.0
        %1300 = vmatprep.subr.mxu0 0.0
        %1301 = vmatpush1.msra.mxu0 0.0
        %1302 = vmatprep.subr.mxu0 0.0
        %1303 = vmatpush1.msra.mxu0 0.0
        %1304 = vmatprep.subr.mxu0 0.0
        %1305 = vmatpush1.msra.mxu0 0.0
        %1306 = vmatprep.subr.mxu0 0.0
        %1307 = vmatpush1.msra.mxu0 0.0
        %1308 = vmatprep.subr.mxu0 0.0
        %1309 = vmatpush1.msra.mxu0 0.0
        %1310 = vmatprep.subr.mxu0 0.0
        %1311 = vmatpush1.msra.mxu0 0.0
        %1312 = vmatprep.mubr.f32.mxu0 0.0
        %1313 = vmatmul.mubr.f32.gmra.mrb[0].mxu0 %v989
        %v1314 = vpop.f32.mrb[0].mxu0
        %v1315 = vadd.f32 %v1246, %v1314
        %v1316 = vpop.f32.mrb[0].mxu0
        %1317 = vmatprep.mubr.f32.mxu0 0.0
        %1318 = vmatmul.mubr.f32.gmra.mrb[0].mxu0 %v992
        %v1319 = vpop.f32.mrb[0].mxu0
        %v1320 = vadd.f32 %v1246, %v1319
        %v1321 = vpop.f32.mrb[0].mxu0
        %1322 = vmatprep.mubr.f32.mxu0 0.0
        %1323 = vmatmul.mubr.f32.gmra.mrb[0].mxu0 %v995
        %v1324 = vpop.f32.mrb[0].mxu0
        %v1325 = vadd.f32 %v1246, %v1324
        %v1326 = vpop.f32.mrb[0].mxu0
        %1327 = vmatprep.mubr.f32.mxu0 0.0
        %1328 = vmatmul.mubr.f32.gmra.mrb[0].mxu0 %v998
        %v1329 = vpop.f32.mrb[0].mxu0
        %v1330 = vadd.f32 %v1246, %v1329
        %v1331 = vpop.f32.mrb[0].mxu0
        %1332 = vdwg.mxu0
        %1333 = vset.pattern.permute.xlu0 2
        %1334 = vperm.xlu0 %1333, %v958
        %v1335 = vpop.permute.xlu0 %1334
        %1337 = vset.pattern.permute.xlu0 2
        %1338 = vperm.xlu0 %1337, %v963
        %v1339 = vpop.permute.xlu0 %1338
        %1341 = vset.pattern.permute.xlu0 2
        %1342 = vperm.xlu0 %1341, %v968
        %v1343 = vpop.permute.xlu0 %1342
        %1345 = vset.pattern.permute.xlu0 2
        %1346 = vperm.xlu0 %1345, %v973
        %v1347 = vpop.permute.xlu0 %1346
        %v1349 = vmul.f32 %v1335, %v1315
        %v1350 = vmul.f32 %v1339, %v1320
        %v1351 = vmul.f32 %v1343, %v1325
        %v1352 = vmul.f32 %v1347, %v1330
        %v1353 = vadd.f32 %v1231, %v1349
        %v1354 = vadd.f32 %v1232, %v1350
        %v1355 = vadd.f32 %v1233, %v1351
        %v1356 = vadd.f32 %v1234, %v1352
        %s1357 = scalar_lea.vmem %s7, 96
        %v1358 = vld [vmem:[%s1357] sm:$0xff]
        %v1359 = vld [vmem:[%s1357 + $0x8] sm:$0xff]
        %v1360 = vld [vmem:[%s1357 + $0x10] sm:$0xff]
        %v1361 = vld [vmem:[%s1357 + $0x18] sm:$0xff]
        %s1362 = scalar_lea.vmem %s8, 3
        %v1363 = vld [vmem:[%s1362] sm:$0x1]
        %v1365 = vlaneseq
        %v1366 = vshrl.u32 %v1365, 7
        %v1367 = vsub.s32 0, %v1366
        %v1368 = vrot.slane %v1363, %v1367
        %1370 = vmatprep.subr.mxu0 0.0
        %1371 = vmatpush1.msra.mxu0 %v1358
        %1372 = vmatprep.subr.mxu0 0.0
        %1373 = vmatpush1.msra.mxu0 %v1359
        %1374 = vmatprep.subr.mxu0 0.0
        %1375 = vmatpush1.msra.mxu0 %v1360
        %1376 = vmatprep.subr.mxu0 0.0
        %1377 = vmatpush1.msra.mxu0 %v1361
        %1378 = vmatprep.subr.mxu0 0.0
        %1379 = vmatpush1.msra.mxu0 0.0
        %1380 = vmatprep.subr.mxu0 0.0
        %1381 = vmatpush1.msra.mxu0 0.0
        %1382 = vmatprep.subr.mxu0 0.0
        %1383 = vmatpush1.msra.mxu0 0.0
        %1384 = vmatprep.subr.mxu0 0.0
        %1385 = vmatpush1.msra.mxu0 0.0
        %1386 = vmatprep.subr.mxu0 0.0
        %1387 = vmatpush1.msra.mxu0 0.0
        %1388 = vmatprep.subr.mxu0 0.0
        %1389 = vmatpush1.msra.mxu0 0.0
        %1390 = vmatprep.subr.mxu0 0.0
        %1391 = vmatpush1.msra.mxu0 0.0
        %1392 = vmatprep.subr.mxu0 0.0
        %1393 = vmatpush1.msra.mxu0 0.0
        %1394 = vmatprep.subr.mxu0 0.0
        %1395 = vmatpush1.msra.mxu0 0.0
        %1396 = vmatprep.subr.mxu0 0.0
        %1397 = vmatpush1.msra.mxu0 0.0
        %1398 = vmatprep.subr.mxu0 0.0
        %1399 = vmatpush1.msra.mxu0 0.0
        %1400 = vmatprep.subr.mxu0 0.0
        %1401 = vmatpush1.msra.mxu0 0.0
        %1402 = vmatprep.subr.mxu0 0.0
        %1403 = vmatpush1.msra.mxu0 0.0
        %1404 = vmatprep.subr.mxu0 0.0
        %1405 = vmatpush1.msra.mxu0 0.0
        %1406 = vmatprep.subr.mxu0 0.0
        %1407 = vmatpush1.msra.mxu0 0.0
        %1408 = vmatprep.subr.mxu0 0.0
        %1409 = vmatpush1.msra.mxu0 0.0
        %1410 = vmatprep.subr.mxu0 0.0
        %1411 = vmatpush1.msra.mxu0 0.0
        %1412 = vmatprep.subr.mxu0 0.0
        %1413 = vmatpush1.msra.mxu0 0.0
        %1414 = vmatprep.subr.mxu0 0.0
        %1415 = vmatpush1.msra.mxu0 0.0
        %1416 = vmatprep.subr.mxu0 0.0
        %1417 = vmatpush1.msra.mxu0 0.0
        %1418 = vmatprep.subr.mxu0 0.0
        %1419 = vmatpush1.msra.mxu0 0.0
        %1420 = vmatprep.subr.mxu0 0.0
        %1421 = vmatpush1.msra.mxu0 0.0
        %1422 = vmatprep.subr.mxu0 0.0
        %1423 = vmatpush1.msra.mxu0 0.0
        %1424 = vmatprep.subr.mxu0 0.0
        %1425 = vmatpush1.msra.mxu0 0.0
        %1426 = vmatprep.subr.mxu0 0.0
        %1427 = vmatpush1.msra.mxu0 0.0
        %1428 = vmatprep.subr.mxu0 0.0
        %1429 = vmatpush1.msra.mxu0 0.0
        %1430 = vmatprep.subr.mxu0 0.0
        %1431 = vmatpush1.msra.mxu0 0.0
        %1432 = vmatprep.subr.mxu0 0.0
        %1433 = vmatpush1.msra.mxu0 0.0
        %1434 = vmatprep.mubr.f32.mxu0 0.0
        %1435 = vmatmul.mubr.f32.gmra.mrb[0].mxu0 %v989
        %v1436 = vpop.f32.mrb[0].mxu0
        %v1437 = vadd.f32 %v1368, %v1436
        %v1438 = vpop.f32.mrb[0].mxu0
        %1439 = vmatprep.mubr.f32.mxu0 0.0
        %1440 = vmatmul.mubr.f32.gmra.mrb[0].mxu0 %v992
        %v1441 = vpop.f32.mrb[0].mxu0
        %v1442 = vadd.f32 %v1368, %v1441
        %v1443 = vpop.f32.mrb[0].mxu0
        %1444 = vmatprep.mubr.f32.mxu0 0.0
        %1445 = vmatmul.mubr.f32.gmra.mrb[0].mxu0 %v995
        %v1446 = vpop.f32.mrb[0].mxu0
        %v1447 = vadd.f32 %v1368, %v1446
        %v1448 = vpop.f32.mrb[0].mxu0
        %1449 = vmatprep.mubr.f32.mxu0 0.0
        %1450 = vmatmul.mubr.f32.gmra.mrb[0].mxu0 %v998
        %v1451 = vpop.f32.mrb[0].mxu0
        %v1452 = vadd.f32 %v1368, %v1451
        %v1453 = vpop.f32.mrb[0].mxu0
        %1454 = vdwg.mxu0
        %1455 = vset.pattern.permute.xlu0 3
        %1456 = vperm.xlu0 %1455, %v958
        %v1457 = vpop.permute.xlu0 %1456
        %1459 = vset.pattern.permute.xlu0 3
        %1460 = vperm.xlu0 %1459, %v963
        %v1461 = vpop.permute.xlu0 %1460
        %1463 = vset.pattern.permute.xlu0 3
        %1464 = vperm.xlu0 %1463, %v968
        %v1465 = vpop.permute.xlu0 %1464
        %1467 = vset.pattern.permute.xlu0 3
        %1468 = vperm.xlu0 %1467, %v973
        %v1469 = vpop.permute.xlu0 %1468
        %v1471 = vmul.f32 %v1457, %v1437
        %v1472 = vmul.f32 %v1461, %v1442
        %v1473 = vmul.f32 %v1465, %v1447
        %v1474 = vmul.f32 %v1469, %v1452
        %v1475 = vadd.f32 %v1353, %v1471
        %v1476 = vadd.f32 %v1354, %v1472
        %v1477 = vadd.f32 %v1355, %v1473
        %v1478 = vadd.f32 %v1356, %v1474
        %s1479 = scalar_lea.vmem %s7, 128
        %v1480 = vld [vmem:[%s1479] sm:$0xff]
        %v1481 = vld [vmem:[%s1479 + $0x8] sm:$0xff]
        %v1482 = vld [vmem:[%s1479 + $0x10] sm:$0xff]
        %v1483 = vld [vmem:[%s1479 + $0x18] sm:$0xff]
        %s1484 = scalar_lea.vmem %s8, 4
        %v1485 = vld [vmem:[%s1484] sm:$0x1]
        %v1487 = vlaneseq
        %v1488 = vshrl.u32 %v1487, 7
        %v1489 = vsub.s32 0, %v1488
        %v1490 = vrot.slane %v1485, %v1489
        %1492 = vmatprep.subr.mxu0 0.0
        %1493 = vmatpush1.msra.mxu0 %v1480
        %1494 = vmatprep.subr.mxu0 0.0
        %1495 = vmatpush1.msra.mxu0 %v1481
        %1496 = vmatprep.subr.mxu0 0.0
        %1497 = vmatpush1.msra.mxu0 %v1482
        %1498 = vmatprep.subr.mxu0 0.0
        %1499 = vmatpush1.msra.mxu0 %v1483
        %1500 = vmatprep.subr.mxu0 0.0
        %1501 = vmatpush1.msra.mxu0 0.0
        %1502 = vmatprep.subr.mxu0 0.0
        %1503 = vmatpush1.msra.mxu0 0.0
        %1504 = vmatprep.subr.mxu0 0.0
        %1505 = vmatpush1.msra.mxu0 0.0
        %1506 = vmatprep.subr.mxu0 0.0
        %1507 = vmatpush1.msra.mxu0 0.0
        %1508 = vmatprep.subr.mxu0 0.0
        %1509 = vmatpush1.msra.mxu0 0.0
        %1510 = vmatprep.subr.mxu0 0.0
        %1511 = vmatpush1.msra.mxu0 0.0
        %1512 = vmatprep.subr.mxu0 0.0
        %1513 = vmatpush1.msra.mxu0 0.0
        %1514 = vmatprep.subr.mxu0 0.0
        %1515 = vmatpush1.msra.mxu0 0.0
        %1516 = vmatprep.subr.mxu0 0.0
        %1517 = vmatpush1.msra.mxu0 0.0
        %1518 = vmatprep.subr.mxu0 0.0
        %1519 = vmatpush1.msra.mxu0 0.0
        %1520 = vmatprep.subr.mxu0 0.0
        %1521 = vmatpush1.msra.mxu0 0.0
        %1522 = vmatprep.subr.mxu0 0.0
        %1523 = vmatpush1.msra.mxu0 0.0
        %1524 = vmatprep.subr.mxu0 0.0
        %1525 = vmatpush1.msra.mxu0 0.0
        %1526 = vmatprep.subr.mxu0 0.0
        %1527 = vmatpush1.msra.mxu0 0.0
        %1528 = vmatprep.subr.mxu0 0.0
        %1529 = vmatpush1.msra.mxu0 0.0
        %1530 = vmatprep.subr.mxu0 0.0
        %1531 = vmatpush1.msra.mxu0 0.0
        %1532 = vmatprep.subr.mxu0 0.0
        %1533 = vmatpush1.msra.mxu0 0.0
        %1534 = vmatprep.subr.mxu0 0.0
        %1535 = vmatpush1.msra.mxu0 0.0
        %1536 = vmatprep.subr.mxu0 0.0
        %1537 = vmatpush1.msra.mxu0 0.0
        %1538 = vmatprep.subr.mxu0 0.0
        %1539 = vmatpush1.msra.mxu0 0.0
        %1540 = vmatprep.subr.mxu0 0.0
        %1541 = vmatpush1.msra.mxu0 0.0
        %1542 = vmatprep.subr.mxu0 0.0
        %1543 = vmatpush1.msra.mxu0 0.0
        %1544 = vmatprep.subr.mxu0 0.0
        %1545 = vmatpush1.msra.mxu0 0.0
        %1546 = vmatprep.subr.mxu0 0.0
        %1547 = vmatpush1.msra.mxu0 0.0
        %1548 = vmatprep.subr.mxu0 0.0
        %1549 = vmatpush1.msra.mxu0 0.0
        %1550 = vmatprep.subr.mxu0 0.0
        %1551 = vmatpush1.msra.mxu0 0.0
        %1552 = vmatprep.subr.mxu0 0.0
        %1553 = vmatpush1.msra.mxu0 0.0
        %1554 = vmatprep.subr.mxu0 0.0
        %1555 = vmatpush1.msra.mxu0 0.0
        %1556 = vmatprep.mubr.f32.mxu0 0.0
        %1557 = vmatmul.mubr.f32.gmra.mrb[0].mxu0 %v989
        %v1558 = vpop.f32.mrb[0].mxu0
        %v1559 = vadd.f32 %v1490, %v1558
        %v1560 = vpop.f32.mrb[0].mxu0
        %1561 = vmatprep.mubr.f32.mxu0 0.0
        %1562 = vmatmul.mubr.f32.gmra.mrb[0].mxu0 %v992
        %v1563 = vpop.f32.mrb[0].mxu0
        %v1564 = vadd.f32 %v1490, %v1563
        %v1565 = vpop.f32.mrb[0].mxu0
        %1566 = vmatprep.mubr.f32.mxu0 0.0
        %1567 = vmatmul.mubr.f32.gmra.mrb[0].mxu0 %v995
        %v1568 = vpop.f32.mrb[0].mxu0
        %v1569 = vadd.f32 %v1490, %v1568
        %v1570 = vpop.f32.mrb[0].mxu0
        %1571 = vmatprep.mubr.f32.mxu0 0.0
        %1572 = vmatmul.mubr.f32.gmra.mrb[0].mxu0 %v998
        %v1573 = vpop.f32.mrb[0].mxu0
        %v1574 = vadd.f32 %v1490, %v1573
        %v1575 = vpop.f32.mrb[0].mxu0
        %1576 = vdwg.mxu0
        %1577 = vset.pattern.permute.xlu0 4
        %1578 = vperm.xlu0 %1577, %v958
        %v1579 = vpop.permute.xlu0 %1578
        %1581 = vset.pattern.permute.xlu0 4
        %1582 = vperm.xlu0 %1581, %v963
        %v1583 = vpop.permute.xlu0 %1582
        %1585 = vset.pattern.permute.xlu0 4
        %1586 = vperm.xlu0 %1585, %v968
        %v1587 = vpop.permute.xlu0 %1586
        %1589 = vset.pattern.permute.xlu0 4
        %1590 = vperm.xlu0 %1589, %v973
        %v1591 = vpop.permute.xlu0 %1590
        %v1593 = vmul.f32 %v1579, %v1559
        %v1594 = vmul.f32 %v1583, %v1564
        %v1595 = vmul.f32 %v1587, %v1569
        %v1596 = vmul.f32 %v1591, %v1574
        %v1597 = vadd.f32 %v1475, %v1593
        %v1598 = vadd.f32 %v1476, %v1594
        %v1599 = vadd.f32 %v1477, %v1595
        %v1600 = vadd.f32 %v1478, %v1596
        %s1601 = scalar_lea.vmem %s7, 160
        %v1602 = vld [vmem:[%s1601] sm:$0xff]
        %v1603 = vld [vmem:[%s1601 + $0x8] sm:$0xff]
        %v1604 = vld [vmem:[%s1601 + $0x10] sm:$0xff]
        %v1605 = vld [vmem:[%s1601 + $0x18] sm:$0xff]
        %s1606 = scalar_lea.vmem %s8, 5
        %v1607 = vld [vmem:[%s1606] sm:$0x1]
        %v1609 = vlaneseq
        %v1610 = vshrl.u32 %v1609, 7
        %v1611 = vsub.s32 0, %v1610
        %v1612 = vrot.slane %v1607, %v1611
        %1614 = vmatprep.subr.mxu0 0.0
        %1615 = vmatpush1.msra.mxu0 %v1602
        %1616 = vmatprep.subr.mxu0 0.0
        %1617 = vmatpush1.msra.mxu0 %v1603
        %1618 = vmatprep.subr.mxu0 0.0
        %1619 = vmatpush1.msra.mxu0 %v1604
        %1620 = vmatprep.subr.mxu0 0.0
        %1621 = vmatpush1.msra.mxu0 %v1605
        %1622 = vmatprep.subr.mxu0 0.0
        %1623 = vmatpush1.msra.mxu0 0.0
        %1624 = vmatprep.subr.mxu0 0.0
        %1625 = vmatpush1.msra.mxu0 0.0
        %1626 = vmatprep.subr.mxu0 0.0
        %1627 = vmatpush1.msra.mxu0 0.0
        %1628 = vmatprep.subr.mxu0 0.0
        %1629 = vmatpush1.msra.mxu0 0.0
        %1630 = vmatprep.subr.mxu0 0.0
        %1631 = vmatpush1.msra.mxu0 0.0
        %1632 = vmatprep.subr.mxu0 0.0
        %1633 = vmatpush1.msra.mxu0 0.0
        %1634 = vmatprep.subr.mxu0 0.0
        %1635 = vmatpush1.msra.mxu0 0.0
        %1636 = vmatprep.subr.mxu0 0.0
        %1637 = vmatpush1.msra.mxu0 0.0
        %1638 = vmatprep.subr.mxu0 0.0
        %1639 = vmatpush1.msra.mxu0 0.0
        %1640 = vmatprep.subr.mxu0 0.0
        %1641 = vmatpush1.msra.mxu0 0.0
        %1642 = vmatprep.subr.mxu0 0.0
        %1643 = vmatpush1.msra.mxu0 0.0
        %1644 = vmatprep.subr.mxu0 0.0
        %1645 = vmatpush1.msra.mxu0 0.0
        %1646 = vmatprep.subr.mxu0 0.0
        %1647 = vmatpush1.msra.mxu0 0.0
        %1648 = vmatprep.subr.mxu0 0.0
        %1649 = vmatpush1.msra.mxu0 0.0
        %1650 = vmatprep.subr.mxu0 0.0
        %1651 = vmatpush1.msra.mxu0 0.0
        %1652 = vmatprep.subr.mxu0 0.0
        %1653 = vmatpush1.msra.mxu0 0.0
        %1654 = vmatprep.subr.mxu0 0.0
        %1655 = vmatpush1.msra.mxu0 0.0
        %1656 = vmatprep.subr.mxu0 0.0
        %1657 = vmatpush1.msra.mxu0 0.0
        %1658 = vmatprep.subr.mxu0 0.0
        %1659 = vmatpush1.msra.mxu0 0.0
        %1660 = vmatprep.subr.mxu0 0.0
        %1661 = vmatpush1.msra.mxu0 0.0
        %1662 = vmatprep.subr.mxu0 0.0
        %1663 = vmatpush1.msra.mxu0 0.0
        %1664 = vmatprep.subr.mxu0 0.0
        %1665 = vmatpush1.msra.mxu0 0.0
        %1666 = vmatprep.subr.mxu0 0.0
        %1667 = vmatpush1.msra.mxu0 0.0
        %1668 = vmatprep.subr.mxu0 0.0
        %1669 = vmatpush1.msra.mxu0 0.0
        %1670 = vmatprep.subr.mxu0 0.0
        %1671 = vmatpush1.msra.mxu0 0.0
        %1672 = vmatprep.subr.mxu0 0.0
        %1673 = vmatpush1.msra.mxu0 0.0
        %1674 = vmatprep.subr.mxu0 0.0
        %1675 = vmatpush1.msra.mxu0 0.0
        %1676 = vmatprep.subr.mxu0 0.0
        %1677 = vmatpush1.msra.mxu0 0.0
        %1678 = vmatprep.mubr.f32.mxu0 0.0
        %1679 = vmatmul.mubr.f32.gmra.mrb[0].mxu0 %v989
        %v1680 = vpop.f32.mrb[0].mxu0
        %v1681 = vadd.f32 %v1612, %v1680
        %v1682 = vpop.f32.mrb[0].mxu0
        %1683 = vmatprep.mubr.f32.mxu0 0.0
        %1684 = vmatmul.mubr.f32.gmra.mrb[0].mxu0 %v992
        %v1685 = vpop.f32.mrb[0].mxu0
        %v1686 = vadd.f32 %v1612, %v1685
        %v1687 = vpop.f32.mrb[0].mxu0
        %1688 = vmatprep.mubr.f32.mxu0 0.0
        %1689 = vmatmul.mubr.f32.gmra.mrb[0].mxu0 %v995
        %v1690 = vpop.f32.mrb[0].mxu0
        %v1691 = vadd.f32 %v1612, %v1690
        %v1692 = vpop.f32.mrb[0].mxu0
        %1693 = vmatprep.mubr.f32.mxu0 0.0
        %1694 = vmatmul.mubr.f32.gmra.mrb[0].mxu0 %v998
        %v1695 = vpop.f32.mrb[0].mxu0
        %v1696 = vadd.f32 %v1612, %v1695
        %v1697 = vpop.f32.mrb[0].mxu0
        %1698 = vdwg.mxu0
        %1699 = vset.pattern.permute.xlu0 5
        %1700 = vperm.xlu0 %1699, %v958
        %v1701 = vpop.permute.xlu0 %1700
        %1703 = vset.pattern.permute.xlu0 5
        %1704 = vperm.xlu0 %1703, %v963
        %v1705 = vpop.permute.xlu0 %1704
        %1707 = vset.pattern.permute.xlu0 5
        %1708 = vperm.xlu0 %1707, %v968
        %v1709 = vpop.permute.xlu0 %1708
        %1711 = vset.pattern.permute.xlu0 5
        %1712 = vperm.xlu0 %1711, %v973
        %v1713 = vpop.permute.xlu0 %1712
        %v1715 = vmul.f32 %v1701, %v1681
        %v1716 = vmul.f32 %v1705, %v1686
        %v1717 = vmul.f32 %v1709, %v1691
        %v1718 = vmul.f32 %v1713, %v1696
        %v1719 = vadd.f32 %v1597, %v1715
        %v1720 = vadd.f32 %v1598, %v1716
        %v1721 = vadd.f32 %v1599, %v1717
        %v1722 = vadd.f32 %v1600, %v1718
        %s1723 = scalar_lea.vmem %s7, 192
        %v1724 = vld [vmem:[%s1723] sm:$0xff]
        %v1725 = vld [vmem:[%s1723 + $0x8] sm:$0xff]
        %v1726 = vld [vmem:[%s1723 + $0x10] sm:$0xff]
        %v1727 = vld [vmem:[%s1723 + $0x18] sm:$0xff]
        %s1728 = scalar_lea.vmem %s8, 6
        %v1729 = vld [vmem:[%s1728] sm:$0x1]
        %v1731 = vlaneseq
        %v1732 = vshrl.u32 %v1731, 7
        %v1733 = vsub.s32 0, %v1732
        %v1734 = vrot.slane %v1729, %v1733
        %1736 = vmatprep.subr.mxu0 0.0
        %1737 = vmatpush1.msra.mxu0 %v1724
        %1738 = vmatprep.subr.mxu0 0.0
        %1739 = vmatpush1.msra.mxu0 %v1725
        %1740 = vmatprep.subr.mxu0 0.0
        %1741 = vmatpush1.msra.mxu0 %v1726
        %1742 = vmatprep.subr.mxu0 0.0
        %1743 = vmatpush1.msra.mxu0 %v1727
        %1744 = vmatprep.subr.mxu0 0.0
        %1745 = vmatpush1.msra.mxu0 0.0
        %1746 = vmatprep.subr.mxu0 0.0
        %1747 = vmatpush1.msra.mxu0 0.0
        %1748 = vmatprep.subr.mxu0 0.0
        %1749 = vmatpush1.msra.mxu0 0.0
        %1750 = vmatprep.subr.mxu0 0.0
        %1751 = vmatpush1.msra.mxu0 0.0
        %1752 = vmatprep.subr.mxu0 0.0
        %1753 = vmatpush1.msra.mxu0 0.0
        %1754 = vmatprep.subr.mxu0 0.0
        %1755 = vmatpush1.msra.mxu0 0.0
        %1756 = vmatprep.subr.mxu0 0.0
        %1757 = vmatpush1.msra.mxu0 0.0
        %1758 = vmatprep.subr.mxu0 0.0
        %1759 = vmatpush1.msra.mxu0 0.0
        %1760 = vmatprep.subr.mxu0 0.0
        %1761 = vmatpush1.msra.mxu0 0.0
        %1762 = vmatprep.subr.mxu0 0.0
        %1763 = vmatpush1.msra.mxu0 0.0
        %1764 = vmatprep.subr.mxu0 0.0
        %1765 = vmatpush1.msra.mxu0 0.0
        %1766 = vmatprep.subr.mxu0 0.0
        %1767 = vmatpush1.msra.mxu0 0.0
        %1768 = vmatprep.subr.mxu0 0.0
        %1769 = vmatpush1.msra.mxu0 0.0
        %1770 = vmatprep.subr.mxu0 0.0
        %1771 = vmatpush1.msra.mxu0 0.0
        %1772 = vmatprep.subr.mxu0 0.0
        %1773 = vmatpush1.msra.mxu0 0.0
        %1774 = vmatprep.subr.mxu0 0.0
        %1775 = vmatpush1.msra.mxu0 0.0
        %1776 = vmatprep.subr.mxu0 0.0
        %1777 = vmatpush1.msra.mxu0 0.0
        %1778 = vmatprep.subr.mxu0 0.0
        %1779 = vmatpush1.msra.mxu0 0.0
        %1780 = vmatprep.subr.mxu0 0.0
        %1781 = vmatpush1.msra.mxu0 0.0
        %1782 = vmatprep.subr.mxu0 0.0
        %1783 = vmatpush1.msra.mxu0 0.0
        %1784 = vmatprep.subr.mxu0 0.0
        %1785 = vmatpush1.msra.mxu0 0.0
        %1786 = vmatprep.subr.mxu0 0.0
        %1787 = vmatpush1.msra.mxu0 0.0
        %1788 = vmatprep.subr.mxu0 0.0
        %1789 = vmatpush1.msra.mxu0 0.0
        %1790 = vmatprep.subr.mxu0 0.0
        %1791 = vmatpush1.msra.mxu0 0.0
        %1792 = vmatprep.subr.mxu0 0.0
        %1793 = vmatpush1.msra.mxu0 0.0
        %1794 = vmatprep.subr.mxu0 0.0
        %1795 = vmatpush1.msra.mxu0 0.0
        %1796 = vmatprep.subr.mxu0 0.0
        %1797 = vmatpush1.msra.mxu0 0.0
        %1798 = vmatprep.subr.mxu0 0.0
        %1799 = vmatpush1.msra.mxu0 0.0
        %1800 = vmatprep.mubr.f32.mxu0 0.0
        %1801 = vmatmul.mubr.f32.gmra.mrb[0].mxu0 %v989
        %v1802 = vpop.f32.mrb[0].mxu0
        %v1803 = vadd.f32 %v1734, %v1802
        %v1804 = vpop.f32.mrb[0].mxu0
        %1805 = vmatprep.mubr.f32.mxu0 0.0
        %1806 = vmatmul.mubr.f32.gmra.mrb[0].mxu0 %v992
        %v1807 = vpop.f32.mrb[0].mxu0
        %v1808 = vadd.f32 %v1734, %v1807
        %v1809 = vpop.f32.mrb[0].mxu0
        %1810 = vmatprep.mubr.f32.mxu0 0.0
        %1811 = vmatmul.mubr.f32.gmra.mrb[0].mxu0 %v995
        %v1812 = vpop.f32.mrb[0].mxu0
        %v1813 = vadd.f32 %v1734, %v1812
        %v1814 = vpop.f32.mrb[0].mxu0
        %1815 = vmatprep.mubr.f32.mxu0 0.0
        %1816 = vmatmul.mubr.f32.gmra.mrb[0].mxu0 %v998
        %v1817 = vpop.f32.mrb[0].mxu0
        %v1818 = vadd.f32 %v1734, %v1817
        %v1819 = vpop.f32.mrb[0].mxu0
        %1820 = vdwg.mxu0
        %1821 = vset.pattern.permute.xlu0 6
        %1822 = vperm.xlu0 %1821, %v958
        %v1823 = vpop.permute.xlu0 %1822
        %1825 = vset.pattern.permute.xlu0 6
        %1826 = vperm.xlu0 %1825, %v963
        %v1827 = vpop.permute.xlu0 %1826
        %1829 = vset.pattern.permute.xlu0 6
        %1830 = vperm.xlu0 %1829, %v968
        %v1831 = vpop.permute.xlu0 %1830
        %1833 = vset.pattern.permute.xlu0 6
        %1834 = vperm.xlu0 %1833, %v973
        %v1835 = vpop.permute.xlu0 %1834
        %v1837 = vmul.f32 %v1823, %v1803
        %v1838 = vmul.f32 %v1827, %v1808
        %v1839 = vmul.f32 %v1831, %v1813
        %v1840 = vmul.f32 %v1835, %v1818
        %v1841 = vadd.f32 %v1719, %v1837
        %v1842 = vadd.f32 %v1720, %v1838
        %v1843 = vadd.f32 %v1721, %v1839
        %v1844 = vadd.f32 %v1722, %v1840
        %s1845 = scalar_lea.vmem %s7, 224
        %v1846 = vld [vmem:[%s1845] sm:$0xff]
        %v1847 = vld [vmem:[%s1845 + $0x8] sm:$0xff]
        %v1848 = vld [vmem:[%s1845 + $0x10] sm:$0xff]
        %v1849 = vld [vmem:[%s1845 + $0x18] sm:$0xff]
        %s1850 = scalar_lea.vmem %s8, 7
        %v1851 = vld [vmem:[%s1850] sm:$0x1]
        %v1853 = vlaneseq
        %v1854 = vshrl.u32 %v1853, 7
        %v1855 = vsub.s32 0, %v1854
        %v1856 = vrot.slane %v1851, %v1855
        %1858 = vmatprep.subr.mxu0 0.0
        %1859 = vmatpush1.msra.mxu0 %v1846
        %1860 = vmatprep.subr.mxu0 0.0
        %1861 = vmatpush1.msra.mxu0 %v1847
        %1862 = vmatprep.subr.mxu0 0.0
        %1863 = vmatpush1.msra.mxu0 %v1848
        %1864 = vmatprep.subr.mxu0 0.0
        %1865 = vmatpush1.msra.mxu0 %v1849
        %1866 = vmatprep.subr.mxu0 0.0
        %1867 = vmatpush1.msra.mxu0 0.0
        %1868 = vmatprep.subr.mxu0 0.0
        %1869 = vmatpush1.msra.mxu0 0.0
        %1870 = vmatprep.subr.mxu0 0.0
        %1871 = vmatpush1.msra.mxu0 0.0
        %1872 = vmatprep.subr.mxu0 0.0
        %1873 = vmatpush1.msra.mxu0 0.0
        %1874 = vmatprep.subr.mxu0 0.0
        %1875 = vmatpush1.msra.mxu0 0.0
        %1876 = vmatprep.subr.mxu0 0.0
        %1877 = vmatpush1.msra.mxu0 0.0
        %1878 = vmatprep.subr.mxu0 0.0
        %1879 = vmatpush1.msra.mxu0 0.0
        %1880 = vmatprep.subr.mxu0 0.0
        %1881 = vmatpush1.msra.mxu0 0.0
        %1882 = vmatprep.subr.mxu0 0.0
        %1883 = vmatpush1.msra.mxu0 0.0
        %1884 = vmatprep.subr.mxu0 0.0
        %1885 = vmatpush1.msra.mxu0 0.0
        %1886 = vmatprep.subr.mxu0 0.0
        %1887 = vmatpush1.msra.mxu0 0.0
        %1888 = vmatprep.subr.mxu0 0.0
        %1889 = vmatpush1.msra.mxu0 0.0
        %1890 = vmatprep.subr.mxu0 0.0
        %1891 = vmatpush1.msra.mxu0 0.0
        %1892 = vmatprep.subr.mxu0 0.0
        %1893 = vmatpush1.msra.mxu0 0.0
        %1894 = vmatprep.subr.mxu0 0.0
        %1895 = vmatpush1.msra.mxu0 0.0
        %1896 = vmatprep.subr.mxu0 0.0
        %1897 = vmatpush1.msra.mxu0 0.0
        %1898 = vmatprep.subr.mxu0 0.0
        %1899 = vmatpush1.msra.mxu0 0.0
        %1900 = vmatprep.subr.mxu0 0.0
        %1901 = vmatpush1.msra.mxu0 0.0
        %1902 = vmatprep.subr.mxu0 0.0
        %1903 = vmatpush1.msra.mxu0 0.0
        %1904 = vmatprep.subr.mxu0 0.0
        %1905 = vmatpush1.msra.mxu0 0.0
        %1906 = vmatprep.subr.mxu0 0.0
        %1907 = vmatpush1.msra.mxu0 0.0
        %1908 = vmatprep.subr.mxu0 0.0
        %1909 = vmatpush1.msra.mxu0 0.0
        %1910 = vmatprep.subr.mxu0 0.0
        %1911 = vmatpush1.msra.mxu0 0.0
        %1912 = vmatprep.subr.mxu0 0.0
        %1913 = vmatpush1.msra.mxu0 0.0
        %1914 = vmatprep.subr.mxu0 0.0
        %1915 = vmatpush1.msra.mxu0 0.0
        %1916 = vmatprep.subr.mxu0 0.0
        %1917 = vmatpush1.msra.mxu0 0.0
        %1918 = vmatprep.subr.mxu0 0.0
        %1919 = vmatpush1.msra.mxu0 0.0
        %1920 = vmatprep.subr.mxu0 0.0
        %1921 = vmatpush1.msra.mxu0 0.0
        %1922 = vmatprep.mubr.f32.mxu0 0.0
        %1923 = vmatmul.mubr.f32.gmra.mrb[0].mxu0 %v989
        %v1924 = vpop.f32.mrb[0].mxu0
        %v1925 = vadd.f32 %v1856, %v1924
        %v1926 = vpop.f32.mrb[0].mxu0
        %1927 = vmatprep.mubr.f32.mxu0 0.0
        %1928 = vmatmul.mubr.f32.gmra.mrb[0].mxu0 %v992
        %v1929 = vpop.f32.mrb[0].mxu0
        %v1930 = vadd.f32 %v1856, %v1929
        %v1931 = vpop.f32.mrb[0].mxu0
        %1932 = vmatprep.mubr.f32.mxu0 0.0
        %1933 = vmatmul.mubr.f32.gmra.mrb[0].mxu0 %v995
        %v1934 = vpop.f32.mrb[0].mxu0
        %v1935 = vadd.f32 %v1856, %v1934
        %v1936 = vpop.f32.mrb[0].mxu0
        %1937 = vmatprep.mubr.f32.mxu0 0.0
        %1938 = vmatmul.mubr.f32.gmra.mrb[0].mxu0 %v998
        %v1939 = vpop.f32.mrb[0].mxu0
        %v1940 = vadd.f32 %v1856, %v1939
        %v1941 = vpop.f32.mrb[0].mxu0
        %1942 = vdwg.mxu0
        %1943 = vset.pattern.permute.xlu0 7
        %1944 = vperm.xlu0 %1943, %v958
        %v1945 = vpop.permute.xlu0 %1944
        %1947 = vset.pattern.permute.xlu0 7
        %1948 = vperm.xlu0 %1947, %v963
        %v1949 = vpop.permute.xlu0 %1948
        %1951 = vset.pattern.permute.xlu0 7
        %1952 = vperm.xlu0 %1951, %v968
        %v1953 = vpop.permute.xlu0 %1952
        %1955 = vset.pattern.permute.xlu0 7
        %1956 = vperm.xlu0 %1955, %v973
        %v1957 = vpop.permute.xlu0 %1956
        %v1959 = vmul.f32 %v1945, %v1925
        %v1960 = vmul.f32 %v1949, %v1930
        %v1961 = vmul.f32 %v1953, %v1935
        %v1962 = vmul.f32 %v1957, %v1940
        %v1963 = vadd.f32 %v1841, %v1959
        %v1964 = vadd.f32 %v1842, %v1960
        %v1965 = vadd.f32 %v1843, %v1961
        %v1966 = vadd.f32 %v1844, %v1962
        %s1967 = scalar_lea.vmem %s7, 256
        %v1968 = vld [vmem:[%s1967] sm:$0xff]
        %v1969 = vld [vmem:[%s1967 + $0x8] sm:$0xff]
        %v1970 = vld [vmem:[%s1967 + $0x10] sm:$0xff]
        %v1971 = vld [vmem:[%s1967 + $0x18] sm:$0xff]
        %s1972 = scalar_lea.vmem %s8, 8
        %v1973 = vld [vmem:[%s1972] sm:$0x1]
        %v1975 = vlaneseq
        %v1976 = vshrl.u32 %v1975, 7
        %v1977 = vsub.s32 0, %v1976
        %v1978 = vrot.slane %v1973, %v1977
        %1980 = vmatprep.subr.mxu0 0.0
        %1981 = vmatpush1.msra.mxu0 %v1968
        %1982 = vmatprep.subr.mxu0 0.0
        %1983 = vmatpush1.msra.mxu0 %v1969
        %1984 = vmatprep.subr.mxu0 0.0
        %1985 = vmatpush1.msra.mxu0 %v1970
        %1986 = vmatprep.subr.mxu0 0.0
        %1987 = vmatpush1.msra.mxu0 %v1971
        %1988 = vmatprep.subr.mxu0 0.0
        %1989 = vmatpush1.msra.mxu0 0.0
        %1990 = vmatprep.subr.mxu0 0.0
        %1991 = vmatpush1.msra.mxu0 0.0
        %1992 = vmatprep.subr.mxu0 0.0
        %1993 = vmatpush1.msra.mxu0 0.0
        %1994 = vmatprep.subr.mxu0 0.0
        %1995 = vmatpush1.msra.mxu0 0.0
        %1996 = vmatprep.subr.mxu0 0.0
        %1997 = vmatpush1.msra.mxu0 0.0
        %1998 = vmatprep.subr.mxu0 0.0
        %1999 = vmatpush1.msra.mxu0 0.0
        %2000 = vmatprep.subr.mxu0 0.0
        %2001 = vmatpush1.msra.mxu0 0.0
        %2002 = vmatprep.subr.mxu0 0.0
        %2003 = vmatpush1.msra.mxu0 0.0
        %2004 = vmatprep.subr.mxu0 0.0
        %2005 = vmatpush1.msra.mxu0 0.0
        %2006 = vmatprep.subr.mxu0 0.0
        %2007 = vmatpush1.msra.mxu0 0.0
        %2008 = vmatprep.subr.mxu0 0.0
        %2009 = vmatpush1.msra.mxu0 0.0
        %2010 = vmatprep.subr.mxu0 0.0
        %2011 = vmatpush1.msra.mxu0 0.0
        %2012 = vmatprep.subr.mxu0 0.0
        %2013 = vmatpush1.msra.mxu0 0.0
        %2014 = vmatprep.subr.mxu0 0.0
        %2015 = vmatpush1.msra.mxu0 0.0
        %2016 = vmatprep.subr.mxu0 0.0
        %2017 = vmatpush1.msra.mxu0 0.0
        %2018 = vmatprep.subr.mxu0 0.0
        %2019 = vmatpush1.msra.mxu0 0.0
        %2020 = vmatprep.subr.mxu0 0.0
        %2021 = vmatpush1.msra.mxu0 0.0
        %2022 = vmatprep.subr.mxu0 0.0
        %2023 = vmatpush1.msra.mxu0 0.0
        %2024 = vmatprep.subr.mxu0 0.0
        %2025 = vmatpush1.msra.mxu0 0.0
        %2026 = vmatprep.subr.mxu0 0.0
        %2027 = vmatpush1.msra.mxu0 0.0
        %2028 = vmatprep.subr.mxu0 0.0
        %2029 = vmatpush1.msra.mxu0 0.0
        %2030 = vmatprep.subr.mxu0 0.0
        %2031 = vmatpush1.msra.mxu0 0.0
        %2032 = vmatprep.subr.mxu0 0.0
        %2033 = vmatpush1.msra.mxu0 0.0
        %2034 = vmatprep.subr.mxu0 0.0
        %2035 = vmatpush1.msra.mxu0 0.0
        %2036 = vmatprep.subr.mxu0 0.0
        %2037 = vmatpush1.msra.mxu0 0.0
        %2038 = vmatprep.subr.mxu0 0.0
        %2039 = vmatpush1.msra.mxu0 0.0
        %2040 = vmatprep.subr.mxu0 0.0
        %2041 = vmatpush1.msra.mxu0 0.0
        %2042 = vmatprep.subr.mxu0 0.0
        %2043 = vmatpush1.msra.mxu0 0.0
        %2044 = vmatprep.mubr.f32.mxu0 0.0
        %2045 = vmatmul.mubr.f32.gmra.mrb[0].mxu0 %v989
        %v2046 = vpop.f32.mrb[0].mxu0
        %v2047 = vadd.f32 %v1978, %v2046
        %v2048 = vpop.f32.mrb[0].mxu0
        %2049 = vmatprep.mubr.f32.mxu0 0.0
        %2050 = vmatmul.mubr.f32.gmra.mrb[0].mxu0 %v992
        %v2051 = vpop.f32.mrb[0].mxu0
        %v2052 = vadd.f32 %v1978, %v2051
        %v2053 = vpop.f32.mrb[0].mxu0
        %2054 = vmatprep.mubr.f32.mxu0 0.0
        %2055 = vmatmul.mubr.f32.gmra.mrb[0].mxu0 %v995
        %v2056 = vpop.f32.mrb[0].mxu0
        %v2057 = vadd.f32 %v1978, %v2056
        %v2058 = vpop.f32.mrb[0].mxu0
        %2059 = vmatprep.mubr.f32.mxu0 0.0
        %2060 = vmatmul.mubr.f32.gmra.mrb[0].mxu0 %v998
        %v2061 = vpop.f32.mrb[0].mxu0
        %v2062 = vadd.f32 %v1978, %v2061
        %v2063 = vpop.f32.mrb[0].mxu0
        %2064 = vdwg.mxu0
        %2065 = vset.pattern.permute.xlu0 8
        %2066 = vperm.xlu0 %2065, %v958
        %v2067 = vpop.permute.xlu0 %2066
        %2069 = vset.pattern.permute.xlu0 8
        %2070 = vperm.xlu0 %2069, %v963
        %v2071 = vpop.permute.xlu0 %2070
        %2073 = vset.pattern.permute.xlu0 8
        %2074 = vperm.xlu0 %2073, %v968
        %v2075 = vpop.permute.xlu0 %2074
        %2077 = vset.pattern.permute.xlu0 8
        %2078 = vperm.xlu0 %2077, %v973
        %v2079 = vpop.permute.xlu0 %2078
        %v2081 = vmul.f32 %v2067, %v2047
        %v2082 = vmul.f32 %v2071, %v2052
        %v2083 = vmul.f32 %v2075, %v2057
        %v2084 = vmul.f32 %v2079, %v2062
        %v2085 = vadd.f32 %v1963, %v2081
        %v2086 = vadd.f32 %v1964, %v2082
        %v2087 = vadd.f32 %v1965, %v2083
        %v2088 = vadd.f32 %v1966, %v2084
        %s2089 = scalar_lea.vmem %s7, 288
        %v2090 = vld [vmem:[%s2089] sm:$0xff]
        %v2091 = vld [vmem:[%s2089 + $0x8] sm:$0xff]
        %v2092 = vld [vmem:[%s2089 + $0x10] sm:$0xff]
        %v2093 = vld [vmem:[%s2089 + $0x18] sm:$0xff]
        %s2094 = scalar_lea.vmem %s8, 9
        %v2095 = vld [vmem:[%s2094] sm:$0x1]
        %v2097 = vlaneseq
        %v2098 = vshrl.u32 %v2097, 7
        %v2099 = vsub.s32 0, %v2098
        %v2100 = vrot.slane %v2095, %v2099
        %2102 = vmatprep.subr.mxu0 0.0
        %2103 = vmatpush1.msra.mxu0 %v2090
        %2104 = vmatprep.subr.mxu0 0.0
        %2105 = vmatpush1.msra.mxu0 %v2091
        %2106 = vmatprep.subr.mxu0 0.0
        %2107 = vmatpush1.msra.mxu0 %v2092
        %2108 = vmatprep.subr.mxu0 0.0
        %2109 = vmatpush1.msra.mxu0 %v2093
        %2110 = vmatprep.subr.mxu0 0.0
        %2111 = vmatpush1.msra.mxu0 0.0
        %2112 = vmatprep.subr.mxu0 0.0
        %2113 = vmatpush1.msra.mxu0 0.0
        %2114 = vmatprep.subr.mxu0 0.0
        %2115 = vmatpush1.msra.mxu0 0.0
        %2116 = vmatprep.subr.mxu0 0.0
        %2117 = vmatpush1.msra.mxu0 0.0
        %2118 = vmatprep.subr.mxu0 0.0
        %2119 = vmatpush1.msra.mxu0 0.0
        %2120 = vmatprep.subr.mxu0 0.0
        %2121 = vmatpush1.msra.mxu0 0.0
        %2122 = vmatprep.subr.mxu0 0.0
        %2123 = vmatpush1.msra.mxu0 0.0
        %2124 = vmatprep.subr.mxu0 0.0
        %2125 = vmatpush1.msra.mxu0 0.0
        %2126 = vmatprep.subr.mxu0 0.0
        %2127 = vmatpush1.msra.mxu0 0.0
        %2128 = vmatprep.subr.mxu0 0.0
        %2129 = vmatpush1.msra.mxu0 0.0
        %2130 = vmatprep.subr.mxu0 0.0
        %2131 = vmatpush1.msra.mxu0 0.0
        %2132 = vmatprep.subr.mxu0 0.0
        %2133 = vmatpush1.msra.mxu0 0.0
        %2134 = vmatprep.subr.mxu0 0.0
        %2135 = vmatpush1.msra.mxu0 0.0
        %2136 = vmatprep.subr.mxu0 0.0
        %2137 = vmatpush1.msra.mxu0 0.0
        %2138 = vmatprep.subr.mxu0 0.0
        %2139 = vmatpush1.msra.mxu0 0.0
        %2140 = vmatprep.subr.mxu0 0.0
        %2141 = vmatpush1.msra.mxu0 0.0
        %2142 = vmatprep.subr.mxu0 0.0
        %2143 = vmatpush1.msra.mxu0 0.0
        %2144 = vmatprep.subr.mxu0 0.0
        %2145 = vmatpush1.msra.mxu0 0.0
        %2146 = vmatprep.subr.mxu0 0.0
        %2147 = vmatpush1.msra.mxu0 0.0
        %2148 = vmatprep.subr.mxu0 0.0
        %2149 = vmatpush1.msra.mxu0 0.0
        %2150 = vmatprep.subr.mxu0 0.0
        %2151 = vmatpush1.msra.mxu0 0.0
        %2152 = vmatprep.subr.mxu0 0.0
        %2153 = vmatpush1.msra.mxu0 0.0
        %2154 = vmatprep.subr.mxu0 0.0
        %2155 = vmatpush1.msra.mxu0 0.0
        %2156 = vmatprep.subr.mxu0 0.0
        %2157 = vmatpush1.msra.mxu0 0.0
        %2158 = vmatprep.subr.mxu0 0.0
        %2159 = vmatpush1.msra.mxu0 0.0
        %2160 = vmatprep.subr.mxu0 0.0
        %2161 = vmatpush1.msra.mxu0 0.0
        %2162 = vmatprep.subr.mxu0 0.0
        %2163 = vmatpush1.msra.mxu0 0.0
        %2164 = vmatprep.subr.mxu0 0.0
        %2165 = vmatpush1.msra.mxu0 0.0
        %2166 = vmatprep.mubr.f32.mxu0 0.0
        %2167 = vmatmul.mubr.f32.gmra.mrb[0].mxu0 %v989
        %v2168 = vpop.f32.mrb[0].mxu0
        %v2169 = vadd.f32 %v2100, %v2168
        %v2170 = vpop.f32.mrb[0].mxu0
        %2171 = vmatprep.mubr.f32.mxu0 0.0
        %2172 = vmatmul.mubr.f32.gmra.mrb[0].mxu0 %v992
        %v2173 = vpop.f32.mrb[0].mxu0
        %v2174 = vadd.f32 %v2100, %v2173
        %v2175 = vpop.f32.mrb[0].mxu0
        %2176 = vmatprep.mubr.f32.mxu0 0.0
        %2177 = vmatmul.mubr.f32.gmra.mrb[0].mxu0 %v995
        %v2178 = vpop.f32.mrb[0].mxu0
        %v2179 = vadd.f32 %v2100, %v2178
        %v2180 = vpop.f32.mrb[0].mxu0
        %2181 = vmatprep.mubr.f32.mxu0 0.0
        %2182 = vmatmul.mubr.f32.gmra.mrb[0].mxu0 %v998
        %v2183 = vpop.f32.mrb[0].mxu0
        %v2184 = vadd.f32 %v2100, %v2183
        %v2185 = vpop.f32.mrb[0].mxu0
        %2186 = vdwg.mxu0
        %2187 = vset.pattern.permute.xlu0 9
        %2188 = vperm.xlu0 %2187, %v958
        %v2189 = vpop.permute.xlu0 %2188
        %2191 = vset.pattern.permute.xlu0 9
        %2192 = vperm.xlu0 %2191, %v963
        %v2193 = vpop.permute.xlu0 %2192
        %2195 = vset.pattern.permute.xlu0 9
        %2196 = vperm.xlu0 %2195, %v968
        %v2197 = vpop.permute.xlu0 %2196
        %2199 = vset.pattern.permute.xlu0 9
        %2200 = vperm.xlu0 %2199, %v973
        %v2201 = vpop.permute.xlu0 %2200
        %v2203 = vmul.f32 %v2189, %v2169
        %v2204 = vmul.f32 %v2193, %v2174
        %v2205 = vmul.f32 %v2197, %v2179
        %v2206 = vmul.f32 %v2201, %v2184
        %v2207 = vadd.f32 %v2085, %v2203
        %v2208 = vadd.f32 %v2086, %v2204
        %v2209 = vadd.f32 %v2087, %v2205
        %v2210 = vadd.f32 %v2088, %v2206
        %s2211 = scalar_lea.vmem %s7, 320
        %v2212 = vld [vmem:[%s2211] sm:$0xff]
        %v2213 = vld [vmem:[%s2211 + $0x8] sm:$0xff]
        %v2214 = vld [vmem:[%s2211 + $0x10] sm:$0xff]
        %v2215 = vld [vmem:[%s2211 + $0x18] sm:$0xff]
        %s2216 = scalar_lea.vmem %s8, 10
        %v2217 = vld [vmem:[%s2216] sm:$0x1]
        %v2219 = vlaneseq
        %v2220 = vshrl.u32 %v2219, 7
        %v2221 = vsub.s32 0, %v2220
        %v2222 = vrot.slane %v2217, %v2221
        %2224 = vmatprep.subr.mxu0 0.0
        %2225 = vmatpush1.msra.mxu0 %v2212
        %2226 = vmatprep.subr.mxu0 0.0
        %2227 = vmatpush1.msra.mxu0 %v2213
        %2228 = vmatprep.subr.mxu0 0.0
        %2229 = vmatpush1.msra.mxu0 %v2214
        %2230 = vmatprep.subr.mxu0 0.0
        %2231 = vmatpush1.msra.mxu0 %v2215
        %2232 = vmatprep.subr.mxu0 0.0
        %2233 = vmatpush1.msra.mxu0 0.0
        %2234 = vmatprep.subr.mxu0 0.0
        %2235 = vmatpush1.msra.mxu0 0.0
        %2236 = vmatprep.subr.mxu0 0.0
        %2237 = vmatpush1.msra.mxu0 0.0
        %2238 = vmatprep.subr.mxu0 0.0
        %2239 = vmatpush1.msra.mxu0 0.0
        %2240 = vmatprep.subr.mxu0 0.0
        %2241 = vmatpush1.msra.mxu0 0.0
        %2242 = vmatprep.subr.mxu0 0.0
        %2243 = vmatpush1.msra.mxu0 0.0
        %2244 = vmatprep.subr.mxu0 0.0
        %2245 = vmatpush1.msra.mxu0 0.0
        %2246 = vmatprep.subr.mxu0 0.0
        %2247 = vmatpush1.msra.mxu0 0.0
        %2248 = vmatprep.subr.mxu0 0.0
        %2249 = vmatpush1.msra.mxu0 0.0
        %2250 = vmatprep.subr.mxu0 0.0
        %2251 = vmatpush1.msra.mxu0 0.0
        %2252 = vmatprep.subr.mxu0 0.0
        %2253 = vmatpush1.msra.mxu0 0.0
        %2254 = vmatprep.subr.mxu0 0.0
        %2255 = vmatpush1.msra.mxu0 0.0
        %2256 = vmatprep.subr.mxu0 0.0
        %2257 = vmatpush1.msra.mxu0 0.0
        %2258 = vmatprep.subr.mxu0 0.0
        %2259 = vmatpush1.msra.mxu0 0.0
        %2260 = vmatprep.subr.mxu0 0.0
        %2261 = vmatpush1.msra.mxu0 0.0
        %2262 = vmatprep.subr.mxu0 0.0
        %2263 = vmatpush1.msra.mxu0 0.0
        %2264 = vmatprep.subr.mxu0 0.0
        %2265 = vmatpush1.msra.mxu0 0.0
        %2266 = vmatprep.subr.mxu0 0.0
        %2267 = vmatpush1.msra.mxu0 0.0
        %2268 = vmatprep.subr.mxu0 0.0
        %2269 = vmatpush1.msra.mxu0 0.0
        %2270 = vmatprep.subr.mxu0 0.0
        %2271 = vmatpush1.msra.mxu0 0.0
        %2272 = vmatprep.subr.mxu0 0.0
        %2273 = vmatpush1.msra.mxu0 0.0
        %2274 = vmatprep.subr.mxu0 0.0
        %2275 = vmatpush1.msra.mxu0 0.0
        %2276 = vmatprep.subr.mxu0 0.0
        %2277 = vmatpush1.msra.mxu0 0.0
        %2278 = vmatprep.subr.mxu0 0.0
        %2279 = vmatpush1.msra.mxu0 0.0
        %2280 = vmatprep.subr.mxu0 0.0
        %2281 = vmatpush1.msra.mxu0 0.0
        %2282 = vmatprep.subr.mxu0 0.0
        %2283 = vmatpush1.msra.mxu0 0.0
        %2284 = vmatprep.subr.mxu0 0.0
        %2285 = vmatpush1.msra.mxu0 0.0
        %2286 = vmatprep.subr.mxu0 0.0
        %2287 = vmatpush1.msra.mxu0 0.0
        %2288 = vmatprep.mubr.f32.mxu0 0.0
        %2289 = vmatmul.mubr.f32.gmra.mrb[0].mxu0 %v989
        %v2290 = vpop.f32.mrb[0].mxu0
        %v2291 = vadd.f32 %v2222, %v2290
        %v2292 = vpop.f32.mrb[0].mxu0
        %2293 = vmatprep.mubr.f32.mxu0 0.0
        %2294 = vmatmul.mubr.f32.gmra.mrb[0].mxu0 %v992
        %v2295 = vpop.f32.mrb[0].mxu0
        %v2296 = vadd.f32 %v2222, %v2295
        %v2297 = vpop.f32.mrb[0].mxu0
        %2298 = vmatprep.mubr.f32.mxu0 0.0
        %2299 = vmatmul.mubr.f32.gmra.mrb[0].mxu0 %v995
        %v2300 = vpop.f32.mrb[0].mxu0
        %v2301 = vadd.f32 %v2222, %v2300
        %v2302 = vpop.f32.mrb[0].mxu0
        %2303 = vmatprep.mubr.f32.mxu0 0.0
        %2304 = vmatmul.mubr.f32.gmra.mrb[0].mxu0 %v998
        %v2305 = vpop.f32.mrb[0].mxu0
        %v2306 = vadd.f32 %v2222, %v2305
        %v2307 = vpop.f32.mrb[0].mxu0
        %2308 = vdwg.mxu0
        %2309 = vset.pattern.permute.xlu0 10
        %2310 = vperm.xlu0 %2309, %v958
        %v2311 = vpop.permute.xlu0 %2310
        %2313 = vset.pattern.permute.xlu0 10
        %2314 = vperm.xlu0 %2313, %v963
        %v2315 = vpop.permute.xlu0 %2314
        %2317 = vset.pattern.permute.xlu0 10
        %2318 = vperm.xlu0 %2317, %v968
        %v2319 = vpop.permute.xlu0 %2318
        %2321 = vset.pattern.permute.xlu0 10
        %2322 = vperm.xlu0 %2321, %v973
        %v2323 = vpop.permute.xlu0 %2322
        %v2325 = vmul.f32 %v2311, %v2291
        %v2326 = vmul.f32 %v2315, %v2296
        %v2327 = vmul.f32 %v2319, %v2301
        %v2328 = vmul.f32 %v2323, %v2306
        %v2329 = vadd.f32 %v2207, %v2325
        %v2330 = vadd.f32 %v2208, %v2326
        %v2331 = vadd.f32 %v2209, %v2327
        %v2332 = vadd.f32 %v2210, %v2328
        %v2333 = vld [vmem:[#allocation2] sm:$0xff]
        %v2334 = vld [vmem:[#allocation2 + $0x8] sm:$0xff]
        %v2336 = vsel %vm987, %v753, 0
        %v2339 = vsel %vm987, %v754, 0
        %2341 = vmatprep.subr.mxu0 0.0
        %2342 = vmatpush1.msra.mxu0 %v2329
        %2343 = vmatprep.subr.mxu0 0.0
        %2344 = vmatpush1.msra.mxu0 %v2330
        %2345 = vmatprep.subr.mxu0 0.0
        %2346 = vmatpush1.msra.mxu0 %v2331
        %2347 = vmatprep.subr.mxu0 0.0
        %2348 = vmatpush1.msra.mxu0 %v2332
        %2349 = vmatprep.subr.mxu0 0.0
        %2350 = vmatpush1.msra.mxu0 0.0
        %2351 = vmatprep.subr.mxu0 0.0
        %2352 = vmatpush1.msra.mxu0 0.0
        %2353 = vmatprep.subr.mxu0 0.0
        %2354 = vmatpush1.msra.mxu0 0.0
        %2355 = vmatprep.subr.mxu0 0.0
        %2356 = vmatpush1.msra.mxu0 0.0
        %2357 = vmatprep.subr.mxu0 0.0
        %2358 = vmatpush1.msra.mxu0 0.0
        %2359 = vmatprep.subr.mxu0 0.0
        %2360 = vmatpush1.msra.mxu0 0.0
        %2361 = vmatprep.subr.mxu0 0.0
        %2362 = vmatpush1.msra.mxu0 0.0
        %2363 = vmatprep.subr.mxu0 0.0
        %2364 = vmatpush1.msra.mxu0 0.0
        %2365 = vmatprep.subr.mxu0 0.0
        %2366 = vmatpush1.msra.mxu0 0.0
        %2367 = vmatprep.subr.mxu0 0.0
        %2368 = vmatpush1.msra.mxu0 0.0
        %2369 = vmatprep.subr.mxu0 0.0
        %2370 = vmatpush1.msra.mxu0 0.0
        %2371 = vmatprep.subr.mxu0 0.0
        %2372 = vmatpush1.msra.mxu0 0.0
        %2373 = vmatprep.subr.mxu0 0.0
        %2374 = vmatpush1.msra.mxu0 0.0
        %2375 = vmatprep.subr.mxu0 0.0
        %2376 = vmatpush1.msra.mxu0 0.0
        %2377 = vmatprep.subr.mxu0 0.0
        %2378 = vmatpush1.msra.mxu0 0.0
        %2379 = vmatprep.subr.mxu0 0.0
        %2380 = vmatpush1.msra.mxu0 0.0
        %2381 = vmatprep.subr.mxu0 0.0
        %2382 = vmatpush1.msra.mxu0 0.0
        %2383 = vmatprep.subr.mxu0 0.0
        %2384 = vmatpush1.msra.mxu0 0.0
        %2385 = vmatprep.subr.mxu0 0.0
        %2386 = vmatpush1.msra.mxu0 0.0
        %2387 = vmatprep.subr.mxu0 0.0
        %2388 = vmatpush1.msra.mxu0 0.0
        %2389 = vmatprep.subr.mxu0 0.0
        %2390 = vmatpush1.msra.mxu0 0.0
        %2391 = vmatprep.subr.mxu0 0.0
        %2392 = vmatpush1.msra.mxu0 0.0
        %2393 = vmatprep.subr.mxu0 0.0
        %2394 = vmatpush1.msra.mxu0 0.0
        %2395 = vmatprep.subr.mxu0 0.0
        %2396 = vmatpush1.msra.mxu0 0.0
        %2397 = vmatprep.subr.mxu0 0.0
        %2398 = vmatpush1.msra.mxu0 0.0
        %2399 = vmatprep.subr.mxu0 0.0
        %2400 = vmatpush1.msra.mxu0 0.0
        %2401 = vmatprep.subr.mxu0 0.0
        %2402 = vmatpush1.msra.mxu0 0.0
        %2403 = vmatprep.subr.mxu0 0.0
        %2404 = vmatpush1.msra.mxu0 0.0
        %2405 = vmatprep.mubr.f32.mxu0 0.0
        %2406 = vmatmul.mubr.f32.gmra.mrb[0].mxu0 %v2336
        %v2407 = vpop.f32.mrb[0].mxu0
        %v2408 = vadd.f32 0.0, %v2407
        %v2409 = vpop.f32.mrb[0].mxu0
        %2410 = vmatprep.mubr.f32.mxu0 0.0
        %2411 = vmatmul.mubr.f32.gmra.mrb[0].mxu0 %v2339
        %v2412 = vpop.f32.mrb[0].mxu0
        %v2413 = vadd.f32 0.0, %v2412
        %v2414 = vpop.f32.mrb[0].mxu0
        %2415 = vdwg.mxu0
        %v2416 = vadd.f32 %v2333, %v2408
        %v2417 = vadd.f32 %v2334, %v2413
        %2418 = vst.msk [vmem:[#allocation2] sm:$0xff] %vm987, %v2416
        %2419 = vst.msk [vmem:[#allocation2 + $0x8] sm:$0xff] %vm987, %v2417
      $region116: #{tpu_custom_call.1} parent=103 // pred_fallthru
        _
      // Predicated region
      $region117: #{tpu_custom_call.1} parent=103 // pred_check
        _
      $region118: #{tpu_custom_call.1} parent=103 // pred_check_branch
        %2421 = sbr.rel (%p696) target = $region120
      $region119: #{tpu_custom_call.1} parent=103 // pred_region
        %v2422 = vld [vmem:[%s3] sm:$0xff]
        %v2423 = vld [vmem:[%s3 + $0x8] sm:$0xff]
        %v2424 = vld [vmem:[%s9] sm:$0xff]
        %v2425 = vld [vmem:[%s9 + $0x8] sm:$0x7]
        %v2426 = vld [vmem:[%s10] sm:$0x1]
        %v2428 = vlaneseq
        %v2429 = vshrl.u32 %v2428, 7
        %v2430 = vsub.s32 0, %v2429
        %v2431 = vrot.slane %v2426, %v2430
        %vm2433 = vcmask 89088
        %v2435 = vsel %vm2433, %v2422, 0
        %v2438 = vsel %vm2433, %v2423, 0
        %vm2440 = vcmask 1042432
        %v2442 = vsel %vm2440, %v2425, 0
        %2444 = vmatprep.subr.mxu0 0.0
        %2445 = vmatpush1.msra.mxu0 %v2424
        %2446 = vmatprep.subr.mxu0 0.0
        %2447 = vmatpush1.msra.mxu0 %v2442
        %2448 = vmatprep.subr.mxu0 0.0
        %2449 = vmatpush1.msra.mxu0 0.0
        %2450 = vmatprep.subr.mxu0 0.0
        %2451 = vmatpush1.msra.mxu0 0.0
        %2452 = vmatprep.subr.mxu0 0.0
        %2453 = vmatpush1.msra.mxu0 0.0
        %2454 = vmatprep.subr.mxu0 0.0
        %2455 = vmatpush1.msra.mxu0 0.0
        %2456 = vmatprep.subr.mxu0 0.0
        %2457 = vmatpush1.msra.mxu0 0.0
        %2458 = vmatprep.subr.mxu0 0.0
        %2459 = vmatpush1.msra.mxu0 0.0
        %2460 = vmatprep.subr.mxu0 0.0
        %2461 = vmatpush1.msra.mxu0 0.0
        %2462 = vmatprep.subr.mxu0 0.0
        %2463 = vmatpush1.msra.mxu0 0.0
        %2464 = vmatprep.subr.mxu0 0.0
        %2465 = vmatpush1.msra.mxu0 0.0
        %2466 = vmatprep.subr.mxu0 0.0
        %2467 = vmatpush1.msra.mxu0 0.0
        %2468 = vmatprep.subr.mxu0 0.0
        %2469 = vmatpush1.msra.mxu0 0.0
        %2470 = vmatprep.subr.mxu0 0.0
        %2471 = vmatpush1.msra.mxu0 0.0
        %2472 = vmatprep.subr.mxu0 0.0
        %2473 = vmatpush1.msra.mxu0 0.0
        %2474 = vmatprep.subr.mxu0 0.0
        %2475 = vmatpush1.msra.mxu0 0.0
        %2476 = vmatprep.subr.mxu0 0.0
        %2477 = vmatpush1.msra.mxu0 0.0
        %2478 = vmatprep.subr.mxu0 0.0
        %2479 = vmatpush1.msra.mxu0 0.0
        %2480 = vmatprep.subr.mxu0 0.0
        %2481 = vmatpush1.msra.mxu0 0.0
        %2482 = vmatprep.subr.mxu0 0.0
        %2483 = vmatpush1.msra.mxu0 0.0
        %2484 = vmatprep.subr.mxu0 0.0
        %2485 = vmatpush1.msra.mxu0 0.0
        %2486 = vmatprep.subr.mxu0 0.0
        %2487 = vmatpush1.msra.mxu0 0.0
        %2488 = vmatprep.subr.mxu0 0.0
        %2489 = vmatpush1.msra.mxu0 0.0
        %2490 = vmatprep.subr.mxu0 0.0
        %2491 = vmatpush1.msra.mxu0 0.0
        %2492 = vmatprep.subr.mxu0 0.0
        %2493 = vmatpush1.msra.mxu0 0.0
        %2494 = vmatprep.subr.mxu0 0.0
        %2495 = vmatpush1.msra.mxu0 0.0
        %2496 = vmatprep.subr.mxu0 0.0
        %2497 = vmatpush1.msra.mxu0 0.0
        %2498 = vmatprep.subr.mxu0 0.0
        %2499 = vmatpush1.msra.mxu0 0.0
        %2500 = vmatprep.subr.mxu0 0.0
        %2501 = vmatpush1.msra.mxu0 0.0
        %2502 = vmatprep.subr.mxu0 0.0
        %2503 = vmatpush1.msra.mxu0 0.0
        %2504 = vmatprep.subr.mxu0 0.0
        %2505 = vmatpush1.msra.mxu0 0.0
        %2506 = vmatprep.subr.mxu0 0.0
        %2507 = vmatpush1.msra.mxu0 0.0
        %2508 = vmatprep.mubr.f32.mxu0 0.0
        %2509 = vmatmul.mubr.f32.gmra.mrb[0].mxu0 %v2435
        %v2510 = vpop.f32.mrb[0].mxu0
        %v2511 = vadd.f32 %v2431, %v2510
        %v2512 = vpop.f32.mrb[0].mxu0
        %2513 = vmatprep.mubr.f32.mxu0 0.0
        %2514 = vmatmul.mubr.f32.gmra.mrb[0].mxu0 %v2438
        %v2515 = vpop.f32.mrb[0].mxu0
        %v2516 = vadd.f32 %v2431, %v2515
        %v2517 = vpop.f32.mrb[0].mxu0
        %2518 = vdwg.mxu0
        %v2519 = vld [vmem:[#allocation2] sm:$0xff]
        %v2520 = vld [vmem:[#allocation2 + $0x8] sm:$0xff]
        %v2521 = vadd.f32 %v2519, %v2511
        %v2522 = vadd.f32 %v2520, %v2516
        %v2523 = vmax.f32 %v2521, 0.0
        %v2524 = vmax.f32 %v2522, 0.0
        %vm2525 = vcmask 261120
        %2526 = vst.msk [vmem:[#allocation2] sm:$0xff] %vm2525, %v2523
        %2527 = vst.msk [vmem:[#allocation2 + $0x8] sm:$0xff] %vm2525, %v2524
      $region120: #{tpu_custom_call.1} parent=103 // pred_fallthru
        _
      // Predicated region
      $region121: #{tpu_custom_call.1} parent=103 // pred_check
        %p2528 = pneg %p703
      $region122: #{tpu_custom_call.1} parent=103 // pred_check_branch
        %2530 = sbr.rel (%p2528) target = $region124
      $region123: #{tpu_custom_call.1} parent=103 // pred_region
        %v2531 = vld [vmem:[%s692] sm:$0xff]
        %v2532 = vld [vmem:[%s692 + $0x8] sm:$0xff]
        %v2533 = vld [vmem:[%s692 + $0x10] sm:$0xff]
        %v2534 = vld [vmem:[%s692 + $0x18] sm:$0xff]
        %v2535 = vld [vmem:[%s11] sm:$0xf]
        %v2536 = vld [vmem:[%s12] sm:$0x1]
        %v2538 = vlaneseq
        %v2539 = vshrl.u32 %v2538, 7
        %v2540 = vsub.s32 0, %v2539
        %v2541 = vrot.slane %v2536, %v2540
        %vm2543 = vcmask 31744
        %v2545 = vsel %vm2543, %v2531, 0
        %v2548 = vsel %vm2543, %v2532, 0
        %v2551 = vsel %vm2543, %v2533, 0
        %v2554 = vsel %vm2543, %v2534, 0
        %vm2556 = vcmask 1043456
        %v2558 = vsel %vm2556, %v2535, 0
        %2560 = vmatprep.subr.mxu0 0.0
        %2561 = vmatpush1.msra.mxu0 %v2558
        %2562 = vmatprep.subr.mxu0 0.0
        %2563 = vmatpush1.msra.mxu0 0.0
        %2564 = vmatprep.subr.mxu0 0.0
        %2565 = vmatpush1.msra.mxu0 0.0
        %2566 = vmatprep.subr.mxu0 0.0
        %2567 = vmatpush1.msra.mxu0 0.0
        %2568 = vmatprep.subr.mxu0 0.0
        %2569 = vmatpush1.msra.mxu0 0.0
        %2570 = vmatprep.subr.mxu0 0.0
        %2571 = vmatpush1.msra.mxu0 0.0
        %2572 = vmatprep.subr.mxu0 0.0
        %2573 = vmatpush1.msra.mxu0 0.0
        %2574 = vmatprep.subr.mxu0 0.0
        %2575 = vmatpush1.msra.mxu0 0.0
        %2576 = vmatprep.subr.mxu0 0.0
        %2577 = vmatpush1.msra.mxu0 0.0
        %2578 = vmatprep.subr.mxu0 0.0
        %2579 = vmatpush1.msra.mxu0 0.0
        %2580 = vmatprep.subr.mxu0 0.0
        %2581 = vmatpush1.msra.mxu0 0.0
        %2582 = vmatprep.subr.mxu0 0.0
        %2583 = vmatpush1.msra.mxu0 0.0
        %2584 = vmatprep.subr.mxu0 0.0
        %2585 = vmatpush1.msra.mxu0 0.0
        %2586 = vmatprep.subr.mxu0 0.0
        %2587 = vmatpush1.msra.mxu0 0.0
        %2588 = vmatprep.subr.mxu0 0.0
        %2589 = vmatpush1.msra.mxu0 0.0
        %2590 = vmatprep.subr.mxu0 0.0
        %2591 = vmatpush1.msra.mxu0 0.0
        %2592 = vmatprep.subr.mxu0 0.0
        %2593 = vmatpush1.msra.mxu0 0.0
        %2594 = vmatprep.subr.mxu0 0.0
        %2595 = vmatpush1.msra.mxu0 0.0
        %2596 = vmatprep.subr.mxu0 0.0
        %2597 = vmatpush1.msra.mxu0 0.0
        %2598 = vmatprep.subr.mxu0 0.0
        %2599 = vmatpush1.msra.mxu0 0.0
        %2600 = vmatprep.subr.mxu0 0.0
        %2601 = vmatpush1.msra.mxu0 0.0
        %2602 = vmatprep.subr.mxu0 0.0
        %2603 = vmatpush1.msra.mxu0 0.0
        %2604 = vmatprep.subr.mxu0 0.0
        %2605 = vmatpush1.msra.mxu0 0.0
        %2606 = vmatprep.subr.mxu0 0.0
        %2607 = vmatpush1.msra.mxu0 0.0
        %2608 = vmatprep.subr.mxu0 0.0
        %2609 = vmatpush1.msra.mxu0 0.0
        %2610 = vmatprep.subr.mxu0 0.0
        %2611 = vmatpush1.msra.mxu0 0.0
        %2612 = vmatprep.subr.mxu0 0.0
        %2613 = vmatpush1.msra.mxu0 0.0
        %2614 = vmatprep.subr.mxu0 0.0
        %2615 = vmatpush1.msra.mxu0 0.0
        %2616 = vmatprep.subr.mxu0 0.0
        %2617 = vmatpush1.msra.mxu0 0.0
        %2618 = vmatprep.subr.mxu0 0.0
        %2619 = vmatpush1.msra.mxu0 0.0
        %2620 = vmatprep.subr.mxu0 0.0
        %2621 = vmatpush1.msra.mxu0 0.0
        %2622 = vmatprep.subr.mxu0 0.0
        %2623 = vmatpush1.msra.mxu0 0.0
        %2624 = vmatprep.mubr.f32.mxu0 0.0
        %2625 = vmatmul.mubr.f32.gmra.mrb[0].mxu0 %v2545
        %v2626 = vpop.f32.mrb[0].mxu0
        %v2627 = vadd.f32 %v2541, %v2626
        %v2628 = vpop.f32.mrb[0].mxu0
        %2629 = vmatprep.mubr.f32.mxu0 0.0
        %2630 = vmatmul.mubr.f32.gmra.mrb[0].mxu0 %v2548
        %v2631 = vpop.f32.mrb[0].mxu0
        %v2632 = vadd.f32 %v2541, %v2631
        %v2633 = vpop.f32.mrb[0].mxu0
        %2634 = vmatprep.mubr.f32.mxu0 0.0
        %2635 = vmatmul.mubr.f32.gmra.mrb[0].mxu0 %v2551
        %v2636 = vpop.f32.mrb[0].mxu0
        %v2637 = vadd.f32 %v2541, %v2636
        %v2638 = vpop.f32.mrb[0].mxu0
        %2639 = vmatprep.mubr.f32.mxu0 0.0
        %2640 = vmatmul.mubr.f32.gmra.mrb[0].mxu0 %v2554
        %v2641 = vpop.f32.mrb[0].mxu0
        %v2642 = vadd.f32 %v2541, %v2641
        %v2643 = vpop.f32.mrb[0].mxu0
        %2644 = vdwg.mxu0
        %v2645 = vmax.f32 %v2627, 0.0
        %v2646 = vmax.f32 %v2632, 0.0
        %v2647 = vmax.f32 %v2637, 0.0
        %v2648 = vmax.f32 %v2642, 0.0
        %v2649 = vld [vmem:[#allocation2] sm:$0xff]
        %v2650 = vld [vmem:[#allocation2 + $0x8] sm:$0xff]
        %vm2651 = vcmask 130048
        %v2653 = vsel %vm2651, %v738, 0
        %v2656 = vsel %vm2651, %v739, 0
        %v2659 = vsel %vm2651, %v740, 0
        %v2662 = vsel %vm2651, %v741, 0
        %2664 = vmatprep.subr.mxu0 0.0
        %2665 = vmatpush1.msra.mxu0 %v2649
        %2666 = vmatprep.subr.mxu0 0.0
        %2667 = vmatpush1.msra.mxu0 %v2650
        %2668 = vmatprep.subr.mxu0 0.0
        %2669 = vmatpush1.msra.mxu0 0.0
        %2670 = vmatprep.subr.mxu0 0.0
        %2671 = vmatpush1.msra.mxu0 0.0
        %2672 = vmatprep.subr.mxu0 0.0
        %2673 = vmatpush1.msra.mxu0 0.0
        %2674 = vmatprep.subr.mxu0 0.0
        %2675 = vmatpush1.msra.mxu0 0.0
        %2676 = vmatprep.subr.mxu0 0.0
        %2677 = vmatpush1.msra.mxu0 0.0
        %2678 = vmatprep.subr.mxu0 0.0
        %2679 = vmatpush1.msra.mxu0 0.0
        %2680 = vmatprep.subr.mxu0 0.0
        %2681 = vmatpush1.msra.mxu0 0.0
        %2682 = vmatprep.subr.mxu0 0.0
        %2683 = vmatpush1.msra.mxu0 0.0
        %2684 = vmatprep.subr.mxu0 0.0
        %2685 = vmatpush1.msra.mxu0 0.0
        %2686 = vmatprep.subr.mxu0 0.0
        %2687 = vmatpush1.msra.mxu0 0.0
        %2688 = vmatprep.subr.mxu0 0.0
        %2689 = vmatpush1.msra.mxu0 0.0
        %2690 = vmatprep.subr.mxu0 0.0
        %2691 = vmatpush1.msra.mxu0 0.0
        %2692 = vmatprep.subr.mxu0 0.0
        %2693 = vmatpush1.msra.mxu0 0.0
        %2694 = vmatprep.subr.mxu0 0.0
        %2695 = vmatpush1.msra.mxu0 0.0
        %2696 = vmatprep.subr.mxu0 0.0
        %2697 = vmatpush1.msra.mxu0 0.0
        %2698 = vmatprep.subr.mxu0 0.0
        %2699 = vmatpush1.msra.mxu0 0.0
        %2700 = vmatprep.subr.mxu0 0.0
        %2701 = vmatpush1.msra.mxu0 0.0
        %2702 = vmatprep.subr.mxu0 0.0
        %2703 = vmatpush1.msra.mxu0 0.0
        %2704 = vmatprep.subr.mxu0 0.0
        %2705 = vmatpush1.msra.mxu0 0.0
        %2706 = vmatprep.subr.mxu0 0.0
        %2707 = vmatpush1.msra.mxu0 0.0
        %2708 = vmatprep.subr.mxu0 0.0
        %2709 = vmatpush1.msra.mxu0 0.0
        %2710 = vmatprep.subr.mxu0 0.0
        %2711 = vmatpush1.msra.mxu0 0.0
        %2712 = vmatprep.subr.mxu0 0.0
        %2713 = vmatpush1.msra.mxu0 0.0
        %2714 = vmatprep.subr.mxu0 0.0
        %2715 = vmatpush1.msra.mxu0 0.0
        %2716 = vmatprep.subr.mxu0 0.0
        %2717 = vmatpush1.msra.mxu0 0.0
        %2718 = vmatprep.subr.mxu0 0.0
        %2719 = vmatpush1.msra.mxu0 0.0
        %2720 = vmatprep.subr.mxu0 0.0
        %2721 = vmatpush1.msra.mxu0 0.0
        %2722 = vmatprep.subr.mxu0 0.0
        %2723 = vmatpush1.msra.mxu0 0.0
        %2724 = vmatprep.subr.mxu0 0.0
        %2725 = vmatpush1.msra.mxu0 0.0
        %2726 = vmatprep.subr.mxu0 0.0
        %2727 = vmatpush1.msra.mxu0 0.0
        %2728 = vmatprep.mubr.f32.mxu0 0.0
        %2729 = vmatmul.mubr.f32.gmra.mrb[0].mxu0 %v2653
        %v2730 = vpop.f32.mrb[0].mxu0
        %v2731 = vadd.f32 0.0, %v2730
        %v2732 = vpop.f32.mrb[0].mxu0
        %2733 = vmatprep.mubr.f32.mxu0 0.0
        %2734 = vmatmul.mubr.f32.gmra.mrb[0].mxu0 %v2656
        %v2735 = vpop.f32.mrb[0].mxu0
        %v2736 = vadd.f32 0.0, %v2735
        %v2737 = vpop.f32.mrb[0].mxu0
        %2738 = vmatprep.mubr.f32.mxu0 0.0
        %2739 = vmatmul.mubr.f32.gmra.mrb[0].mxu0 %v2659
        %v2740 = vpop.f32.mrb[0].mxu0
        %v2741 = vadd.f32 0.0, %v2740
        %v2742 = vpop.f32.mrb[0].mxu0
        %2743 = vmatprep.mubr.f32.mxu0 0.0
        %2744 = vmatmul.mubr.f32.gmra.mrb[0].mxu0 %v2662
        %v2745 = vpop.f32.mrb[0].mxu0
        %v2746 = vadd.f32 0.0, %v2745
        %v2747 = vpop.f32.mrb[0].mxu0
        %2748 = vdwg.mxu0
        %v2749 = vld [vmem:[%s13] sm:$0xff]
        %v2750 = vld [vmem:[%s13 + $0x8] sm:$0xff]
        %v2751 = vld [vmem:[%s13 + $0x10] sm:$0xff]
        %v2752 = vld [vmem:[%s13 + $0x18] sm:$0xff]
        %v2753 = vld [vmem:[%s14] sm:$0x1]
        %v2755 = vlaneseq
        %v2756 = vshrl.u32 %v2755, 7
        %v2757 = vsub.s32 0, %v2756
        %v2758 = vrot.slane %v2753, %v2757
        %vm2760 = vcmask 261120
        %v2762 = vsel %vm2760, %v2645, 0
        %v2765 = vsel %vm2760, %v2646, 0
        %v2768 = vsel %vm2760, %v2647, 0
        %v2771 = vsel %vm2760, %v2648, 0
        %2773 = vmatprep.subr.mxu0 0.0
        %2774 = vmatpush1.msra.mxu0 %v2749
        %2775 = vmatprep.subr.mxu0 0.0
        %2776 = vmatpush1.msra.mxu0 %v2750
        %2777 = vmatprep.subr.mxu0 0.0
        %2778 = vmatpush1.msra.mxu0 %v2751
        %2779 = vmatprep.subr.mxu0 0.0
        %2780 = vmatpush1.msra.mxu0 %v2752
        %2781 = vmatprep.subr.mxu0 0.0
        %2782 = vmatpush1.msra.mxu0 0.0
        %2783 = vmatprep.subr.mxu0 0.0
        %2784 = vmatpush1.msra.mxu0 0.0
        %2785 = vmatprep.subr.mxu0 0.0
        %2786 = vmatpush1.msra.mxu0 0.0
        %2787 = vmatprep.subr.mxu0 0.0
        %2788 = vmatpush1.msra.mxu0 0.0
        %2789 = vmatprep.subr.mxu0 0.0
        %2790 = vmatpush1.msra.mxu0 0.0
        %2791 = vmatprep.subr.mxu0 0.0
        %2792 = vmatpush1.msra.mxu0 0.0
        %2793 = vmatprep.subr.mxu0 0.0
        %2794 = vmatpush1.msra.mxu0 0.0
        %2795 = vmatprep.subr.mxu0 0.0
        %2796 = vmatpush1.msra.mxu0 0.0
        %2797 = vmatprep.subr.mxu0 0.0
        %2798 = vmatpush1.msra.mxu0 0.0
        %2799 = vmatprep.subr.mxu0 0.0
        %2800 = vmatpush1.msra.mxu0 0.0
        %2801 = vmatprep.subr.mxu0 0.0
        %2802 = vmatpush1.msra.mxu0 0.0
        %2803 = vmatprep.subr.mxu0 0.0
        %2804 = vmatpush1.msra.mxu0 0.0
        %2805 = vmatprep.subr.mxu0 0.0
        %2806 = vmatpush1.msra.mxu0 0.0
        %2807 = vmatprep.subr.mxu0 0.0
        %2808 = vmatpush1.msra.mxu0 0.0
        %2809 = vmatprep.subr.mxu0 0.0
        %2810 = vmatpush1.msra.mxu0 0.0
        %2811 = vmatprep.subr.mxu0 0.0
        %2812 = vmatpush1.msra.mxu0 0.0
        %2813 = vmatprep.subr.mxu0 0.0
        %2814 = vmatpush1.msra.mxu0 0.0
        %2815 = vmatprep.subr.mxu0 0.0
        %2816 = vmatpush1.msra.mxu0 0.0
        %2817 = vmatprep.subr.mxu0 0.0
        %2818 = vmatpush1.msra.mxu0 0.0
        %2819 = vmatprep.subr.mxu0 0.0
        %2820 = vmatpush1.msra.mxu0 0.0
        %2821 = vmatprep.subr.mxu0 0.0
        %2822 = vmatpush1.msra.mxu0 0.0
        %2823 = vmatprep.subr.mxu0 0.0
        %2824 = vmatpush1.msra.mxu0 0.0
        %2825 = vmatprep.subr.mxu0 0.0
        %2826 = vmatpush1.msra.mxu0 0.0
        %2827 = vmatprep.subr.mxu0 0.0
        %2828 = vmatpush1.msra.mxu0 0.0
        %2829 = vmatprep.subr.mxu0 0.0
        %2830 = vmatpush1.msra.mxu0 0.0
        %2831 = vmatprep.subr.mxu0 0.0
        %2832 = vmatpush1.msra.mxu0 0.0
        %2833 = vmatprep.subr.mxu0 0.0
        %2834 = vmatpush1.msra.mxu0 0.0
        %2835 = vmatprep.subr.mxu0 0.0
        %2836 = vmatpush1.msra.mxu0 0.0
        %2837 = vmatprep.mubr.f32.mxu0 0.0
        %2838 = vmatmul.mubr.f32.gmra.mrb[0].mxu0 %v2762
        %v2839 = vpop.f32.mrb[0].mxu0
        %v2840 = vadd.f32 %v2758, %v2839
        %v2841 = vpop.f32.mrb[0].mxu0
        %2842 = vmatprep.mubr.f32.mxu0 0.0
        %2843 = vmatmul.mubr.f32.gmra.mrb[0].mxu0 %v2765
        %v2844 = vpop.f32.mrb[0].mxu0
        %v2845 = vadd.f32 %v2758, %v2844
        %v2846 = vpop.f32.mrb[0].mxu0
        %2847 = vmatprep.mubr.f32.mxu0 0.0
        %2848 = vmatmul.mubr.f32.gmra.mrb[0].mxu0 %v2768
        %v2849 = vpop.f32.mrb[0].mxu0
        %v2850 = vadd.f32 %v2758, %v2849
        %v2851 = vpop.f32.mrb[0].mxu0
        %2852 = vmatprep.mubr.f32.mxu0 0.0
        %2853 = vmatmul.mubr.f32.gmra.mrb[0].mxu0 %v2771
        %v2854 = vpop.f32.mrb[0].mxu0
        %v2855 = vadd.f32 %v2758, %v2854
        %v2856 = vpop.f32.mrb[0].mxu0
        %2857 = vdwg.mxu0
        %2859 = vset.pattern.permute.xlu0 0
        %2860 = vperm.xlu0 %2859, %v2731
        %v2861 = vpop.permute.xlu0 %2860
        %2864 = vset.pattern.permute.xlu0 0
        %2865 = vperm.xlu0 %2864, %v2736
        %v2866 = vpop.permute.xlu0 %2865
        %2869 = vset.pattern.permute.xlu0 0
        %2870 = vperm.xlu0 %2869, %v2741
        %v2871 = vpop.permute.xlu0 %2870
        %2874 = vset.pattern.permute.xlu0 0
        %2875 = vperm.xlu0 %2874, %v2746
        %v2876 = vpop.permute.xlu0 %2875
        %v2878 = vmul.f32 %v2861, %v2840
        %v2879 = vmul.f32 %v2866, %v2845
        %v2880 = vmul.f32 %v2871, %v2850
        %v2881 = vmul.f32 %v2876, %v2855
        %v2882 = vadd.f32 %v2878, 0.0
        %v2883 = vadd.f32 %v2879, 0.0
        %v2884 = vadd.f32 %v2880, 0.0
        %v2885 = vadd.f32 %v2881, 0.0
        %s2886 = scalar_lea.vmem %s13, 32
        %v2887 = vld [vmem:[%s2886] sm:$0xff]
        %v2888 = vld [vmem:[%s2886 + $0x8] sm:$0xff]
        %v2889 = vld [vmem:[%s2886 + $0x10] sm:$0xff]
        %v2890 = vld [vmem:[%s2886 + $0x18] sm:$0xff]
        %s2891 = scalar_lea.vmem %s14, 1
        %v2892 = vld [vmem:[%s2891] sm:$0x1]
        %v2894 = vlaneseq
        %v2895 = vshrl.u32 %v2894, 7
        %v2896 = vsub.s32 0, %v2895
        %v2897 = vrot.slane %v2892, %v2896
        %2899 = vmatprep.subr.mxu0 0.0
        %2900 = vmatpush1.msra.mxu0 %v2887
        %2901 = vmatprep.subr.mxu0 0.0
        %2902 = vmatpush1.msra.mxu0 %v2888
        %2903 = vmatprep.subr.mxu0 0.0
        %2904 = vmatpush1.msra.mxu0 %v2889
        %2905 = vmatprep.subr.mxu0 0.0
        %2906 = vmatpush1.msra.mxu0 %v2890
        %2907 = vmatprep.subr.mxu0 0.0
        %2908 = vmatpush1.msra.mxu0 0.0
        %2909 = vmatprep.subr.mxu0 0.0
        %2910 = vmatpush1.msra.mxu0 0.0
        %2911 = vmatprep.subr.mxu0 0.0
        %2912 = vmatpush1.msra.mxu0 0.0
        %2913 = vmatprep.subr.mxu0 0.0
        %2914 = vmatpush1.msra.mxu0 0.0
        %2915 = vmatprep.subr.mxu0 0.0
        %2916 = vmatpush1.msra.mxu0 0.0
        %2917 = vmatprep.subr.mxu0 0.0
        %2918 = vmatpush1.msra.mxu0 0.0
        %2919 = vmatprep.subr.mxu0 0.0
        %2920 = vmatpush1.msra.mxu0 0.0
        %2921 = vmatprep.subr.mxu0 0.0
        %2922 = vmatpush1.msra.mxu0 0.0
        %2923 = vmatprep.subr.mxu0 0.0
        %2924 = vmatpush1.msra.mxu0 0.0
        %2925 = vmatprep.subr.mxu0 0.0
        %2926 = vmatpush1.msra.mxu0 0.0
        %2927 = vmatprep.subr.mxu0 0.0
        %2928 = vmatpush1.msra.mxu0 0.0
        %2929 = vmatprep.subr.mxu0 0.0
        %2930 = vmatpush1.msra.mxu0 0.0
        %2931 = vmatprep.subr.mxu0 0.0
        %2932 = vmatpush1.msra.mxu0 0.0
        %2933 = vmatprep.subr.mxu0 0.0
        %2934 = vmatpush1.msra.mxu0 0.0
        %2935 = vmatprep.subr.mxu0 0.0
        %2936 = vmatpush1.msra.mxu0 0.0
        %2937 = vmatprep.subr.mxu0 0.0
        %2938 = vmatpush1.msra.mxu0 0.0
        %2939 = vmatprep.subr.mxu0 0.0
        %2940 = vmatpush1.msra.mxu0 0.0
        %2941 = vmatprep.subr.mxu0 0.0
        %2942 = vmatpush1.msra.mxu0 0.0
        %2943 = vmatprep.subr.mxu0 0.0
        %2944 = vmatpush1.msra.mxu0 0.0
        %2945 = vmatprep.subr.mxu0 0.0
        %2946 = vmatpush1.msra.mxu0 0.0
        %2947 = vmatprep.subr.mxu0 0.0
        %2948 = vmatpush1.msra.mxu0 0.0
        %2949 = vmatprep.subr.mxu0 0.0
        %2950 = vmatpush1.msra.mxu0 0.0
        %2951 = vmatprep.subr.mxu0 0.0
        %2952 = vmatpush1.msra.mxu0 0.0
        %2953 = vmatprep.subr.mxu0 0.0
        %2954 = vmatpush1.msra.mxu0 0.0
        %2955 = vmatprep.subr.mxu0 0.0
        %2956 = vmatpush1.msra.mxu0 0.0
        %2957 = vmatprep.subr.mxu0 0.0
        %2958 = vmatpush1.msra.mxu0 0.0
        %2959 = vmatprep.subr.mxu0 0.0
        %2960 = vmatpush1.msra.mxu0 0.0
        %2961 = vmatprep.subr.mxu0 0.0
        %2962 = vmatpush1.msra.mxu0 0.0
        %2963 = vmatprep.mubr.f32.mxu0 0.0
        %2964 = vmatmul.mubr.f32.gmra.mrb[0].mxu0 %v2762
        %v2965 = vpop.f32.mrb[0].mxu0
        %v2966 = vadd.f32 %v2897, %v2965
        %v2967 = vpop.f32.mrb[0].mxu0
        %2968 = vmatprep.mubr.f32.mxu0 0.0
        %2969 = vmatmul.mubr.f32.gmra.mrb[0].mxu0 %v2765
        %v2970 = vpop.f32.mrb[0].mxu0
        %v2971 = vadd.f32 %v2897, %v2970
        %v2972 = vpop.f32.mrb[0].mxu0
        %2973 = vmatprep.mubr.f32.mxu0 0.0
        %2974 = vmatmul.mubr.f32.gmra.mrb[0].mxu0 %v2768
        %v2975 = vpop.f32.mrb[0].mxu0
        %v2976 = vadd.f32 %v2897, %v2975
        %v2977 = vpop.f32.mrb[0].mxu0
        %2978 = vmatprep.mubr.f32.mxu0 0.0
        %2979 = vmatmul.mubr.f32.gmra.mrb[0].mxu0 %v2771
        %v2980 = vpop.f32.mrb[0].mxu0
        %v2981 = vadd.f32 %v2897, %v2980
        %v2982 = vpop.f32.mrb[0].mxu0
        %2983 = vdwg.mxu0
        %2984 = vset.pattern.permute.xlu0 1
        %2985 = vperm.xlu0 %2984, %v2731
        %v2986 = vpop.permute.xlu0 %2985
        %2988 = vset.pattern.permute.xlu0 1
        %2989 = vperm.xlu0 %2988, %v2736
        %v2990 = vpop.permute.xlu0 %2989
        %2992 = vset.pattern.permute.xlu0 1
        %2993 = vperm.xlu0 %2992, %v2741
        %v2994 = vpop.permute.xlu0 %2993
        %2996 = vset.pattern.permute.xlu0 1
        %2997 = vperm.xlu0 %2996, %v2746
        %v2998 = vpop.permute.xlu0 %2997
        %v3000 = vmul.f32 %v2986, %v2966
        %v3001 = vmul.f32 %v2990, %v2971
        %v3002 = vmul.f32 %v2994, %v2976
        %v3003 = vmul.f32 %v2998, %v2981
        %v3004 = vadd.f32 %v2882, %v3000
        %v3005 = vadd.f32 %v2883, %v3001
        %v3006 = vadd.f32 %v2884, %v3002
        %v3007 = vadd.f32 %v2885, %v3003
        %s3008 = scalar_lea.vmem %s13, 64
        %v3009 = vld [vmem:[%s3008] sm:$0xff]
        %v3010 = vld [vmem:[%s3008 + $0x8] sm:$0xff]
        %v3011 = vld [vmem:[%s3008 + $0x10] sm:$0xff]
        %v3012 = vld [vmem:[%s3008 + $0x18] sm:$0xff]
        %s3013 = scalar_lea.vmem %s14, 2
        %v3014 = vld [vmem:[%s3013] sm:$0x1]
        %v3016 = vlaneseq
        %v3017 = vshrl.u32 %v3016, 7
        %v3018 = vsub.s32 0, %v3017
        %v3019 = vrot.slane %v3014, %v3018
        %3021 = vmatprep.subr.mxu0 0.0
        %3022 = vmatpush1.msra.mxu0 %v3009
        %3023 = vmatprep.subr.mxu0 0.0
        %3024 = vmatpush1.msra.mxu0 %v3010
        %3025 = vmatprep.subr.mxu0 0.0
        %3026 = vmatpush1.msra.mxu0 %v3011
        %3027 = vmatprep.subr.mxu0 0.0
        %3028 = vmatpush1.msra.mxu0 %v3012
        %3029 = vmatprep.subr.mxu0 0.0
        %3030 = vmatpush1.msra.mxu0 0.0
        %3031 = vmatprep.subr.mxu0 0.0
        %3032 = vmatpush1.msra.mxu0 0.0
        %3033 = vmatprep.subr.mxu0 0.0
        %3034 = vmatpush1.msra.mxu0 0.0
        %3035 = vmatprep.subr.mxu0 0.0
        %3036 = vmatpush1.msra.mxu0 0.0
        %3037 = vmatprep.subr.mxu0 0.0
        %3038 = vmatpush1.msra.mxu0 0.0
        %3039 = vmatprep.subr.mxu0 0.0
        %3040 = vmatpush1.msra.mxu0 0.0
        %3041 = vmatprep.subr.mxu0 0.0
        %3042 = vmatpush1.msra.mxu0 0.0
        %3043 = vmatprep.subr.mxu0 0.0
        %3044 = vmatpush1.msra.mxu0 0.0
        %3045 = vmatprep.subr.mxu0 0.0
        %3046 = vmatpush1.msra.mxu0 0.0
        %3047 = vmatprep.subr.mxu0 0.0
        %3048 = vmatpush1.msra.mxu0 0.0
        %3049 = vmatprep.subr.mxu0 0.0
        %3050 = vmatpush1.msra.mxu0 0.0
        %3051 = vmatprep.subr.mxu0 0.0
        %3052 = vmatpush1.msra.mxu0 0.0
        %3053 = vmatprep.subr.mxu0 0.0
        %3054 = vmatpush1.msra.mxu0 0.0
        %3055 = vmatprep.subr.mxu0 0.0
        %3056 = vmatpush1.msra.mxu0 0.0
        %3057 = vmatprep.subr.mxu0 0.0
        %3058 = vmatpush1.msra.mxu0 0.0
        %3059 = vmatprep.subr.mxu0 0.0
        %3060 = vmatpush1.msra.mxu0 0.0
        %3061 = vmatprep.subr.mxu0 0.0
        %3062 = vmatpush1.msra.mxu0 0.0
        %3063 = vmatprep.subr.mxu0 0.0
        %3064 = vmatpush1.msra.mxu0 0.0
        %3065 = vmatprep.subr.mxu0 0.0
        %3066 = vmatpush1.msra.mxu0 0.0
        %3067 = vmatprep.subr.mxu0 0.0
        %3068 = vmatpush1.msra.mxu0 0.0
        %3069 = vmatprep.subr.mxu0 0.0
        %3070 = vmatpush1.msra.mxu0 0.0
        %3071 = vmatprep.subr.mxu0 0.0
        %3072 = vmatpush1.msra.mxu0 0.0
        %3073 = vmatprep.subr.mxu0 0.0
        %3074 = vmatpush1.msra.mxu0 0.0
        %3075 = vmatprep.subr.mxu0 0.0
        %3076 = vmatpush1.msra.mxu0 0.0
        %3077 = vmatprep.subr.mxu0 0.0
        %3078 = vmatpush1.msra.mxu0 0.0
        %3079 = vmatprep.subr.mxu0 0.0
        %3080 = vmatpush1.msra.mxu0 0.0
        %3081 = vmatprep.subr.mxu0 0.0
        %3082 = vmatpush1.msra.mxu0 0.0
        %3083 = vmatprep.subr.mxu0 0.0
        %3084 = vmatpush1.msra.mxu0 0.0
        %3085 = vmatprep.mubr.f32.mxu0 0.0
        %3086 = vmatmul.mubr.f32.gmra.mrb[0].mxu0 %v2762
        %v3087 = vpop.f32.mrb[0].mxu0
        %v3088 = vadd.f32 %v3019, %v3087
        %v3089 = vpop.f32.mrb[0].mxu0
        %3090 = vmatprep.mubr.f32.mxu0 0.0
        %3091 = vmatmul.mubr.f32.gmra.mrb[0].mxu0 %v2765
        %v3092 = vpop.f32.mrb[0].mxu0
        %v3093 = vadd.f32 %v3019, %v3092
        %v3094 = vpop.f32.mrb[0].mxu0
        %3095 = vmatprep.mubr.f32.mxu0 0.0
        %3096 = vmatmul.mubr.f32.gmra.mrb[0].mxu0 %v2768
        %v3097 = vpop.f32.mrb[0].mxu0
        %v3098 = vadd.f32 %v3019, %v3097
        %v3099 = vpop.f32.mrb[0].mxu0
        %3100 = vmatprep.mubr.f32.mxu0 0.0
        %3101 = vmatmul.mubr.f32.gmra.mrb[0].mxu0 %v2771
        %v3102 = vpop.f32.mrb[0].mxu0
        %v3103 = vadd.f32 %v3019, %v3102
        %v3104 = vpop.f32.mrb[0].mxu0
        %3105 = vdwg.mxu0
        %3106 = vset.pattern.permute.xlu0 2
        %3107 = vperm.xlu0 %3106, %v2731
        %v3108 = vpop.permute.xlu0 %3107
        %3110 = vset.pattern.permute.xlu0 2
        %3111 = vperm.xlu0 %3110, %v2736
        %v3112 = vpop.permute.xlu0 %3111
        %3114 = vset.pattern.permute.xlu0 2
        %3115 = vperm.xlu0 %3114, %v2741
        %v3116 = vpop.permute.xlu0 %3115
        %3118 = vset.pattern.permute.xlu0 2
        %3119 = vperm.xlu0 %3118, %v2746
        %v3120 = vpop.permute.xlu0 %3119
        %v3122 = vmul.f32 %v3108, %v3088
        %v3123 = vmul.f32 %v3112, %v3093
        %v3124 = vmul.f32 %v3116, %v3098
        %v3125 = vmul.f32 %v3120, %v3103
        %v3126 = vadd.f32 %v3004, %v3122
        %v3127 = vadd.f32 %v3005, %v3123
        %v3128 = vadd.f32 %v3006, %v3124
        %v3129 = vadd.f32 %v3007, %v3125
        %s3130 = scalar_lea.vmem %s13, 96
        %v3131 = vld [vmem:[%s3130] sm:$0xff]
        %v3132 = vld [vmem:[%s3130 + $0x8] sm:$0xff]
        %v3133 = vld [vmem:[%s3130 + $0x10] sm:$0xff]
        %v3134 = vld [vmem:[%s3130 + $0x18] sm:$0xff]
        %s3135 = scalar_lea.vmem %s14, 3
        %v3136 = vld [vmem:[%s3135] sm:$0x1]
        %v3138 = vlaneseq
        %v3139 = vshrl.u32 %v3138, 7
        %v3140 = vsub.s32 0, %v3139
        %v3141 = vrot.slane %v3136, %v3140
        %3143 = vmatprep.subr.mxu0 0.0
        %3144 = vmatpush1.msra.mxu0 %v3131
        %3145 = vmatprep.subr.mxu0 0.0
        %3146 = vmatpush1.msra.mxu0 %v3132
        %3147 = vmatprep.subr.mxu0 0.0
        %3148 = vmatpush1.msra.mxu0 %v3133
        %3149 = vmatprep.subr.mxu0 0.0
        %3150 = vmatpush1.msra.mxu0 %v3134
        %3151 = vmatprep.subr.mxu0 0.0
        %3152 = vmatpush1.msra.mxu0 0.0
        %3153 = vmatprep.subr.mxu0 0.0
        %3154 = vmatpush1.msra.mxu0 0.0
        %3155 = vmatprep.subr.mxu0 0.0
        %3156 = vmatpush1.msra.mxu0 0.0
        %3157 = vmatprep.subr.mxu0 0.0
        %3158 = vmatpush1.msra.mxu0 0.0
        %3159 = vmatprep.subr.mxu0 0.0
        %3160 = vmatpush1.msra.mxu0 0.0
        %3161 = vmatprep.subr.mxu0 0.0
        %3162 = vmatpush1.msra.mxu0 0.0
        %3163 = vmatprep.subr.mxu0 0.0
        %3164 = vmatpush1.msra.mxu0 0.0
        %3165 = vmatprep.subr.mxu0 0.0
        %3166 = vmatpush1.msra.mxu0 0.0
        %3167 = vmatprep.subr.mxu0 0.0
        %3168 = vmatpush1.msra.mxu0 0.0
        %3169 = vmatprep.subr.mxu0 0.0
        %3170 = vmatpush1.msra.mxu0 0.0
        %3171 = vmatprep.subr.mxu0 0.0
        %3172 = vmatpush1.msra.mxu0 0.0
        %3173 = vmatprep.subr.mxu0 0.0
        %3174 = vmatpush1.msra.mxu0 0.0
        %3175 = vmatprep.subr.mxu0 0.0
        %3176 = vmatpush1.msra.mxu0 0.0
        %3177 = vmatprep.subr.mxu0 0.0
        %3178 = vmatpush1.msra.mxu0 0.0
        %3179 = vmatprep.subr.mxu0 0.0
        %3180 = vmatpush1.msra.mxu0 0.0
        %3181 = vmatprep.subr.mxu0 0.0
        %3182 = vmatpush1.msra.mxu0 0.0
        %3183 = vmatprep.subr.mxu0 0.0
        %3184 = vmatpush1.msra.mxu0 0.0
        %3185 = vmatprep.subr.mxu0 0.0
        %3186 = vmatpush1.msra.mxu0 0.0
        %3187 = vmatprep.subr.mxu0 0.0
        %3188 = vmatpush1.msra.mxu0 0.0
        %3189 = vmatprep.subr.mxu0 0.0
        %3190 = vmatpush1.msra.mxu0 0.0
        %3191 = vmatprep.subr.mxu0 0.0
        %3192 = vmatpush1.msra.mxu0 0.0
        %3193 = vmatprep.subr.mxu0 0.0
        %3194 = vmatpush1.msra.mxu0 0.0
        %3195 = vmatprep.subr.mxu0 0.0
        %3196 = vmatpush1.msra.mxu0 0.0
        %3197 = vmatprep.subr.mxu0 0.0
        %3198 = vmatpush1.msra.mxu0 0.0
        %3199 = vmatprep.subr.mxu0 0.0
        %3200 = vmatpush1.msra.mxu0 0.0
        %3201 = vmatprep.subr.mxu0 0.0
        %3202 = vmatpush1.msra.mxu0 0.0
        %3203 = vmatprep.subr.mxu0 0.0
        %3204 = vmatpush1.msra.mxu0 0.0
        %3205 = vmatprep.subr.mxu0 0.0
        %3206 = vmatpush1.msra.mxu0 0.0
        %3207 = vmatprep.mubr.f32.mxu0 0.0
        %3208 = vmatmul.mubr.f32.gmra.mrb[0].mxu0 %v2762
        %v3209 = vpop.f32.mrb[0].mxu0
        %v3210 = vadd.f32 %v3141, %v3209
        %v3211 = vpop.f32.mrb[0].mxu0
        %3212 = vmatprep.mubr.f32.mxu0 0.0
        %3213 = vmatmul.mubr.f32.gmra.mrb[0].mxu0 %v2765
        %v3214 = vpop.f32.mrb[0].mxu0
        %v3215 = vadd.f32 %v3141, %v3214
        %v3216 = vpop.f32.mrb[0].mxu0
        %3217 = vmatprep.mubr.f32.mxu0 0.0
        %3218 = vmatmul.mubr.f32.gmra.mrb[0].mxu0 %v2768
        %v3219 = vpop.f32.mrb[0].mxu0
        %v3220 = vadd.f32 %v3141, %v3219
        %v3221 = vpop.f32.mrb[0].mxu0
        %3222 = vmatprep.mubr.f32.mxu0 0.0
        %3223 = vmatmul.mubr.f32.gmra.mrb[0].mxu0 %v2771
        %v3224 = vpop.f32.mrb[0].mxu0
        %v3225 = vadd.f32 %v3141, %v3224
        %v3226 = vpop.f32.mrb[0].mxu0
        %3227 = vdwg.mxu0
        %3228 = vset.pattern.permute.xlu0 3
        %3229 = vperm.xlu0 %3228, %v2731
        %v3230 = vpop.permute.xlu0 %3229
        %3232 = vset.pattern.permute.xlu0 3
        %3233 = vperm.xlu0 %3232, %v2736
        %v3234 = vpop.permute.xlu0 %3233
        %3236 = vset.pattern.permute.xlu0 3
        %3237 = vperm.xlu0 %3236, %v2741
        %v3238 = vpop.permute.xlu0 %3237
        %3240 = vset.pattern.permute.xlu0 3
        %3241 = vperm.xlu0 %3240, %v2746
        %v3242 = vpop.permute.xlu0 %3241
        %v3244 = vmul.f32 %v3230, %v3210
        %v3245 = vmul.f32 %v3234, %v3215
        %v3246 = vmul.f32 %v3238, %v3220
        %v3247 = vmul.f32 %v3242, %v3225
        %v3248 = vadd.f32 %v3126, %v3244
        %v3249 = vadd.f32 %v3127, %v3245
        %v3250 = vadd.f32 %v3128, %v3246
        %v3251 = vadd.f32 %v3129, %v3247
        %s3252 = scalar_lea.vmem %s13, 128
        %v3253 = vld [vmem:[%s3252] sm:$0xff]
        %v3254 = vld [vmem:[%s3252 + $0x8] sm:$0xff]
        %v3255 = vld [vmem:[%s3252 + $0x10] sm:$0xff]
        %v3256 = vld [vmem:[%s3252 + $0x18] sm:$0xff]
        %s3257 = scalar_lea.vmem %s14, 4
        %v3258 = vld [vmem:[%s3257] sm:$0x1]
        %v3260 = vlaneseq
        %v3261 = vshrl.u32 %v3260, 7
        %v3262 = vsub.s32 0, %v3261
        %v3263 = vrot.slane %v3258, %v3262
        %3265 = vmatprep.subr.mxu0 0.0
        %3266 = vmatpush1.msra.mxu0 %v3253
        %3267 = vmatprep.subr.mxu0 0.0
        %3268 = vmatpush1.msra.mxu0 %v3254
        %3269 = vmatprep.subr.mxu0 0.0
        %3270 = vmatpush1.msra.mxu0 %v3255
        %3271 = vmatprep.subr.mxu0 0.0
        %3272 = vmatpush1.msra.mxu0 %v3256
        %3273 = vmatprep.subr.mxu0 0.0
        %3274 = vmatpush1.msra.mxu0 0.0
        %3275 = vmatprep.subr.mxu0 0.0
        %3276 = vmatpush1.msra.mxu0 0.0
        %3277 = vmatprep.subr.mxu0 0.0
        %3278 = vmatpush1.msra.mxu0 0.0
        %3279 = vmatprep.subr.mxu0 0.0
        %3280 = vmatpush1.msra.mxu0 0.0
        %3281 = vmatprep.subr.mxu0 0.0
        %3282 = vmatpush1.msra.mxu0 0.0
        %3283 = vmatprep.subr.mxu0 0.0
        %3284 = vmatpush1.msra.mxu0 0.0
        %3285 = vmatprep.subr.mxu0 0.0
        %3286 = vmatpush1.msra.mxu0 0.0
        %3287 = vmatprep.subr.mxu0 0.0
        %3288 = vmatpush1.msra.mxu0 0.0
        %3289 = vmatprep.subr.mxu0 0.0
        %3290 = vmatpush1.msra.mxu0 0.0
        %3291 = vmatprep.subr.mxu0 0.0
        %3292 = vmatpush1.msra.mxu0 0.0
        %3293 = vmatprep.subr.mxu0 0.0
        %3294 = vmatpush1.msra.mxu0 0.0
        %3295 = vmatprep.subr.mxu0 0.0
        %3296 = vmatpush1.msra.mxu0 0.0
        %3297 = vmatprep.subr.mxu0 0.0
        %3298 = vmatpush1.msra.mxu0 0.0
        %3299 = vmatprep.subr.mxu0 0.0
        %3300 = vmatpush1.msra.mxu0 0.0
        %3301 = vmatprep.subr.mxu0 0.0
        %3302 = vmatpush1.msra.mxu0 0.0
        %3303 = vmatprep.subr.mxu0 0.0
        %3304 = vmatpush1.msra.mxu0 0.0
        %3305 = vmatprep.subr.mxu0 0.0
        %3306 = vmatpush1.msra.mxu0 0.0
        %3307 = vmatprep.subr.mxu0 0.0
        %3308 = vmatpush1.msra.mxu0 0.0
        %3309 = vmatprep.subr.mxu0 0.0
        %3310 = vmatpush1.msra.mxu0 0.0
        %3311 = vmatprep.subr.mxu0 0.0
        %3312 = vmatpush1.msra.mxu0 0.0
        %3313 = vmatprep.subr.mxu0 0.0
        %3314 = vmatpush1.msra.mxu0 0.0
        %3315 = vmatprep.subr.mxu0 0.0
        %3316 = vmatpush1.msra.mxu0 0.0
        %3317 = vmatprep.subr.mxu0 0.0
        %3318 = vmatpush1.msra.mxu0 0.0
        %3319 = vmatprep.subr.mxu0 0.0
        %3320 = vmatpush1.msra.mxu0 0.0
        %3321 = vmatprep.subr.mxu0 0.0
        %3322 = vmatpush1.msra.mxu0 0.0
        %3323 = vmatprep.subr.mxu0 0.0
        %3324 = vmatpush1.msra.mxu0 0.0
        %3325 = vmatprep.subr.mxu0 0.0
        %3326 = vmatpush1.msra.mxu0 0.0
        %3327 = vmatprep.subr.mxu0 0.0
        %3328 = vmatpush1.msra.mxu0 0.0
        %3329 = vmatprep.mubr.f32.mxu0 0.0
        %3330 = vmatmul.mubr.f32.gmra.mrb[0].mxu0 %v2762
        %v3331 = vpop.f32.mrb[0].mxu0
        %v3332 = vadd.f32 %v3263, %v3331
        %v3333 = vpop.f32.mrb[0].mxu0
        %3334 = vmatprep.mubr.f32.mxu0 0.0
        %3335 = vmatmul.mubr.f32.gmra.mrb[0].mxu0 %v2765
        %v3336 = vpop.f32.mrb[0].mxu0
        %v3337 = vadd.f32 %v3263, %v3336
        %v3338 = vpop.f32.mrb[0].mxu0
        %3339 = vmatprep.mubr.f32.mxu0 0.0
        %3340 = vmatmul.mubr.f32.gmra.mrb[0].mxu0 %v2768
        %v3341 = vpop.f32.mrb[0].mxu0
        %v3342 = vadd.f32 %v3263, %v3341
        %v3343 = vpop.f32.mrb[0].mxu0
        %3344 = vmatprep.mubr.f32.mxu0 0.0
        %3345 = vmatmul.mubr.f32.gmra.mrb[0].mxu0 %v2771
        %v3346 = vpop.f32.mrb[0].mxu0
        %v3347 = vadd.f32 %v3263, %v3346
        %v3348 = vpop.f32.mrb[0].mxu0
        %3349 = vdwg.mxu0
        %3350 = vset.pattern.permute.xlu0 4
        %3351 = vperm.xlu0 %3350, %v2731
        %v3352 = vpop.permute.xlu0 %3351
        %3354 = vset.pattern.permute.xlu0 4
        %3355 = vperm.xlu0 %3354, %v2736
        %v3356 = vpop.permute.xlu0 %3355
        %3358 = vset.pattern.permute.xlu0 4
        %3359 = vperm.xlu0 %3358, %v2741
        %v3360 = vpop.permute.xlu0 %3359
        %3362 = vset.pattern.permute.xlu0 4
        %3363 = vperm.xlu0 %3362, %v2746
        %v3364 = vpop.permute.xlu0 %3363
        %v3366 = vmul.f32 %v3352, %v3332
        %v3367 = vmul.f32 %v3356, %v3337
        %v3368 = vmul.f32 %v3360, %v3342
        %v3369 = vmul.f32 %v3364, %v3347
        %v3370 = vadd.f32 %v3248, %v3366
        %v3371 = vadd.f32 %v3249, %v3367
        %v3372 = vadd.f32 %v3250, %v3368
        %v3373 = vadd.f32 %v3251, %v3369
        %s3374 = scalar_lea.vmem %s13, 160
        %v3375 = vld [vmem:[%s3374] sm:$0xff]
        %v3376 = vld [vmem:[%s3374 + $0x8] sm:$0xff]
        %v3377 = vld [vmem:[%s3374 + $0x10] sm:$0xff]
        %v3378 = vld [vmem:[%s3374 + $0x18] sm:$0xff]
        %s3379 = scalar_lea.vmem %s14, 5
        %v3380 = vld [vmem:[%s3379] sm:$0x1]
        %v3382 = vlaneseq
        %v3383 = vshrl.u32 %v3382, 7
        %v3384 = vsub.s32 0, %v3383
        %v3385 = vrot.slane %v3380, %v3384
        %3387 = vmatprep.subr.mxu0 0.0
        %3388 = vmatpush1.msra.mxu0 %v3375
        %3389 = vmatprep.subr.mxu0 0.0
        %3390 = vmatpush1.msra.mxu0 %v3376
        %3391 = vmatprep.subr.mxu0 0.0
        %3392 = vmatpush1.msra.mxu0 %v3377
        %3393 = vmatprep.subr.mxu0 0.0
        %3394 = vmatpush1.msra.mxu0 %v3378
        %3395 = vmatprep.subr.mxu0 0.0
        %3396 = vmatpush1.msra.mxu0 0.0
        %3397 = vmatprep.subr.mxu0 0.0
        %3398 = vmatpush1.msra.mxu0 0.0
        %3399 = vmatprep.subr.mxu0 0.0
        %3400 = vmatpush1.msra.mxu0 0.0
        %3401 = vmatprep.subr.mxu0 0.0
        %3402 = vmatpush1.msra.mxu0 0.0
        %3403 = vmatprep.subr.mxu0 0.0
        %3404 = vmatpush1.msra.mxu0 0.0
        %3405 = vmatprep.subr.mxu0 0.0
        %3406 = vmatpush1.msra.mxu0 0.0
        %3407 = vmatprep.subr.mxu0 0.0
        %3408 = vmatpush1.msra.mxu0 0.0
        %3409 = vmatprep.subr.mxu0 0.0
        %3410 = vmatpush1.msra.mxu0 0.0
        %3411 = vmatprep.subr.mxu0 0.0
        %3412 = vmatpush1.msra.mxu0 0.0
        %3413 = vmatprep.subr.mxu0 0.0
        %3414 = vmatpush1.msra.mxu0 0.0
        %3415 = vmatprep.subr.mxu0 0.0
        %3416 = vmatpush1.msra.mxu0 0.0
        %3417 = vmatprep.subr.mxu0 0.0
        %3418 = vmatpush1.msra.mxu0 0.0
        %3419 = vmatprep.subr.mxu0 0.0
        %3420 = vmatpush1.msra.mxu0 0.0
        %3421 = vmatprep.subr.mxu0 0.0
        %3422 = vmatpush1.msra.mxu0 0.0
        %3423 = vmatprep.subr.mxu0 0.0
        %3424 = vmatpush1.msra.mxu0 0.0
        %3425 = vmatprep.subr.mxu0 0.0
        %3426 = vmatpush1.msra.mxu0 0.0
        %3427 = vmatprep.subr.mxu0 0.0
        %3428 = vmatpush1.msra.mxu0 0.0
        %3429 = vmatprep.subr.mxu0 0.0
        %3430 = vmatpush1.msra.mxu0 0.0
        %3431 = vmatprep.subr.mxu0 0.0
        %3432 = vmatpush1.msra.mxu0 0.0
        %3433 = vmatprep.subr.mxu0 0.0
        %3434 = vmatpush1.msra.mxu0 0.0
        %3435 = vmatprep.subr.mxu0 0.0
        %3436 = vmatpush1.msra.mxu0 0.0
        %3437 = vmatprep.subr.mxu0 0.0
        %3438 = vmatpush1.msra.mxu0 0.0
        %3439 = vmatprep.subr.mxu0 0.0
        %3440 = vmatpush1.msra.mxu0 0.0
        %3441 = vmatprep.subr.mxu0 0.0
        %3442 = vmatpush1.msra.mxu0 0.0
        %3443 = vmatprep.subr.mxu0 0.0
        %3444 = vmatpush1.msra.mxu0 0.0
        %3445 = vmatprep.subr.mxu0 0.0
        %3446 = vmatpush1.msra.mxu0 0.0
        %3447 = vmatprep.subr.mxu0 0.0
        %3448 = vmatpush1.msra.mxu0 0.0
        %3449 = vmatprep.subr.mxu0 0.0
        %3450 = vmatpush1.msra.mxu0 0.0
        %3451 = vmatprep.mubr.f32.mxu0 0.0
        %3452 = vmatmul.mubr.f32.gmra.mrb[0].mxu0 %v2762
        %v3453 = vpop.f32.mrb[0].mxu0
        %v3454 = vadd.f32 %v3385, %v3453
        %v3455 = vpop.f32.mrb[0].mxu0
        %3456 = vmatprep.mubr.f32.mxu0 0.0
        %3457 = vmatmul.mubr.f32.gmra.mrb[0].mxu0 %v2765
        %v3458 = vpop.f32.mrb[0].mxu0
        %v3459 = vadd.f32 %v3385, %v3458
        %v3460 = vpop.f32.mrb[0].mxu0
        %3461 = vmatprep.mubr.f32.mxu0 0.0
        %3462 = vmatmul.mubr.f32.gmra.mrb[0].mxu0 %v2768
        %v3463 = vpop.f32.mrb[0].mxu0
        %v3464 = vadd.f32 %v3385, %v3463
        %v3465 = vpop.f32.mrb[0].mxu0
        %3466 = vmatprep.mubr.f32.mxu0 0.0
        %3467 = vmatmul.mubr.f32.gmra.mrb[0].mxu0 %v2771
        %v3468 = vpop.f32.mrb[0].mxu0
        %v3469 = vadd.f32 %v3385, %v3468
        %v3470 = vpop.f32.mrb[0].mxu0
        %3471 = vdwg.mxu0
        %3472 = vset.pattern.permute.xlu0 5
        %3473 = vperm.xlu0 %3472, %v2731
        %v3474 = vpop.permute.xlu0 %3473
        %3476 = vset.pattern.permute.xlu0 5
        %3477 = vperm.xlu0 %3476, %v2736
        %v3478 = vpop.permute.xlu0 %3477
        %3480 = vset.pattern.permute.xlu0 5
        %3481 = vperm.xlu0 %3480, %v2741
        %v3482 = vpop.permute.xlu0 %3481
        %3484 = vset.pattern.permute.xlu0 5
        %3485 = vperm.xlu0 %3484, %v2746
        %v3486 = vpop.permute.xlu0 %3485
        %v3488 = vmul.f32 %v3474, %v3454
        %v3489 = vmul.f32 %v3478, %v3459
        %v3490 = vmul.f32 %v3482, %v3464
        %v3491 = vmul.f32 %v3486, %v3469
        %v3492 = vadd.f32 %v3370, %v3488
        %v3493 = vadd.f32 %v3371, %v3489
        %v3494 = vadd.f32 %v3372, %v3490
        %v3495 = vadd.f32 %v3373, %v3491
        %s3496 = scalar_lea.vmem %s13, 192
        %v3497 = vld [vmem:[%s3496] sm:$0xff]
        %v3498 = vld [vmem:[%s3496 + $0x8] sm:$0xff]
        %v3499 = vld [vmem:[%s3496 + $0x10] sm:$0xff]
        %v3500 = vld [vmem:[%s3496 + $0x18] sm:$0xff]
        %s3501 = scalar_lea.vmem %s14, 6
        %v3502 = vld [vmem:[%s3501] sm:$0x1]
        %v3504 = vlaneseq
        %v3505 = vshrl.u32 %v3504, 7
        %v3506 = vsub.s32 0, %v3505
        %v3507 = vrot.slane %v3502, %v3506
        %3509 = vmatprep.subr.mxu0 0.0
        %3510 = vmatpush1.msra.mxu0 %v3497
        %3511 = vmatprep.subr.mxu0 0.0
        %3512 = vmatpush1.msra.mxu0 %v3498
        %3513 = vmatprep.subr.mxu0 0.0
        %3514 = vmatpush1.msra.mxu0 %v3499
        %3515 = vmatprep.subr.mxu0 0.0
        %3516 = vmatpush1.msra.mxu0 %v3500
        %3517 = vmatprep.subr.mxu0 0.0
        %3518 = vmatpush1.msra.mxu0 0.0
        %3519 = vmatprep.subr.mxu0 0.0
        %3520 = vmatpush1.msra.mxu0 0.0
        %3521 = vmatprep.subr.mxu0 0.0
        %3522 = vmatpush1.msra.mxu0 0.0
        %3523 = vmatprep.subr.mxu0 0.0
        %3524 = vmatpush1.msra.mxu0 0.0
        %3525 = vmatprep.subr.mxu0 0.0
        %3526 = vmatpush1.msra.mxu0 0.0
        %3527 = vmatprep.subr.mxu0 0.0
        %3528 = vmatpush1.msra.mxu0 0.0
        %3529 = vmatprep.subr.mxu0 0.0
        %3530 = vmatpush1.msra.mxu0 0.0
        %3531 = vmatprep.subr.mxu0 0.0
        %3532 = vmatpush1.msra.mxu0 0.0
        %3533 = vmatprep.subr.mxu0 0.0
        %3534 = vmatpush1.msra.mxu0 0.0
        %3535 = vmatprep.subr.mxu0 0.0
        %3536 = vmatpush1.msra.mxu0 0.0
        %3537 = vmatprep.subr.mxu0 0.0
        %3538 = vmatpush1.msra.mxu0 0.0
        %3539 = vmatprep.subr.mxu0 0.0
        %3540 = vmatpush1.msra.mxu0 0.0
        %3541 = vmatprep.subr.mxu0 0.0
        %3542 = vmatpush1.msra.mxu0 0.0
        %3543 = vmatprep.subr.mxu0 0.0
        %3544 = vmatpush1.msra.mxu0 0.0
        %3545 = vmatprep.subr.mxu0 0.0
        %3546 = vmatpush1.msra.mxu0 0.0
        %3547 = vmatprep.subr.mxu0 0.0
        %3548 = vmatpush1.msra.mxu0 0.0
        %3549 = vmatprep.subr.mxu0 0.0
        %3550 = vmatpush1.msra.mxu0 0.0
        %3551 = vmatprep.subr.mxu0 0.0
        %3552 = vmatpush1.msra.mxu0 0.0
        %3553 = vmatprep.subr.mxu0 0.0
        %3554 = vmatpush1.msra.mxu0 0.0
        %3555 = vmatprep.subr.mxu0 0.0
        %3556 = vmatpush1.msra.mxu0 0.0
        %3557 = vmatprep.subr.mxu0 0.0
        %3558 = vmatpush1.msra.mxu0 0.0
        %3559 = vmatprep.subr.mxu0 0.0
        %3560 = vmatpush1.msra.mxu0 0.0
        %3561 = vmatprep.subr.mxu0 0.0
        %3562 = vmatpush1.msra.mxu0 0.0
        %3563 = vmatprep.subr.mxu0 0.0
        %3564 = vmatpush1.msra.mxu0 0.0
        %3565 = vmatprep.subr.mxu0 0.0
        %3566 = vmatpush1.msra.mxu0 0.0
        %3567 = vmatprep.subr.mxu0 0.0
        %3568 = vmatpush1.msra.mxu0 0.0
        %3569 = vmatprep.subr.mxu0 0.0
        %3570 = vmatpush1.msra.mxu0 0.0
        %3571 = vmatprep.subr.mxu0 0.0
        %3572 = vmatpush1.msra.mxu0 0.0
        %3573 = vmatprep.mubr.f32.mxu0 0.0
        %3574 = vmatmul.mubr.f32.gmra.mrb[0].mxu0 %v2762
        %v3575 = vpop.f32.mrb[0].mxu0
        %v3576 = vadd.f32 %v3507, %v3575
        %v3577 = vpop.f32.mrb[0].mxu0
        %3578 = vmatprep.mubr.f32.mxu0 0.0
        %3579 = vmatmul.mubr.f32.gmra.mrb[0].mxu0 %v2765
        %v3580 = vpop.f32.mrb[0].mxu0
        %v3581 = vadd.f32 %v3507, %v3580
        %v3582 = vpop.f32.mrb[0].mxu0
        %3583 = vmatprep.mubr.f32.mxu0 0.0
        %3584 = vmatmul.mubr.f32.gmra.mrb[0].mxu0 %v2768
        %v3585 = vpop.f32.mrb[0].mxu0
        %v3586 = vadd.f32 %v3507, %v3585
        %v3587 = vpop.f32.mrb[0].mxu0
        %3588 = vmatprep.mubr.f32.mxu0 0.0
        %3589 = vmatmul.mubr.f32.gmra.mrb[0].mxu0 %v2771
        %v3590 = vpop.f32.mrb[0].mxu0
        %v3591 = vadd.f32 %v3507, %v3590
        %v3592 = vpop.f32.mrb[0].mxu0
        %3593 = vdwg.mxu0
        %3594 = vset.pattern.permute.xlu0 6
        %3595 = vperm.xlu0 %3594, %v2731
        %v3596 = vpop.permute.xlu0 %3595
        %3598 = vset.pattern.permute.xlu0 6
        %3599 = vperm.xlu0 %3598, %v2736
        %v3600 = vpop.permute.xlu0 %3599
        %3602 = vset.pattern.permute.xlu0 6
        %3603 = vperm.xlu0 %3602, %v2741
        %v3604 = vpop.permute.xlu0 %3603
        %3606 = vset.pattern.permute.xlu0 6
        %3607 = vperm.xlu0 %3606, %v2746
        %v3608 = vpop.permute.xlu0 %3607
        %v3610 = vmul.f32 %v3596, %v3576
        %v3611 = vmul.f32 %v3600, %v3581
        %v3612 = vmul.f32 %v3604, %v3586
        %v3613 = vmul.f32 %v3608, %v3591
        %v3614 = vadd.f32 %v3492, %v3610
        %v3615 = vadd.f32 %v3493, %v3611
        %v3616 = vadd.f32 %v3494, %v3612
        %v3617 = vadd.f32 %v3495, %v3613
        %s3618 = scalar_lea.vmem %s13, 224
        %v3619 = vld [vmem:[%s3618] sm:$0xff]
        %v3620 = vld [vmem:[%s3618 + $0x8] sm:$0xff]
        %v3621 = vld [vmem:[%s3618 + $0x10] sm:$0xff]
        %v3622 = vld [vmem:[%s3618 + $0x18] sm:$0xff]
        %s3623 = scalar_lea.vmem %s14, 7
        %v3624 = vld [vmem:[%s3623] sm:$0x1]
        %v3626 = vlaneseq
        %v3627 = vshrl.u32 %v3626, 7
        %v3628 = vsub.s32 0, %v3627
        %v3629 = vrot.slane %v3624, %v3628
        %3631 = vmatprep.subr.mxu0 0.0
        %3632 = vmatpush1.msra.mxu0 %v3619
        %3633 = vmatprep.subr.mxu0 0.0
        %3634 = vmatpush1.msra.mxu0 %v3620
        %3635 = vmatprep.subr.mxu0 0.0
        %3636 = vmatpush1.msra.mxu0 %v3621
        %3637 = vmatprep.subr.mxu0 0.0
        %3638 = vmatpush1.msra.mxu0 %v3622
        %3639 = vmatprep.subr.mxu0 0.0
        %3640 = vmatpush1.msra.mxu0 0.0
        %3641 = vmatprep.subr.mxu0 0.0
        %3642 = vmatpush1.msra.mxu0 0.0
        %3643 = vmatprep.subr.mxu0 0.0
        %3644 = vmatpush1.msra.mxu0 0.0
        %3645 = vmatprep.subr.mxu0 0.0
        %3646 = vmatpush1.msra.mxu0 0.0
        %3647 = vmatprep.subr.mxu0 0.0
        %3648 = vmatpush1.msra.mxu0 0.0
        %3649 = vmatprep.subr.mxu0 0.0
        %3650 = vmatpush1.msra.mxu0 0.0
        %3651 = vmatprep.subr.mxu0 0.0
        %3652 = vmatpush1.msra.mxu0 0.0
        %3653 = vmatprep.subr.mxu0 0.0
        %3654 = vmatpush1.msra.mxu0 0.0
        %3655 = vmatprep.subr.mxu0 0.0
        %3656 = vmatpush1.msra.mxu0 0.0
        %3657 = vmatprep.subr.mxu0 0.0
        %3658 = vmatpush1.msra.mxu0 0.0
        %3659 = vmatprep.subr.mxu0 0.0
        %3660 = vmatpush1.msra.mxu0 0.0
        %3661 = vmatprep.subr.mxu0 0.0
        %3662 = vmatpush1.msra.mxu0 0.0
        %3663 = vmatprep.subr.mxu0 0.0
        %3664 = vmatpush1.msra.mxu0 0.0
        %3665 = vmatprep.subr.mxu0 0.0
        %3666 = vmatpush1.msra.mxu0 0.0
        %3667 = vmatprep.subr.mxu0 0.0
        %3668 = vmatpush1.msra.mxu0 0.0
        %3669 = vmatprep.subr.mxu0 0.0
        %3670 = vmatpush1.msra.mxu0 0.0
        %3671 = vmatprep.subr.mxu0 0.0
        %3672 = vmatpush1.msra.mxu0 0.0
        %3673 = vmatprep.subr.mxu0 0.0
        %3674 = vmatpush1.msra.mxu0 0.0
        %3675 = vmatprep.subr.mxu0 0.0
        %3676 = vmatpush1.msra.mxu0 0.0
        %3677 = vmatprep.subr.mxu0 0.0
        %3678 = vmatpush1.msra.mxu0 0.0
        %3679 = vmatprep.subr.mxu0 0.0
        %3680 = vmatpush1.msra.mxu0 0.0
        %3681 = vmatprep.subr.mxu0 0.0
        %3682 = vmatpush1.msra.mxu0 0.0
        %3683 = vmatprep.subr.mxu0 0.0
        %3684 = vmatpush1.msra.mxu0 0.0
        %3685 = vmatprep.subr.mxu0 0.0
        %3686 = vmatpush1.msra.mxu0 0.0
        %3687 = vmatprep.subr.mxu0 0.0
        %3688 = vmatpush1.msra.mxu0 0.0
        %3689 = vmatprep.subr.mxu0 0.0
        %3690 = vmatpush1.msra.mxu0 0.0
        %3691 = vmatprep.subr.mxu0 0.0
        %3692 = vmatpush1.msra.mxu0 0.0
        %3693 = vmatprep.subr.mxu0 0.0
        %3694 = vmatpush1.msra.mxu0 0.0
        %3695 = vmatprep.mubr.f32.mxu0 0.0
        %3696 = vmatmul.mubr.f32.gmra.mrb[0].mxu0 %v2762
        %v3697 = vpop.f32.mrb[0].mxu0
        %v3698 = vadd.f32 %v3629, %v3697
        %v3699 = vpop.f32.mrb[0].mxu0
        %3700 = vmatprep.mubr.f32.mxu0 0.0
        %3701 = vmatmul.mubr.f32.gmra.mrb[0].mxu0 %v2765
        %v3702 = vpop.f32.mrb[0].mxu0
        %v3703 = vadd.f32 %v3629, %v3702
        %v3704 = vpop.f32.mrb[0].mxu0
        %3705 = vmatprep.mubr.f32.mxu0 0.0
        %3706 = vmatmul.mubr.f32.gmra.mrb[0].mxu0 %v2768
        %v3707 = vpop.f32.mrb[0].mxu0
        %v3708 = vadd.f32 %v3629, %v3707
        %v3709 = vpop.f32.mrb[0].mxu0
        %3710 = vmatprep.mubr.f32.mxu0 0.0
        %3711 = vmatmul.mubr.f32.gmra.mrb[0].mxu0 %v2771
        %v3712 = vpop.f32.mrb[0].mxu0
        %v3713 = vadd.f32 %v3629, %v3712
        %v3714 = vpop.f32.mrb[0].mxu0
        %3715 = vdwg.mxu0
        %3716 = vset.pattern.permute.xlu0 7
        %3717 = vperm.xlu0 %3716, %v2731
        %v3718 = vpop.permute.xlu0 %3717
        %3720 = vset.pattern.permute.xlu0 7
        %3721 = vperm.xlu0 %3720, %v2736
        %v3722 = vpop.permute.xlu0 %3721
        %3724 = vset.pattern.permute.xlu0 7
        %3725 = vperm.xlu0 %3724, %v2741
        %v3726 = vpop.permute.xlu0 %3725
        %3728 = vset.pattern.permute.xlu0 7
        %3729 = vperm.xlu0 %3728, %v2746
        %v3730 = vpop.permute.xlu0 %3729
        %v3732 = vmul.f32 %v3718, %v3698
        %v3733 = vmul.f32 %v3722, %v3703
        %v3734 = vmul.f32 %v3726, %v3708
        %v3735 = vmul.f32 %v3730, %v3713
        %v3736 = vadd.f32 %v3614, %v3732
        %v3737 = vadd.f32 %v3615, %v3733
        %v3738 = vadd.f32 %v3616, %v3734
        %v3739 = vadd.f32 %v3617, %v3735
        %s3740 = scalar_lea.vmem %s13, 256
        %v3741 = vld [vmem:[%s3740] sm:$0xff]
        %v3742 = vld [vmem:[%s3740 + $0x8] sm:$0xff]
        %v3743 = vld [vmem:[%s3740 + $0x10] sm:$0xff]
        %v3744 = vld [vmem:[%s3740 + $0x18] sm:$0xff]
        %s3745 = scalar_lea.vmem %s14, 8
        %v3746 = vld [vmem:[%s3745] sm:$0x1]
        %v3748 = vlaneseq
        %v3749 = vshrl.u32 %v3748, 7
        %v3750 = vsub.s32 0, %v3749
        %v3751 = vrot.slane %v3746, %v3750
        %3753 = vmatprep.subr.mxu0 0.0
        %3754 = vmatpush1.msra.mxu0 %v3741
        %3755 = vmatprep.subr.mxu0 0.0
        %3756 = vmatpush1.msra.mxu0 %v3742
        %3757 = vmatprep.subr.mxu0 0.0
        %3758 = vmatpush1.msra.mxu0 %v3743
        %3759 = vmatprep.subr.mxu0 0.0
        %3760 = vmatpush1.msra.mxu0 %v3744
        %3761 = vmatprep.subr.mxu0 0.0
        %3762 = vmatpush1.msra.mxu0 0.0
        %3763 = vmatprep.subr.mxu0 0.0
        %3764 = vmatpush1.msra.mxu0 0.0
        %3765 = vmatprep.subr.mxu0 0.0
        %3766 = vmatpush1.msra.mxu0 0.0
        %3767 = vmatprep.subr.mxu0 0.0
        %3768 = vmatpush1.msra.mxu0 0.0
        %3769 = vmatprep.subr.mxu0 0.0
        %3770 = vmatpush1.msra.mxu0 0.0
        %3771 = vmatprep.subr.mxu0 0.0
        %3772 = vmatpush1.msra.mxu0 0.0
        %3773 = vmatprep.subr.mxu0 0.0
        %3774 = vmatpush1.msra.mxu0 0.0
        %3775 = vmatprep.subr.mxu0 0.0
        %3776 = vmatpush1.msra.mxu0 0.0
        %3777 = vmatprep.subr.mxu0 0.0
        %3778 = vmatpush1.msra.mxu0 0.0
        %3779 = vmatprep.subr.mxu0 0.0
        %3780 = vmatpush1.msra.mxu0 0.0
        %3781 = vmatprep.subr.mxu0 0.0
        %3782 = vmatpush1.msra.mxu0 0.0
        %3783 = vmatprep.subr.mxu0 0.0
        %3784 = vmatpush1.msra.mxu0 0.0
        %3785 = vmatprep.subr.mxu0 0.0
        %3786 = vmatpush1.msra.mxu0 0.0
        %3787 = vmatprep.subr.mxu0 0.0
        %3788 = vmatpush1.msra.mxu0 0.0
        %3789 = vmatprep.subr.mxu0 0.0
        %3790 = vmatpush1.msra.mxu0 0.0
        %3791 = vmatprep.subr.mxu0 0.0
        %3792 = vmatpush1.msra.mxu0 0.0
        %3793 = vmatprep.subr.mxu0 0.0
        %3794 = vmatpush1.msra.mxu0 0.0
        %3795 = vmatprep.subr.mxu0 0.0
        %3796 = vmatpush1.msra.mxu0 0.0
        %3797 = vmatprep.subr.mxu0 0.0
        %3798 = vmatpush1.msra.mxu0 0.0
        %3799 = vmatprep.subr.mxu0 0.0
        %3800 = vmatpush1.msra.mxu0 0.0
        %3801 = vmatprep.subr.mxu0 0.0
        %3802 = vmatpush1.msra.mxu0 0.0
        %3803 = vmatprep.subr.mxu0 0.0
        %3804 = vmatpush1.msra.mxu0 0.0
        %3805 = vmatprep.subr.mxu0 0.0
        %3806 = vmatpush1.msra.mxu0 0.0
        %3807 = vmatprep.subr.mxu0 0.0
        %3808 = vmatpush1.msra.mxu0 0.0
        %3809 = vmatprep.subr.mxu0 0.0
        %3810 = vmatpush1.msra.mxu0 0.0
        %3811 = vmatprep.subr.mxu0 0.0
        %3812 = vmatpush1.msra.mxu0 0.0
        %3813 = vmatprep.subr.mxu0 0.0
        %3814 = vmatpush1.msra.mxu0 0.0
        %3815 = vmatprep.subr.mxu0 0.0
        %3816 = vmatpush1.msra.mxu0 0.0
        %3817 = vmatprep.mubr.f32.mxu0 0.0
        %3818 = vmatmul.mubr.f32.gmra.mrb[0].mxu0 %v2762
        %v3819 = vpop.f32.mrb[0].mxu0
        %v3820 = vadd.f32 %v3751, %v3819
        %v3821 = vpop.f32.mrb[0].mxu0
        %3822 = vmatprep.mubr.f32.mxu0 0.0
        %3823 = vmatmul.mubr.f32.gmra.mrb[0].mxu0 %v2765
        %v3824 = vpop.f32.mrb[0].mxu0
        %v3825 = vadd.f32 %v3751, %v3824
        %v3826 = vpop.f32.mrb[0].mxu0
        %3827 = vmatprep.mubr.f32.mxu0 0.0
        %3828 = vmatmul.mubr.f32.gmra.mrb[0].mxu0 %v2768
        %v3829 = vpop.f32.mrb[0].mxu0
        %v3830 = vadd.f32 %v3751, %v3829
        %v3831 = vpop.f32.mrb[0].mxu0
        %3832 = vmatprep.mubr.f32.mxu0 0.0
        %3833 = vmatmul.mubr.f32.gmra.mrb[0].mxu0 %v2771
        %v3834 = vpop.f32.mrb[0].mxu0
        %v3835 = vadd.f32 %v3751, %v3834
        %v3836 = vpop.f32.mrb[0].mxu0
        %3837 = vdwg.mxu0
        %3838 = vset.pattern.permute.xlu0 8
        %3839 = vperm.xlu0 %3838, %v2731
        %v3840 = vpop.permute.xlu0 %3839
        %3842 = vset.pattern.permute.xlu0 8
        %3843 = vperm.xlu0 %3842, %v2736
        %v3844 = vpop.permute.xlu0 %3843
        %3846 = vset.pattern.permute.xlu0 8
        %3847 = vperm.xlu0 %3846, %v2741
        %v3848 = vpop.permute.xlu0 %3847
        %3850 = vset.pattern.permute.xlu0 8
        %3851 = vperm.xlu0 %3850, %v2746
        %v3852 = vpop.permute.xlu0 %3851
        %v3854 = vmul.f32 %v3840, %v3820
        %v3855 = vmul.f32 %v3844, %v3825
        %v3856 = vmul.f32 %v3848, %v3830
        %v3857 = vmul.f32 %v3852, %v3835
        %v3858 = vadd.f32 %v3736, %v3854
        %v3859 = vadd.f32 %v3737, %v3855
        %v3860 = vadd.f32 %v3738, %v3856
        %v3861 = vadd.f32 %v3739, %v3857
        %s3862 = scalar_lea.vmem %s13, 288
        %v3863 = vld [vmem:[%s3862] sm:$0xff]
        %v3864 = vld [vmem:[%s3862 + $0x8] sm:$0xff]
        %v3865 = vld [vmem:[%s3862 + $0x10] sm:$0xff]
        %v3866 = vld [vmem:[%s3862 + $0x18] sm:$0xff]
        %s3867 = scalar_lea.vmem %s14, 9
        %v3868 = vld [vmem:[%s3867] sm:$0x1]
        %v3870 = vlaneseq
        %v3871 = vshrl.u32 %v3870, 7
        %v3872 = vsub.s32 0, %v3871
        %v3873 = vrot.slane %v3868, %v3872
        %3875 = vmatprep.subr.mxu0 0.0
        %3876 = vmatpush1.msra.mxu0 %v3863
        %3877 = vmatprep.subr.mxu0 0.0
        %3878 = vmatpush1.msra.mxu0 %v3864
        %3879 = vmatprep.subr.mxu0 0.0
        %3880 = vmatpush1.msra.mxu0 %v3865
        %3881 = vmatprep.subr.mxu0 0.0
        %3882 = vmatpush1.msra.mxu0 %v3866
        %3883 = vmatprep.subr.mxu0 0.0
        %3884 = vmatpush1.msra.mxu0 0.0
        %3885 = vmatprep.subr.mxu0 0.0
        %3886 = vmatpush1.msra.mxu0 0.0
        %3887 = vmatprep.subr.mxu0 0.0
        %3888 = vmatpush1.msra.mxu0 0.0
        %3889 = vmatprep.subr.mxu0 0.0
        %3890 = vmatpush1.msra.mxu0 0.0
        %3891 = vmatprep.subr.mxu0 0.0
        %3892 = vmatpush1.msra.mxu0 0.0
        %3893 = vmatprep.subr.mxu0 0.0
        %3894 = vmatpush1.msra.mxu0 0.0
        %3895 = vmatprep.subr.mxu0 0.0
        %3896 = vmatpush1.msra.mxu0 0.0
        %3897 = vmatprep.subr.mxu0 0.0
        %3898 = vmatpush1.msra.mxu0 0.0
        %3899 = vmatprep.subr.mxu0 0.0
        %3900 = vmatpush1.msra.mxu0 0.0
        %3901 = vmatprep.subr.mxu0 0.0
        %3902 = vmatpush1.msra.mxu0 0.0
        %3903 = vmatprep.subr.mxu0 0.0
        %3904 = vmatpush1.msra.mxu0 0.0
        %3905 = vmatprep.subr.mxu0 0.0
        %3906 = vmatpush1.msra.mxu0 0.0
        %3907 = vmatprep.subr.mxu0 0.0
        %3908 = vmatpush1.msra.mxu0 0.0
        %3909 = vmatprep.subr.mxu0 0.0
        %3910 = vmatpush1.msra.mxu0 0.0
        %3911 = vmatprep.subr.mxu0 0.0
        %3912 = vmatpush1.msra.mxu0 0.0
        %3913 = vmatprep.subr.mxu0 0.0
        %3914 = vmatpush1.msra.mxu0 0.0
        %3915 = vmatprep.subr.mxu0 0.0
        %3916 = vmatpush1.msra.mxu0 0.0
        %3917 = vmatprep.subr.mxu0 0.0
        %3918 = vmatpush1.msra.mxu0 0.0
        %3919 = vmatprep.subr.mxu0 0.0
        %3920 = vmatpush1.msra.mxu0 0.0
        %3921 = vmatprep.subr.mxu0 0.0
        %3922 = vmatpush1.msra.mxu0 0.0
        %3923 = vmatprep.subr.mxu0 0.0
        %3924 = vmatpush1.msra.mxu0 0.0
        %3925 = vmatprep.subr.mxu0 0.0
        %3926 = vmatpush1.msra.mxu0 0.0
        %3927 = vmatprep.subr.mxu0 0.0
        %3928 = vmatpush1.msra.mxu0 0.0
        %3929 = vmatprep.subr.mxu0 0.0
        %3930 = vmatpush1.msra.mxu0 0.0
        %3931 = vmatprep.subr.mxu0 0.0
        %3932 = vmatpush1.msra.mxu0 0.0
        %3933 = vmatprep.subr.mxu0 0.0
        %3934 = vmatpush1.msra.mxu0 0.0
        %3935 = vmatprep.subr.mxu0 0.0
        %3936 = vmatpush1.msra.mxu0 0.0
        %3937 = vmatprep.subr.mxu0 0.0
        %3938 = vmatpush1.msra.mxu0 0.0
        %3939 = vmatprep.mubr.f32.mxu0 0.0
        %3940 = vmatmul.mubr.f32.gmra.mrb[0].mxu0 %v2762
        %v3941 = vpop.f32.mrb[0].mxu0
        %v3942 = vadd.f32 %v3873, %v3941
        %v3943 = vpop.f32.mrb[0].mxu0
        %3944 = vmatprep.mubr.f32.mxu0 0.0
        %3945 = vmatmul.mubr.f32.gmra.mrb[0].mxu0 %v2765
        %v3946 = vpop.f32.mrb[0].mxu0
        %v3947 = vadd.f32 %v3873, %v3946
        %v3948 = vpop.f32.mrb[0].mxu0
        %3949 = vmatprep.mubr.f32.mxu0 0.0
        %3950 = vmatmul.mubr.f32.gmra.mrb[0].mxu0 %v2768
        %v3951 = vpop.f32.mrb[0].mxu0
        %v3952 = vadd.f32 %v3873, %v3951
        %v3953 = vpop.f32.mrb[0].mxu0
        %3954 = vmatprep.mubr.f32.mxu0 0.0
        %3955 = vmatmul.mubr.f32.gmra.mrb[0].mxu0 %v2771
        %v3956 = vpop.f32.mrb[0].mxu0
        %v3957 = vadd.f32 %v3873, %v3956
        %v3958 = vpop.f32.mrb[0].mxu0
        %3959 = vdwg.mxu0
        %3960 = vset.pattern.permute.xlu0 9
        %3961 = vperm.xlu0 %3960, %v2731
        %v3962 = vpop.permute.xlu0 %3961
        %3964 = vset.pattern.permute.xlu0 9
        %3965 = vperm.xlu0 %3964, %v2736
        %v3966 = vpop.permute.xlu0 %3965
        %3968 = vset.pattern.permute.xlu0 9
        %3969 = vperm.xlu0 %3968, %v2741
        %v3970 = vpop.permute.xlu0 %3969
        %3972 = vset.pattern.permute.xlu0 9
        %3973 = vperm.xlu0 %3972, %v2746
        %v3974 = vpop.permute.xlu0 %3973
        %v3976 = vmul.f32 %v3962, %v3942
        %v3977 = vmul.f32 %v3966, %v3947
        %v3978 = vmul.f32 %v3970, %v3952
        %v3979 = vmul.f32 %v3974, %v3957
        %v3980 = vadd.f32 %v3858, %v3976
        %v3981 = vadd.f32 %v3859, %v3977
        %v3982 = vadd.f32 %v3860, %v3978
        %v3983 = vadd.f32 %v3861, %v3979
        %s3984 = scalar_lea.vmem %s13, 320
        %v3985 = vld [vmem:[%s3984] sm:$0xff]
        %v3986 = vld [vmem:[%s3984 + $0x8] sm:$0xff]
        %v3987 = vld [vmem:[%s3984 + $0x10] sm:$0xff]
        %v3988 = vld [vmem:[%s3984 + $0x18] sm:$0xff]
        %s3989 = scalar_lea.vmem %s14, 10
        %v3990 = vld [vmem:[%s3989] sm:$0x1]
        %v3992 = vlaneseq
        %v3993 = vshrl.u32 %v3992, 7
        %v3994 = vsub.s32 0, %v3993
        %v3995 = vrot.slane %v3990, %v3994
        %3997 = vmatprep.subr.mxu0 0.0
        %3998 = vmatpush1.msra.mxu0 %v3985
        %3999 = vmatprep.subr.mxu0 0.0
        %4000 = vmatpush1.msra.mxu0 %v3986
        %4001 = vmatprep.subr.mxu0 0.0
        %4002 = vmatpush1.msra.mxu0 %v3987
        %4003 = vmatprep.subr.mxu0 0.0
        %4004 = vmatpush1.msra.mxu0 %v3988
        %4005 = vmatprep.subr.mxu0 0.0
        %4006 = vmatpush1.msra.mxu0 0.0
        %4007 = vmatprep.subr.mxu0 0.0
        %4008 = vmatpush1.msra.mxu0 0.0
        %4009 = vmatprep.subr.mxu0 0.0
        %4010 = vmatpush1.msra.mxu0 0.0
        %4011 = vmatprep.subr.mxu0 0.0
        %4012 = vmatpush1.msra.mxu0 0.0
        %4013 = vmatprep.subr.mxu0 0.0
        %4014 = vmatpush1.msra.mxu0 0.0
        %4015 = vmatprep.subr.mxu0 0.0
        %4016 = vmatpush1.msra.mxu0 0.0
        %4017 = vmatprep.subr.mxu0 0.0
        %4018 = vmatpush1.msra.mxu0 0.0
        %4019 = vmatprep.subr.mxu0 0.0
        %4020 = vmatpush1.msra.mxu0 0.0
        %4021 = vmatprep.subr.mxu0 0.0
        %4022 = vmatpush1.msra.mxu0 0.0
        %4023 = vmatprep.subr.mxu0 0.0
        %4024 = vmatpush1.msra.mxu0 0.0
        %4025 = vmatprep.subr.mxu0 0.0
        %4026 = vmatpush1.msra.mxu0 0.0
        %4027 = vmatprep.subr.mxu0 0.0
        %4028 = vmatpush1.msra.mxu0 0.0
        %4029 = vmatprep.subr.mxu0 0.0
        %4030 = vmatpush1.msra.mxu0 0.0
        %4031 = vmatprep.subr.mxu0 0.0
        %4032 = vmatpush1.msra.mxu0 0.0
        %4033 = vmatprep.subr.mxu0 0.0
        %4034 = vmatpush1.msra.mxu0 0.0
        %4035 = vmatprep.subr.mxu0 0.0
        %4036 = vmatpush1.msra.mxu0 0.0
        %4037 = vmatprep.subr.mxu0 0.0
        %4038 = vmatpush1.msra.mxu0 0.0
        %4039 = vmatprep.subr.mxu0 0.0
        %4040 = vmatpush1.msra.mxu0 0.0
        %4041 = vmatprep.subr.mxu0 0.0
        %4042 = vmatpush1.msra.mxu0 0.0
        %4043 = vmatprep.subr.mxu0 0.0
        %4044 = vmatpush1.msra.mxu0 0.0
        %4045 = vmatprep.subr.mxu0 0.0
        %4046 = vmatpush1.msra.mxu0 0.0
        %4047 = vmatprep.subr.mxu0 0.0
        %4048 = vmatpush1.msra.mxu0 0.0
        %4049 = vmatprep.subr.mxu0 0.0
        %4050 = vmatpush1.msra.mxu0 0.0
        %4051 = vmatprep.subr.mxu0 0.0
        %4052 = vmatpush1.msra.mxu0 0.0
        %4053 = vmatprep.subr.mxu0 0.0
        %4054 = vmatpush1.msra.mxu0 0.0
        %4055 = vmatprep.subr.mxu0 0.0
        %4056 = vmatpush1.msra.mxu0 0.0
        %4057 = vmatprep.subr.mxu0 0.0
        %4058 = vmatpush1.msra.mxu0 0.0
        %4059 = vmatprep.subr.mxu0 0.0
        %4060 = vmatpush1.msra.mxu0 0.0
        %4061 = vmatprep.mubr.f32.mxu0 0.0
        %4062 = vmatmul.mubr.f32.gmra.mrb[0].mxu0 %v2762
        %v4063 = vpop.f32.mrb[0].mxu0
        %v4064 = vadd.f32 %v3995, %v4063
        %v4065 = vpop.f32.mrb[0].mxu0
        %4066 = vmatprep.mubr.f32.mxu0 0.0
        %4067 = vmatmul.mubr.f32.gmra.mrb[0].mxu0 %v2765
        %v4068 = vpop.f32.mrb[0].mxu0
        %v4069 = vadd.f32 %v3995, %v4068
        %v4070 = vpop.f32.mrb[0].mxu0
        %4071 = vmatprep.mubr.f32.mxu0 0.0
        %4072 = vmatmul.mubr.f32.gmra.mrb[0].mxu0 %v2768
        %v4073 = vpop.f32.mrb[0].mxu0
        %v4074 = vadd.f32 %v3995, %v4073
        %v4075 = vpop.f32.mrb[0].mxu0
        %4076 = vmatprep.mubr.f32.mxu0 0.0
        %4077 = vmatmul.mubr.f32.gmra.mrb[0].mxu0 %v2771
        %v4078 = vpop.f32.mrb[0].mxu0
        %v4079 = vadd.f32 %v3995, %v4078
        %v4080 = vpop.f32.mrb[0].mxu0
        %4081 = vdwg.mxu0
        %4082 = vset.pattern.permute.xlu0 10
        %4083 = vperm.xlu0 %4082, %v2731
        %v4084 = vpop.permute.xlu0 %4083
        %4086 = vset.pattern.permute.xlu0 10
        %4087 = vperm.xlu0 %4086, %v2736
        %v4088 = vpop.permute.xlu0 %4087
        %4090 = vset.pattern.permute.xlu0 10
        %4091 = vperm.xlu0 %4090, %v2741
        %v4092 = vpop.permute.xlu0 %4091
        %4094 = vset.pattern.permute.xlu0 10
        %4095 = vperm.xlu0 %4094, %v2746
        %v4096 = vpop.permute.xlu0 %4095
        %v4098 = vmul.f32 %v4084, %v4064
        %v4099 = vmul.f32 %v4088, %v4069
        %v4100 = vmul.f32 %v4092, %v4074
        %v4101 = vmul.f32 %v4096, %v4079
        %v4102 = vadd.f32 %v3980, %v4098
        %v4103 = vadd.f32 %v3981, %v4099
        %v4104 = vadd.f32 %v3982, %v4100
        %v4105 = vadd.f32 %v3983, %v4101
        %s4106 = scalar_lea.vmem %s13, 352
        %v4107 = vld [vmem:[%s4106] sm:$0xff]
        %v4108 = vld [vmem:[%s4106 + $0x8] sm:$0xff]
        %v4109 = vld [vmem:[%s4106 + $0x10] sm:$0xff]
        %v4110 = vld [vmem:[%s4106 + $0x18] sm:$0xff]
        %s4111 = scalar_lea.vmem %s14, 11
        %v4112 = vld [vmem:[%s4111] sm:$0x1]
        %v4114 = vlaneseq
        %v4115 = vshrl.u32 %v4114, 7
        %v4116 = vsub.s32 0, %v4115
        %v4117 = vrot.slane %v4112, %v4116
        %4119 = vmatprep.subr.mxu0 0.0
        %4120 = vmatpush1.msra.mxu0 %v4107
        %4121 = vmatprep.subr.mxu0 0.0
        %4122 = vmatpush1.msra.mxu0 %v4108
        %4123 = vmatprep.subr.mxu0 0.0
        %4124 = vmatpush1.msra.mxu0 %v4109
        %4125 = vmatprep.subr.mxu0 0.0
        %4126 = vmatpush1.msra.mxu0 %v4110
        %4127 = vmatprep.subr.mxu0 0.0
        %4128 = vmatpush1.msra.mxu0 0.0
        %4129 = vmatprep.subr.mxu0 0.0
        %4130 = vmatpush1.msra.mxu0 0.0
        %4131 = vmatprep.subr.mxu0 0.0
        %4132 = vmatpush1.msra.mxu0 0.0
        %4133 = vmatprep.subr.mxu0 0.0
        %4134 = vmatpush1.msra.mxu0 0.0
        %4135 = vmatprep.subr.mxu0 0.0
        %4136 = vmatpush1.msra.mxu0 0.0
        %4137 = vmatprep.subr.mxu0 0.0
        %4138 = vmatpush1.msra.mxu0 0.0
        %4139 = vmatprep.subr.mxu0 0.0
        %4140 = vmatpush1.msra.mxu0 0.0
        %4141 = vmatprep.subr.mxu0 0.0
        %4142 = vmatpush1.msra.mxu0 0.0
        %4143 = vmatprep.subr.mxu0 0.0
        %4144 = vmatpush1.msra.mxu0 0.0
        %4145 = vmatprep.subr.mxu0 0.0
        %4146 = vmatpush1.msra.mxu0 0.0
        %4147 = vmatprep.subr.mxu0 0.0
        %4148 = vmatpush1.msra.mxu0 0.0
        %4149 = vmatprep.subr.mxu0 0.0
        %4150 = vmatpush1.msra.mxu0 0.0
        %4151 = vmatprep.subr.mxu0 0.0
        %4152 = vmatpush1.msra.mxu0 0.0
        %4153 = vmatprep.subr.mxu0 0.0
        %4154 = vmatpush1.msra.mxu0 0.0
        %4155 = vmatprep.subr.mxu0 0.0
        %4156 = vmatpush1.msra.mxu0 0.0
        %4157 = vmatprep.subr.mxu0 0.0
        %4158 = vmatpush1.msra.mxu0 0.0
        %4159 = vmatprep.subr.mxu0 0.0
        %4160 = vmatpush1.msra.mxu0 0.0
        %4161 = vmatprep.subr.mxu0 0.0
        %4162 = vmatpush1.msra.mxu0 0.0
        %4163 = vmatprep.subr.mxu0 0.0
        %4164 = vmatpush1.msra.mxu0 0.0
        %4165 = vmatprep.subr.mxu0 0.0
        %4166 = vmatpush1.msra.mxu0 0.0
        %4167 = vmatprep.subr.mxu0 0.0
        %4168 = vmatpush1.msra.mxu0 0.0
        %4169 = vmatprep.subr.mxu0 0.0
        %4170 = vmatpush1.msra.mxu0 0.0
        %4171 = vmatprep.subr.mxu0 0.0
        %4172 = vmatpush1.msra.mxu0 0.0
        %4173 = vmatprep.subr.mxu0 0.0
        %4174 = vmatpush1.msra.mxu0 0.0
        %4175 = vmatprep.subr.mxu0 0.0
        %4176 = vmatpush1.msra.mxu0 0.0
        %4177 = vmatprep.subr.mxu0 0.0
        %4178 = vmatpush1.msra.mxu0 0.0
        %4179 = vmatprep.subr.mxu0 0.0
        %4180 = vmatpush1.msra.mxu0 0.0
        %4181 = vmatprep.subr.mxu0 0.0
        %4182 = vmatpush1.msra.mxu0 0.0
        %4183 = vmatprep.mubr.f32.mxu0 0.0
        %4184 = vmatmul.mubr.f32.gmra.mrb[0].mxu0 %v2762
        %v4185 = vpop.f32.mrb[0].mxu0
        %v4186 = vadd.f32 %v4117, %v4185
        %v4187 = vpop.f32.mrb[0].mxu0
        %4188 = vmatprep.mubr.f32.mxu0 0.0
        %4189 = vmatmul.mubr.f32.gmra.mrb[0].mxu0 %v2765
        %v4190 = vpop.f32.mrb[0].mxu0
        %v4191 = vadd.f32 %v4117, %v4190
        %v4192 = vpop.f32.mrb[0].mxu0
        %4193 = vmatprep.mubr.f32.mxu0 0.0
        %4194 = vmatmul.mubr.f32.gmra.mrb[0].mxu0 %v2768
        %v4195 = vpop.f32.mrb[0].mxu0
        %v4196 = vadd.f32 %v4117, %v4195
        %v4197 = vpop.f32.mrb[0].mxu0
        %4198 = vmatprep.mubr.f32.mxu0 0.0
        %4199 = vmatmul.mubr.f32.gmra.mrb[0].mxu0 %v2771
        %v4200 = vpop.f32.mrb[0].mxu0
        %v4201 = vadd.f32 %v4117, %v4200
        %v4202 = vpop.f32.mrb[0].mxu0
        %4203 = vdwg.mxu0
        %4204 = vset.pattern.permute.xlu0 11
        %4205 = vperm.xlu0 %4204, %v2731
        %v4206 = vpop.permute.xlu0 %4205
        %4208 = vset.pattern.permute.xlu0 11
        %4209 = vperm.xlu0 %4208, %v2736
        %v4210 = vpop.permute.xlu0 %4209
        %4212 = vset.pattern.permute.xlu0 11
        %4213 = vperm.xlu0 %4212, %v2741
        %v4214 = vpop.permute.xlu0 %4213
        %4216 = vset.pattern.permute.xlu0 11
        %4217 = vperm.xlu0 %4216, %v2746
        %v4218 = vpop.permute.xlu0 %4217
        %v4220 = vmul.f32 %v4206, %v4186
        %v4221 = vmul.f32 %v4210, %v4191
        %v4222 = vmul.f32 %v4214, %v4196
        %v4223 = vmul.f32 %v4218, %v4201
        %v4224 = vadd.f32 %v4102, %v4220
        %v4225 = vadd.f32 %v4103, %v4221
        %v4226 = vadd.f32 %v4104, %v4222
        %v4227 = vadd.f32 %v4105, %v4223
        %s4228 = scalar_lea.vmem %s13, 384
        %v4229 = vld [vmem:[%s4228] sm:$0xff]
        %v4230 = vld [vmem:[%s4228 + $0x8] sm:$0xff]
        %v4231 = vld [vmem:[%s4228 + $0x10] sm:$0xff]
        %v4232 = vld [vmem:[%s4228 + $0x18] sm:$0xff]
        %s4233 = scalar_lea.vmem %s14, 12
        %v4234 = vld [vmem:[%s4233] sm:$0x1]
        %v4236 = vlaneseq
        %v4237 = vshrl.u32 %v4236, 7
        %v4238 = vsub.s32 0, %v4237
        %v4239 = vrot.slane %v4234, %v4238
        %4241 = vmatprep.subr.mxu0 0.0
        %4242 = vmatpush1.msra.mxu0 %v4229
        %4243 = vmatprep.subr.mxu0 0.0
        %4244 = vmatpush1.msra.mxu0 %v4230
        %4245 = vmatprep.subr.mxu0 0.0
        %4246 = vmatpush1.msra.mxu0 %v4231
        %4247 = vmatprep.subr.mxu0 0.0
        %4248 = vmatpush1.msra.mxu0 %v4232
        %4249 = vmatprep.subr.mxu0 0.0
        %4250 = vmatpush1.msra.mxu0 0.0
        %4251 = vmatprep.subr.mxu0 0.0
        %4252 = vmatpush1.msra.mxu0 0.0
        %4253 = vmatprep.subr.mxu0 0.0
        %4254 = vmatpush1.msra.mxu0 0.0
        %4255 = vmatprep.subr.mxu0 0.0
        %4256 = vmatpush1.msra.mxu0 0.0
        %4257 = vmatprep.subr.mxu0 0.0
        %4258 = vmatpush1.msra.mxu0 0.0
        %4259 = vmatprep.subr.mxu0 0.0
        %4260 = vmatpush1.msra.mxu0 0.0
        %4261 = vmatprep.subr.mxu0 0.0
        %4262 = vmatpush1.msra.mxu0 0.0
        %4263 = vmatprep.subr.mxu0 0.0
        %4264 = vmatpush1.msra.mxu0 0.0
        %4265 = vmatprep.subr.mxu0 0.0
        %4266 = vmatpush1.msra.mxu0 0.0
        %4267 = vmatprep.subr.mxu0 0.0
        %4268 = vmatpush1.msra.mxu0 0.0
        %4269 = vmatprep.subr.mxu0 0.0
        %4270 = vmatpush1.msra.mxu0 0.0
        %4271 = vmatprep.subr.mxu0 0.0
        %4272 = vmatpush1.msra.mxu0 0.0
        %4273 = vmatprep.subr.mxu0 0.0
        %4274 = vmatpush1.msra.mxu0 0.0
        %4275 = vmatprep.subr.mxu0 0.0
        %4276 = vmatpush1.msra.mxu0 0.0
        %4277 = vmatprep.subr.mxu0 0.0
        %4278 = vmatpush1.msra.mxu0 0.0
        %4279 = vmatprep.subr.mxu0 0.0
        %4280 = vmatpush1.msra.mxu0 0.0
        %4281 = vmatprep.subr.mxu0 0.0
        %4282 = vmatpush1.msra.mxu0 0.0
        %4283 = vmatprep.subr.mxu0 0.0
        %4284 = vmatpush1.msra.mxu0 0.0
        %4285 = vmatprep.subr.mxu0 0.0
        %4286 = vmatpush1.msra.mxu0 0.0
        %4287 = vmatprep.subr.mxu0 0.0
        %4288 = vmatpush1.msra.mxu0 0.0
        %4289 = vmatprep.subr.mxu0 0.0
        %4290 = vmatpush1.msra.mxu0 0.0
        %4291 = vmatprep.subr.mxu0 0.0
        %4292 = vmatpush1.msra.mxu0 0.0
        %4293 = vmatprep.subr.mxu0 0.0
        %4294 = vmatpush1.msra.mxu0 0.0
        %4295 = vmatprep.subr.mxu0 0.0
        %4296 = vmatpush1.msra.mxu0 0.0
        %4297 = vmatprep.subr.mxu0 0.0
        %4298 = vmatpush1.msra.mxu0 0.0
        %4299 = vmatprep.subr.mxu0 0.0
        %4300 = vmatpush1.msra.mxu0 0.0
        %4301 = vmatprep.subr.mxu0 0.0
        %4302 = vmatpush1.msra.mxu0 0.0
        %4303 = vmatprep.subr.mxu0 0.0
        %4304 = vmatpush1.msra.mxu0 0.0
        %4305 = vmatprep.mubr.f32.mxu0 0.0
        %4306 = vmatmul.mubr.f32.gmra.mrb[0].mxu0 %v2762
        %v4307 = vpop.f32.mrb[0].mxu0
        %v4308 = vadd.f32 %v4239, %v4307
        %v4309 = vpop.f32.mrb[0].mxu0
        %4310 = vmatprep.mubr.f32.mxu0 0.0
        %4311 = vmatmul.mubr.f32.gmra.mrb[0].mxu0 %v2765
        %v4312 = vpop.f32.mrb[0].mxu0
        %v4313 = vadd.f32 %v4239, %v4312
        %v4314 = vpop.f32.mrb[0].mxu0
        %4315 = vmatprep.mubr.f32.mxu0 0.0
        %4316 = vmatmul.mubr.f32.gmra.mrb[0].mxu0 %v2768
        %v4317 = vpop.f32.mrb[0].mxu0
        %v4318 = vadd.f32 %v4239, %v4317
        %v4319 = vpop.f32.mrb[0].mxu0
        %4320 = vmatprep.mubr.f32.mxu0 0.0
        %4321 = vmatmul.mubr.f32.gmra.mrb[0].mxu0 %v2771
        %v4322 = vpop.f32.mrb[0].mxu0
        %v4323 = vadd.f32 %v4239, %v4322
        %v4324 = vpop.f32.mrb[0].mxu0
        %4325 = vdwg.mxu0
        %4326 = vset.pattern.permute.xlu0 12
        %4327 = vperm.xlu0 %4326, %v2731
        %v4328 = vpop.permute.xlu0 %4327
        %4330 = vset.pattern.permute.xlu0 12
        %4331 = vperm.xlu0 %4330, %v2736
        %v4332 = vpop.permute.xlu0 %4331
        %4334 = vset.pattern.permute.xlu0 12
        %4335 = vperm.xlu0 %4334, %v2741
        %v4336 = vpop.permute.xlu0 %4335
        %4338 = vset.pattern.permute.xlu0 12
        %4339 = vperm.xlu0 %4338, %v2746
        %v4340 = vpop.permute.xlu0 %4339
        %v4342 = vmul.f32 %v4328, %v4308
        %v4343 = vmul.f32 %v4332, %v4313
        %v4344 = vmul.f32 %v4336, %v4318
        %v4345 = vmul.f32 %v4340, %v4323
        %v4346 = vadd.f32 %v4224, %v4342
        %v4347 = vadd.f32 %v4225, %v4343
        %v4348 = vadd.f32 %v4226, %v4344
        %v4349 = vadd.f32 %v4227, %v4345
        %s4350 = scalar_lea.vmem %s13, 416
        %v4351 = vld [vmem:[%s4350] sm:$0xff]
        %v4352 = vld [vmem:[%s4350 + $0x8] sm:$0xff]
        %v4353 = vld [vmem:[%s4350 + $0x10] sm:$0xff]
        %v4354 = vld [vmem:[%s4350 + $0x18] sm:$0xff]
        %s4355 = scalar_lea.vmem %s14, 13
        %v4356 = vld [vmem:[%s4355] sm:$0x1]
        %v4358 = vlaneseq
        %v4359 = vshrl.u32 %v4358, 7
        %v4360 = vsub.s32 0, %v4359
        %v4361 = vrot.slane %v4356, %v4360
        %4363 = vmatprep.subr.mxu0 0.0
        %4364 = vmatpush1.msra.mxu0 %v4351
        %4365 = vmatprep.subr.mxu0 0.0
        %4366 = vmatpush1.msra.mxu0 %v4352
        %4367 = vmatprep.subr.mxu0 0.0
        %4368 = vmatpush1.msra.mxu0 %v4353
        %4369 = vmatprep.subr.mxu0 0.0
        %4370 = vmatpush1.msra.mxu0 %v4354
        %4371 = vmatprep.subr.mxu0 0.0
        %4372 = vmatpush1.msra.mxu0 0.0
        %4373 = vmatprep.subr.mxu0 0.0
        %4374 = vmatpush1.msra.mxu0 0.0
        %4375 = vmatprep.subr.mxu0 0.0
        %4376 = vmatpush1.msra.mxu0 0.0
        %4377 = vmatprep.subr.mxu0 0.0
        %4378 = vmatpush1.msra.mxu0 0.0
        %4379 = vmatprep.subr.mxu0 0.0
        %4380 = vmatpush1.msra.mxu0 0.0
        %4381 = vmatprep.subr.mxu0 0.0
        %4382 = vmatpush1.msra.mxu0 0.0
        %4383 = vmatprep.subr.mxu0 0.0
        %4384 = vmatpush1.msra.mxu0 0.0
        %4385 = vmatprep.subr.mxu0 0.0
        %4386 = vmatpush1.msra.mxu0 0.0
        %4387 = vmatprep.subr.mxu0 0.0
        %4388 = vmatpush1.msra.mxu0 0.0
        %4389 = vmatprep.subr.mxu0 0.0
        %4390 = vmatpush1.msra.mxu0 0.0
        %4391 = vmatprep.subr.mxu0 0.0
        %4392 = vmatpush1.msra.mxu0 0.0
        %4393 = vmatprep.subr.mxu0 0.0
        %4394 = vmatpush1.msra.mxu0 0.0
        %4395 = vmatprep.subr.mxu0 0.0
        %4396 = vmatpush1.msra.mxu0 0.0
        %4397 = vmatprep.subr.mxu0 0.0
        %4398 = vmatpush1.msra.mxu0 0.0
        %4399 = vmatprep.subr.mxu0 0.0
        %4400 = vmatpush1.msra.mxu0 0.0
        %4401 = vmatprep.subr.mxu0 0.0
        %4402 = vmatpush1.msra.mxu0 0.0
        %4403 = vmatprep.subr.mxu0 0.0
        %4404 = vmatpush1.msra.mxu0 0.0
        %4405 = vmatprep.subr.mxu0 0.0
        %4406 = vmatpush1.msra.mxu0 0.0
        %4407 = vmatprep.subr.mxu0 0.0
        %4408 = vmatpush1.msra.mxu0 0.0
        %4409 = vmatprep.subr.mxu0 0.0
        %4410 = vmatpush1.msra.mxu0 0.0
        %4411 = vmatprep.subr.mxu0 0.0
        %4412 = vmatpush1.msra.mxu0 0.0
        %4413 = vmatprep.subr.mxu0 0.0
        %4414 = vmatpush1.msra.mxu0 0.0
        %4415 = vmatprep.subr.mxu0 0.0
        %4416 = vmatpush1.msra.mxu0 0.0
        %4417 = vmatprep.subr.mxu0 0.0
        %4418 = vmatpush1.msra.mxu0 0.0
        %4419 = vmatprep.subr.mxu0 0.0
        %4420 = vmatpush1.msra.mxu0 0.0
        %4421 = vmatprep.subr.mxu0 0.0
        %4422 = vmatpush1.msra.mxu0 0.0
        %4423 = vmatprep.subr.mxu0 0.0
        %4424 = vmatpush1.msra.mxu0 0.0
        %4425 = vmatprep.subr.mxu0 0.0
        %4426 = vmatpush1.msra.mxu0 0.0
        %4427 = vmatprep.mubr.f32.mxu0 0.0
        %4428 = vmatmul.mubr.f32.gmra.mrb[0].mxu0 %v2762
        %v4429 = vpop.f32.mrb[0].mxu0
        %v4430 = vadd.f32 %v4361, %v4429
        %v4431 = vpop.f32.mrb[0].mxu0
        %4432 = vmatprep.mubr.f32.mxu0 0.0
        %4433 = vmatmul.mubr.f32.gmra.mrb[0].mxu0 %v2765
        %v4434 = vpop.f32.mrb[0].mxu0
        %v4435 = vadd.f32 %v4361, %v4434
        %v4436 = vpop.f32.mrb[0].mxu0
        %4437 = vmatprep.mubr.f32.mxu0 0.0
        %4438 = vmatmul.mubr.f32.gmra.mrb[0].mxu0 %v2768
        %v4439 = vpop.f32.mrb[0].mxu0
        %v4440 = vadd.f32 %v4361, %v4439
        %v4441 = vpop.f32.mrb[0].mxu0
        %4442 = vmatprep.mubr.f32.mxu0 0.0
        %4443 = vmatmul.mubr.f32.gmra.mrb[0].mxu0 %v2771
        %v4444 = vpop.f32.mrb[0].mxu0
        %v4445 = vadd.f32 %v4361, %v4444
        %v4446 = vpop.f32.mrb[0].mxu0
        %4447 = vdwg.mxu0
        %4448 = vset.pattern.permute.xlu0 13
        %4449 = vperm.xlu0 %4448, %v2731
        %v4450 = vpop.permute.xlu0 %4449
        %4452 = vset.pattern.permute.xlu0 13
        %4453 = vperm.xlu0 %4452, %v2736
        %v4454 = vpop.permute.xlu0 %4453
        %4456 = vset.pattern.permute.xlu0 13
        %4457 = vperm.xlu0 %4456, %v2741
        %v4458 = vpop.permute.xlu0 %4457
        %4460 = vset.pattern.permute.xlu0 13
        %4461 = vperm.xlu0 %4460, %v2746
        %v4462 = vpop.permute.xlu0 %4461
        %v4464 = vmul.f32 %v4450, %v4430
        %v4465 = vmul.f32 %v4454, %v4435
        %v4466 = vmul.f32 %v4458, %v4440
        %v4467 = vmul.f32 %v4462, %v4445
        %v4468 = vadd.f32 %v4346, %v4464
        %v4469 = vadd.f32 %v4347, %v4465
        %v4470 = vadd.f32 %v4348, %v4466
        %v4471 = vadd.f32 %v4349, %v4467
        %s4472 = scalar_lea.vmem %s13, 448
        %v4473 = vld [vmem:[%s4472] sm:$0xff]
        %v4474 = vld [vmem:[%s4472 + $0x8] sm:$0xff]
        %v4475 = vld [vmem:[%s4472 + $0x10] sm:$0xff]
        %v4476 = vld [vmem:[%s4472 + $0x18] sm:$0xff]
        %s4477 = scalar_lea.vmem %s14, 14
        %v4478 = vld [vmem:[%s4477] sm:$0x1]
        %v4480 = vlaneseq
        %v4481 = vshrl.u32 %v4480, 7
        %v4482 = vsub.s32 0, %v4481
        %v4483 = vrot.slane %v4478, %v4482
        %4485 = vmatprep.subr.mxu0 0.0
        %4486 = vmatpush1.msra.mxu0 %v4473
        %4487 = vmatprep.subr.mxu0 0.0
        %4488 = vmatpush1.msra.mxu0 %v4474
        %4489 = vmatprep.subr.mxu0 0.0
        %4490 = vmatpush1.msra.mxu0 %v4475
        %4491 = vmatprep.subr.mxu0 0.0
        %4492 = vmatpush1.msra.mxu0 %v4476
        %4493 = vmatprep.subr.mxu0 0.0
        %4494 = vmatpush1.msra.mxu0 0.0
        %4495 = vmatprep.subr.mxu0 0.0
        %4496 = vmatpush1.msra.mxu0 0.0
        %4497 = vmatprep.subr.mxu0 0.0
        %4498 = vmatpush1.msra.mxu0 0.0
        %4499 = vmatprep.subr.mxu0 0.0
        %4500 = vmatpush1.msra.mxu0 0.0
        %4501 = vmatprep.subr.mxu0 0.0
        %4502 = vmatpush1.msra.mxu0 0.0
        %4503 = vmatprep.subr.mxu0 0.0
        %4504 = vmatpush1.msra.mxu0 0.0
        %4505 = vmatprep.subr.mxu0 0.0
        %4506 = vmatpush1.msra.mxu0 0.0
        %4507 = vmatprep.subr.mxu0 0.0
        %4508 = vmatpush1.msra.mxu0 0.0
        %4509 = vmatprep.subr.mxu0 0.0
        %4510 = vmatpush1.msra.mxu0 0.0
        %4511 = vmatprep.subr.mxu0 0.0
        %4512 = vmatpush1.msra.mxu0 0.0
        %4513 = vmatprep.subr.mxu0 0.0
        %4514 = vmatpush1.msra.mxu0 0.0
        %4515 = vmatprep.subr.mxu0 0.0
        %4516 = vmatpush1.msra.mxu0 0.0
        %4517 = vmatprep.subr.mxu0 0.0
        %4518 = vmatpush1.msra.mxu0 0.0
        %4519 = vmatprep.subr.mxu0 0.0
        %4520 = vmatpush1.msra.mxu0 0.0
        %4521 = vmatprep.subr.mxu0 0.0
        %4522 = vmatpush1.msra.mxu0 0.0
        %4523 = vmatprep.subr.mxu0 0.0
        %4524 = vmatpush1.msra.mxu0 0.0
        %4525 = vmatprep.subr.mxu0 0.0
        %4526 = vmatpush1.msra.mxu0 0.0
        %4527 = vmatprep.subr.mxu0 0.0
        %4528 = vmatpush1.msra.mxu0 0.0
        %4529 = vmatprep.subr.mxu0 0.0
        %4530 = vmatpush1.msra.mxu0 0.0
        %4531 = vmatprep.subr.mxu0 0.0
        %4532 = vmatpush1.msra.mxu0 0.0
        %4533 = vmatprep.subr.mxu0 0.0
        %4534 = vmatpush1.msra.mxu0 0.0
        %4535 = vmatprep.subr.mxu0 0.0
        %4536 = vmatpush1.msra.mxu0 0.0
        %4537 = vmatprep.subr.mxu0 0.0
        %4538 = vmatpush1.msra.mxu0 0.0
        %4539 = vmatprep.subr.mxu0 0.0
        %4540 = vmatpush1.msra.mxu0 0.0
        %4541 = vmatprep.subr.mxu0 0.0
        %4542 = vmatpush1.msra.mxu0 0.0
        %4543 = vmatprep.subr.mxu0 0.0
        %4544 = vmatpush1.msra.mxu0 0.0
        %4545 = vmatprep.subr.mxu0 0.0
        %4546 = vmatpush1.msra.mxu0 0.0
        %4547 = vmatprep.subr.mxu0 0.0
        %4548 = vmatpush1.msra.mxu0 0.0
        %4549 = vmatprep.mubr.f32.mxu0 0.0
        %4550 = vmatmul.mubr.f32.gmra.mrb[0].mxu0 %v2762
        %v4551 = vpop.f32.mrb[0].mxu0
        %v4552 = vadd.f32 %v4483, %v4551
        %v4553 = vpop.f32.mrb[0].mxu0
        %4554 = vmatprep.mubr.f32.mxu0 0.0
        %4555 = vmatmul.mubr.f32.gmra.mrb[0].mxu0 %v2765
        %v4556 = vpop.f32.mrb[0].mxu0
        %v4557 = vadd.f32 %v4483, %v4556
        %v4558 = vpop.f32.mrb[0].mxu0
        %4559 = vmatprep.mubr.f32.mxu0 0.0
        %4560 = vmatmul.mubr.f32.gmra.mrb[0].mxu0 %v2768
        %v4561 = vpop.f32.mrb[0].mxu0
        %v4562 = vadd.f32 %v4483, %v4561
        %v4563 = vpop.f32.mrb[0].mxu0
        %4564 = vmatprep.mubr.f32.mxu0 0.0
        %4565 = vmatmul.mubr.f32.gmra.mrb[0].mxu0 %v2771
        %v4566 = vpop.f32.mrb[0].mxu0
        %v4567 = vadd.f32 %v4483, %v4566
        %v4568 = vpop.f32.mrb[0].mxu0
        %4569 = vdwg.mxu0
        %4570 = vset.pattern.permute.xlu0 14
        %4571 = vperm.xlu0 %4570, %v2731
        %v4572 = vpop.permute.xlu0 %4571
        %4574 = vset.pattern.permute.xlu0 14
        %4575 = vperm.xlu0 %4574, %v2736
        %v4576 = vpop.permute.xlu0 %4575
        %4578 = vset.pattern.permute.xlu0 14
        %4579 = vperm.xlu0 %4578, %v2741
        %v4580 = vpop.permute.xlu0 %4579
        %4582 = vset.pattern.permute.xlu0 14
        %4583 = vperm.xlu0 %4582, %v2746
        %v4584 = vpop.permute.xlu0 %4583
        %v4586 = vmul.f32 %v4572, %v4552
        %v4587 = vmul.f32 %v4576, %v4557
        %v4588 = vmul.f32 %v4580, %v4562
        %v4589 = vmul.f32 %v4584, %v4567
        %v4590 = vadd.f32 %v4468, %v4586
        %v4591 = vadd.f32 %v4469, %v4587
        %v4592 = vadd.f32 %v4470, %v4588
        %v4593 = vadd.f32 %v4471, %v4589
        %s4594 = scalar_lea.vmem %s13, 480
        %v4595 = vld [vmem:[%s4594] sm:$0xff]
        %v4596 = vld [vmem:[%s4594 + $0x8] sm:$0xff]
        %v4597 = vld [vmem:[%s4594 + $0x10] sm:$0xff]
        %v4598 = vld [vmem:[%s4594 + $0x18] sm:$0xff]
        %s4599 = scalar_lea.vmem %s14, 15
        %v4600 = vld [vmem:[%s4599] sm:$0x1]
        %v4602 = vlaneseq
        %v4603 = vshrl.u32 %v4602, 7
        %v4604 = vsub.s32 0, %v4603
        %v4605 = vrot.slane %v4600, %v4604
        %4607 = vmatprep.subr.mxu0 0.0
        %4608 = vmatpush1.msra.mxu0 %v4595
        %4609 = vmatprep.subr.mxu0 0.0
        %4610 = vmatpush1.msra.mxu0 %v4596
        %4611 = vmatprep.subr.mxu0 0.0
        %4612 = vmatpush1.msra.mxu0 %v4597
        %4613 = vmatprep.subr.mxu0 0.0
        %4614 = vmatpush1.msra.mxu0 %v4598
        %4615 = vmatprep.subr.mxu0 0.0
        %4616 = vmatpush1.msra.mxu0 0.0
        %4617 = vmatprep.subr.mxu0 0.0
        %4618 = vmatpush1.msra.mxu0 0.0
        %4619 = vmatprep.subr.mxu0 0.0
        %4620 = vmatpush1.msra.mxu0 0.0
        %4621 = vmatprep.subr.mxu0 0.0
        %4622 = vmatpush1.msra.mxu0 0.0
        %4623 = vmatprep.subr.mxu0 0.0
        %4624 = vmatpush1.msra.mxu0 0.0
        %4625 = vmatprep.subr.mxu0 0.0
        %4626 = vmatpush1.msra.mxu0 0.0
        %4627 = vmatprep.subr.mxu0 0.0
        %4628 = vmatpush1.msra.mxu0 0.0
        %4629 = vmatprep.subr.mxu0 0.0
        %4630 = vmatpush1.msra.mxu0 0.0
        %4631 = vmatprep.subr.mxu0 0.0
        %4632 = vmatpush1.msra.mxu0 0.0
        %4633 = vmatprep.subr.mxu0 0.0
        %4634 = vmatpush1.msra.mxu0 0.0
        %4635 = vmatprep.subr.mxu0 0.0
        %4636 = vmatpush1.msra.mxu0 0.0
        %4637 = vmatprep.subr.mxu0 0.0
        %4638 = vmatpush1.msra.mxu0 0.0
        %4639 = vmatprep.subr.mxu0 0.0
        %4640 = vmatpush1.msra.mxu0 0.0
        %4641 = vmatprep.subr.mxu0 0.0
        %4642 = vmatpush1.msra.mxu0 0.0
        %4643 = vmatprep.subr.mxu0 0.0
        %4644 = vmatpush1.msra.mxu0 0.0
        %4645 = vmatprep.subr.mxu0 0.0
        %4646 = vmatpush1.msra.mxu0 0.0
        %4647 = vmatprep.subr.mxu0 0.0
        %4648 = vmatpush1.msra.mxu0 0.0
        %4649 = vmatprep.subr.mxu0 0.0
        %4650 = vmatpush1.msra.mxu0 0.0
        %4651 = vmatprep.subr.mxu0 0.0
        %4652 = vmatpush1.msra.mxu0 0.0
        %4653 = vmatprep.subr.mxu0 0.0
        %4654 = vmatpush1.msra.mxu0 0.0
        %4655 = vmatprep.subr.mxu0 0.0
        %4656 = vmatpush1.msra.mxu0 0.0
        %4657 = vmatprep.subr.mxu0 0.0
        %4658 = vmatpush1.msra.mxu0 0.0
        %4659 = vmatprep.subr.mxu0 0.0
        %4660 = vmatpush1.msra.mxu0 0.0
        %4661 = vmatprep.subr.mxu0 0.0
        %4662 = vmatpush1.msra.mxu0 0.0
        %4663 = vmatprep.subr.mxu0 0.0
        %4664 = vmatpush1.msra.mxu0 0.0
        %4665 = vmatprep.subr.mxu0 0.0
        %4666 = vmatpush1.msra.mxu0 0.0
        %4667 = vmatprep.subr.mxu0 0.0
        %4668 = vmatpush1.msra.mxu0 0.0
        %4669 = vmatprep.subr.mxu0 0.0
        %4670 = vmatpush1.msra.mxu0 0.0
        %4671 = vmatprep.mubr.f32.mxu0 0.0
        %4672 = vmatmul.mubr.f32.gmra.mrb[0].mxu0 %v2762
        %v4673 = vpop.f32.mrb[0].mxu0
        %v4674 = vadd.f32 %v4605, %v4673
        %v4675 = vpop.f32.mrb[0].mxu0
        %4676 = vmatprep.mubr.f32.mxu0 0.0
        %4677 = vmatmul.mubr.f32.gmra.mrb[0].mxu0 %v2765
        %v4678 = vpop.f32.mrb[0].mxu0
        %v4679 = vadd.f32 %v4605, %v4678
        %v4680 = vpop.f32.mrb[0].mxu0
        %4681 = vmatprep.mubr.f32.mxu0 0.0
        %4682 = vmatmul.mubr.f32.gmra.mrb[0].mxu0 %v2768
        %v4683 = vpop.f32.mrb[0].mxu0
        %v4684 = vadd.f32 %v4605, %v4683
        %v4685 = vpop.f32.mrb[0].mxu0
        %4686 = vmatprep.mubr.f32.mxu0 0.0
        %4687 = vmatmul.mubr.f32.gmra.mrb[0].mxu0 %v2771
        %v4688 = vpop.f32.mrb[0].mxu0
        %v4689 = vadd.f32 %v4605, %v4688
        %v4690 = vpop.f32.mrb[0].mxu0
        %4691 = vdwg.mxu0
        %4692 = vset.pattern.permute.xlu0 15
        %4693 = vperm.xlu0 %4692, %v2731
        %v4694 = vpop.permute.xlu0 %4693
        %4696 = vset.pattern.permute.xlu0 15
        %4697 = vperm.xlu0 %4696, %v2736
        %v4698 = vpop.permute.xlu0 %4697
        %4700 = vset.pattern.permute.xlu0 15
        %4701 = vperm.xlu0 %4700, %v2741
        %v4702 = vpop.permute.xlu0 %4701
        %4704 = vset.pattern.permute.xlu0 15
        %4705 = vperm.xlu0 %4704, %v2746
        %v4706 = vpop.permute.xlu0 %4705
        %v4708 = vmul.f32 %v4694, %v4674
        %v4709 = vmul.f32 %v4698, %v4679
        %v4710 = vmul.f32 %v4702, %v4684
        %v4711 = vmul.f32 %v4706, %v4689
        %v4712 = vadd.f32 %v4590, %v4708
        %v4713 = vadd.f32 %v4591, %v4709
        %v4714 = vadd.f32 %v4592, %v4710
        %v4715 = vadd.f32 %v4593, %v4711
        %s4716 = scalar_lea.vmem %s13, 512
        %v4717 = vld [vmem:[%s4716] sm:$0xff]
        %v4718 = vld [vmem:[%s4716 + $0x8] sm:$0xff]
        %v4719 = vld [vmem:[%s4716 + $0x10] sm:$0xff]
        %v4720 = vld [vmem:[%s4716 + $0x18] sm:$0xff]
        %s4721 = scalar_lea.vmem %s14, 16
        %v4722 = vld [vmem:[%s4721] sm:$0x1]
        %v4724 = vlaneseq
        %v4725 = vshrl.u32 %v4724, 7
        %v4726 = vsub.s32 0, %v4725
        %v4727 = vrot.slane %v4722, %v4726
        %4729 = vmatprep.subr.mxu0 0.0
        %4730 = vmatpush1.msra.mxu0 %v4717
        %4731 = vmatprep.subr.mxu0 0.0
        %4732 = vmatpush1.msra.mxu0 %v4718
        %4733 = vmatprep.subr.mxu0 0.0
        %4734 = vmatpush1.msra.mxu0 %v4719
        %4735 = vmatprep.subr.mxu0 0.0
        %4736 = vmatpush1.msra.mxu0 %v4720
        %4737 = vmatprep.subr.mxu0 0.0
        %4738 = vmatpush1.msra.mxu0 0.0
        %4739 = vmatprep.subr.mxu0 0.0
        %4740 = vmatpush1.msra.mxu0 0.0
        %4741 = vmatprep.subr.mxu0 0.0
        %4742 = vmatpush1.msra.mxu0 0.0
        %4743 = vmatprep.subr.mxu0 0.0
        %4744 = vmatpush1.msra.mxu0 0.0
        %4745 = vmatprep.subr.mxu0 0.0
        %4746 = vmatpush1.msra.mxu0 0.0
        %4747 = vmatprep.subr.mxu0 0.0
        %4748 = vmatpush1.msra.mxu0 0.0
        %4749 = vmatprep.subr.mxu0 0.0
        %4750 = vmatpush1.msra.mxu0 0.0
        %4751 = vmatprep.subr.mxu0 0.0
        %4752 = vmatpush1.msra.mxu0 0.0
        %4753 = vmatprep.subr.mxu0 0.0
        %4754 = vmatpush1.msra.mxu0 0.0
        %4755 = vmatprep.subr.mxu0 0.0
        %4756 = vmatpush1.msra.mxu0 0.0
        %4757 = vmatprep.subr.mxu0 0.0
        %4758 = vmatpush1.msra.mxu0 0.0
        %4759 = vmatprep.subr.mxu0 0.0
        %4760 = vmatpush1.msra.mxu0 0.0
        %4761 = vmatprep.subr.mxu0 0.0
        %4762 = vmatpush1.msra.mxu0 0.0
        %4763 = vmatprep.subr.mxu0 0.0
        %4764 = vmatpush1.msra.mxu0 0.0
        %4765 = vmatprep.subr.mxu0 0.0
        %4766 = vmatpush1.msra.mxu0 0.0
        %4767 = vmatprep.subr.mxu0 0.0
        %4768 = vmatpush1.msra.mxu0 0.0
        %4769 = vmatprep.subr.mxu0 0.0
        %4770 = vmatpush1.msra.mxu0 0.0
        %4771 = vmatprep.subr.mxu0 0.0
        %4772 = vmatpush1.msra.mxu0 0.0
        %4773 = vmatprep.subr.mxu0 0.0
        %4774 = vmatpush1.msra.mxu0 0.0
        %4775 = vmatprep.subr.mxu0 0.0
        %4776 = vmatpush1.msra.mxu0 0.0
        %4777 = vmatprep.subr.mxu0 0.0
        %4778 = vmatpush1.msra.mxu0 0.0
        %4779 = vmatprep.subr.mxu0 0.0
        %4780 = vmatpush1.msra.mxu0 0.0
        %4781 = vmatprep.subr.mxu0 0.0
        %4782 = vmatpush1.msra.mxu0 0.0
        %4783 = vmatprep.subr.mxu0 0.0
        %4784 = vmatpush1.msra.mxu0 0.0
        %4785 = vmatprep.subr.mxu0 0.0
        %4786 = vmatpush1.msra.mxu0 0.0
        %4787 = vmatprep.subr.mxu0 0.0
        %4788 = vmatpush1.msra.mxu0 0.0
        %4789 = vmatprep.subr.mxu0 0.0
        %4790 = vmatpush1.msra.mxu0 0.0
        %4791 = vmatprep.subr.mxu0 0.0
        %4792 = vmatpush1.msra.mxu0 0.0
        %4793 = vmatprep.mubr.f32.mxu0 0.0
        %4794 = vmatmul.mubr.f32.gmra.mrb[0].mxu0 %v2762
        %v4795 = vpop.f32.mrb[0].mxu0
        %v4796 = vadd.f32 %v4727, %v4795
        %v4797 = vpop.f32.mrb[0].mxu0
        %4798 = vmatprep.mubr.f32.mxu0 0.0
        %4799 = vmatmul.mubr.f32.gmra.mrb[0].mxu0 %v2765
        %v4800 = vpop.f32.mrb[0].mxu0
        %v4801 = vadd.f32 %v4727, %v4800
        %v4802 = vpop.f32.mrb[0].mxu0
        %4803 = vmatprep.mubr.f32.mxu0 0.0
        %4804 = vmatmul.mubr.f32.gmra.mrb[0].mxu0 %v2768
        %v4805 = vpop.f32.mrb[0].mxu0
        %v4806 = vadd.f32 %v4727, %v4805
        %v4807 = vpop.f32.mrb[0].mxu0
        %4808 = vmatprep.mubr.f32.mxu0 0.0
        %4809 = vmatmul.mubr.f32.gmra.mrb[0].mxu0 %v2771
        %v4810 = vpop.f32.mrb[0].mxu0
        %v4811 = vadd.f32 %v4727, %v4810
        %v4812 = vpop.f32.mrb[0].mxu0
        %4813 = vdwg.mxu0
        %4814 = vset.pattern.permute.xlu0 16
        %4815 = vperm.xlu0 %4814, %v2731
        %v4816 = vpop.permute.xlu0 %4815
        %4818 = vset.pattern.permute.xlu0 16
        %4819 = vperm.xlu0 %4818, %v2736
        %v4820 = vpop.permute.xlu0 %4819
        %4822 = vset.pattern.permute.xlu0 16
        %4823 = vperm.xlu0 %4822, %v2741
        %v4824 = vpop.permute.xlu0 %4823
        %4826 = vset.pattern.permute.xlu0 16
        %4827 = vperm.xlu0 %4826, %v2746
        %v4828 = vpop.permute.xlu0 %4827
        %v4830 = vmul.f32 %v4816, %v4796
        %v4831 = vmul.f32 %v4820, %v4801
        %v4832 = vmul.f32 %v4824, %v4806
        %v4833 = vmul.f32 %v4828, %v4811
        %v4834 = vadd.f32 %v4712, %v4830
        %v4835 = vadd.f32 %v4713, %v4831
        %v4836 = vadd.f32 %v4714, %v4832
        %v4837 = vadd.f32 %v4715, %v4833
        %s4838 = scalar_lea.vmem %s13, 544
        %v4839 = vld [vmem:[%s4838] sm:$0xff]
        %v4840 = vld [vmem:[%s4838 + $0x8] sm:$0xff]
        %v4841 = vld [vmem:[%s4838 + $0x10] sm:$0xff]
        %v4842 = vld [vmem:[%s4838 + $0x18] sm:$0xff]
        %s4843 = scalar_lea.vmem %s14, 17
        %v4844 = vld [vmem:[%s4843] sm:$0x1]
        %v4846 = vlaneseq
        %v4847 = vshrl.u32 %v4846, 7
        %v4848 = vsub.s32 0, %v4847
        %v4849 = vrot.slane %v4844, %v4848
        %4851 = vmatprep.subr.mxu0 0.0
        %4852 = vmatpush1.msra.mxu0 %v4839
        %4853 = vmatprep.subr.mxu0 0.0
        %4854 = vmatpush1.msra.mxu0 %v4840
        %4855 = vmatprep.subr.mxu0 0.0
        %4856 = vmatpush1.msra.mxu0 %v4841
        %4857 = vmatprep.subr.mxu0 0.0
        %4858 = vmatpush1.msra.mxu0 %v4842
        %4859 = vmatprep.subr.mxu0 0.0
        %4860 = vmatpush1.msra.mxu0 0.0
        %4861 = vmatprep.subr.mxu0 0.0
        %4862 = vmatpush1.msra.mxu0 0.0
        %4863 = vmatprep.subr.mxu0 0.0
        %4864 = vmatpush1.msra.mxu0 0.0
        %4865 = vmatprep.subr.mxu0 0.0
        %4866 = vmatpush1.msra.mxu0 0.0
        %4867 = vmatprep.subr.mxu0 0.0
        %4868 = vmatpush1.msra.mxu0 0.0
        %4869 = vmatprep.subr.mxu0 0.0
        %4870 = vmatpush1.msra.mxu0 0.0
        %4871 = vmatprep.subr.mxu0 0.0
        %4872 = vmatpush1.msra.mxu0 0.0
        %4873 = vmatprep.subr.mxu0 0.0
        %4874 = vmatpush1.msra.mxu0 0.0
        %4875 = vmatprep.subr.mxu0 0.0
        %4876 = vmatpush1.msra.mxu0 0.0
        %4877 = vmatprep.subr.mxu0 0.0
        %4878 = vmatpush1.msra.mxu0 0.0
        %4879 = vmatprep.subr.mxu0 0.0
        %4880 = vmatpush1.msra.mxu0 0.0
        %4881 = vmatprep.subr.mxu0 0.0
        %4882 = vmatpush1.msra.mxu0 0.0
        %4883 = vmatprep.subr.mxu0 0.0
        %4884 = vmatpush1.msra.mxu0 0.0
        %4885 = vmatprep.subr.mxu0 0.0
        %4886 = vmatpush1.msra.mxu0 0.0
        %4887 = vmatprep.subr.mxu0 0.0
        %4888 = vmatpush1.msra.mxu0 0.0
        %4889 = vmatprep.subr.mxu0 0.0
        %4890 = vmatpush1.msra.mxu0 0.0
        %4891 = vmatprep.subr.mxu0 0.0
        %4892 = vmatpush1.msra.mxu0 0.0
        %4893 = vmatprep.subr.mxu0 0.0
        %4894 = vmatpush1.msra.mxu0 0.0
        %4895 = vmatprep.subr.mxu0 0.0
        %4896 = vmatpush1.msra.mxu0 0.0
        %4897 = vmatprep.subr.mxu0 0.0
        %4898 = vmatpush1.msra.mxu0 0.0
        %4899 = vmatprep.subr.mxu0 0.0
        %4900 = vmatpush1.msra.mxu0 0.0
        %4901 = vmatprep.subr.mxu0 0.0
        %4902 = vmatpush1.msra.mxu0 0.0
        %4903 = vmatprep.subr.mxu0 0.0
        %4904 = vmatpush1.msra.mxu0 0.0
        %4905 = vmatprep.subr.mxu0 0.0
        %4906 = vmatpush1.msra.mxu0 0.0
        %4907 = vmatprep.subr.mxu0 0.0
        %4908 = vmatpush1.msra.mxu0 0.0
        %4909 = vmatprep.subr.mxu0 0.0
        %4910 = vmatpush1.msra.mxu0 0.0
        %4911 = vmatprep.subr.mxu0 0.0
        %4912 = vmatpush1.msra.mxu0 0.0
        %4913 = vmatprep.subr.mxu0 0.0
        %4914 = vmatpush1.msra.mxu0 0.0
        %4915 = vmatprep.mubr.f32.mxu0 0.0
        %4916 = vmatmul.mubr.f32.gmra.mrb[0].mxu0 %v2762
        %v4917 = vpop.f32.mrb[0].mxu0
        %v4918 = vadd.f32 %v4849, %v4917
        %v4919 = vpop.f32.mrb[0].mxu0
        %4920 = vmatprep.mubr.f32.mxu0 0.0
        %4921 = vmatmul.mubr.f32.gmra.mrb[0].mxu0 %v2765
        %v4922 = vpop.f32.mrb[0].mxu0
        %v4923 = vadd.f32 %v4849, %v4922
        %v4924 = vpop.f32.mrb[0].mxu0
        %4925 = vmatprep.mubr.f32.mxu0 0.0
        %4926 = vmatmul.mubr.f32.gmra.mrb[0].mxu0 %v2768
        %v4927 = vpop.f32.mrb[0].mxu0
        %v4928 = vadd.f32 %v4849, %v4927
        %v4929 = vpop.f32.mrb[0].mxu0
        %4930 = vmatprep.mubr.f32.mxu0 0.0
        %4931 = vmatmul.mubr.f32.gmra.mrb[0].mxu0 %v2771
        %v4932 = vpop.f32.mrb[0].mxu0
        %v4933 = vadd.f32 %v4849, %v4932
        %v4934 = vpop.f32.mrb[0].mxu0
        %4935 = vdwg.mxu0
        %4936 = vset.pattern.permute.xlu0 17
        %4937 = vperm.xlu0 %4936, %v2731
        %v4938 = vpop.permute.xlu0 %4937
        %4940 = vset.pattern.permute.xlu0 17
        %4941 = vperm.xlu0 %4940, %v2736
        %v4942 = vpop.permute.xlu0 %4941
        %4944 = vset.pattern.permute.xlu0 17
        %4945 = vperm.xlu0 %4944, %v2741
        %v4946 = vpop.permute.xlu0 %4945
        %4948 = vset.pattern.permute.xlu0 17
        %4949 = vperm.xlu0 %4948, %v2746
        %v4950 = vpop.permute.xlu0 %4949
        %v4952 = vmul.f32 %v4938, %v4918
        %v4953 = vmul.f32 %v4942, %v4923
        %v4954 = vmul.f32 %v4946, %v4928
        %v4955 = vmul.f32 %v4950, %v4933
        %v4956 = vadd.f32 %v4834, %v4952
        %v4957 = vadd.f32 %v4835, %v4953
        %v4958 = vadd.f32 %v4836, %v4954
        %v4959 = vadd.f32 %v4837, %v4955
        %s4960 = scalar_lea.vmem %s13, 576
        %v4961 = vld [vmem:[%s4960] sm:$0xff]
        %v4962 = vld [vmem:[%s4960 + $0x8] sm:$0xff]
        %v4963 = vld [vmem:[%s4960 + $0x10] sm:$0xff]
        %v4964 = vld [vmem:[%s4960 + $0x18] sm:$0xff]
        %s4965 = scalar_lea.vmem %s14, 18
        %v4966 = vld [vmem:[%s4965] sm:$0x1]
        %v4968 = vlaneseq
        %v4969 = vshrl.u32 %v4968, 7
        %v4970 = vsub.s32 0, %v4969
        %v4971 = vrot.slane %v4966, %v4970
        %4973 = vmatprep.subr.mxu0 0.0
        %4974 = vmatpush1.msra.mxu0 %v4961
        %4975 = vmatprep.subr.mxu0 0.0
        %4976 = vmatpush1.msra.mxu0 %v4962
        %4977 = vmatprep.subr.mxu0 0.0
        %4978 = vmatpush1.msra.mxu0 %v4963
        %4979 = vmatprep.subr.mxu0 0.0
        %4980 = vmatpush1.msra.mxu0 %v4964
        %4981 = vmatprep.subr.mxu0 0.0
        %4982 = vmatpush1.msra.mxu0 0.0
        %4983 = vmatprep.subr.mxu0 0.0
        %4984 = vmatpush1.msra.mxu0 0.0
        %4985 = vmatprep.subr.mxu0 0.0
        %4986 = vmatpush1.msra.mxu0 0.0
        %4987 = vmatprep.subr.mxu0 0.0
        %4988 = vmatpush1.msra.mxu0 0.0
        %4989 = vmatprep.subr.mxu0 0.0
        %4990 = vmatpush1.msra.mxu0 0.0
        %4991 = vmatprep.subr.mxu0 0.0
        %4992 = vmatpush1.msra.mxu0 0.0
        %4993 = vmatprep.subr.mxu0 0.0
        %4994 = vmatpush1.msra.mxu0 0.0
        %4995 = vmatprep.subr.mxu0 0.0
        %4996 = vmatpush1.msra.mxu0 0.0
        %4997 = vmatprep.subr.mxu0 0.0
        %4998 = vmatpush1.msra.mxu0 0.0
        %4999 = vmatprep.subr.mxu0 0.0
        %5000 = vmatpush1.msra.mxu0 0.0
        %5001 = vmatprep.subr.mxu0 0.0
        %5002 = vmatpush1.msra.mxu0 0.0
        %5003 = vmatprep.subr.mxu0 0.0
        %5004 = vmatpush1.msra.mxu0 0.0
        %5005 = vmatprep.subr.mxu0 0.0
        %5006 = vmatpush1.msra.mxu0 0.0
        %5007 = vmatprep.subr.mxu0 0.0
        %5008 = vmatpush1.msra.mxu0 0.0
        %5009 = vmatprep.subr.mxu0 0.0
        %5010 = vmatpush1.msra.mxu0 0.0
        %5011 = vmatprep.subr.mxu0 0.0
        %5012 = vmatpush1.msra.mxu0 0.0
        %5013 = vmatprep.subr.mxu0 0.0
        %5014 = vmatpush1.msra.mxu0 0.0
        %5015 = vmatprep.subr.mxu0 0.0
        %5016 = vmatpush1.msra.mxu0 0.0
        %5017 = vmatprep.subr.mxu0 0.0
        %5018 = vmatpush1.msra.mxu0 0.0
        %5019 = vmatprep.subr.mxu0 0.0
        %5020 = vmatpush1.msra.mxu0 0.0
        %5021 = vmatprep.subr.mxu0 0.0
        %5022 = vmatpush1.msra.mxu0 0.0
        %5023 = vmatprep.subr.mxu0 0.0
        %5024 = vmatpush1.msra.mxu0 0.0
        %5025 = vmatprep.subr.mxu0 0.0
        %5026 = vmatpush1.msra.mxu0 0.0
        %5027 = vmatprep.subr.mxu0 0.0
        %5028 = vmatpush1.msra.mxu0 0.0
        %5029 = vmatprep.subr.mxu0 0.0
        %5030 = vmatpush1.msra.mxu0 0.0
        %5031 = vmatprep.subr.mxu0 0.0
        %5032 = vmatpush1.msra.mxu0 0.0
        %5033 = vmatprep.subr.mxu0 0.0
        %5034 = vmatpush1.msra.mxu0 0.0
        %5035 = vmatprep.subr.mxu0 0.0
        %5036 = vmatpush1.msra.mxu0 0.0
        %5037 = vmatprep.mubr.f32.mxu0 0.0
        %5038 = vmatmul.mubr.f32.gmra.mrb[0].mxu0 %v2762
        %v5039 = vpop.f32.mrb[0].mxu0
        %v5040 = vadd.f32 %v4971, %v5039
        %v5041 = vpop.f32.mrb[0].mxu0
        %5042 = vmatprep.mubr.f32.mxu0 0.0
        %5043 = vmatmul.mubr.f32.gmra.mrb[0].mxu0 %v2765
        %v5044 = vpop.f32.mrb[0].mxu0
        %v5045 = vadd.f32 %v4971, %v5044
        %v5046 = vpop.f32.mrb[0].mxu0
        %5047 = vmatprep.mubr.f32.mxu0 0.0
        %5048 = vmatmul.mubr.f32.gmra.mrb[0].mxu0 %v2768
        %v5049 = vpop.f32.mrb[0].mxu0
        %v5050 = vadd.f32 %v4971, %v5049
        %v5051 = vpop.f32.mrb[0].mxu0
        %5052 = vmatprep.mubr.f32.mxu0 0.0
        %5053 = vmatmul.mubr.f32.gmra.mrb[0].mxu0 %v2771
        %v5054 = vpop.f32.mrb[0].mxu0
        %v5055 = vadd.f32 %v4971, %v5054
        %v5056 = vpop.f32.mrb[0].mxu0
        %5057 = vdwg.mxu0
        %5058 = vset.pattern.permute.xlu0 18
        %5059 = vperm.xlu0 %5058, %v2731
        %v5060 = vpop.permute.xlu0 %5059
        %5062 = vset.pattern.permute.xlu0 18
        %5063 = vperm.xlu0 %5062, %v2736
        %v5064 = vpop.permute.xlu0 %5063
        %5066 = vset.pattern.permute.xlu0 18
        %5067 = vperm.xlu0 %5066, %v2741
        %v5068 = vpop.permute.xlu0 %5067
        %5070 = vset.pattern.permute.xlu0 18
        %5071 = vperm.xlu0 %5070, %v2746
        %v5072 = vpop.permute.xlu0 %5071
        %v5074 = vmul.f32 %v5060, %v5040
        %v5075 = vmul.f32 %v5064, %v5045
        %v5076 = vmul.f32 %v5068, %v5050
        %v5077 = vmul.f32 %v5072, %v5055
        %v5078 = vadd.f32 %v4956, %v5074
        %v5079 = vadd.f32 %v4957, %v5075
        %v5080 = vadd.f32 %v4958, %v5076
        %v5081 = vadd.f32 %v4959, %v5077
        %s5082 = scalar_lea.vmem %s13, 608
        %v5083 = vld [vmem:[%s5082] sm:$0xff]
        %v5084 = vld [vmem:[%s5082 + $0x8] sm:$0xff]
        %v5085 = vld [vmem:[%s5082 + $0x10] sm:$0xff]
        %v5086 = vld [vmem:[%s5082 + $0x18] sm:$0xff]
        %s5087 = scalar_lea.vmem %s14, 19
        %v5088 = vld [vmem:[%s5087] sm:$0x1]
        %v5090 = vlaneseq
        %v5091 = vshrl.u32 %v5090, 7
        %v5092 = vsub.s32 0, %v5091
        %v5093 = vrot.slane %v5088, %v5092
        %5095 = vmatprep.subr.mxu0 0.0
        %5096 = vmatpush1.msra.mxu0 %v5083
        %5097 = vmatprep.subr.mxu0 0.0
        %5098 = vmatpush1.msra.mxu0 %v5084
        %5099 = vmatprep.subr.mxu0 0.0
        %5100 = vmatpush1.msra.mxu0 %v5085
        %5101 = vmatprep.subr.mxu0 0.0
        %5102 = vmatpush1.msra.mxu0 %v5086
        %5103 = vmatprep.subr.mxu0 0.0
        %5104 = vmatpush1.msra.mxu0 0.0
        %5105 = vmatprep.subr.mxu0 0.0
        %5106 = vmatpush1.msra.mxu0 0.0
        %5107 = vmatprep.subr.mxu0 0.0
        %5108 = vmatpush1.msra.mxu0 0.0
        %5109 = vmatprep.subr.mxu0 0.0
        %5110 = vmatpush1.msra.mxu0 0.0
        %5111 = vmatprep.subr.mxu0 0.0
        %5112 = vmatpush1.msra.mxu0 0.0
        %5113 = vmatprep.subr.mxu0 0.0
        %5114 = vmatpush1.msra.mxu0 0.0
        %5115 = vmatprep.subr.mxu0 0.0
        %5116 = vmatpush1.msra.mxu0 0.0
        %5117 = vmatprep.subr.mxu0 0.0
        %5118 = vmatpush1.msra.mxu0 0.0
        %5119 = vmatprep.subr.mxu0 0.0
        %5120 = vmatpush1.msra.mxu0 0.0
        %5121 = vmatprep.subr.mxu0 0.0
        %5122 = vmatpush1.msra.mxu0 0.0
        %5123 = vmatprep.subr.mxu0 0.0
        %5124 = vmatpush1.msra.mxu0 0.0
        %5125 = vmatprep.subr.mxu0 0.0
        %5126 = vmatpush1.msra.mxu0 0.0
        %5127 = vmatprep.subr.mxu0 0.0
        %5128 = vmatpush1.msra.mxu0 0.0
        %5129 = vmatprep.subr.mxu0 0.0
        %5130 = vmatpush1.msra.mxu0 0.0
        %5131 = vmatprep.subr.mxu0 0.0
        %5132 = vmatpush1.msra.mxu0 0.0
        %5133 = vmatprep.subr.mxu0 0.0
        %5134 = vmatpush1.msra.mxu0 0.0
        %5135 = vmatprep.subr.mxu0 0.0
        %5136 = vmatpush1.msra.mxu0 0.0
        %5137 = vmatprep.subr.mxu0 0.0
        %5138 = vmatpush1.msra.mxu0 0.0
        %5139 = vmatprep.subr.mxu0 0.0
        %5140 = vmatpush1.msra.mxu0 0.0
        %5141 = vmatprep.subr.mxu0 0.0
        %5142 = vmatpush1.msra.mxu0 0.0
        %5143 = vmatprep.subr.mxu0 0.0
        %5144 = vmatpush1.msra.mxu0 0.0
        %5145 = vmatprep.subr.mxu0 0.0
        %5146 = vmatpush1.msra.mxu0 0.0
        %5147 = vmatprep.subr.mxu0 0.0
        %5148 = vmatpush1.msra.mxu0 0.0
        %5149 = vmatprep.subr.mxu0 0.0
        %5150 = vmatpush1.msra.mxu0 0.0
        %5151 = vmatprep.subr.mxu0 0.0
        %5152 = vmatpush1.msra.mxu0 0.0
        %5153 = vmatprep.subr.mxu0 0.0
        %5154 = vmatpush1.msra.mxu0 0.0
        %5155 = vmatprep.subr.mxu0 0.0
        %5156 = vmatpush1.msra.mxu0 0.0
        %5157 = vmatprep.subr.mxu0 0.0
        %5158 = vmatpush1.msra.mxu0 0.0
        %5159 = vmatprep.mubr.f32.mxu0 0.0
        %5160 = vmatmul.mubr.f32.gmra.mrb[0].mxu0 %v2762
        %v5161 = vpop.f32.mrb[0].mxu0
        %v5162 = vadd.f32 %v5093, %v5161
        %v5163 = vpop.f32.mrb[0].mxu0
        %5164 = vmatprep.mubr.f32.mxu0 0.0
        %5165 = vmatmul.mubr.f32.gmra.mrb[0].mxu0 %v2765
        %v5166 = vpop.f32.mrb[0].mxu0
        %v5167 = vadd.f32 %v5093, %v5166
        %v5168 = vpop.f32.mrb[0].mxu0
        %5169 = vmatprep.mubr.f32.mxu0 0.0
        %5170 = vmatmul.mubr.f32.gmra.mrb[0].mxu0 %v2768
        %v5171 = vpop.f32.mrb[0].mxu0
        %v5172 = vadd.f32 %v5093, %v5171
        %v5173 = vpop.f32.mrb[0].mxu0
        %5174 = vmatprep.mubr.f32.mxu0 0.0
        %5175 = vmatmul.mubr.f32.gmra.mrb[0].mxu0 %v2771
        %v5176 = vpop.f32.mrb[0].mxu0
        %v5177 = vadd.f32 %v5093, %v5176
        %v5178 = vpop.f32.mrb[0].mxu0
        %5179 = vdwg.mxu0
        %5180 = vset.pattern.permute.xlu0 19
        %5181 = vperm.xlu0 %5180, %v2731
        %v5182 = vpop.permute.xlu0 %5181
        %5184 = vset.pattern.permute.xlu0 19
        %5185 = vperm.xlu0 %5184, %v2736
        %v5186 = vpop.permute.xlu0 %5185
        %5188 = vset.pattern.permute.xlu0 19
        %5189 = vperm.xlu0 %5188, %v2741
        %v5190 = vpop.permute.xlu0 %5189
        %5192 = vset.pattern.permute.xlu0 19
        %5193 = vperm.xlu0 %5192, %v2746
        %v5194 = vpop.permute.xlu0 %5193
        %v5196 = vmul.f32 %v5182, %v5162
        %v5197 = vmul.f32 %v5186, %v5167
        %v5198 = vmul.f32 %v5190, %v5172
        %v5199 = vmul.f32 %v5194, %v5177
        %v5200 = vadd.f32 %v5078, %v5196
        %v5201 = vadd.f32 %v5079, %v5197
        %v5202 = vadd.f32 %v5080, %v5198
        %v5203 = vadd.f32 %v5081, %v5199
        %s5204 = scalar_lea.vmem %s13, 640
        %v5205 = vld [vmem:[%s5204] sm:$0xff]
        %v5206 = vld [vmem:[%s5204 + $0x8] sm:$0xff]
        %v5207 = vld [vmem:[%s5204 + $0x10] sm:$0xff]
        %v5208 = vld [vmem:[%s5204 + $0x18] sm:$0xff]
        %s5209 = scalar_lea.vmem %s14, 20
        %v5210 = vld [vmem:[%s5209] sm:$0x1]
        %v5212 = vlaneseq
        %v5213 = vshrl.u32 %v5212, 7
        %v5214 = vsub.s32 0, %v5213
        %v5215 = vrot.slane %v5210, %v5214
        %5217 = vmatprep.subr.mxu0 0.0
        %5218 = vmatpush1.msra.mxu0 %v5205
        %5219 = vmatprep.subr.mxu0 0.0
        %5220 = vmatpush1.msra.mxu0 %v5206
        %5221 = vmatprep.subr.mxu0 0.0
        %5222 = vmatpush1.msra.mxu0 %v5207
        %5223 = vmatprep.subr.mxu0 0.0
        %5224 = vmatpush1.msra.mxu0 %v5208
        %5225 = vmatprep.subr.mxu0 0.0
        %5226 = vmatpush1.msra.mxu0 0.0
        %5227 = vmatprep.subr.mxu0 0.0
        %5228 = vmatpush1.msra.mxu0 0.0
        %5229 = vmatprep.subr.mxu0 0.0
        %5230 = vmatpush1.msra.mxu0 0.0
        %5231 = vmatprep.subr.mxu0 0.0
        %5232 = vmatpush1.msra.mxu0 0.0
        %5233 = vmatprep.subr.mxu0 0.0
        %5234 = vmatpush1.msra.mxu0 0.0
        %5235 = vmatprep.subr.mxu0 0.0
        %5236 = vmatpush1.msra.mxu0 0.0
        %5237 = vmatprep.subr.mxu0 0.0
        %5238 = vmatpush1.msra.mxu0 0.0
        %5239 = vmatprep.subr.mxu0 0.0
        %5240 = vmatpush1.msra.mxu0 0.0
        %5241 = vmatprep.subr.mxu0 0.0
        %5242 = vmatpush1.msra.mxu0 0.0
        %5243 = vmatprep.subr.mxu0 0.0
        %5244 = vmatpush1.msra.mxu0 0.0
        %5245 = vmatprep.subr.mxu0 0.0
        %5246 = vmatpush1.msra.mxu0 0.0
        %5247 = vmatprep.subr.mxu0 0.0
        %5248 = vmatpush1.msra.mxu0 0.0
        %5249 = vmatprep.subr.mxu0 0.0
        %5250 = vmatpush1.msra.mxu0 0.0
        %5251 = vmatprep.subr.mxu0 0.0
        %5252 = vmatpush1.msra.mxu0 0.0
        %5253 = vmatprep.subr.mxu0 0.0
        %5254 = vmatpush1.msra.mxu0 0.0
        %5255 = vmatprep.subr.mxu0 0.0
        %5256 = vmatpush1.msra.mxu0 0.0
        %5257 = vmatprep.subr.mxu0 0.0
        %5258 = vmatpush1.msra.mxu0 0.0
        %5259 = vmatprep.subr.mxu0 0.0
        %5260 = vmatpush1.msra.mxu0 0.0
        %5261 = vmatprep.subr.mxu0 0.0
        %5262 = vmatpush1.msra.mxu0 0.0
        %5263 = vmatprep.subr.mxu0 0.0
        %5264 = vmatpush1.msra.mxu0 0.0
        %5265 = vmatprep.subr.mxu0 0.0
        %5266 = vmatpush1.msra.mxu0 0.0
        %5267 = vmatprep.subr.mxu0 0.0
        %5268 = vmatpush1.msra.mxu0 0.0
        %5269 = vmatprep.subr.mxu0 0.0
        %5270 = vmatpush1.msra.mxu0 0.0
        %5271 = vmatprep.subr.mxu0 0.0
        %5272 = vmatpush1.msra.mxu0 0.0
        %5273 = vmatprep.subr.mxu0 0.0
        %5274 = vmatpush1.msra.mxu0 0.0
        %5275 = vmatprep.subr.mxu0 0.0
        %5276 = vmatpush1.msra.mxu0 0.0
        %5277 = vmatprep.subr.mxu0 0.0
        %5278 = vmatpush1.msra.mxu0 0.0
        %5279 = vmatprep.subr.mxu0 0.0
        %5280 = vmatpush1.msra.mxu0 0.0
        %5281 = vmatprep.mubr.f32.mxu0 0.0
        %5282 = vmatmul.mubr.f32.gmra.mrb[0].mxu0 %v2762
        %v5283 = vpop.f32.mrb[0].mxu0
        %v5284 = vadd.f32 %v5215, %v5283
        %v5285 = vpop.f32.mrb[0].mxu0
        %5286 = vmatprep.mubr.f32.mxu0 0.0
        %5287 = vmatmul.mubr.f32.gmra.mrb[0].mxu0 %v2765
        %v5288 = vpop.f32.mrb[0].mxu0
        %v5289 = vadd.f32 %v5215, %v5288
        %v5290 = vpop.f32.mrb[0].mxu0
        %5291 = vmatprep.mubr.f32.mxu0 0.0
        %5292 = vmatmul.mubr.f32.gmra.mrb[0].mxu0 %v2768
        %v5293 = vpop.f32.mrb[0].mxu0
        %v5294 = vadd.f32 %v5215, %v5293
        %v5295 = vpop.f32.mrb[0].mxu0
        %5296 = vmatprep.mubr.f32.mxu0 0.0
        %5297 = vmatmul.mubr.f32.gmra.mrb[0].mxu0 %v2771
        %v5298 = vpop.f32.mrb[0].mxu0
        %v5299 = vadd.f32 %v5215, %v5298
        %v5300 = vpop.f32.mrb[0].mxu0
        %5301 = vdwg.mxu0
        %5302 = vset.pattern.permute.xlu0 20
        %5303 = vperm.xlu0 %5302, %v2731
        %v5304 = vpop.permute.xlu0 %5303
        %5306 = vset.pattern.permute.xlu0 20
        %5307 = vperm.xlu0 %5306, %v2736
        %v5308 = vpop.permute.xlu0 %5307
        %5310 = vset.pattern.permute.xlu0 20
        %5311 = vperm.xlu0 %5310, %v2741
        %v5312 = vpop.permute.xlu0 %5311
        %5314 = vset.pattern.permute.xlu0 20
        %5315 = vperm.xlu0 %5314, %v2746
        %v5316 = vpop.permute.xlu0 %5315
        %v5318 = vmul.f32 %v5304, %v5284
        %v5319 = vmul.f32 %v5308, %v5289
        %v5320 = vmul.f32 %v5312, %v5294
        %v5321 = vmul.f32 %v5316, %v5299
        %v5322 = vadd.f32 %v5200, %v5318
        %v5323 = vadd.f32 %v5201, %v5319
        %v5324 = vadd.f32 %v5202, %v5320
        %v5325 = vadd.f32 %v5203, %v5321
        %s5326 = scalar_lea.vmem %s13, 672
        %v5327 = vld [vmem:[%s5326] sm:$0xff]
        %v5328 = vld [vmem:[%s5326 + $0x8] sm:$0xff]
        %v5329 = vld [vmem:[%s5326 + $0x10] sm:$0xff]
        %v5330 = vld [vmem:[%s5326 + $0x18] sm:$0xff]
        %s5331 = scalar_lea.vmem %s14, 21
        %v5332 = vld [vmem:[%s5331] sm:$0x1]
        %v5334 = vlaneseq
        %v5335 = vshrl.u32 %v5334, 7
        %v5336 = vsub.s32 0, %v5335
        %v5337 = vrot.slane %v5332, %v5336
        %5339 = vmatprep.subr.mxu0 0.0
        %5340 = vmatpush1.msra.mxu0 %v5327
        %5341 = vmatprep.subr.mxu0 0.0
        %5342 = vmatpush1.msra.mxu0 %v5328
        %5343 = vmatprep.subr.mxu0 0.0
        %5344 = vmatpush1.msra.mxu0 %v5329
        %5345 = vmatprep.subr.mxu0 0.0
        %5346 = vmatpush1.msra.mxu0 %v5330
        %5347 = vmatprep.subr.mxu0 0.0
        %5348 = vmatpush1.msra.mxu0 0.0
        %5349 = vmatprep.subr.mxu0 0.0
        %5350 = vmatpush1.msra.mxu0 0.0
        %5351 = vmatprep.subr.mxu0 0.0
        %5352 = vmatpush1.msra.mxu0 0.0
        %5353 = vmatprep.subr.mxu0 0.0
        %5354 = vmatpush1.msra.mxu0 0.0
        %5355 = vmatprep.subr.mxu0 0.0
        %5356 = vmatpush1.msra.mxu0 0.0
        %5357 = vmatprep.subr.mxu0 0.0
        %5358 = vmatpush1.msra.mxu0 0.0
        %5359 = vmatprep.subr.mxu0 0.0
        %5360 = vmatpush1.msra.mxu0 0.0
        %5361 = vmatprep.subr.mxu0 0.0
        %5362 = vmatpush1.msra.mxu0 0.0
        %5363 = vmatprep.subr.mxu0 0.0
        %5364 = vmatpush1.msra.mxu0 0.0
        %5365 = vmatprep.subr.mxu0 0.0
        %5366 = vmatpush1.msra.mxu0 0.0
        %5367 = vmatprep.subr.mxu0 0.0
        %5368 = vmatpush1.msra.mxu0 0.0
        %5369 = vmatprep.subr.mxu0 0.0
        %5370 = vmatpush1.msra.mxu0 0.0
        %5371 = vmatprep.subr.mxu0 0.0
        %5372 = vmatpush1.msra.mxu0 0.0
        %5373 = vmatprep.subr.mxu0 0.0
        %5374 = vmatpush1.msra.mxu0 0.0
        %5375 = vmatprep.subr.mxu0 0.0
        %5376 = vmatpush1.msra.mxu0 0.0
        %5377 = vmatprep.subr.mxu0 0.0
        %5378 = vmatpush1.msra.mxu0 0.0
        %5379 = vmatprep.subr.mxu0 0.0
        %5380 = vmatpush1.msra.mxu0 0.0
        %5381 = vmatprep.subr.mxu0 0.0
        %5382 = vmatpush1.msra.mxu0 0.0
        %5383 = vmatprep.subr.mxu0 0.0
        %5384 = vmatpush1.msra.mxu0 0.0
        %5385 = vmatprep.subr.mxu0 0.0
        %5386 = vmatpush1.msra.mxu0 0.0
        %5387 = vmatprep.subr.mxu0 0.0
        %5388 = vmatpush1.msra.mxu0 0.0
        %5389 = vmatprep.subr.mxu0 0.0
        %5390 = vmatpush1.msra.mxu0 0.0
        %5391 = vmatprep.subr.mxu0 0.0
        %5392 = vmatpush1.msra.mxu0 0.0
        %5393 = vmatprep.subr.mxu0 0.0
        %5394 = vmatpush1.msra.mxu0 0.0
        %5395 = vmatprep.subr.mxu0 0.0
        %5396 = vmatpush1.msra.mxu0 0.0
        %5397 = vmatprep.subr.mxu0 0.0
        %5398 = vmatpush1.msra.mxu0 0.0
        %5399 = vmatprep.subr.mxu0 0.0
        %5400 = vmatpush1.msra.mxu0 0.0
        %5401 = vmatprep.subr.mxu0 0.0
        %5402 = vmatpush1.msra.mxu0 0.0
        %5403 = vmatprep.mubr.f32.mxu0 0.0
        %5404 = vmatmul.mubr.f32.gmra.mrb[0].mxu0 %v2762
        %v5405 = vpop.f32.mrb[0].mxu0
        %v5406 = vadd.f32 %v5337, %v5405
        %v5407 = vpop.f32.mrb[0].mxu0
        %5408 = vmatprep.mubr.f32.mxu0 0.0
        %5409 = vmatmul.mubr.f32.gmra.mrb[0].mxu0 %v2765
        %v5410 = vpop.f32.mrb[0].mxu0
        %v5411 = vadd.f32 %v5337, %v5410
        %v5412 = vpop.f32.mrb[0].mxu0
        %5413 = vmatprep.mubr.f32.mxu0 0.0
        %5414 = vmatmul.mubr.f32.gmra.mrb[0].mxu0 %v2768
        %v5415 = vpop.f32.mrb[0].mxu0
        %v5416 = vadd.f32 %v5337, %v5415
        %v5417 = vpop.f32.mrb[0].mxu0
        %5418 = vmatprep.mubr.f32.mxu0 0.0
        %5419 = vmatmul.mubr.f32.gmra.mrb[0].mxu0 %v2771
        %v5420 = vpop.f32.mrb[0].mxu0
        %v5421 = vadd.f32 %v5337, %v5420
        %v5422 = vpop.f32.mrb[0].mxu0
        %5423 = vdwg.mxu0
        %5424 = vset.pattern.permute.xlu0 21
        %5425 = vperm.xlu0 %5424, %v2731
        %v5426 = vpop.permute.xlu0 %5425
        %5428 = vset.pattern.permute.xlu0 21
        %5429 = vperm.xlu0 %5428, %v2736
        %v5430 = vpop.permute.xlu0 %5429
        %5432 = vset.pattern.permute.xlu0 21
        %5433 = vperm.xlu0 %5432, %v2741
        %v5434 = vpop.permute.xlu0 %5433
        %5436 = vset.pattern.permute.xlu0 21
        %5437 = vperm.xlu0 %5436, %v2746
        %v5438 = vpop.permute.xlu0 %5437
        %v5440 = vmul.f32 %v5426, %v5406
        %v5441 = vmul.f32 %v5430, %v5411
        %v5442 = vmul.f32 %v5434, %v5416
        %v5443 = vmul.f32 %v5438, %v5421
        %v5444 = vadd.f32 %v5322, %v5440
        %v5445 = vadd.f32 %v5323, %v5441
        %v5446 = vadd.f32 %v5324, %v5442
        %v5447 = vadd.f32 %v5325, %v5443
        %s5448 = scalar_lea.vmem %s13, 704
        %v5449 = vld [vmem:[%s5448] sm:$0xff]
        %v5450 = vld [vmem:[%s5448 + $0x8] sm:$0xff]
        %v5451 = vld [vmem:[%s5448 + $0x10] sm:$0xff]
        %v5452 = vld [vmem:[%s5448 + $0x18] sm:$0xff]
        %s5453 = scalar_lea.vmem %s14, 22
        %v5454 = vld [vmem:[%s5453] sm:$0x1]
        %v5456 = vlaneseq
        %v5457 = vshrl.u32 %v5456, 7
        %v5458 = vsub.s32 0, %v5457
        %v5459 = vrot.slane %v5454, %v5458
        %5461 = vmatprep.subr.mxu0 0.0
        %5462 = vmatpush1.msra.mxu0 %v5449
        %5463 = vmatprep.subr.mxu0 0.0
        %5464 = vmatpush1.msra.mxu0 %v5450
        %5465 = vmatprep.subr.mxu0 0.0
        %5466 = vmatpush1.msra.mxu0 %v5451
        %5467 = vmatprep.subr.mxu0 0.0
        %5468 = vmatpush1.msra.mxu0 %v5452
        %5469 = vmatprep.subr.mxu0 0.0
        %5470 = vmatpush1.msra.mxu0 0.0
        %5471 = vmatprep.subr.mxu0 0.0
        %5472 = vmatpush1.msra.mxu0 0.0
        %5473 = vmatprep.subr.mxu0 0.0
        %5474 = vmatpush1.msra.mxu0 0.0
        %5475 = vmatprep.subr.mxu0 0.0
        %5476 = vmatpush1.msra.mxu0 0.0
        %5477 = vmatprep.subr.mxu0 0.0
        %5478 = vmatpush1.msra.mxu0 0.0
        %5479 = vmatprep.subr.mxu0 0.0
        %5480 = vmatpush1.msra.mxu0 0.0
        %5481 = vmatprep.subr.mxu0 0.0
        %5482 = vmatpush1.msra.mxu0 0.0
        %5483 = vmatprep.subr.mxu0 0.0
        %5484 = vmatpush1.msra.mxu0 0.0
        %5485 = vmatprep.subr.mxu0 0.0
        %5486 = vmatpush1.msra.mxu0 0.0
        %5487 = vmatprep.subr.mxu0 0.0
        %5488 = vmatpush1.msra.mxu0 0.0
        %5489 = vmatprep.subr.mxu0 0.0
        %5490 = vmatpush1.msra.mxu0 0.0
        %5491 = vmatprep.subr.mxu0 0.0
        %5492 = vmatpush1.msra.mxu0 0.0
        %5493 = vmatprep.subr.mxu0 0.0
        %5494 = vmatpush1.msra.mxu0 0.0
        %5495 = vmatprep.subr.mxu0 0.0
        %5496 = vmatpush1.msra.mxu0 0.0
        %5497 = vmatprep.subr.mxu0 0.0
        %5498 = vmatpush1.msra.mxu0 0.0
        %5499 = vmatprep.subr.mxu0 0.0
        %5500 = vmatpush1.msra.mxu0 0.0
        %5501 = vmatprep.subr.mxu0 0.0
        %5502 = vmatpush1.msra.mxu0 0.0
        %5503 = vmatprep.subr.mxu0 0.0
        %5504 = vmatpush1.msra.mxu0 0.0
        %5505 = vmatprep.subr.mxu0 0.0
        %5506 = vmatpush1.msra.mxu0 0.0
        %5507 = vmatprep.subr.mxu0 0.0
        %5508 = vmatpush1.msra.mxu0 0.0
        %5509 = vmatprep.subr.mxu0 0.0
        %5510 = vmatpush1.msra.mxu0 0.0
        %5511 = vmatprep.subr.mxu0 0.0
        %5512 = vmatpush1.msra.mxu0 0.0
        %5513 = vmatprep.subr.mxu0 0.0
        %5514 = vmatpush1.msra.mxu0 0.0
        %5515 = vmatprep.subr.mxu0 0.0
        %5516 = vmatpush1.msra.mxu0 0.0
        %5517 = vmatprep.subr.mxu0 0.0
        %5518 = vmatpush1.msra.mxu0 0.0
        %5519 = vmatprep.subr.mxu0 0.0
        %5520 = vmatpush1.msra.mxu0 0.0
        %5521 = vmatprep.subr.mxu0 0.0
        %5522 = vmatpush1.msra.mxu0 0.0
        %5523 = vmatprep.subr.mxu0 0.0
        %5524 = vmatpush1.msra.mxu0 0.0
        %5525 = vmatprep.mubr.f32.mxu0 0.0
        %5526 = vmatmul.mubr.f32.gmra.mrb[0].mxu0 %v2762
        %v5527 = vpop.f32.mrb[0].mxu0
        %v5528 = vadd.f32 %v5459, %v5527
        %v5529 = vpop.f32.mrb[0].mxu0
        %5530 = vmatprep.mubr.f32.mxu0 0.0
        %5531 = vmatmul.mubr.f32.gmra.mrb[0].mxu0 %v2765
        %v5532 = vpop.f32.mrb[0].mxu0
        %v5533 = vadd.f32 %v5459, %v5532
        %v5534 = vpop.f32.mrb[0].mxu0
        %5535 = vmatprep.mubr.f32.mxu0 0.0
        %5536 = vmatmul.mubr.f32.gmra.mrb[0].mxu0 %v2768
        %v5537 = vpop.f32.mrb[0].mxu0
        %v5538 = vadd.f32 %v5459, %v5537
        %v5539 = vpop.f32.mrb[0].mxu0
        %5540 = vmatprep.mubr.f32.mxu0 0.0
        %5541 = vmatmul.mubr.f32.gmra.mrb[0].mxu0 %v2771
        %v5542 = vpop.f32.mrb[0].mxu0
        %v5543 = vadd.f32 %v5459, %v5542
        %v5544 = vpop.f32.mrb[0].mxu0
        %5545 = vdwg.mxu0
        %5546 = vset.pattern.permute.xlu0 22
        %5547 = vperm.xlu0 %5546, %v2731
        %v5548 = vpop.permute.xlu0 %5547
        %5550 = vset.pattern.permute.xlu0 22
        %5551 = vperm.xlu0 %5550, %v2736
        %v5552 = vpop.permute.xlu0 %5551
        %5554 = vset.pattern.permute.xlu0 22
        %5555 = vperm.xlu0 %5554, %v2741
        %v5556 = vpop.permute.xlu0 %5555
        %5558 = vset.pattern.permute.xlu0 22
        %5559 = vperm.xlu0 %5558, %v2746
        %v5560 = vpop.permute.xlu0 %5559
        %v5562 = vmul.f32 %v5548, %v5528
        %v5563 = vmul.f32 %v5552, %v5533
        %v5564 = vmul.f32 %v5556, %v5538
        %v5565 = vmul.f32 %v5560, %v5543
        %v5566 = vadd.f32 %v5444, %v5562
        %v5567 = vadd.f32 %v5445, %v5563
        %v5568 = vadd.f32 %v5446, %v5564
        %v5569 = vadd.f32 %v5447, %v5565
        %s5570 = scalar_lea.vmem %s13, 736
        %v5571 = vld [vmem:[%s5570] sm:$0xff]
        %v5572 = vld [vmem:[%s5570 + $0x8] sm:$0xff]
        %v5573 = vld [vmem:[%s5570 + $0x10] sm:$0xff]
        %v5574 = vld [vmem:[%s5570 + $0x18] sm:$0xff]
        %s5575 = scalar_lea.vmem %s14, 23
        %v5576 = vld [vmem:[%s5575] sm:$0x1]
        %v5578 = vlaneseq
        %v5579 = vshrl.u32 %v5578, 7
        %v5580 = vsub.s32 0, %v5579
        %v5581 = vrot.slane %v5576, %v5580
        %5583 = vmatprep.subr.mxu0 0.0
        %5584 = vmatpush1.msra.mxu0 %v5571
        %5585 = vmatprep.subr.mxu0 0.0
        %5586 = vmatpush1.msra.mxu0 %v5572
        %5587 = vmatprep.subr.mxu0 0.0
        %5588 = vmatpush1.msra.mxu0 %v5573
        %5589 = vmatprep.subr.mxu0 0.0
        %5590 = vmatpush1.msra.mxu0 %v5574
        %5591 = vmatprep.subr.mxu0 0.0
        %5592 = vmatpush1.msra.mxu0 0.0
        %5593 = vmatprep.subr.mxu0 0.0
        %5594 = vmatpush1.msra.mxu0 0.0
        %5595 = vmatprep.subr.mxu0 0.0
        %5596 = vmatpush1.msra.mxu0 0.0
        %5597 = vmatprep.subr.mxu0 0.0
        %5598 = vmatpush1.msra.mxu0 0.0
        %5599 = vmatprep.subr.mxu0 0.0
        %5600 = vmatpush1.msra.mxu0 0.0
        %5601 = vmatprep.subr.mxu0 0.0
        %5602 = vmatpush1.msra.mxu0 0.0
        %5603 = vmatprep.subr.mxu0 0.0
        %5604 = vmatpush1.msra.mxu0 0.0
        %5605 = vmatprep.subr.mxu0 0.0
        %5606 = vmatpush1.msra.mxu0 0.0
        %5607 = vmatprep.subr.mxu0 0.0
        %5608 = vmatpush1.msra.mxu0 0.0
        %5609 = vmatprep.subr.mxu0 0.0
        %5610 = vmatpush1.msra.mxu0 0.0
        %5611 = vmatprep.subr.mxu0 0.0
        %5612 = vmatpush1.msra.mxu0 0.0
        %5613 = vmatprep.subr.mxu0 0.0
        %5614 = vmatpush1.msra.mxu0 0.0
        %5615 = vmatprep.subr.mxu0 0.0
        %5616 = vmatpush1.msra.mxu0 0.0
        %5617 = vmatprep.subr.mxu0 0.0
        %5618 = vmatpush1.msra.mxu0 0.0
        %5619 = vmatprep.subr.mxu0 0.0
        %5620 = vmatpush1.msra.mxu0 0.0
        %5621 = vmatprep.subr.mxu0 0.0
        %5622 = vmatpush1.msra.mxu0 0.0
        %5623 = vmatprep.subr.mxu0 0.0
        %5624 = vmatpush1.msra.mxu0 0.0
        %5625 = vmatprep.subr.mxu0 0.0
        %5626 = vmatpush1.msra.mxu0 0.0
        %5627 = vmatprep.subr.mxu0 0.0
        %5628 = vmatpush1.msra.mxu0 0.0
        %5629 = vmatprep.subr.mxu0 0.0
        %5630 = vmatpush1.msra.mxu0 0.0
        %5631 = vmatprep.subr.mxu0 0.0
        %5632 = vmatpush1.msra.mxu0 0.0
        %5633 = vmatprep.subr.mxu0 0.0
        %5634 = vmatpush1.msra.mxu0 0.0
        %5635 = vmatprep.subr.mxu0 0.0
        %5636 = vmatpush1.msra.mxu0 0.0
        %5637 = vmatprep.subr.mxu0 0.0
        %5638 = vmatpush1.msra.mxu0 0.0
        %5639 = vmatprep.subr.mxu0 0.0
        %5640 = vmatpush1.msra.mxu0 0.0
        %5641 = vmatprep.subr.mxu0 0.0
        %5642 = vmatpush1.msra.mxu0 0.0
        %5643 = vmatprep.subr.mxu0 0.0
        %5644 = vmatpush1.msra.mxu0 0.0
        %5645 = vmatprep.subr.mxu0 0.0
        %5646 = vmatpush1.msra.mxu0 0.0
        %5647 = vmatprep.mubr.f32.mxu0 0.0
        %5648 = vmatmul.mubr.f32.gmra.mrb[0].mxu0 %v2762
        %v5649 = vpop.f32.mrb[0].mxu0
        %v5650 = vadd.f32 %v5581, %v5649
        %v5651 = vpop.f32.mrb[0].mxu0
        %5652 = vmatprep.mubr.f32.mxu0 0.0
        %5653 = vmatmul.mubr.f32.gmra.mrb[0].mxu0 %v2765
        %v5654 = vpop.f32.mrb[0].mxu0
        %v5655 = vadd.f32 %v5581, %v5654
        %v5656 = vpop.f32.mrb[0].mxu0
        %5657 = vmatprep.mubr.f32.mxu0 0.0
        %5658 = vmatmul.mubr.f32.gmra.mrb[0].mxu0 %v2768
        %v5659 = vpop.f32.mrb[0].mxu0
        %v5660 = vadd.f32 %v5581, %v5659
        %v5661 = vpop.f32.mrb[0].mxu0
        %5662 = vmatprep.mubr.f32.mxu0 0.0
        %5663 = vmatmul.mubr.f32.gmra.mrb[0].mxu0 %v2771
        %v5664 = vpop.f32.mrb[0].mxu0
        %v5665 = vadd.f32 %v5581, %v5664
        %v5666 = vpop.f32.mrb[0].mxu0
        %5667 = vdwg.mxu0
        %5668 = vset.pattern.permute.xlu0 23
        %5669 = vperm.xlu0 %5668, %v2731
        %v5670 = vpop.permute.xlu0 %5669
        %5672 = vset.pattern.permute.xlu0 23
        %5673 = vperm.xlu0 %5672, %v2736
        %v5674 = vpop.permute.xlu0 %5673
        %5676 = vset.pattern.permute.xlu0 23
        %5677 = vperm.xlu0 %5676, %v2741
        %v5678 = vpop.permute.xlu0 %5677
        %5680 = vset.pattern.permute.xlu0 23
        %5681 = vperm.xlu0 %5680, %v2746
        %v5682 = vpop.permute.xlu0 %5681
        %v5684 = vmul.f32 %v5670, %v5650
        %v5685 = vmul.f32 %v5674, %v5655
        %v5686 = vmul.f32 %v5678, %v5660
        %v5687 = vmul.f32 %v5682, %v5665
        %v5688 = vadd.f32 %v5566, %v5684
        %v5689 = vadd.f32 %v5567, %v5685
        %v5690 = vadd.f32 %v5568, %v5686
        %v5691 = vadd.f32 %v5569, %v5687
        %s5692 = scalar_lea.vmem %s13, 768
        %v5693 = vld [vmem:[%s5692] sm:$0xff]
        %v5694 = vld [vmem:[%s5692 + $0x8] sm:$0xff]
        %v5695 = vld [vmem:[%s5692 + $0x10] sm:$0xff]
        %v5696 = vld [vmem:[%s5692 + $0x18] sm:$0xff]
        %s5697 = scalar_lea.vmem %s14, 24
        %v5698 = vld [vmem:[%s5697] sm:$0x1]
        %v5700 = vlaneseq
        %v5701 = vshrl.u32 %v5700, 7
        %v5702 = vsub.s32 0, %v5701
        %v5703 = vrot.slane %v5698, %v5702
        %5705 = vmatprep.subr.mxu0 0.0
        %5706 = vmatpush1.msra.mxu0 %v5693
        %5707 = vmatprep.subr.mxu0 0.0
        %5708 = vmatpush1.msra.mxu0 %v5694
        %5709 = vmatprep.subr.mxu0 0.0
        %5710 = vmatpush1.msra.mxu0 %v5695
        %5711 = vmatprep.subr.mxu0 0.0
        %5712 = vmatpush1.msra.mxu0 %v5696
        %5713 = vmatprep.subr.mxu0 0.0
        %5714 = vmatpush1.msra.mxu0 0.0
        %5715 = vmatprep.subr.mxu0 0.0
        %5716 = vmatpush1.msra.mxu0 0.0
        %5717 = vmatprep.subr.mxu0 0.0
        %5718 = vmatpush1.msra.mxu0 0.0
        %5719 = vmatprep.subr.mxu0 0.0
        %5720 = vmatpush1.msra.mxu0 0.0
        %5721 = vmatprep.subr.mxu0 0.0
        %5722 = vmatpush1.msra.mxu0 0.0
        %5723 = vmatprep.subr.mxu0 0.0
        %5724 = vmatpush1.msra.mxu0 0.0
        %5725 = vmatprep.subr.mxu0 0.0
        %5726 = vmatpush1.msra.mxu0 0.0
        %5727 = vmatprep.subr.mxu0 0.0
        %5728 = vmatpush1.msra.mxu0 0.0
        %5729 = vmatprep.subr.mxu0 0.0
        %5730 = vmatpush1.msra.mxu0 0.0
        %5731 = vmatprep.subr.mxu0 0.0
        %5732 = vmatpush1.msra.mxu0 0.0
        %5733 = vmatprep.subr.mxu0 0.0
        %5734 = vmatpush1.msra.mxu0 0.0
        %5735 = vmatprep.subr.mxu0 0.0
        %5736 = vmatpush1.msra.mxu0 0.0
        %5737 = vmatprep.subr.mxu0 0.0
        %5738 = vmatpush1.msra.mxu0 0.0
        %5739 = vmatprep.subr.mxu0 0.0
        %5740 = vmatpush1.msra.mxu0 0.0
        %5741 = vmatprep.subr.mxu0 0.0
        %5742 = vmatpush1.msra.mxu0 0.0
        %5743 = vmatprep.subr.mxu0 0.0
        %5744 = vmatpush1.msra.mxu0 0.0
        %5745 = vmatprep.subr.mxu0 0.0
        %5746 = vmatpush1.msra.mxu0 0.0
        %5747 = vmatprep.subr.mxu0 0.0
        %5748 = vmatpush1.msra.mxu0 0.0
        %5749 = vmatprep.subr.mxu0 0.0
        %5750 = vmatpush1.msra.mxu0 0.0
        %5751 = vmatprep.subr.mxu0 0.0
        %5752 = vmatpush1.msra.mxu0 0.0
        %5753 = vmatprep.subr.mxu0 0.0
        %5754 = vmatpush1.msra.mxu0 0.0
        %5755 = vmatprep.subr.mxu0 0.0
        %5756 = vmatpush1.msra.mxu0 0.0
        %5757 = vmatprep.subr.mxu0 0.0
        %5758 = vmatpush1.msra.mxu0 0.0
        %5759 = vmatprep.subr.mxu0 0.0
        %5760 = vmatpush1.msra.mxu0 0.0
        %5761 = vmatprep.subr.mxu0 0.0
        %5762 = vmatpush1.msra.mxu0 0.0
        %5763 = vmatprep.subr.mxu0 0.0
        %5764 = vmatpush1.msra.mxu0 0.0
        %5765 = vmatprep.subr.mxu0 0.0
        %5766 = vmatpush1.msra.mxu0 0.0
        %5767 = vmatprep.subr.mxu0 0.0
        %5768 = vmatpush1.msra.mxu0 0.0
        %5769 = vmatprep.mubr.f32.mxu0 0.0
        %5770 = vmatmul.mubr.f32.gmra.mrb[0].mxu0 %v2762
        %v5771 = vpop.f32.mrb[0].mxu0
        %v5772 = vadd.f32 %v5703, %v5771
        %v5773 = vpop.f32.mrb[0].mxu0
        %5774 = vmatprep.mubr.f32.mxu0 0.0
        %5775 = vmatmul.mubr.f32.gmra.mrb[0].mxu0 %v2765
        %v5776 = vpop.f32.mrb[0].mxu0
        %v5777 = vadd.f32 %v5703, %v5776
        %v5778 = vpop.f32.mrb[0].mxu0
        %5779 = vmatprep.mubr.f32.mxu0 0.0
        %5780 = vmatmul.mubr.f32.gmra.mrb[0].mxu0 %v2768
        %v5781 = vpop.f32.mrb[0].mxu0
        %v5782 = vadd.f32 %v5703, %v5781
        %v5783 = vpop.f32.mrb[0].mxu0
        %5784 = vmatprep.mubr.f32.mxu0 0.0
        %5785 = vmatmul.mubr.f32.gmra.mrb[0].mxu0 %v2771
        %v5786 = vpop.f32.mrb[0].mxu0
        %v5787 = vadd.f32 %v5703, %v5786
        %v5788 = vpop.f32.mrb[0].mxu0
        %5789 = vdwg.mxu0
        %5790 = vset.pattern.permute.xlu0 24
        %5791 = vperm.xlu0 %5790, %v2731
        %v5792 = vpop.permute.xlu0 %5791
        %5794 = vset.pattern.permute.xlu0 24
        %5795 = vperm.xlu0 %5794, %v2736
        %v5796 = vpop.permute.xlu0 %5795
        %5798 = vset.pattern.permute.xlu0 24
        %5799 = vperm.xlu0 %5798, %v2741
        %v5800 = vpop.permute.xlu0 %5799
        %5802 = vset.pattern.permute.xlu0 24
        %5803 = vperm.xlu0 %5802, %v2746
        %v5804 = vpop.permute.xlu0 %5803
        %v5806 = vmul.f32 %v5792, %v5772
        %v5807 = vmul.f32 %v5796, %v5777
        %v5808 = vmul.f32 %v5800, %v5782
        %v5809 = vmul.f32 %v5804, %v5787
        %v5810 = vadd.f32 %v5688, %v5806
        %v5811 = vadd.f32 %v5689, %v5807
        %v5812 = vadd.f32 %v5690, %v5808
        %v5813 = vadd.f32 %v5691, %v5809
        %s5814 = scalar_lea.vmem %s13, 800
        %v5815 = vld [vmem:[%s5814] sm:$0xff]
        %v5816 = vld [vmem:[%s5814 + $0x8] sm:$0xff]
        %v5817 = vld [vmem:[%s5814 + $0x10] sm:$0xff]
        %v5818 = vld [vmem:[%s5814 + $0x18] sm:$0xff]
        %s5819 = scalar_lea.vmem %s14, 25
        %v5820 = vld [vmem:[%s5819] sm:$0x1]
        %v5822 = vlaneseq
        %v5823 = vshrl.u32 %v5822, 7
        %v5824 = vsub.s32 0, %v5823
        %v5825 = vrot.slane %v5820, %v5824
        %5827 = vmatprep.subr.mxu0 0.0
        %5828 = vmatpush1.msra.mxu0 %v5815
        %5829 = vmatprep.subr.mxu0 0.0
        %5830 = vmatpush1.msra.mxu0 %v5816
        %5831 = vmatprep.subr.mxu0 0.0
        %5832 = vmatpush1.msra.mxu0 %v5817
        %5833 = vmatprep.subr.mxu0 0.0
        %5834 = vmatpush1.msra.mxu0 %v5818
        %5835 = vmatprep.subr.mxu0 0.0
        %5836 = vmatpush1.msra.mxu0 0.0
        %5837 = vmatprep.subr.mxu0 0.0
        %5838 = vmatpush1.msra.mxu0 0.0
        %5839 = vmatprep.subr.mxu0 0.0
        %5840 = vmatpush1.msra.mxu0 0.0
        %5841 = vmatprep.subr.mxu0 0.0
        %5842 = vmatpush1.msra.mxu0 0.0
        %5843 = vmatprep.subr.mxu0 0.0
        %5844 = vmatpush1.msra.mxu0 0.0
        %5845 = vmatprep.subr.mxu0 0.0
        %5846 = vmatpush1.msra.mxu0 0.0
        %5847 = vmatprep.subr.mxu0 0.0
        %5848 = vmatpush1.msra.mxu0 0.0
        %5849 = vmatprep.subr.mxu0 0.0
        %5850 = vmatpush1.msra.mxu0 0.0
        %5851 = vmatprep.subr.mxu0 0.0
        %5852 = vmatpush1.msra.mxu0 0.0
        %5853 = vmatprep.subr.mxu0 0.0
        %5854 = vmatpush1.msra.mxu0 0.0
        %5855 = vmatprep.subr.mxu0 0.0
        %5856 = vmatpush1.msra.mxu0 0.0
        %5857 = vmatprep.subr.mxu0 0.0
        %5858 = vmatpush1.msra.mxu0 0.0
        %5859 = vmatprep.subr.mxu0 0.0
        %5860 = vmatpush1.msra.mxu0 0.0
        %5861 = vmatprep.subr.mxu0 0.0
        %5862 = vmatpush1.msra.mxu0 0.0
        %5863 = vmatprep.subr.mxu0 0.0
        %5864 = vmatpush1.msra.mxu0 0.0
        %5865 = vmatprep.subr.mxu0 0.0
        %5866 = vmatpush1.msra.mxu0 0.0
        %5867 = vmatprep.subr.mxu0 0.0
        %5868 = vmatpush1.msra.mxu0 0.0
        %5869 = vmatprep.subr.mxu0 0.0
        %5870 = vmatpush1.msra.mxu0 0.0
        %5871 = vmatprep.subr.mxu0 0.0
        %5872 = vmatpush1.msra.mxu0 0.0
        %5873 = vmatprep.subr.mxu0 0.0
        %5874 = vmatpush1.msra.mxu0 0.0
        %5875 = vmatprep.subr.mxu0 0.0
        %5876 = vmatpush1.msra.mxu0 0.0
        %5877 = vmatprep.subr.mxu0 0.0
        %5878 = vmatpush1.msra.mxu0 0.0
        %5879 = vmatprep.subr.mxu0 0.0
        %5880 = vmatpush1.msra.mxu0 0.0
        %5881 = vmatprep.subr.mxu0 0.0
        %5882 = vmatpush1.msra.mxu0 0.0
        %5883 = vmatprep.subr.mxu0 0.0
        %5884 = vmatpush1.msra.mxu0 0.0
        %5885 = vmatprep.subr.mxu0 0.0
        %5886 = vmatpush1.msra.mxu0 0.0
        %5887 = vmatprep.subr.mxu0 0.0
        %5888 = vmatpush1.msra.mxu0 0.0
        %5889 = vmatprep.subr.mxu0 0.0
        %5890 = vmatpush1.msra.mxu0 0.0
        %5891 = vmatprep.mubr.f32.mxu0 0.0
        %5892 = vmatmul.mubr.f32.gmra.mrb[0].mxu0 %v2762
        %v5893 = vpop.f32.mrb[0].mxu0
        %v5894 = vadd.f32 %v5825, %v5893
        %v5895 = vpop.f32.mrb[0].mxu0
        %5896 = vmatprep.mubr.f32.mxu0 0.0
        %5897 = vmatmul.mubr.f32.gmra.mrb[0].mxu0 %v2765
        %v5898 = vpop.f32.mrb[0].mxu0
        %v5899 = vadd.f32 %v5825, %v5898
        %v5900 = vpop.f32.mrb[0].mxu0
        %5901 = vmatprep.mubr.f32.mxu0 0.0
        %5902 = vmatmul.mubr.f32.gmra.mrb[0].mxu0 %v2768
        %v5903 = vpop.f32.mrb[0].mxu0
        %v5904 = vadd.f32 %v5825, %v5903
        %v5905 = vpop.f32.mrb[0].mxu0
        %5906 = vmatprep.mubr.f32.mxu0 0.0
        %5907 = vmatmul.mubr.f32.gmra.mrb[0].mxu0 %v2771
        %v5908 = vpop.f32.mrb[0].mxu0
        %v5909 = vadd.f32 %v5825, %v5908
        %v5910 = vpop.f32.mrb[0].mxu0
        %5911 = vdwg.mxu0
        %5912 = vset.pattern.permute.xlu0 25
        %5913 = vperm.xlu0 %5912, %v2731
        %v5914 = vpop.permute.xlu0 %5913
        %5916 = vset.pattern.permute.xlu0 25
        %5917 = vperm.xlu0 %5916, %v2736
        %v5918 = vpop.permute.xlu0 %5917
        %5920 = vset.pattern.permute.xlu0 25
        %5921 = vperm.xlu0 %5920, %v2741
        %v5922 = vpop.permute.xlu0 %5921
        %5924 = vset.pattern.permute.xlu0 25
        %5925 = vperm.xlu0 %5924, %v2746
        %v5926 = vpop.permute.xlu0 %5925
        %v5928 = vmul.f32 %v5914, %v5894
        %v5929 = vmul.f32 %v5918, %v5899
        %v5930 = vmul.f32 %v5922, %v5904
        %v5931 = vmul.f32 %v5926, %v5909
        %v5932 = vadd.f32 %v5810, %v5928
        %v5933 = vadd.f32 %v5811, %v5929
        %v5934 = vadd.f32 %v5812, %v5930
        %v5935 = vadd.f32 %v5813, %v5931
        %s5936 = scalar_lea.vmem %s13, 832
        %v5937 = vld [vmem:[%s5936] sm:$0xff]
        %v5938 = vld [vmem:[%s5936 + $0x8] sm:$0xff]
        %v5939 = vld [vmem:[%s5936 + $0x10] sm:$0xff]
        %v5940 = vld [vmem:[%s5936 + $0x18] sm:$0xff]
        %s5941 = scalar_lea.vmem %s14, 26
        %v5942 = vld [vmem:[%s5941] sm:$0x1]
        %v5944 = vlaneseq
        %v5945 = vshrl.u32 %v5944, 7
        %v5946 = vsub.s32 0, %v5945
        %v5947 = vrot.slane %v5942, %v5946
        %5949 = vmatprep.subr.mxu0 0.0
        %5950 = vmatpush1.msra.mxu0 %v5937
        %5951 = vmatprep.subr.mxu0 0.0
        %5952 = vmatpush1.msra.mxu0 %v5938
        %5953 = vmatprep.subr.mxu0 0.0
        %5954 = vmatpush1.msra.mxu0 %v5939
        %5955 = vmatprep.subr.mxu0 0.0
        %5956 = vmatpush1.msra.mxu0 %v5940
        %5957 = vmatprep.subr.mxu0 0.0
        %5958 = vmatpush1.msra.mxu0 0.0
        %5959 = vmatprep.subr.mxu0 0.0
        %5960 = vmatpush1.msra.mxu0 0.0
        %5961 = vmatprep.subr.mxu0 0.0
        %5962 = vmatpush1.msra.mxu0 0.0
        %5963 = vmatprep.subr.mxu0 0.0
        %5964 = vmatpush1.msra.mxu0 0.0
        %5965 = vmatprep.subr.mxu0 0.0
        %5966 = vmatpush1.msra.mxu0 0.0
        %5967 = vmatprep.subr.mxu0 0.0
        %5968 = vmatpush1.msra.mxu0 0.0
        %5969 = vmatprep.subr.mxu0 0.0
        %5970 = vmatpush1.msra.mxu0 0.0
        %5971 = vmatprep.subr.mxu0 0.0
        %5972 = vmatpush1.msra.mxu0 0.0
        %5973 = vmatprep.subr.mxu0 0.0
        %5974 = vmatpush1.msra.mxu0 0.0
        %5975 = vmatprep.subr.mxu0 0.0
        %5976 = vmatpush1.msra.mxu0 0.0
        %5977 = vmatprep.subr.mxu0 0.0
        %5978 = vmatpush1.msra.mxu0 0.0
        %5979 = vmatprep.subr.mxu0 0.0
        %5980 = vmatpush1.msra.mxu0 0.0
        %5981 = vmatprep.subr.mxu0 0.0
        %5982 = vmatpush1.msra.mxu0 0.0
        %5983 = vmatprep.subr.mxu0 0.0
        %5984 = vmatpush1.msra.mxu0 0.0
        %5985 = vmatprep.subr.mxu0 0.0
        %5986 = vmatpush1.msra.mxu0 0.0
        %5987 = vmatprep.subr.mxu0 0.0
        %5988 = vmatpush1.msra.mxu0 0.0
        %5989 = vmatprep.subr.mxu0 0.0
        %5990 = vmatpush1.msra.mxu0 0.0
        %5991 = vmatprep.subr.mxu0 0.0
        %5992 = vmatpush1.msra.mxu0 0.0
        %5993 = vmatprep.subr.mxu0 0.0
        %5994 = vmatpush1.msra.mxu0 0.0
        %5995 = vmatprep.subr.mxu0 0.0
        %5996 = vmatpush1.msra.mxu0 0.0
        %5997 = vmatprep.subr.mxu0 0.0
        %5998 = vmatpush1.msra.mxu0 0.0
        %5999 = vmatprep.subr.mxu0 0.0
        %6000 = vmatpush1.msra.mxu0 0.0
        %6001 = vmatprep.subr.mxu0 0.0
        %6002 = vmatpush1.msra.mxu0 0.0
        %6003 = vmatprep.subr.mxu0 0.0
        %6004 = vmatpush1.msra.mxu0 0.0
        %6005 = vmatprep.subr.mxu0 0.0
        %6006 = vmatpush1.msra.mxu0 0.0
        %6007 = vmatprep.subr.mxu0 0.0
        %6008 = vmatpush1.msra.mxu0 0.0
        %6009 = vmatprep.subr.mxu0 0.0
        %6010 = vmatpush1.msra.mxu0 0.0
        %6011 = vmatprep.subr.mxu0 0.0
        %6012 = vmatpush1.msra.mxu0 0.0
        %6013 = vmatprep.mubr.f32.mxu0 0.0
        %6014 = vmatmul.mubr.f32.gmra.mrb[0].mxu0 %v2762
        %v6015 = vpop.f32.mrb[0].mxu0
        %v6016 = vadd.f32 %v5947, %v6015
        %v6017 = vpop.f32.mrb[0].mxu0
        %6018 = vmatprep.mubr.f32.mxu0 0.0
        %6019 = vmatmul.mubr.f32.gmra.mrb[0].mxu0 %v2765
        %v6020 = vpop.f32.mrb[0].mxu0
        %v6021 = vadd.f32 %v5947, %v6020
        %v6022 = vpop.f32.mrb[0].mxu0
        %6023 = vmatprep.mubr.f32.mxu0 0.0
        %6024 = vmatmul.mubr.f32.gmra.mrb[0].mxu0 %v2768
        %v6025 = vpop.f32.mrb[0].mxu0
        %v6026 = vadd.f32 %v5947, %v6025
        %v6027 = vpop.f32.mrb[0].mxu0
        %6028 = vmatprep.mubr.f32.mxu0 0.0
        %6029 = vmatmul.mubr.f32.gmra.mrb[0].mxu0 %v2771
        %v6030 = vpop.f32.mrb[0].mxu0
        %v6031 = vadd.f32 %v5947, %v6030
        %v6032 = vpop.f32.mrb[0].mxu0
        %6033 = vdwg.mxu0
        %6034 = vset.pattern.permute.xlu0 26
        %6035 = vperm.xlu0 %6034, %v2731
        %v6036 = vpop.permute.xlu0 %6035
        %6038 = vset.pattern.permute.xlu0 26
        %6039 = vperm.xlu0 %6038, %v2736
        %v6040 = vpop.permute.xlu0 %6039
        %6042 = vset.pattern.permute.xlu0 26
        %6043 = vperm.xlu0 %6042, %v2741
        %v6044 = vpop.permute.xlu0 %6043
        %6046 = vset.pattern.permute.xlu0 26
        %6047 = vperm.xlu0 %6046, %v2746
        %v6048 = vpop.permute.xlu0 %6047
        %v6050 = vmul.f32 %v6036, %v6016
        %v6051 = vmul.f32 %v6040, %v6021
        %v6052 = vmul.f32 %v6044, %v6026
        %v6053 = vmul.f32 %v6048, %v6031
        %v6054 = vadd.f32 %v5932, %v6050
        %v6055 = vadd.f32 %v5933, %v6051
        %v6056 = vadd.f32 %v5934, %v6052
        %v6057 = vadd.f32 %v5935, %v6053
        %s6058 = scalar_lea.vmem %s13, 864
        %v6059 = vld [vmem:[%s6058] sm:$0xff]
        %v6060 = vld [vmem:[%s6058 + $0x8] sm:$0xff]
        %v6061 = vld [vmem:[%s6058 + $0x10] sm:$0xff]
        %v6062 = vld [vmem:[%s6058 + $0x18] sm:$0xff]
        %s6063 = scalar_lea.vmem %s14, 27
        %v6064 = vld [vmem:[%s6063] sm:$0x1]
        %v6066 = vlaneseq
        %v6067 = vshrl.u32 %v6066, 7
        %v6068 = vsub.s32 0, %v6067
        %v6069 = vrot.slane %v6064, %v6068
        %6071 = vmatprep.subr.mxu0 0.0
        %6072 = vmatpush1.msra.mxu0 %v6059
        %6073 = vmatprep.subr.mxu0 0.0
        %6074 = vmatpush1.msra.mxu0 %v6060
        %6075 = vmatprep.subr.mxu0 0.0
        %6076 = vmatpush1.msra.mxu0 %v6061
        %6077 = vmatprep.subr.mxu0 0.0
        %6078 = vmatpush1.msra.mxu0 %v6062
        %6079 = vmatprep.subr.mxu0 0.0
        %6080 = vmatpush1.msra.mxu0 0.0
        %6081 = vmatprep.subr.mxu0 0.0
        %6082 = vmatpush1.msra.mxu0 0.0
        %6083 = vmatprep.subr.mxu0 0.0
        %6084 = vmatpush1.msra.mxu0 0.0
        %6085 = vmatprep.subr.mxu0 0.0
        %6086 = vmatpush1.msra.mxu0 0.0
        %6087 = vmatprep.subr.mxu0 0.0
        %6088 = vmatpush1.msra.mxu0 0.0
        %6089 = vmatprep.subr.mxu0 0.0
        %6090 = vmatpush1.msra.mxu0 0.0
        %6091 = vmatprep.subr.mxu0 0.0
        %6092 = vmatpush1.msra.mxu0 0.0
        %6093 = vmatprep.subr.mxu0 0.0
        %6094 = vmatpush1.msra.mxu0 0.0
        %6095 = vmatprep.subr.mxu0 0.0
        %6096 = vmatpush1.msra.mxu0 0.0
        %6097 = vmatprep.subr.mxu0 0.0
        %6098 = vmatpush1.msra.mxu0 0.0
        %6099 = vmatprep.subr.mxu0 0.0
        %6100 = vmatpush1.msra.mxu0 0.0
        %6101 = vmatprep.subr.mxu0 0.0
        %6102 = vmatpush1.msra.mxu0 0.0
        %6103 = vmatprep.subr.mxu0 0.0
        %6104 = vmatpush1.msra.mxu0 0.0
        %6105 = vmatprep.subr.mxu0 0.0
        %6106 = vmatpush1.msra.mxu0 0.0
        %6107 = vmatprep.subr.mxu0 0.0
        %6108 = vmatpush1.msra.mxu0 0.0
        %6109 = vmatprep.subr.mxu0 0.0
        %6110 = vmatpush1.msra.mxu0 0.0
        %6111 = vmatprep.subr.mxu0 0.0
        %6112 = vmatpush1.msra.mxu0 0.0
        %6113 = vmatprep.subr.mxu0 0.0
        %6114 = vmatpush1.msra.mxu0 0.0
        %6115 = vmatprep.subr.mxu0 0.0
        %6116 = vmatpush1.msra.mxu0 0.0
        %6117 = vmatprep.subr.mxu0 0.0
        %6118 = vmatpush1.msra.mxu0 0.0
        %6119 = vmatprep.subr.mxu0 0.0
        %6120 = vmatpush1.msra.mxu0 0.0
        %6121 = vmatprep.subr.mxu0 0.0
        %6122 = vmatpush1.msra.mxu0 0.0
        %6123 = vmatprep.subr.mxu0 0.0
        %6124 = vmatpush1.msra.mxu0 0.0
        %6125 = vmatprep.subr.mxu0 0.0
        %6126 = vmatpush1.msra.mxu0 0.0
        %6127 = vmatprep.subr.mxu0 0.0
        %6128 = vmatpush1.msra.mxu0 0.0
        %6129 = vmatprep.subr.mxu0 0.0
        %6130 = vmatpush1.msra.mxu0 0.0
        %6131 = vmatprep.subr.mxu0 0.0
        %6132 = vmatpush1.msra.mxu0 0.0
        %6133 = vmatprep.subr.mxu0 0.0
        %6134 = vmatpush1.msra.mxu0 0.0
        %6135 = vmatprep.mubr.f32.mxu0 0.0
        %6136 = vmatmul.mubr.f32.gmra.mrb[0].mxu0 %v2762
        %v6137 = vpop.f32.mrb[0].mxu0
        %v6138 = vadd.f32 %v6069, %v6137
        %v6139 = vpop.f32.mrb[0].mxu0
        %6140 = vmatprep.mubr.f32.mxu0 0.0
        %6141 = vmatmul.mubr.f32.gmra.mrb[0].mxu0 %v2765
        %v6142 = vpop.f32.mrb[0].mxu0
        %v6143 = vadd.f32 %v6069, %v6142
        %v6144 = vpop.f32.mrb[0].mxu0
        %6145 = vmatprep.mubr.f32.mxu0 0.0
        %6146 = vmatmul.mubr.f32.gmra.mrb[0].mxu0 %v2768
        %v6147 = vpop.f32.mrb[0].mxu0
        %v6148 = vadd.f32 %v6069, %v6147
        %v6149 = vpop.f32.mrb[0].mxu0
        %6150 = vmatprep.mubr.f32.mxu0 0.0
        %6151 = vmatmul.mubr.f32.gmra.mrb[0].mxu0 %v2771
        %v6152 = vpop.f32.mrb[0].mxu0
        %v6153 = vadd.f32 %v6069, %v6152
        %v6154 = vpop.f32.mrb[0].mxu0
        %6155 = vdwg.mxu0
        %6156 = vset.pattern.permute.xlu0 27
        %6157 = vperm.xlu0 %6156, %v2731
        %v6158 = vpop.permute.xlu0 %6157
        %6160 = vset.pattern.permute.xlu0 27
        %6161 = vperm.xlu0 %6160, %v2736
        %v6162 = vpop.permute.xlu0 %6161
        %6164 = vset.pattern.permute.xlu0 27
        %6165 = vperm.xlu0 %6164, %v2741
        %v6166 = vpop.permute.xlu0 %6165
        %6168 = vset.pattern.permute.xlu0 27
        %6169 = vperm.xlu0 %6168, %v2746
        %v6170 = vpop.permute.xlu0 %6169
        %v6172 = vmul.f32 %v6158, %v6138
        %v6173 = vmul.f32 %v6162, %v6143
        %v6174 = vmul.f32 %v6166, %v6148
        %v6175 = vmul.f32 %v6170, %v6153
        %v6176 = vadd.f32 %v6054, %v6172
        %v6177 = vadd.f32 %v6055, %v6173
        %v6178 = vadd.f32 %v6056, %v6174
        %v6179 = vadd.f32 %v6057, %v6175
        %s6180 = scalar_lea.vmem %s13, 896
        %v6181 = vld [vmem:[%s6180] sm:$0xff]
        %v6182 = vld [vmem:[%s6180 + $0x8] sm:$0xff]
        %v6183 = vld [vmem:[%s6180 + $0x10] sm:$0xff]
        %v6184 = vld [vmem:[%s6180 + $0x18] sm:$0xff]
        %s6185 = scalar_lea.vmem %s14, 28
        %v6186 = vld [vmem:[%s6185] sm:$0x1]
        %v6188 = vlaneseq
        %v6189 = vshrl.u32 %v6188, 7
        %v6190 = vsub.s32 0, %v6189
        %v6191 = vrot.slane %v6186, %v6190
        %6193 = vmatprep.subr.mxu0 0.0
        %6194 = vmatpush1.msra.mxu0 %v6181
        %6195 = vmatprep.subr.mxu0 0.0
        %6196 = vmatpush1.msra.mxu0 %v6182
        %6197 = vmatprep.subr.mxu0 0.0
        %6198 = vmatpush1.msra.mxu0 %v6183
        %6199 = vmatprep.subr.mxu0 0.0
        %6200 = vmatpush1.msra.mxu0 %v6184
        %6201 = vmatprep.subr.mxu0 0.0
        %6202 = vmatpush1.msra.mxu0 0.0
        %6203 = vmatprep.subr.mxu0 0.0
        %6204 = vmatpush1.msra.mxu0 0.0
        %6205 = vmatprep.subr.mxu0 0.0
        %6206 = vmatpush1.msra.mxu0 0.0
        %6207 = vmatprep.subr.mxu0 0.0
        %6208 = vmatpush1.msra.mxu0 0.0
        %6209 = vmatprep.subr.mxu0 0.0
        %6210 = vmatpush1.msra.mxu0 0.0
        %6211 = vmatprep.subr.mxu0 0.0
        %6212 = vmatpush1.msra.mxu0 0.0
        %6213 = vmatprep.subr.mxu0 0.0
        %6214 = vmatpush1.msra.mxu0 0.0
        %6215 = vmatprep.subr.mxu0 0.0
        %6216 = vmatpush1.msra.mxu0 0.0
        %6217 = vmatprep.subr.mxu0 0.0
        %6218 = vmatpush1.msra.mxu0 0.0
        %6219 = vmatprep.subr.mxu0 0.0
        %6220 = vmatpush1.msra.mxu0 0.0
        %6221 = vmatprep.subr.mxu0 0.0
        %6222 = vmatpush1.msra.mxu0 0.0
        %6223 = vmatprep.subr.mxu0 0.0
        %6224 = vmatpush1.msra.mxu0 0.0
        %6225 = vmatprep.subr.mxu0 0.0
        %6226 = vmatpush1.msra.mxu0 0.0
        %6227 = vmatprep.subr.mxu0 0.0
        %6228 = vmatpush1.msra.mxu0 0.0
        %6229 = vmatprep.subr.mxu0 0.0
        %6230 = vmatpush1.msra.mxu0 0.0
        %6231 = vmatprep.subr.mxu0 0.0
        %6232 = vmatpush1.msra.mxu0 0.0
        %6233 = vmatprep.subr.mxu0 0.0
        %6234 = vmatpush1.msra.mxu0 0.0
        %6235 = vmatprep.subr.mxu0 0.0
        %6236 = vmatpush1.msra.mxu0 0.0
        %6237 = vmatprep.subr.mxu0 0.0
        %6238 = vmatpush1.msra.mxu0 0.0
        %6239 = vmatprep.subr.mxu0 0.0
        %6240 = vmatpush1.msra.mxu0 0.0
        %6241 = vmatprep.subr.mxu0 0.0
        %6242 = vmatpush1.msra.mxu0 0.0
        %6243 = vmatprep.subr.mxu0 0.0
        %6244 = vmatpush1.msra.mxu0 0.0
        %6245 = vmatprep.subr.mxu0 0.0
        %6246 = vmatpush1.msra.mxu0 0.0
        %6247 = vmatprep.subr.mxu0 0.0
        %6248 = vmatpush1.msra.mxu0 0.0
        %6249 = vmatprep.subr.mxu0 0.0
        %6250 = vmatpush1.msra.mxu0 0.0
        %6251 = vmatprep.subr.mxu0 0.0
        %6252 = vmatpush1.msra.mxu0 0.0
        %6253 = vmatprep.subr.mxu0 0.0
        %6254 = vmatpush1.msra.mxu0 0.0
        %6255 = vmatprep.subr.mxu0 0.0
        %6256 = vmatpush1.msra.mxu0 0.0
        %6257 = vmatprep.mubr.f32.mxu0 0.0
        %6258 = vmatmul.mubr.f32.gmra.mrb[0].mxu0 %v2762
        %v6259 = vpop.f32.mrb[0].mxu0
        %v6260 = vadd.f32 %v6191, %v6259
        %v6261 = vpop.f32.mrb[0].mxu0
        %6262 = vmatprep.mubr.f32.mxu0 0.0
        %6263 = vmatmul.mubr.f32.gmra.mrb[0].mxu0 %v2765
        %v6264 = vpop.f32.mrb[0].mxu0
        %v6265 = vadd.f32 %v6191, %v6264
        %v6266 = vpop.f32.mrb[0].mxu0
        %6267 = vmatprep.mubr.f32.mxu0 0.0
        %6268 = vmatmul.mubr.f32.gmra.mrb[0].mxu0 %v2768
        %v6269 = vpop.f32.mrb[0].mxu0
        %v6270 = vadd.f32 %v6191, %v6269
        %v6271 = vpop.f32.mrb[0].mxu0
        %6272 = vmatprep.mubr.f32.mxu0 0.0
        %6273 = vmatmul.mubr.f32.gmra.mrb[0].mxu0 %v2771
        %v6274 = vpop.f32.mrb[0].mxu0
        %v6275 = vadd.f32 %v6191, %v6274
        %v6276 = vpop.f32.mrb[0].mxu0
        %6277 = vdwg.mxu0
        %6278 = vset.pattern.permute.xlu0 28
        %6279 = vperm.xlu0 %6278, %v2731
        %v6280 = vpop.permute.xlu0 %6279
        %6282 = vset.pattern.permute.xlu0 28
        %6283 = vperm.xlu0 %6282, %v2736
        %v6284 = vpop.permute.xlu0 %6283
        %6286 = vset.pattern.permute.xlu0 28
        %6287 = vperm.xlu0 %6286, %v2741
        %v6288 = vpop.permute.xlu0 %6287
        %6290 = vset.pattern.permute.xlu0 28
        %6291 = vperm.xlu0 %6290, %v2746
        %v6292 = vpop.permute.xlu0 %6291
        %v6294 = vmul.f32 %v6280, %v6260
        %v6295 = vmul.f32 %v6284, %v6265
        %v6296 = vmul.f32 %v6288, %v6270
        %v6297 = vmul.f32 %v6292, %v6275
        %v6298 = vadd.f32 %v6176, %v6294
        %v6299 = vadd.f32 %v6177, %v6295
        %v6300 = vadd.f32 %v6178, %v6296
        %v6301 = vadd.f32 %v6179, %v6297
        %s6302 = scalar_lea.vmem %s13, 928
        %v6303 = vld [vmem:[%s6302] sm:$0xff]
        %v6304 = vld [vmem:[%s6302 + $0x8] sm:$0xff]
        %v6305 = vld [vmem:[%s6302 + $0x10] sm:$0xff]
        %v6306 = vld [vmem:[%s6302 + $0x18] sm:$0xff]
        %s6307 = scalar_lea.vmem %s14, 29
        %v6308 = vld [vmem:[%s6307] sm:$0x1]
        %v6310 = vlaneseq
        %v6311 = vshrl.u32 %v6310, 7
        %v6312 = vsub.s32 0, %v6311
        %v6313 = vrot.slane %v6308, %v6312
        %6315 = vmatprep.subr.mxu0 0.0
        %6316 = vmatpush1.msra.mxu0 %v6303
        %6317 = vmatprep.subr.mxu0 0.0
        %6318 = vmatpush1.msra.mxu0 %v6304
        %6319 = vmatprep.subr.mxu0 0.0
        %6320 = vmatpush1.msra.mxu0 %v6305
        %6321 = vmatprep.subr.mxu0 0.0
        %6322 = vmatpush1.msra.mxu0 %v6306
        %6323 = vmatprep.subr.mxu0 0.0
        %6324 = vmatpush1.msra.mxu0 0.0
        %6325 = vmatprep.subr.mxu0 0.0
        %6326 = vmatpush1.msra.mxu0 0.0
        %6327 = vmatprep.subr.mxu0 0.0
        %6328 = vmatpush1.msra.mxu0 0.0
        %6329 = vmatprep.subr.mxu0 0.0
        %6330 = vmatpush1.msra.mxu0 0.0
        %6331 = vmatprep.subr.mxu0 0.0
        %6332 = vmatpush1.msra.mxu0 0.0
        %6333 = vmatprep.subr.mxu0 0.0
        %6334 = vmatpush1.msra.mxu0 0.0
        %6335 = vmatprep.subr.mxu0 0.0
        %6336 = vmatpush1.msra.mxu0 0.0
        %6337 = vmatprep.subr.mxu0 0.0
        %6338 = vmatpush1.msra.mxu0 0.0
        %6339 = vmatprep.subr.mxu0 0.0
        %6340 = vmatpush1.msra.mxu0 0.0
        %6341 = vmatprep.subr.mxu0 0.0
        %6342 = vmatpush1.msra.mxu0 0.0
        %6343 = vmatprep.subr.mxu0 0.0
        %6344 = vmatpush1.msra.mxu0 0.0
        %6345 = vmatprep.subr.mxu0 0.0
        %6346 = vmatpush1.msra.mxu0 0.0
        %6347 = vmatprep.subr.mxu0 0.0
        %6348 = vmatpush1.msra.mxu0 0.0
        %6349 = vmatprep.subr.mxu0 0.0
        %6350 = vmatpush1.msra.mxu0 0.0
        %6351 = vmatprep.subr.mxu0 0.0
        %6352 = vmatpush1.msra.mxu0 0.0
        %6353 = vmatprep.subr.mxu0 0.0
        %6354 = vmatpush1.msra.mxu0 0.0
        %6355 = vmatprep.subr.mxu0 0.0
        %6356 = vmatpush1.msra.mxu0 0.0
        %6357 = vmatprep.subr.mxu0 0.0
        %6358 = vmatpush1.msra.mxu0 0.0
        %6359 = vmatprep.subr.mxu0 0.0
        %6360 = vmatpush1.msra.mxu0 0.0
        %6361 = vmatprep.subr.mxu0 0.0
        %6362 = vmatpush1.msra.mxu0 0.0
        %6363 = vmatprep.subr.mxu0 0.0
        %6364 = vmatpush1.msra.mxu0 0.0
        %6365 = vmatprep.subr.mxu0 0.0
        %6366 = vmatpush1.msra.mxu0 0.0
        %6367 = vmatprep.subr.mxu0 0.0
        %6368 = vmatpush1.msra.mxu0 0.0
        %6369 = vmatprep.subr.mxu0 0.0
        %6370 = vmatpush1.msra.mxu0 0.0
        %6371 = vmatprep.subr.mxu0 0.0
        %6372 = vmatpush1.msra.mxu0 0.0
        %6373 = vmatprep.subr.mxu0 0.0
        %6374 = vmatpush1.msra.mxu0 0.0
        %6375 = vmatprep.subr.mxu0 0.0
        %6376 = vmatpush1.msra.mxu0 0.0
        %6377 = vmatprep.subr.mxu0 0.0
        %6378 = vmatpush1.msra.mxu0 0.0
        %6379 = vmatprep.mubr.f32.mxu0 0.0
        %6380 = vmatmul.mubr.f32.gmra.mrb[0].mxu0 %v2762
        %v6381 = vpop.f32.mrb[0].mxu0
        %v6382 = vadd.f32 %v6313, %v6381
        %v6383 = vpop.f32.mrb[0].mxu0
        %6384 = vmatprep.mubr.f32.mxu0 0.0
        %6385 = vmatmul.mubr.f32.gmra.mrb[0].mxu0 %v2765
        %v6386 = vpop.f32.mrb[0].mxu0
        %v6387 = vadd.f32 %v6313, %v6386
        %v6388 = vpop.f32.mrb[0].mxu0
        %6389 = vmatprep.mubr.f32.mxu0 0.0
        %6390 = vmatmul.mubr.f32.gmra.mrb[0].mxu0 %v2768
        %v6391 = vpop.f32.mrb[0].mxu0
        %v6392 = vadd.f32 %v6313, %v6391
        %v6393 = vpop.f32.mrb[0].mxu0
        %6394 = vmatprep.mubr.f32.mxu0 0.0
        %6395 = vmatmul.mubr.f32.gmra.mrb[0].mxu0 %v2771
        %v6396 = vpop.f32.mrb[0].mxu0
        %v6397 = vadd.f32 %v6313, %v6396
        %v6398 = vpop.f32.mrb[0].mxu0
        %6399 = vdwg.mxu0
        %6400 = vset.pattern.permute.xlu0 29
        %6401 = vperm.xlu0 %6400, %v2731
        %v6402 = vpop.permute.xlu0 %6401
        %6404 = vset.pattern.permute.xlu0 29
        %6405 = vperm.xlu0 %6404, %v2736
        %v6406 = vpop.permute.xlu0 %6405
        %6408 = vset.pattern.permute.xlu0 29
        %6409 = vperm.xlu0 %6408, %v2741
        %v6410 = vpop.permute.xlu0 %6409
        %6412 = vset.pattern.permute.xlu0 29
        %6413 = vperm.xlu0 %6412, %v2746
        %v6414 = vpop.permute.xlu0 %6413
        %v6416 = vmul.f32 %v6402, %v6382
        %v6417 = vmul.f32 %v6406, %v6387
        %v6418 = vmul.f32 %v6410, %v6392
        %v6419 = vmul.f32 %v6414, %v6397
        %v6420 = vadd.f32 %v6298, %v6416
        %v6421 = vadd.f32 %v6299, %v6417
        %v6422 = vadd.f32 %v6300, %v6418
        %v6423 = vadd.f32 %v6301, %v6419
        %s6424 = scalar_lea.vmem %s13, 960
        %v6425 = vld [vmem:[%s6424] sm:$0xff]
        %v6426 = vld [vmem:[%s6424 + $0x8] sm:$0xff]
        %v6427 = vld [vmem:[%s6424 + $0x10] sm:$0xff]
        %v6428 = vld [vmem:[%s6424 + $0x18] sm:$0xff]
        %s6429 = scalar_lea.vmem %s14, 30
        %v6430 = vld [vmem:[%s6429] sm:$0x1]
        %v6432 = vlaneseq
        %v6433 = vshrl.u32 %v6432, 7
        %v6434 = vsub.s32 0, %v6433
        %v6435 = vrot.slane %v6430, %v6434
        %6437 = vmatprep.subr.mxu0 0.0
        %6438 = vmatpush1.msra.mxu0 %v6425
        %6439 = vmatprep.subr.mxu0 0.0
        %6440 = vmatpush1.msra.mxu0 %v6426
        %6441 = vmatprep.subr.mxu0 0.0
        %6442 = vmatpush1.msra.mxu0 %v6427
        %6443 = vmatprep.subr.mxu0 0.0
        %6444 = vmatpush1.msra.mxu0 %v6428
        %6445 = vmatprep.subr.mxu0 0.0
        %6446 = vmatpush1.msra.mxu0 0.0
        %6447 = vmatprep.subr.mxu0 0.0
        %6448 = vmatpush1.msra.mxu0 0.0
        %6449 = vmatprep.subr.mxu0 0.0
        %6450 = vmatpush1.msra.mxu0 0.0
        %6451 = vmatprep.subr.mxu0 0.0
        %6452 = vmatpush1.msra.mxu0 0.0
        %6453 = vmatprep.subr.mxu0 0.0
        %6454 = vmatpush1.msra.mxu0 0.0
        %6455 = vmatprep.subr.mxu0 0.0
        %6456 = vmatpush1.msra.mxu0 0.0
        %6457 = vmatprep.subr.mxu0 0.0
        %6458 = vmatpush1.msra.mxu0 0.0
        %6459 = vmatprep.subr.mxu0 0.0
        %6460 = vmatpush1.msra.mxu0 0.0
        %6461 = vmatprep.subr.mxu0 0.0
        %6462 = vmatpush1.msra.mxu0 0.0
        %6463 = vmatprep.subr.mxu0 0.0
        %6464 = vmatpush1.msra.mxu0 0.0
        %6465 = vmatprep.subr.mxu0 0.0
        %6466 = vmatpush1.msra.mxu0 0.0
        %6467 = vmatprep.subr.mxu0 0.0
        %6468 = vmatpush1.msra.mxu0 0.0
        %6469 = vmatprep.subr.mxu0 0.0
        %6470 = vmatpush1.msra.mxu0 0.0
        %6471 = vmatprep.subr.mxu0 0.0
        %6472 = vmatpush1.msra.mxu0 0.0
        %6473 = vmatprep.subr.mxu0 0.0
        %6474 = vmatpush1.msra.mxu0 0.0
        %6475 = vmatprep.subr.mxu0 0.0
        %6476 = vmatpush1.msra.mxu0 0.0
        %6477 = vmatprep.subr.mxu0 0.0
        %6478 = vmatpush1.msra.mxu0 0.0
        %6479 = vmatprep.subr.mxu0 0.0
        %6480 = vmatpush1.msra.mxu0 0.0
        %6481 = vmatprep.subr.mxu0 0.0
        %6482 = vmatpush1.msra.mxu0 0.0
        %6483 = vmatprep.subr.mxu0 0.0
        %6484 = vmatpush1.msra.mxu0 0.0
        %6485 = vmatprep.subr.mxu0 0.0
        %6486 = vmatpush1.msra.mxu0 0.0
        %6487 = vmatprep.subr.mxu0 0.0
        %6488 = vmatpush1.msra.mxu0 0.0
        %6489 = vmatprep.subr.mxu0 0.0
        %6490 = vmatpush1.msra.mxu0 0.0
        %6491 = vmatprep.subr.mxu0 0.0
        %6492 = vmatpush1.msra.mxu0 0.0
        %6493 = vmatprep.subr.mxu0 0.0
        %6494 = vmatpush1.msra.mxu0 0.0
        %6495 = vmatprep.subr.mxu0 0.0
        %6496 = vmatpush1.msra.mxu0 0.0
        %6497 = vmatprep.subr.mxu0 0.0
        %6498 = vmatpush1.msra.mxu0 0.0
        %6499 = vmatprep.subr.mxu0 0.0
        %6500 = vmatpush1.msra.mxu0 0.0
        %6501 = vmatprep.mubr.f32.mxu0 0.0
        %6502 = vmatmul.mubr.f32.gmra.mrb[0].mxu0 %v2762
        %v6503 = vpop.f32.mrb[0].mxu0
        %v6504 = vadd.f32 %v6435, %v6503
        %v6505 = vpop.f32.mrb[0].mxu0
        %6506 = vmatprep.mubr.f32.mxu0 0.0
        %6507 = vmatmul.mubr.f32.gmra.mrb[0].mxu0 %v2765
        %v6508 = vpop.f32.mrb[0].mxu0
        %v6509 = vadd.f32 %v6435, %v6508
        %v6510 = vpop.f32.mrb[0].mxu0
        %6511 = vmatprep.mubr.f32.mxu0 0.0
        %6512 = vmatmul.mubr.f32.gmra.mrb[0].mxu0 %v2768
        %v6513 = vpop.f32.mrb[0].mxu0
        %v6514 = vadd.f32 %v6435, %v6513
        %v6515 = vpop.f32.mrb[0].mxu0
        %6516 = vmatprep.mubr.f32.mxu0 0.0
        %6517 = vmatmul.mubr.f32.gmra.mrb[0].mxu0 %v2771
        %v6518 = vpop.f32.mrb[0].mxu0
        %v6519 = vadd.f32 %v6435, %v6518
        %v6520 = vpop.f32.mrb[0].mxu0
        %6521 = vdwg.mxu0
        %6522 = vset.pattern.permute.xlu0 30
        %6523 = vperm.xlu0 %6522, %v2731
        %v6524 = vpop.permute.xlu0 %6523
        %6526 = vset.pattern.permute.xlu0 30
        %6527 = vperm.xlu0 %6526, %v2736
        %v6528 = vpop.permute.xlu0 %6527
        %6530 = vset.pattern.permute.xlu0 30
        %6531 = vperm.xlu0 %6530, %v2741
        %v6532 = vpop.permute.xlu0 %6531
        %6534 = vset.pattern.permute.xlu0 30
        %6535 = vperm.xlu0 %6534, %v2746
        %v6536 = vpop.permute.xlu0 %6535
        %v6538 = vmul.f32 %v6524, %v6504
        %v6539 = vmul.f32 %v6528, %v6509
        %v6540 = vmul.f32 %v6532, %v6514
        %v6541 = vmul.f32 %v6536, %v6519
        %v6542 = vadd.f32 %v6420, %v6538
        %v6543 = vadd.f32 %v6421, %v6539
        %v6544 = vadd.f32 %v6422, %v6540
        %v6545 = vadd.f32 %v6423, %v6541
        %s6546 = scalar_lea.vmem %s13, 992
        %v6547 = vld [vmem:[%s6546] sm:$0xff]
        %v6548 = vld [vmem:[%s6546 + $0x8] sm:$0xff]
        %v6549 = vld [vmem:[%s6546 + $0x10] sm:$0xff]
        %v6550 = vld [vmem:[%s6546 + $0x18] sm:$0xff]
        %s6551 = scalar_lea.vmem %s14, 31
        %v6552 = vld [vmem:[%s6551] sm:$0x1]
        %v6554 = vlaneseq
        %v6555 = vshrl.u32 %v6554, 7
        %v6556 = vsub.s32 0, %v6555
        %v6557 = vrot.slane %v6552, %v6556
        %6559 = vmatprep.subr.mxu0 0.0
        %6560 = vmatpush1.msra.mxu0 %v6547
        %6561 = vmatprep.subr.mxu0 0.0
        %6562 = vmatpush1.msra.mxu0 %v6548
        %6563 = vmatprep.subr.mxu0 0.0
        %6564 = vmatpush1.msra.mxu0 %v6549
        %6565 = vmatprep.subr.mxu0 0.0
        %6566 = vmatpush1.msra.mxu0 %v6550
        %6567 = vmatprep.subr.mxu0 0.0
        %6568 = vmatpush1.msra.mxu0 0.0
        %6569 = vmatprep.subr.mxu0 0.0
        %6570 = vmatpush1.msra.mxu0 0.0
        %6571 = vmatprep.subr.mxu0 0.0
        %6572 = vmatpush1.msra.mxu0 0.0
        %6573 = vmatprep.subr.mxu0 0.0
        %6574 = vmatpush1.msra.mxu0 0.0
        %6575 = vmatprep.subr.mxu0 0.0
        %6576 = vmatpush1.msra.mxu0 0.0
        %6577 = vmatprep.subr.mxu0 0.0
        %6578 = vmatpush1.msra.mxu0 0.0
        %6579 = vmatprep.subr.mxu0 0.0
        %6580 = vmatpush1.msra.mxu0 0.0
        %6581 = vmatprep.subr.mxu0 0.0
        %6582 = vmatpush1.msra.mxu0 0.0
        %6583 = vmatprep.subr.mxu0 0.0
        %6584 = vmatpush1.msra.mxu0 0.0
        %6585 = vmatprep.subr.mxu0 0.0
        %6586 = vmatpush1.msra.mxu0 0.0
        %6587 = vmatprep.subr.mxu0 0.0
        %6588 = vmatpush1.msra.mxu0 0.0
        %6589 = vmatprep.subr.mxu0 0.0
        %6590 = vmatpush1.msra.mxu0 0.0
        %6591 = vmatprep.subr.mxu0 0.0
        %6592 = vmatpush1.msra.mxu0 0.0
        %6593 = vmatprep.subr.mxu0 0.0
        %6594 = vmatpush1.msra.mxu0 0.0
        %6595 = vmatprep.subr.mxu0 0.0
        %6596 = vmatpush1.msra.mxu0 0.0
        %6597 = vmatprep.subr.mxu0 0.0
        %6598 = vmatpush1.msra.mxu0 0.0
        %6599 = vmatprep.subr.mxu0 0.0
        %6600 = vmatpush1.msra.mxu0 0.0
        %6601 = vmatprep.subr.mxu0 0.0
        %6602 = vmatpush1.msra.mxu0 0.0
        %6603 = vmatprep.subr.mxu0 0.0
        %6604 = vmatpush1.msra.mxu0 0.0
        %6605 = vmatprep.subr.mxu0 0.0
        %6606 = vmatpush1.msra.mxu0 0.0
        %6607 = vmatprep.subr.mxu0 0.0
        %6608 = vmatpush1.msra.mxu0 0.0
        %6609 = vmatprep.subr.mxu0 0.0
        %6610 = vmatpush1.msra.mxu0 0.0
        %6611 = vmatprep.subr.mxu0 0.0
        %6612 = vmatpush1.msra.mxu0 0.0
        %6613 = vmatprep.subr.mxu0 0.0
        %6614 = vmatpush1.msra.mxu0 0.0
        %6615 = vmatprep.subr.mxu0 0.0
        %6616 = vmatpush1.msra.mxu0 0.0
        %6617 = vmatprep.subr.mxu0 0.0
        %6618 = vmatpush1.msra.mxu0 0.0
        %6619 = vmatprep.subr.mxu0 0.0
        %6620 = vmatpush1.msra.mxu0 0.0
        %6621 = vmatprep.subr.mxu0 0.0
        %6622 = vmatpush1.msra.mxu0 0.0
        %6623 = vmatprep.mubr.f32.mxu0 0.0
        %6624 = vmatmul.mubr.f32.gmra.mrb[0].mxu0 %v2762
        %v6625 = vpop.f32.mrb[0].mxu0
        %v6626 = vadd.f32 %v6557, %v6625
        %v6627 = vpop.f32.mrb[0].mxu0
        %6628 = vmatprep.mubr.f32.mxu0 0.0
        %6629 = vmatmul.mubr.f32.gmra.mrb[0].mxu0 %v2765
        %v6630 = vpop.f32.mrb[0].mxu0
        %v6631 = vadd.f32 %v6557, %v6630
        %v6632 = vpop.f32.mrb[0].mxu0
        %6633 = vmatprep.mubr.f32.mxu0 0.0
        %6634 = vmatmul.mubr.f32.gmra.mrb[0].mxu0 %v2768
        %v6635 = vpop.f32.mrb[0].mxu0
        %v6636 = vadd.f32 %v6557, %v6635
        %v6637 = vpop.f32.mrb[0].mxu0
        %6638 = vmatprep.mubr.f32.mxu0 0.0
        %6639 = vmatmul.mubr.f32.gmra.mrb[0].mxu0 %v2771
        %v6640 = vpop.f32.mrb[0].mxu0
        %v6641 = vadd.f32 %v6557, %v6640
        %v6642 = vpop.f32.mrb[0].mxu0
        %6643 = vdwg.mxu0
        %6644 = vset.pattern.permute.xlu0 31
        %6645 = vperm.xlu0 %6644, %v2731
        %v6646 = vpop.permute.xlu0 %6645
        %6648 = vset.pattern.permute.xlu0 31
        %6649 = vperm.xlu0 %6648, %v2736
        %v6650 = vpop.permute.xlu0 %6649
        %6652 = vset.pattern.permute.xlu0 31
        %6653 = vperm.xlu0 %6652, %v2741
        %v6654 = vpop.permute.xlu0 %6653
        %6656 = vset.pattern.permute.xlu0 31
        %6657 = vperm.xlu0 %6656, %v2746
        %v6658 = vpop.permute.xlu0 %6657
        %v6660 = vmul.f32 %v6646, %v6626
        %v6661 = vmul.f32 %v6650, %v6631
        %v6662 = vmul.f32 %v6654, %v6636
        %v6663 = vmul.f32 %v6658, %v6641
        %v6664 = vadd.f32 %v6542, %v6660
        %v6665 = vadd.f32 %v6543, %v6661
        %v6666 = vadd.f32 %v6544, %v6662
        %v6667 = vadd.f32 %v6545, %v6663
        %v6668 = vld [vmem:[#allocation3] sm:$0xff]
        %v6669 = vld [vmem:[#allocation3 + $0x8] sm:$0xff]
        %v6671 = vsel %vm2760, %v753, 0
        %v6674 = vsel %vm2760, %v754, 0
        %6676 = vmatprep.subr.mxu0 0.0
        %6677 = vmatpush1.msra.mxu0 %v6664
        %6678 = vmatprep.subr.mxu0 0.0
        %6679 = vmatpush1.msra.mxu0 %v6665
        %6680 = vmatprep.subr.mxu0 0.0
        %6681 = vmatpush1.msra.mxu0 %v6666
        %6682 = vmatprep.subr.mxu0 0.0
        %6683 = vmatpush1.msra.mxu0 %v6667
        %6684 = vmatprep.subr.mxu0 0.0
        %6685 = vmatpush1.msra.mxu0 0.0
        %6686 = vmatprep.subr.mxu0 0.0
        %6687 = vmatpush1.msra.mxu0 0.0
        %6688 = vmatprep.subr.mxu0 0.0
        %6689 = vmatpush1.msra.mxu0 0.0
        %6690 = vmatprep.subr.mxu0 0.0
        %6691 = vmatpush1.msra.mxu0 0.0
        %6692 = vmatprep.subr.mxu0 0.0
        %6693 = vmatpush1.msra.mxu0 0.0
        %6694 = vmatprep.subr.mxu0 0.0
        %6695 = vmatpush1.msra.mxu0 0.0
        %6696 = vmatprep.subr.mxu0 0.0
        %6697 = vmatpush1.msra.mxu0 0.0
        %6698 = vmatprep.subr.mxu0 0.0
        %6699 = vmatpush1.msra.mxu0 0.0
        %6700 = vmatprep.subr.mxu0 0.0
        %6701 = vmatpush1.msra.mxu0 0.0
        %6702 = vmatprep.subr.mxu0 0.0
        %6703 = vmatpush1.msra.mxu0 0.0
        %6704 = vmatprep.subr.mxu0 0.0
        %6705 = vmatpush1.msra.mxu0 0.0
        %6706 = vmatprep.subr.mxu0 0.0
        %6707 = vmatpush1.msra.mxu0 0.0
        %6708 = vmatprep.subr.mxu0 0.0
        %6709 = vmatpush1.msra.mxu0 0.0
        %6710 = vmatprep.subr.mxu0 0.0
        %6711 = vmatpush1.msra.mxu0 0.0
        %6712 = vmatprep.subr.mxu0 0.0
        %6713 = vmatpush1.msra.mxu0 0.0
        %6714 = vmatprep.subr.mxu0 0.0
        %6715 = vmatpush1.msra.mxu0 0.0
        %6716 = vmatprep.subr.mxu0 0.0
        %6717 = vmatpush1.msra.mxu0 0.0
        %6718 = vmatprep.subr.mxu0 0.0
        %6719 = vmatpush1.msra.mxu0 0.0
        %6720 = vmatprep.subr.mxu0 0.0
        %6721 = vmatpush1.msra.mxu0 0.0
        %6722 = vmatprep.subr.mxu0 0.0
        %6723 = vmatpush1.msra.mxu0 0.0
        %6724 = vmatprep.subr.mxu0 0.0
        %6725 = vmatpush1.msra.mxu0 0.0
        %6726 = vmatprep.subr.mxu0 0.0
        %6727 = vmatpush1.msra.mxu0 0.0
        %6728 = vmatprep.subr.mxu0 0.0
        %6729 = vmatpush1.msra.mxu0 0.0
        %6730 = vmatprep.subr.mxu0 0.0
        %6731 = vmatpush1.msra.mxu0 0.0
        %6732 = vmatprep.subr.mxu0 0.0
        %6733 = vmatpush1.msra.mxu0 0.0
        %6734 = vmatprep.subr.mxu0 0.0
        %6735 = vmatpush1.msra.mxu0 0.0
        %6736 = vmatprep.subr.mxu0 0.0
        %6737 = vmatpush1.msra.mxu0 0.0
        %6738 = vmatprep.subr.mxu0 0.0
        %6739 = vmatpush1.msra.mxu0 0.0
        %6740 = vmatprep.mubr.f32.mxu0 0.0
        %6741 = vmatmul.mubr.f32.gmra.mrb[0].mxu0 %v6671
        %v6742 = vpop.f32.mrb[0].mxu0
        %v6743 = vadd.f32 0.0, %v6742
        %v6744 = vpop.f32.mrb[0].mxu0
        %6745 = vmatprep.mubr.f32.mxu0 0.0
        %6746 = vmatmul.mubr.f32.gmra.mrb[0].mxu0 %v6674
        %v6747 = vpop.f32.mrb[0].mxu0
        %v6748 = vadd.f32 0.0, %v6747
        %v6749 = vpop.f32.mrb[0].mxu0
        %6750 = vdwg.mxu0
        %v6751 = vadd.f32 %v6668, %v6743
        %v6752 = vadd.f32 %v6669, %v6748
        %6753 = vst.msk [vmem:[#allocation3] sm:$0xff] %vm2651, %v6751
        %6754 = vst.msk [vmem:[#allocation3 + $0x8] sm:$0xff] %vm2651, %v6752
      $region124: #{tpu_custom_call.1} parent=103 // pred_fallthru
        _
      // Predicated region
      $region125: #{tpu_custom_call.1} parent=103 // pred_check
        _
      $region126: #{tpu_custom_call.1} parent=103 // pred_check_branch
        %6756 = sbr.rel (%p704) target = $region128
      $region127: #{tpu_custom_call.1} parent=103 // pred_region
        %v6757 = vld [vmem:[#allocation2] sm:$0xff]
        %v6758 = vld [vmem:[#allocation2 + $0x8] sm:$0xff]
        %v6759 = vld [vmem:[%s15] sm:$0xff]
        %v6760 = vld [vmem:[%s15 + $0x8] sm:$0xff]
        %v6761 = vld [vmem:[%s15 + $0x10] sm:$0xff]
        %v6762 = vld [vmem:[%s15 + $0x18] sm:$0xff]
        %v6763 = vld [vmem:[%s16] sm:$0x1]
        %v6765 = vlaneseq
        %v6766 = vshrl.u32 %v6765, 7
        %v6767 = vsub.s32 0, %v6766
        %v6768 = vrot.slane %v6763, %v6767
        %vm6770 = vcmask 261120
        %v6772 = vsel %vm6770, %v6757, 0
        %v6775 = vsel %vm6770, %v6758, 0
        %6777 = vmatprep.subr.mxu0 0.0
        %6778 = vmatpush1.msra.mxu0 %v6759
        %6779 = vmatprep.subr.mxu0 0.0
        %6780 = vmatpush1.msra.mxu0 %v6760
        %6781 = vmatprep.subr.mxu0 0.0
        %6782 = vmatpush1.msra.mxu0 %v6761
        %6783 = vmatprep.subr.mxu0 0.0
        %6784 = vmatpush1.msra.mxu0 %v6762
        %6785 = vmatprep.subr.mxu0 0.0
        %6786 = vmatpush1.msra.mxu0 0.0
        %6787 = vmatprep.subr.mxu0 0.0
        %6788 = vmatpush1.msra.mxu0 0.0
        %6789 = vmatprep.subr.mxu0 0.0
        %6790 = vmatpush1.msra.mxu0 0.0
        %6791 = vmatprep.subr.mxu0 0.0
        %6792 = vmatpush1.msra.mxu0 0.0
        %6793 = vmatprep.subr.mxu0 0.0
        %6794 = vmatpush1.msra.mxu0 0.0
        %6795 = vmatprep.subr.mxu0 0.0
        %6796 = vmatpush1.msra.mxu0 0.0
        %6797 = vmatprep.subr.mxu0 0.0
        %6798 = vmatpush1.msra.mxu0 0.0
        %6799 = vmatprep.subr.mxu0 0.0
        %6800 = vmatpush1.msra.mxu0 0.0
        %6801 = vmatprep.subr.mxu0 0.0
        %6802 = vmatpush1.msra.mxu0 0.0
        %6803 = vmatprep.subr.mxu0 0.0
        %6804 = vmatpush1.msra.mxu0 0.0
        %6805 = vmatprep.subr.mxu0 0.0
        %6806 = vmatpush1.msra.mxu0 0.0
        %6807 = vmatprep.subr.mxu0 0.0
        %6808 = vmatpush1.msra.mxu0 0.0
        %6809 = vmatprep.subr.mxu0 0.0
        %6810 = vmatpush1.msra.mxu0 0.0
        %6811 = vmatprep.subr.mxu0 0.0
        %6812 = vmatpush1.msra.mxu0 0.0
        %6813 = vmatprep.subr.mxu0 0.0
        %6814 = vmatpush1.msra.mxu0 0.0
        %6815 = vmatprep.subr.mxu0 0.0
        %6816 = vmatpush1.msra.mxu0 0.0
        %6817 = vmatprep.subr.mxu0 0.0
        %6818 = vmatpush1.msra.mxu0 0.0
        %6819 = vmatprep.subr.mxu0 0.0
        %6820 = vmatpush1.msra.mxu0 0.0
        %6821 = vmatprep.subr.mxu0 0.0
        %6822 = vmatpush1.msra.mxu0 0.0
        %6823 = vmatprep.subr.mxu0 0.0
        %6824 = vmatpush1.msra.mxu0 0.0
        %6825 = vmatprep.subr.mxu0 0.0
        %6826 = vmatpush1.msra.mxu0 0.0
        %6827 = vmatprep.subr.mxu0 0.0
        %6828 = vmatpush1.msra.mxu0 0.0
        %6829 = vmatprep.subr.mxu0 0.0
        %6830 = vmatpush1.msra.mxu0 0.0
        %6831 = vmatprep.subr.mxu0 0.0
        %6832 = vmatpush1.msra.mxu0 0.0
        %6833 = vmatprep.subr.mxu0 0.0
        %6834 = vmatpush1.msra.mxu0 0.0
        %6835 = vmatprep.subr.mxu0 0.0
        %6836 = vmatpush1.msra.mxu0 0.0
        %6837 = vmatprep.subr.mxu0 0.0
        %6838 = vmatpush1.msra.mxu0 0.0
        %6839 = vmatprep.subr.mxu0 0.0
        %6840 = vmatpush1.msra.mxu0 0.0
        %6841 = vmatprep.mubr.f32.mxu0 0.0
        %6842 = vmatmul.mubr.f32.gmra.mrb[0].mxu0 %v6772
        %v6843 = vpop.f32.mrb[0].mxu0
        %v6844 = vadd.f32 %v6768, %v6843
        %v6845 = vpop.f32.mrb[0].mxu0
        %6846 = vmatprep.mubr.f32.mxu0 0.0
        %6847 = vmatmul.mubr.f32.gmra.mrb[0].mxu0 %v6775
        %v6848 = vpop.f32.mrb[0].mxu0
        %v6849 = vadd.f32 %v6768, %v6848
        %v6850 = vpop.f32.mrb[0].mxu0
        %6851 = vdwg.mxu0
        %v6852 = vld [vmem:[#allocation3] sm:$0xff]
        %v6853 = vld [vmem:[#allocation3 + $0x8] sm:$0xff]
        %v6854 = vadd.f32 %v6852, %v6844
        %v6855 = vadd.f32 %v6853, %v6849
        %v6856 = vmax.f32 %v6854, 0.0
        %v6857 = vmax.f32 %v6855, 0.0
        %v6858 = vld [vmem:[%s2] sm:$0x1]
        %v6859 = vlaneseq
        %v6860 = vshrl.u32 %v6859, 7
        %v6861 = vsub.s32 0, %v6860
        %v6862 = vrot.slane %v6858, %v6861
        %vm6863 = vcmp.eq.s32.totalorder %v743, %v6862
        %v6864 = vsel %vm6863, 1, 0
        %v6865 = vcvt.s32.f32 %v6864
        %vm6866 = vcmask 130048
        %v6868 = vsel %vm6866, %v6865, 0
        %6870 = vmatprep.subr.mxu0 0.0
        %6871 = vmatpush1.msra.mxu0 %v6856
        %6872 = vmatprep.subr.mxu0 0.0
        %6873 = vmatpush1.msra.mxu0 %v6857
        %6874 = vmatprep.subr.mxu0 0.0
        %6875 = vmatpush1.msra.mxu0 0.0
        %6876 = vmatprep.subr.mxu0 0.0
        %6877 = vmatpush1.msra.mxu0 0.0
        %6878 = vmatprep.subr.mxu0 0.0
        %6879 = vmatpush1.msra.mxu0 0.0
        %6880 = vmatprep.subr.mxu0 0.0
        %6881 = vmatpush1.msra.mxu0 0.0
        %6882 = vmatprep.subr.mxu0 0.0
        %6883 = vmatpush1.msra.mxu0 0.0
        %6884 = vmatprep.subr.mxu0 0.0
        %6885 = vmatpush1.msra.mxu0 0.0
        %6886 = vmatprep.subr.mxu0 0.0
        %6887 = vmatpush1.msra.mxu0 0.0
        %6888 = vmatprep.subr.mxu0 0.0
        %6889 = vmatpush1.msra.mxu0 0.0
        %6890 = vmatprep.subr.mxu0 0.0
        %6891 = vmatpush1.msra.mxu0 0.0
        %6892 = vmatprep.subr.mxu0 0.0
        %6893 = vmatpush1.msra.mxu0 0.0
        %6894 = vmatprep.subr.mxu0 0.0
        %6895 = vmatpush1.msra.mxu0 0.0
        %6896 = vmatprep.subr.mxu0 0.0
        %6897 = vmatpush1.msra.mxu0 0.0
        %6898 = vmatprep.subr.mxu0 0.0
        %6899 = vmatpush1.msra.mxu0 0.0
        %6900 = vmatprep.subr.mxu0 0.0
        %6901 = vmatpush1.msra.mxu0 0.0
        %6902 = vmatprep.subr.mxu0 0.0
        %6903 = vmatpush1.msra.mxu0 0.0
        %6904 = vmatprep.subr.mxu0 0.0
        %6905 = vmatpush1.msra.mxu0 0.0
        %6906 = vmatprep.subr.mxu0 0.0
        %6907 = vmatpush1.msra.mxu0 0.0
        %6908 = vmatprep.subr.mxu0 0.0
        %6909 = vmatpush1.msra.mxu0 0.0
        %6910 = vmatprep.subr.mxu0 0.0
        %6911 = vmatpush1.msra.mxu0 0.0
        %6912 = vmatprep.subr.mxu0 0.0
        %6913 = vmatpush1.msra.mxu0 0.0
        %6914 = vmatprep.subr.mxu0 0.0
        %6915 = vmatpush1.msra.mxu0 0.0
        %6916 = vmatprep.subr.mxu0 0.0
        %6917 = vmatpush1.msra.mxu0 0.0
        %6918 = vmatprep.subr.mxu0 0.0
        %6919 = vmatpush1.msra.mxu0 0.0
        %6920 = vmatprep.subr.mxu0 0.0
        %6921 = vmatpush1.msra.mxu0 0.0
        %6922 = vmatprep.subr.mxu0 0.0
        %6923 = vmatpush1.msra.mxu0 0.0
        %6924 = vmatprep.subr.mxu0 0.0
        %6925 = vmatpush1.msra.mxu0 0.0
        %6926 = vmatprep.subr.mxu0 0.0
        %6927 = vmatpush1.msra.mxu0 0.0
        %6928 = vmatprep.subr.mxu0 0.0
        %6929 = vmatpush1.msra.mxu0 0.0
        %6930 = vmatprep.subr.mxu0 0.0
        %6931 = vmatpush1.msra.mxu0 0.0
        %6932 = vmatprep.subr.mxu0 0.0
        %6933 = vmatpush1.msra.mxu0 0.0
        %6934 = vmatprep.mubr.f32.mxu0 0.0
        %6935 = vmatmul.mubr.f32.gmra.mrb[0].mxu0 %v6868
        %v6936 = vpop.f32.mrb[0].mxu0
        %v6937 = vadd.f32 0.0, %v6936
        %v6938 = vpop.f32.mrb[0].mxu0
        %6939 = vdwg.mxu0
        %v6940 = vld [vmem:[%s17] sm:$0xff]
        %v6941 = vld [vmem:[%s17 + $0x8] sm:$0xff]
        %v6942 = vld [vmem:[%s18] sm:$0x1]
        %v6944 = vlaneseq
        %v6945 = vshrl.u32 %v6944, 7
        %v6946 = vsub.s32 0, %v6945
        %v6947 = vrot.slane %v6942, %v6946
        %v6950 = vsel %vm6866, %v6937, 0
        %6952 = vmatprep.subr.mxu0 0.0
        %6953 = vmatpush1.msra.mxu0 %v6940
        %6954 = vmatprep.subr.mxu0 0.0
        %6955 = vmatpush1.msra.mxu0 %v6941
        %6956 = vmatprep.subr.mxu0 0.0
        %6957 = vmatpush1.msra.mxu0 0.0
        %6958 = vmatprep.subr.mxu0 0.0
        %6959 = vmatpush1.msra.mxu0 0.0
        %6960 = vmatprep.subr.mxu0 0.0
        %6961 = vmatpush1.msra.mxu0 0.0
        %6962 = vmatprep.subr.mxu0 0.0
        %6963 = vmatpush1.msra.mxu0 0.0
        %6964 = vmatprep.subr.mxu0 0.0
        %6965 = vmatpush1.msra.mxu0 0.0
        %6966 = vmatprep.subr.mxu0 0.0
        %6967 = vmatpush1.msra.mxu0 0.0
        %6968 = vmatprep.subr.mxu0 0.0
        %6969 = vmatpush1.msra.mxu0 0.0
        %6970 = vmatprep.subr.mxu0 0.0
        %6971 = vmatpush1.msra.mxu0 0.0
        %6972 = vmatprep.subr.mxu0 0.0
        %6973 = vmatpush1.msra.mxu0 0.0
        %6974 = vmatprep.subr.mxu0 0.0
        %6975 = vmatpush1.msra.mxu0 0.0
        %6976 = vmatprep.subr.mxu0 0.0
        %6977 = vmatpush1.msra.mxu0 0.0
        %6978 = vmatprep.subr.mxu0 0.0
        %6979 = vmatpush1.msra.mxu0 0.0
        %6980 = vmatprep.subr.mxu0 0.0
        %6981 = vmatpush1.msra.mxu0 0.0
        %6982 = vmatprep.subr.mxu0 0.0
        %6983 = vmatpush1.msra.mxu0 0.0
        %6984 = vmatprep.subr.mxu0 0.0
        %6985 = vmatpush1.msra.mxu0 0.0
        %6986 = vmatprep.subr.mxu0 0.0
        %6987 = vmatpush1.msra.mxu0 0.0
        %6988 = vmatprep.subr.mxu0 0.0
        %6989 = vmatpush1.msra.mxu0 0.0
        %6990 = vmatprep.subr.mxu0 0.0
        %6991 = vmatpush1.msra.mxu0 0.0
        %6992 = vmatprep.subr.mxu0 0.0
        %6993 = vmatpush1.msra.mxu0 0.0
        %6994 = vmatprep.subr.mxu0 0.0
        %6995 = vmatpush1.msra.mxu0 0.0
        %6996 = vmatprep.subr.mxu0 0.0
        %6997 = vmatpush1.msra.mxu0 0.0
        %6998 = vmatprep.subr.mxu0 0.0
        %6999 = vmatpush1.msra.mxu0 0.0
        %7000 = vmatprep.subr.mxu0 0.0
        %7001 = vmatpush1.msra.mxu0 0.0
        %7002 = vmatprep.subr.mxu0 0.0
        %7003 = vmatpush1.msra.mxu0 0.0
        %7004 = vmatprep.subr.mxu0 0.0
        %7005 = vmatpush1.msra.mxu0 0.0
        %7006 = vmatprep.subr.mxu0 0.0
        %7007 = vmatpush1.msra.mxu0 0.0
        %7008 = vmatprep.subr.mxu0 0.0
        %7009 = vmatpush1.msra.mxu0 0.0
        %7010 = vmatprep.subr.mxu0 0.0
        %7011 = vmatpush1.msra.mxu0 0.0
        %7012 = vmatprep.subr.mxu0 0.0
        %7013 = vmatpush1.msra.mxu0 0.0
        %7014 = vmatprep.subr.mxu0 0.0
        %7015 = vmatpush1.msra.mxu0 0.0
        %7016 = vmatprep.mubr.f32.mxu0 0.0
        %7017 = vmatmul.mubr.f32.gmra.mrb[0].mxu0 %v6950
        %v7018 = vpop.f32.mrb[0].mxu0
        %v7019 = vadd.f32 %v6947, %v7018
        %v7020 = vpop.f32.mrb[0].mxu0
        %7021 = vdwg.mxu0
        %v7022 = vmax.f32 %v7019, 0.0
        %v7023 = vld [vmem:[%s19] sm:$0xff]
        %v7024 = vld [vmem:[%s19 + $0x8] sm:$0xff]
        %v7025 = vld [vmem:[%s19 + $0x10] sm:$0xff]
        %v7026 = vld [vmem:[%s19 + $0x18] sm:$0xff]
        %v7027 = vld [vmem:[#allocation4] sm:$0x1]
        %v7029 = vlaneseq
        %v7030 = vshrl.u32 %v7029, 7
        %v7031 = vsub.s32 0, %v7030
        %v7032 = vrot.slane %v7027, %v7031
        %v7035 = vsel %vm6770, %v7022, 0
        %7037 = vmatprep.subr.mxu0 0.0
        %7038 = vmatpush1.msra.mxu0 %v7023
        %7039 = vmatprep.subr.mxu0 0.0
        %7040 = vmatpush1.msra.mxu0 %v7024
        %7041 = vmatprep.subr.mxu0 0.0
        %7042 = vmatpush1.msra.mxu0 %v7025
        %7043 = vmatprep.subr.mxu0 0.0
        %7044 = vmatpush1.msra.mxu0 %v7026
        %7045 = vmatprep.subr.mxu0 0.0
        %7046 = vmatpush1.msra.mxu0 0.0
        %7047 = vmatprep.subr.mxu0 0.0
        %7048 = vmatpush1.msra.mxu0 0.0
        %7049 = vmatprep.subr.mxu0 0.0
        %7050 = vmatpush1.msra.mxu0 0.0
        %7051 = vmatprep.subr.mxu0 0.0
        %7052 = vmatpush1.msra.mxu0 0.0
        %7053 = vmatprep.subr.mxu0 0.0
        %7054 = vmatpush1.msra.mxu0 0.0
        %7055 = vmatprep.subr.mxu0 0.0
        %7056 = vmatpush1.msra.mxu0 0.0
        %7057 = vmatprep.subr.mxu0 0.0
        %7058 = vmatpush1.msra.mxu0 0.0
        %7059 = vmatprep.subr.mxu0 0.0
        %7060 = vmatpush1.msra.mxu0 0.0
        %7061 = vmatprep.subr.mxu0 0.0
        %7062 = vmatpush1.msra.mxu0 0.0
        %7063 = vmatprep.subr.mxu0 0.0
        %7064 = vmatpush1.msra.mxu0 0.0
        %7065 = vmatprep.subr.mxu0 0.0
        %7066 = vmatpush1.msra.mxu0 0.0
        %7067 = vmatprep.subr.mxu0 0.0
        %7068 = vmatpush1.msra.mxu0 0.0
        %7069 = vmatprep.subr.mxu0 0.0
        %7070 = vmatpush1.msra.mxu0 0.0
        %7071 = vmatprep.subr.mxu0 0.0
        %7072 = vmatpush1.msra.mxu0 0.0
        %7073 = vmatprep.subr.mxu0 0.0
        %7074 = vmatpush1.msra.mxu0 0.0
        %7075 = vmatprep.subr.mxu0 0.0
        %7076 = vmatpush1.msra.mxu0 0.0
        %7077 = vmatprep.subr.mxu0 0.0
        %7078 = vmatpush1.msra.mxu0 0.0
        %7079 = vmatprep.subr.mxu0 0.0
        %7080 = vmatpush1.msra.mxu0 0.0
        %7081 = vmatprep.subr.mxu0 0.0
        %7082 = vmatpush1.msra.mxu0 0.0
        %7083 = vmatprep.subr.mxu0 0.0
        %7084 = vmatpush1.msra.mxu0 0.0
        %7085 = vmatprep.subr.mxu0 0.0
        %7086 = vmatpush1.msra.mxu0 0.0
        %7087 = vmatprep.subr.mxu0 0.0
        %7088 = vmatpush1.msra.mxu0 0.0
        %7089 = vmatprep.subr.mxu0 0.0
        %7090 = vmatpush1.msra.mxu0 0.0
        %7091 = vmatprep.subr.mxu0 0.0
        %7092 = vmatpush1.msra.mxu0 0.0
        %7093 = vmatprep.subr.mxu0 0.0
        %7094 = vmatpush1.msra.mxu0 0.0
        %7095 = vmatprep.subr.mxu0 0.0
        %7096 = vmatpush1.msra.mxu0 0.0
        %7097 = vmatprep.subr.mxu0 0.0
        %7098 = vmatpush1.msra.mxu0 0.0
        %7099 = vmatprep.subr.mxu0 0.0
        %7100 = vmatpush1.msra.mxu0 0.0
        %7101 = vmatprep.mubr.f32.mxu0 0.0
        %7102 = vmatmul.mubr.f32.gmra.mrb[0].mxu0 %v7035
        %v7103 = vpop.f32.mrb[0].mxu0
        %v7104 = vadd.f32 %v7032, %v7103
        %v7105 = vpop.f32.mrb[0].mxu0
        %7106 = vdwg.mxu0
        %vm7107 = vcmask 1024
        %7108 = vst.msk [vmem:[%s21] sm:$0x3] %vm7107, %v7104
      $region128: #{tpu_custom_call.1} parent=103 // pred_fallthru
        _
      // Predicated region
      $region129: #{tpu_custom_call.1} parent=103 // pred_check
        %p7109 = pneg %p515
      $region130: #{tpu_custom_call.1} parent=103 // pred_check_branch
        %7111 = sbr.rel (%p7109) target = $region132
      $region131: #{tpu_custom_call.1} parent=103 // pred_region
        _
      $region132: #{tpu_custom_call.1} parent=103 // pred_fallthru
        _
      // Predicated region
      $region133: #{tpu_custom_call.1} parent=103 // pred_check
        %p7112 = pneg %p515
      $region134: #{tpu_custom_call.1} parent=103 // pred_check_branch
        %7114 = sbr.rel (%p7112) target = $region136
      $region135: #{tpu_custom_call.1} parent=103 // pred_region
        _
      $region136: #{tpu_custom_call.1} parent=103 // pred_fallthru
        _
    $region104: #{tpu_custom_call.1} parent=5 // pred_fallthru
      _
    %p7115 = scmp.le.s32.totalorder 2, %s29
    // Predicated region
    $region137: #{tpu_custom_call.1} parent=5 // pred_check
      %p7116 = pneg %p7115
    $region138: #{tpu_custom_call.1} parent=5 // pred_check_branch
      %7118 = sbr.rel (%p7116) target = $region140
    $region139: #{tpu_custom_call.1} parent=5 // pred_region
      %s7119 = ssub.s32 %s29, 2
    $region140: #{tpu_custom_call.1} parent=5 // pred_fallthru
      _
  $region6: #{tpu_custom_call.1} parent=0 // loop_footer
    %s33 = sadd.s32 1, %s29
  $region7: #{tpu_custom_call.1} parent=0 // loop_footer_branch
    %28 = sbr.rel target = $region3
  $region8: #{tpu_custom_call.1} parent=0 // loop_exit
    _

</llo_original>
